<compile_context>
chip_gen: v7x
topology: tpu7x:2x2x1
jax: 0.10.0
libtpu: 0.0.40
codegen_flags: <defaults>
</compile_context>

<pallas_src>
import functools

import jax
import jax.numpy as jnp
from jax.experimental import pallas as pl
from jax.experimental.pallas import tpu as pltpu

LANE = 128
SUBLANE = 8


def _round_up(x, m):
    return (x + m - 1) // m * m


def _resnet_block_kernel(dim_red, Wp, S_out, B0, *refs):
    """One batch element.

    x_ref     : (1, S_in, Ci_p)  bf16, flattened padded image at rows
                [B0, B0+Npad), zeros elsewhere (B0 is a multiple of 8 and
                >= Wp+1 so every tap window stays in bounds).
    mask_ref  : (S_out, 1) f32, 1.0 on interior pixels of the padded grid.
    w*_ref    : (9, Cin_p, Cout_p) bf16 tap-major 3x3 weights.
    b*_ref    : (1, Cout_p) f32 biases.
    o_ref     : (1, S_out, Co_p) f32 output over the *padded* grid (halo rows
                are garbage and sliced away in the wrapper).
    h1_ref    : (S_in, Ci_p) bf16 scratch holding conv1's activation in the
                same margin layout.  Its margins are never read for rows that
                are kept, so they are intentionally left uninitialized.
    """
    if dim_red:
        (x_ref, mask_ref, w1_ref, b1_ref, w2_ref, b2_ref,
         wsk_ref, bsk_ref, o_ref, h1_ref) = refs
    else:
        (x_ref, mask_ref, w1_ref, b1_ref, w2_ref, b2_ref,
         o_ref, h1_ref) = refs
        wsk_ref = bsk_ref = None

    def conv3x3(load, w_ref):
        acc = jnp.zeros((S_out, w_ref.shape[-1]), jnp.float32)
        for dy in range(3):
            for dx in range(3):
                off = B0 + (dy - 1) * Wp + (dx - 1)      # static Python int
                acc = acc + jnp.dot(load(off), w_ref[dy * 3 + dx],
                                    preferred_element_type=jnp.float32)
        return acc

    # ---- conv1 (3x3, pad=1) + ReLU -----------------------------------------
    acc1 = conv3x3(lambda o: x_ref[0, o:o + S_out, :], w1_ref)
    h1 = jnp.maximum(acc1 + b1_ref[...], 0.0)
    # Zero the halo so conv2 sees proper zero padding, then park the bf16
    # activation in scratch (single aligned dense store).
    h1_ref[B0:B0 + S_out, :] = (h1 * mask_ref[...]).astype(h1_ref.dtype)

    # ---- conv2 (3x3, pad=1) + skip + ReLU ----------------------------------
    acc2 = conv3x3(lambda o: h1_ref[o:o + S_out, :], w2_ref)
    x_center = x_ref[0, B0:B0 + S_out, :]
    if dim_red:
        skip = (jnp.dot(x_center, wsk_ref[...],
                        preferred_element_type=jnp.float32) + bsk_ref[...])
    else:
        skip = x_center.astype(jnp.float32)               # identity (Cin == C)
    out = jnp.maximum(acc2 + b2_ref[...] + skip, 0.0)
    o_ref[...] = out[None].astype(o_ref.dtype)


def resnet_block_forward(x_nchw, params, dim_red):
    """Pallas implementation of ResNetBlock.forward.  x_nchw: (B, C_in, H, W)."""
    B, C_in, H, W = x_nchw.shape
    w1, b1, w2, b2, wsk, bsk = params          # PyTorch shapes (OIHW / (Cout,))
    C = w2.shape[0]
    if not dim_red:
        assert C_in == C, "identity skip requires C_in == C"

    Ci_p = _round_up(C_in, LANE)
    Co_p = _round_up(C, LANE)
    Hp, Wp = H + 2, W + 2
    Npad = Hp * Wp
    S_out = _round_up(Npad, SUBLANE)                 # rows computed per element
    B0 = _round_up(Wp + 1, SUBLANE)                  # aligned top margin >= max tap shift
    S_in = B0 + S_out + _round_up(Wp + 1, SUBLANE)   # + tail margin

    # ---- activations: NCHW -> NHWC -> spatial pad -> flatten -> margins ----
    # (single fused XLA pass; kernel-side data is lane-dense bf16)
    x = jnp.transpose(x_nchw, (0, 2, 3, 1))
    xp = jnp.pad(x, ((0, 0), (1, 1), (1, 1), (0, Ci_p - C_in)))
    xf = xp.reshape(B, Npad, Ci_p)
    x_ext = jnp.pad(xf, ((0, 0), (B0, S_in - B0 - Npad), (0, 0)))
    x_ext = x_ext.astype(jnp.bfloat16)

    # interior mask over the flattened padded grid
    py, px = jnp.meshgrid(jnp.arange(Hp), jnp.arange(Wp), indexing="ij")
    interior = (py >= 1) & (py <= H) & (px >= 1) & (px <= W)
    mask = jnp.pad(interior.reshape(Npad).astype(jnp.float32),
                   (0, S_out - Npad)).reshape(S_out, 1)

    # ---- weights: OIHW -> tap-major (9, Cin_p, Cout_p), zero padded, bf16 ---
    def prep_w(w, ci_p, co_p):
        co, ci = w.shape[0], w.shape[1]
        wt = jnp.transpose(w, (2, 3, 1, 0)).reshape(9, ci, co)
        return jnp.pad(wt, ((0, 0), (0, ci_p - ci), (0, co_p - co))
                       ).astype(jnp.bfloat16)

    def prep_b(b, cp):
        return jnp.pad(b, (0, cp - b.shape[0])).reshape(1, cp).astype(jnp.float32)

    w1p, b1p = prep_w(w1, Ci_p, Ci_p), prep_b(b1, Ci_p)
    w2p, b2p = prep_w(w2, Ci_p, Co_p), prep_b(b2, Co_p)

    in_specs = [
        pl.BlockSpec((1, S_in, Ci_p), lambda b: (b, 0, 0)),   # x_ext
        pl.BlockSpec((S_out, 1), lambda b: (0, 0)),           # interior mask
        pl.BlockSpec((9, Ci_p, Ci_p), lambda b: (0, 0, 0)),   # w1
        pl.BlockSpec((1, Ci_p), lambda b: (0, 0)),            # b1
        pl.BlockSpec((9, Ci_p, Co_p), lambda b: (0, 0, 0)),   # w2
        pl.BlockSpec((1, Co_p), lambda b: (0, 0)),            # b2
    ]
    args = [x_ext, mask, w1p, b1p, w2p, b2p]
    if dim_red:
        wskp = jnp.pad(jnp.transpose(wsk[:, :, 0, 0], (1, 0)),
                       ((0, Ci_p - C_in), (0, Co_p - C))).astype(jnp.bfloat16)
        bskp = prep_b(bsk, Co_p)
        in_specs += [pl.BlockSpec((Ci_p, Co_p), lambda b: (0, 0)),
                     pl.BlockSpec((1, Co_p), lambda b: (0, 0))]
        args += [wskp, bskp]

    kernel = functools.partial(_resnet_block_kernel, bool(dim_red),
                               Wp, S_out, B0)

    out_flat = pl.pallas_call(
        kernel,
        out_shape=jax.ShapeDtypeStruct((B, S_out, Co_p), jnp.float32),
        grid_spec=pltpu.PrefetchScalarGridSpec(
            num_scalar_prefetch=0,
            grid=(B,),
            in_specs=in_specs,
            out_specs=pl.BlockSpec((1, S_out, Co_p), lambda b: (b, 0, 0)),
            scratch_shapes=[pltpu.VMEM((S_in, Ci_p), jnp.bfloat16)],
        ),
        compiler_params=pltpu.CompilerParams(
            dimension_semantics=("parallel",),   # batch is independent (2 TCs on v7x)
        ),
    )(*args)

    # drop halo rows / padded channels, back to NCHW (single fused XLA pass)
    out = out_flat[:, :Npad, :].reshape(B, Hp, Wp, Co_p)[:, 1:H + 1, 1:W + 1, :C]
    return jnp.transpose(out, (0, 3, 1, 2))


# ---------------- reference (pure JAX, mirrors the PyTorch module) ----------
def reference_forward(x, params, dim_red):
    w1, b1, w2, b2, wsk, bsk = params

    def conv(x, w, b, pad):
        dn = jax.lax.conv_dimension_numbers(x.shape, w.shape,
                                            ('NCHW', 'OIHW', 'NCHW'))
        y = jax.lax.conv_general_dilated(x, w, (1, 1),
                                         [(pad, pad), (pad, pad)],
                                         dimension_numbers=dn)
        return y + b[None, :, None, None]

    fx = jax.nn.relu(conv(x, w1, b1, 1))
    fx = conv(fx, w2, b2, 1)
    skip = conv(x, wsk, bsk, 0) if dim_red else x
    return jax.nn.relu(fx + skip)


def init_params(key, C, dim_red):
    """Deterministic synthetic parameters with nn.Conv2d shapes."""
    C_in = C * 2 if dim_red else C
    ks = jax.random.split(key, 6)
    w1 = jax.random.normal(ks[0], (C_in, C_in, 3, 3), jnp.float32) * 0.1
    b1 = jax.random.normal(ks[1], (C_in,), jnp.float32) * 0.1
    w2 = jax.random.normal(ks[2], (C, C_in, 3, 3), jnp.float32) * 0.1
    b2 = jax.random.normal(ks[3], (C,), jnp.float32) * 0.1
    wsk = jax.random.normal(ks[4], (C, C_in, 1, 1), jnp.float32) * 0.1
    bsk = jax.random.normal(ks[5], (C,), jnp.float32) * 0.1
    return (w1, b1, w2, b2, wsk, bsk)


if __name__ == "__main__":
    key = jax.random.PRNGKey(0)
    C, B, H, W = 4, 2, 16, 16

    for dim_red in (False, True):
        C_in = C * 2 if dim_red else C
        key, kp, kx = jax.random.split(key, 3)
        params = init_params(kp, C, dim_red)
        x = jax.random.normal(kx, (B, C_in, H, W), jnp.float32)

        out = resnet_block_forward(x, params, dim_red)
        out = jax.block_until_ready(out)
        assert out.shape == (B, C, H, W)

        ref = reference_forward(x, params, dim_red)
        max_err = float(jnp.max(jnp.abs(out - ref)))
        # bf16 operands with f32 accumulation -> slightly looser tolerance
        assert jnp.allclose(out, ref, atol=1e-1, rtol=1e-2), (
            f"mismatch (dim_red={dim_red}), max err {max_err}")

    print("KERNEL_OK")
</pallas_src>

<mosaic_0001>
module attributes {stable_mosaic.version = 11 : i64} {
  func.func @_resnet_block_kernel(%arg0: i32, %arg1: memref<1x376x128xbf16, #tpu.memory_space<vmem>>, %arg2: memref<328x1xf32, #tpu.memory_space<vmem>>, %arg3: memref<9x128x128xbf16, #tpu.memory_space<vmem>>, %arg4: memref<1x128xf32, #tpu.memory_space<vmem>>, %arg5: memref<9x128x128xbf16, #tpu.memory_space<vmem>>, %arg6: memref<1x128xf32, #tpu.memory_space<vmem>>, %arg7: memref<1x328x128xf32, #tpu.memory_space<vmem>>, %arg8: memref<376x128xbf16, #tpu.memory_space<vmem>>) attributes {dimension_semantics = [#tpu.dimension_semantics<parallel>], iteration_bounds = array<i64: 2>, scalar_prefetch = 0 : i64, scratch_operands = 1 : i64, tpu.core_type = #tpu.core_type<tc>, window_params = [{transform_indices = @transform_0, window_bounds = array<i64: 1, 376, 128>}, {pipeline_mode = #tpu.pipeline_mode<synchronous>, transform_indices = @transform_1, window_bounds = array<i64: 328, 1>}, {pipeline_mode = #tpu.pipeline_mode<synchronous>, transform_indices = @transform_2, window_bounds = array<i64: 9, 128, 128>}, {pipeline_mode = #tpu.pipeline_mode<synchronous>, transform_indices = @transform_3, window_bounds = array<i64: 1, 128>}, {pipeline_mode = #tpu.pipeline_mode<synchronous>, transform_indices = @transform_4, window_bounds = array<i64: 9, 128, 128>}, {pipeline_mode = #tpu.pipeline_mode<synchronous>, transform_indices = @transform_5, window_bounds = array<i64: 1, 128>}, {transform_indices = @transform_6, window_bounds = array<i64: 1, 328, 128>}]} {
    %cst = arith.constant 0.000000e+00 : f32
    %0 = vector.broadcast %cst : f32 to vector<328x128xf32>
    %c0 = arith.constant 0 : index
    %c5 = arith.constant 5 : index
    %c0_0 = arith.constant 0 : index
    %1 = vector.load %arg1[%c0, %c5, %c0_0] : memref<1x376x128xbf16, #tpu.memory_space<vmem>>, vector<1x328x128xbf16>
    %2 = vector.shape_cast %1 : vector<1x328x128xbf16> to vector<328x128xbf16>
    %c0_1 = arith.constant 0 : index
    %c0_2 = arith.constant 0 : index
    %c0_3 = arith.constant 0 : index
    %3 = vector.load %arg3[%c0_1, %c0_2, %c0_3] : memref<9x128x128xbf16, #tpu.memory_space<vmem>>, vector<1x128x128xbf16>
    %4 = vector.shape_cast %3 : vector<1x128x128xbf16> to vector<128x128xbf16>
    %cst_4 = arith.constant dense<0.000000e+00> : vector<328x128xf32>
    %5 = tpu.matmul %2, %4, %cst_4 {dimension_numbers = #tpu.dot_dimension_numbers<[1], [0], [0], [1], [0, 0, 1, 1], [], []>} : vector<328x128xbf16>, vector<128x128xbf16>, vector<328x128xf32> -> vector<328x128xf32>
    %6 = arith.addf %0, %5 : vector<328x128xf32>
    %c0_5 = arith.constant 0 : index
    %c6 = arith.constant 6 : index
    %c0_6 = arith.constant 0 : index
    %7 = vector.load %arg1[%c0_5, %c6, %c0_6] : memref<1x376x128xbf16, #tpu.memory_space<vmem>>, vector<1x328x128xbf16>
    %8 = vector.shape_cast %7 : vector<1x328x128xbf16> to vector<328x128xbf16>
    %c1 = arith.constant 1 : index
    %c0_7 = arith.constant 0 : index
    %c0_8 = arith.constant 0 : index
    %9 = vector.load %arg3[%c1, %c0_7, %c0_8] : memref<9x128x128xbf16, #tpu.memory_space<vmem>>, vector<1x128x128xbf16>
    %10 = vector.shape_cast %9 : vector<1x128x128xbf16> to vector<128x128xbf16>
    %cst_9 = arith.constant dense<0.000000e+00> : vector<328x128xf32>
    %11 = tpu.matmul %8, %10, %cst_9 {dimension_numbers = #tpu.dot_dimension_numbers<[1], [0], [0], [1], [0, 0, 1, 1], [], []>} : vector<328x128xbf16>, vector<128x128xbf16>, vector<328x128xf32> -> vector<328x128xf32>
    %12 = arith.addf %6, %11 : vector<328x128xf32>
    %c0_10 = arith.constant 0 : index
    %c7 = arith.constant 7 : index
    %c0_11 = arith.constant 0 : index
    %13 = vector.load %arg1[%c0_10, %c7, %c0_11] : memref<1x376x128xbf16, #tpu.memory_space<vmem>>, vector<1x328x128xbf16>
    %14 = vector.shape_cast %13 : vector<1x328x128xbf16> to vector<328x128xbf16>
    %c2 = arith.constant 2 : index
    %c0_12 = arith.constant 0 : index
    %c0_13 = arith.constant 0 : index
    %15 = vector.load %arg3[%c2, %c0_12, %c0_13] : memref<9x128x128xbf16, #tpu.memory_space<vmem>>, vector<1x128x128xbf16>
    %16 = vector.shape_cast %15 : vector<1x128x128xbf16> to vector<128x128xbf16>
    %cst_14 = arith.constant dense<0.000000e+00> : vector<328x128xf32>
    %17 = tpu.matmul %14, %16, %cst_14 {dimension_numbers = #tpu.dot_dimension_numbers<[1], [0], [0], [1], [0, 0, 1, 1], [], []>} : vector<328x128xbf16>, vector<128x128xbf16>, vector<328x128xf32> -> vector<328x128xf32>
    %18 = arith.addf %12, %17 : vector<328x128xf32>
    %c0_15 = arith.constant 0 : index
    %c23 = arith.constant 23 : index
    %c0_16 = arith.constant 0 : index
    %19 = vector.load %arg1[%c0_15, %c23, %c0_16] : memref<1x376x128xbf16, #tpu.memory_space<vmem>>, vector<1x328x128xbf16>
    %20 = vector.shape_cast %19 : vector<1x328x128xbf16> to vector<328x128xbf16>
    %c3 = arith.constant 3 : index
    %c0_17 = arith.constant 0 : index
    %c0_18 = arith.constant 0 : index
    %21 = vector.load %arg3[%c3, %c0_17, %c0_18] : memref<9x128x128xbf16, #tpu.memory_space<vmem>>, vector<1x128x128xbf16>
    %22 = vector.shape_cast %21 : vector<1x128x128xbf16> to vector<128x128xbf16>
    %cst_19 = arith.constant dense<0.000000e+00> : vector<328x128xf32>
    %23 = tpu.matmul %20, %22, %cst_19 {dimension_numbers = #tpu.dot_dimension_numbers<[1], [0], [0], [1], [0, 0, 1, 1], [], []>} : vector<328x128xbf16>, vector<128x128xbf16>, vector<328x128xf32> -> vector<328x128xf32>
    %24 = arith.addf %18, %23 : vector<328x128xf32>
    %c0_20 = arith.constant 0 : index
    %c24 = arith.constant 24 : index
    %c0_21 = arith.constant 0 : index
    %25 = vector.load %arg1[%c0_20, %c24, %c0_21] : memref<1x376x128xbf16, #tpu.memory_space<vmem>>, vector<1x328x128xbf16>
    %26 = vector.shape_cast %25 : vector<1x328x128xbf16> to vector<328x128xbf16>
    %c4 = arith.constant 4 : index
    %c0_22 = arith.constant 0 : index
    %c0_23 = arith.constant 0 : index
    %27 = vector.load %arg3[%c4, %c0_22, %c0_23] : memref<9x128x128xbf16, #tpu.memory_space<vmem>>, vector<1x128x128xbf16>
    %28 = vector.shape_cast %27 : vector<1x128x128xbf16> to vector<128x128xbf16>
    %cst_24 = arith.constant dense<0.000000e+00> : vector<328x128xf32>
    %29 = tpu.matmul %26, %28, %cst_24 {dimension_numbers = #tpu.dot_dimension_numbers<[1], [0], [0], [1], [0, 0, 1, 1], [], []>} : vector<328x128xbf16>, vector<128x128xbf16>, vector<328x128xf32> -> vector<328x128xf32>
    %30 = arith.addf %24, %29 : vector<328x128xf32>
    %c0_25 = arith.constant 0 : index
    %c25 = arith.constant 25 : index
    %c0_26 = arith.constant 0 : index
    %31 = vector.load %arg1[%c0_25, %c25, %c0_26] : memref<1x376x128xbf16, #tpu.memory_space<vmem>>, vector<1x328x128xbf16>
    %32 = vector.shape_cast %31 : vector<1x328x128xbf16> to vector<328x128xbf16>
    %c5_27 = arith.constant 5 : index
    %c0_28 = arith.constant 0 : index
    %c0_29 = arith.constant 0 : index
    %33 = vector.load %arg3[%c5_27, %c0_28, %c0_29] : memref<9x128x128xbf16, #tpu.memory_space<vmem>>, vector<1x128x128xbf16>
    %34 = vector.shape_cast %33 : vector<1x128x128xbf16> to vector<128x128xbf16>
    %cst_30 = arith.constant dense<0.000000e+00> : vector<328x128xf32>
    %35 = tpu.matmul %32, %34, %cst_30 {dimension_numbers = #tpu.dot_dimension_numbers<[1], [0], [0], [1], [0, 0, 1, 1], [], []>} : vector<328x128xbf16>, vector<128x128xbf16>, vector<328x128xf32> -> vector<328x128xf32>
    %36 = arith.addf %30, %35 : vector<328x128xf32>
    %c0_31 = arith.constant 0 : index
    %c41 = arith.constant 41 : index
    %c0_32 = arith.constant 0 : index
    %37 = vector.load %arg1[%c0_31, %c41, %c0_32] : memref<1x376x128xbf16, #tpu.memory_space<vmem>>, vector<1x328x128xbf16>
    %38 = vector.shape_cast %37 : vector<1x328x128xbf16> to vector<328x128xbf16>
    %c6_33 = arith.constant 6 : index
    %c0_34 = arith.constant 0 : index
    %c0_35 = arith.constant 0 : index
    %39 = vector.load %arg3[%c6_33, %c0_34, %c0_35] : memref<9x128x128xbf16, #tpu.memory_space<vmem>>, vector<1x128x128xbf16>
    %40 = vector.shape_cast %39 : vector<1x128x128xbf16> to vector<128x128xbf16>
    %cst_36 = arith.constant dense<0.000000e+00> : vector<328x128xf32>
    %41 = tpu.matmul %38, %40, %cst_36 {dimension_numbers = #tpu.dot_dimension_numbers<[1], [0], [0], [1], [0, 0, 1, 1], [], []>} : vector<328x128xbf16>, vector<128x128xbf16>, vector<328x128xf32> -> vector<328x128xf32>
    %42 = arith.addf %36, %41 : vector<328x128xf32>
    %c0_37 = arith.constant 0 : index
    %c42 = arith.constant 42 : index
    %c0_38 = arith.constant 0 : index
    %43 = vector.load %arg1[%c0_37, %c42, %c0_38] : memref<1x376x128xbf16, #tpu.memory_space<vmem>>, vector<1x328x128xbf16>
    %44 = vector.shape_cast %43 : vector<1x328x128xbf16> to vector<328x128xbf16>
    %c7_39 = arith.constant 7 : index
    %c0_40 = arith.constant 0 : index
    %c0_41 = arith.constant 0 : index
    %45 = vector.load %arg3[%c7_39, %c0_40, %c0_41] : memref<9x128x128xbf16, #tpu.memory_space<vmem>>, vector<1x128x128xbf16>
    %46 = vector.shape_cast %45 : vector<1x128x128xbf16> to vector<128x128xbf16>
    %cst_42 = arith.constant dense<0.000000e+00> : vector<328x128xf32>
    %47 = tpu.matmul %44, %46, %cst_42 {dimension_numbers = #tpu.dot_dimension_numbers<[1], [0], [0], [1], [0, 0, 1, 1], [], []>} : vector<328x128xbf16>, vector<128x128xbf16>, vector<328x128xf32> -> vector<328x128xf32>
    %48 = arith.addf %42, %47 : vector<328x128xf32>
    %c0_43 = arith.constant 0 : index
    %c43 = arith.constant 43 : index
    %c0_44 = arith.constant 0 : index
    %49 = vector.load %arg1[%c0_43, %c43, %c0_44] : memref<1x376x128xbf16, #tpu.memory_space<vmem>>, vector<1x328x128xbf16>
    %50 = vector.shape_cast %49 : vector<1x328x128xbf16> to vector<328x128xbf16>
    %c8 = arith.constant 8 : index
    %c0_45 = arith.constant 0 : index
    %c0_46 = arith.constant 0 : index
    %51 = vector.load %arg3[%c8, %c0_45, %c0_46] : memref<9x128x128xbf16, #tpu.memory_space<vmem>>, vector<1x128x128xbf16>
    %52 = vector.shape_cast %51 : vector<1x128x128xbf16> to vector<128x128xbf16>
    %cst_47 = arith.constant dense<0.000000e+00> : vector<328x128xf32>
    %53 = tpu.matmul %50, %52, %cst_47 {dimension_numbers = #tpu.dot_dimension_numbers<[1], [0], [0], [1], [0, 0, 1, 1], [], []>} : vector<328x128xbf16>, vector<128x128xbf16>, vector<328x128xf32> -> vector<328x128xf32>
    %54 = arith.addf %48, %53 : vector<328x128xf32>
    %c0_48 = arith.constant 0 : index
    %c0_49 = arith.constant 0 : index
    %55 = vector.load %arg4[%c0_48, %c0_49] : memref<1x128xf32, #tpu.memory_space<vmem>>, vector<1x128xf32>
    %56 = vector.broadcast %55 : vector<1x128xf32> to vector<328x128xf32>
    %57 = arith.addf %54, %56 : vector<328x128xf32>
    %cst_50 = arith.constant 0.000000e+00 : f32
    %58 = vector.broadcast %cst_50 : f32 to vector<328x128xf32>
    %59 = arith.maximumf %57, %58 : vector<328x128xf32>
    %c0_51 = arith.constant 0 : index
    %c0_52 = arith.constant 0 : index
    %60 = vector.load %arg2[%c0_51, %c0_52] : memref<328x1xf32, #tpu.memory_space<vmem>>, vector<328x1xf32>
    %61 = vector.broadcast %60 : vector<328x1xf32> to vector<328x128xf32>
    %62 = arith.mulf %59, %61 : vector<328x128xf32>
    %63 = arith.truncf %62 : vector<328x128xf32> to vector<328x128xbf16>
    %c24_53 = arith.constant 24 : index
    %c0_54 = arith.constant 0 : index
    %64 = vector.load %arg8[%c24_53, %c0_54] : memref<376x128xbf16, #tpu.memory_space<vmem>>, vector<328x128xbf16>
    tpu.vector_store %arg8[%c24_53, %c0_54], %63 {strides = array<i32>} : memref<376x128xbf16, #tpu.memory_space<vmem>>, vector<328x128xbf16>,
    %cst_55 = arith.constant 0.000000e+00 : f32
    %65 = vector.broadcast %cst_55 : f32 to vector<328x128xf32>
    %c5_56 = arith.constant 5 : index
    %c0_57 = arith.constant 0 : index
    %66 = vector.load %arg8[%c5_56, %c0_57] : memref<376x128xbf16, #tpu.memory_space<vmem>>, vector<328x128xbf16>
    %c0_58 = arith.constant 0 : index
    %c0_59 = arith.constant 0 : index
    %c0_60 = arith.constant 0 : index
    %67 = vector.load %arg5[%c0_58, %c0_59, %c0_60] : memref<9x128x128xbf16, #tpu.memory_space<vmem>>, vector<1x128x128xbf16>
    %68 = vector.shape_cast %67 : vector<1x128x128xbf16> to vector<128x128xbf16>
    %cst_61 = arith.constant dense<0.000000e+00> : vector<328x128xf32>
    %69 = tpu.matmul %66, %68, %cst_61 {dimension_numbers = #tpu.dot_dimension_numbers<[1], [0], [0], [1], [0, 0, 1, 1], [], []>} : vector<328x128xbf16>, vector<128x128xbf16>, vector<328x128xf32> -> vector<328x128xf32>
    %70 = arith.addf %65, %69 : vector<328x128xf32>
    %c6_62 = arith.constant 6 : index
    %c0_63 = arith.constant 0 : index
    %71 = vector.load %arg8[%c6_62, %c0_63] : memref<376x128xbf16, #tpu.memory_space<vmem>>, vector<328x128xbf16>
    %c1_64 = arith.constant 1 : index
    %c0_65 = arith.constant 0 : index
    %c0_66 = arith.constant 0 : index
    %72 = vector.load %arg5[%c1_64, %c0_65, %c0_66] : memref<9x128x128xbf16, #tpu.memory_space<vmem>>, vector<1x128x128xbf16>
    %73 = vector.shape_cast %72 : vector<1x128x128xbf16> to vector<128x128xbf16>
    %cst_67 = arith.constant dense<0.000000e+00> : vector<328x128xf32>
    %74 = tpu.matmul %71, %73, %cst_67 {dimension_numbers = #tpu.dot_dimension_numbers<[1], [0], [0], [1], [0, 0, 1, 1], [], []>} : vector<328x128xbf16>, vector<128x128xbf16>, vector<328x128xf32> -> vector<328x128xf32>
    %75 = arith.addf %70, %74 : vector<328x128xf32>
    %c7_68 = arith.constant 7 : index
    %c0_69 = arith.constant 0 : index
    %76 = vector.load %arg8[%c7_68, %c0_69] : memref<376x128xbf16, #tpu.memory_space<vmem>>, vector<328x128xbf16>
    %c2_70 = arith.constant 2 : index
    %c0_71 = arith.constant 0 : index
    %c0_72 = arith.constant 0 : index
    %77 = vector.load %arg5[%c2_70, %c0_71, %c0_72] : memref<9x128x128xbf16, #tpu.memory_space<vmem>>, vector<1x128x128xbf16>
    %78 = vector.shape_cast %77 : vector<1x128x128xbf16> to vector<128x128xbf16>
    %cst_73 = arith.constant dense<0.000000e+00> : vector<328x128xf32>
    %79 = tpu.matmul %76, %78, %cst_73 {dimension_numbers = #tpu.dot_dimension_numbers<[1], [0], [0], [1], [0, 0, 1, 1], [], []>} : vector<328x128xbf16>, vector<128x128xbf16>, vector<328x128xf32> -> vector<328x128xf32>
    %80 = arith.addf %75, %79 : vector<328x128xf32>
    %c23_74 = arith.constant 23 : index
    %c0_75 = arith.constant 0 : index
    %81 = vector.load %arg8[%c23_74, %c0_75] : memref<376x128xbf16, #tpu.memory_space<vmem>>, vector<328x128xbf16>
    %c3_76 = arith.constant 3 : index
    %c0_77 = arith.constant 0 : index
    %c0_78 = arith.constant 0 : index
    %82 = vector.load %arg5[%c3_76, %c0_77, %c0_78] : memref<9x128x128xbf16, #tpu.memory_space<vmem>>, vector<1x128x128xbf16>
    %83 = vector.shape_cast %82 : vector<1x128x128xbf16> to vector<128x128xbf16>
    %cst_79 = arith.constant dense<0.000000e+00> : vector<328x128xf32>
    %84 = tpu.matmul %81, %83, %cst_79 {dimension_numbers = #tpu.dot_dimension_numbers<[1], [0], [0], [1], [0, 0, 1, 1], [], []>} : vector<328x128xbf16>, vector<128x128xbf16>, vector<328x128xf32> -> vector<328x128xf32>
    %85 = arith.addf %80, %84 : vector<328x128xf32>
    %c24_80 = arith.constant 24 : index
    %c0_81 = arith.constant 0 : index
    %86 = vector.load %arg8[%c24_80, %c0_81] : memref<376x128xbf16, #tpu.memory_space<vmem>>, vector<328x128xbf16>
    %c4_82 = arith.constant 4 : index
    %c0_83 = arith.constant 0 : index
    %c0_84 = arith.constant 0 : index
    %87 = vector.load %arg5[%c4_82, %c0_83, %c0_84] : memref<9x128x128xbf16, #tpu.memory_space<vmem>>, vector<1x128x128xbf16>
    %88 = vector.shape_cast %87 : vector<1x128x128xbf16> to vector<128x128xbf16>
    %cst_85 = arith.constant dense<0.000000e+00> : vector<328x128xf32>
    %89 = tpu.matmul %86, %88, %cst_85 {dimension_numbers = #tpu.dot_dimension_numbers<[1], [0], [0], [1], [0, 0, 1, 1], [], []>} : vector<328x128xbf16>, vector<128x128xbf16>, vector<328x128xf32> -> vector<328x128xf32>
    %90 = arith.addf %85, %89 : vector<328x128xf32>
    %c25_86 = arith.constant 25 : index
    %c0_87 = arith.constant 0 : index
    %91 = vector.load %arg8[%c25_86, %c0_87] : memref<376x128xbf16, #tpu.memory_space<vmem>>, vector<328x128xbf16>
    %c5_88 = arith.constant 5 : index
    %c0_89 = arith.constant 0 : index
    %c0_90 = arith.constant 0 : index
    %92 = vector.load %arg5[%c5_88, %c0_89, %c0_90] : memref<9x128x128xbf16, #tpu.memory_space<vmem>>, vector<1x128x128xbf16>
    %93 = vector.shape_cast %92 : vector<1x128x128xbf16> to vector<128x128xbf16>
    %cst_91 = arith.constant dense<0.000000e+00> : vector<328x128xf32>
    %94 = tpu.matmul %91, %93, %cst_91 {dimension_numbers = #tpu.dot_dimension_numbers<[1], [0], [0], [1], [0, 0, 1, 1], [], []>} : vector<328x128xbf16>, vector<128x128xbf16>, vector<328x128xf32> -> vector<328x128xf32>
    %95 = arith.addf %90, %94 : vector<328x128xf32>
    %c41_92 = arith.constant 41 : index
    %c0_93 = arith.constant 0 : index
    %96 = vector.load %arg8[%c41_92, %c0_93] : memref<376x128xbf16, #tpu.memory_space<vmem>>, vector<328x128xbf16>
    %c6_94 = arith.constant 6 : index
    %c0_95 = arith.constant 0 : index
    %c0_96 = arith.constant 0 : index
    %97 = vector.load %arg5[%c6_94, %c0_95, %c0_96] : memref<9x128x128xbf16, #tpu.memory_space<vmem>>, vector<1x128x128xbf16>
    %98 = vector.shape_cast %97 : vector<1x128x128xbf16> to vector<128x128xbf16>
    %cst_97 = arith.constant dense<0.000000e+00> : vector<328x128xf32>
    %99 = tpu.matmul %96, %98, %cst_97 {dimension_numbers = #tpu.dot_dimension_numbers<[1], [0], [0], [1], [0, 0, 1, 1], [], []>} : vector<328x128xbf16>, vector<128x128xbf16>, vector<328x128xf32> -> vector<328x128xf32>
    %100 = arith.addf %95, %99 : vector<328x128xf32>
    %c42_98 = arith.constant 42 : index
    %c0_99 = arith.constant 0 : index
    %101 = vector.load %arg8[%c42_98, %c0_99] : memref<376x128xbf16, #tpu.memory_space<vmem>>, vector<328x128xbf16>
    %c7_100 = arith.constant 7 : index
    %c0_101 = arith.constant 0 : index
    %c0_102 = arith.constant 0 : index
    %102 = vector.load %arg5[%c7_100, %c0_101, %c0_102] : memref<9x128x128xbf16, #tpu.memory_space<vmem>>, vector<1x128x128xbf16>
    %103 = vector.shape_cast %102 : vector<1x128x128xbf16> to vector<128x128xbf16>
    %cst_103 = arith.constant dense<0.000000e+00> : vector<328x128xf32>
    %104 = tpu.matmul %101, %103, %cst_103 {dimension_numbers = #tpu.dot_dimension_numbers<[1], [0], [0], [1], [0, 0, 1, 1], [], []>} : vector<328x128xbf16>, vector<128x128xbf16>, vector<328x128xf32> -> vector<328x128xf32>
    %105 = arith.addf %100, %104 : vector<328x128xf32>
    %c43_104 = arith.constant 43 : index
    %c0_105 = arith.constant 0 : index
    %106 = vector.load %arg8[%c43_104, %c0_105] : memref<376x128xbf16, #tpu.memory_space<vmem>>, vector<328x128xbf16>
    %c8_106 = arith.constant 8 : index
    %c0_107 = arith.constant 0 : index
    %c0_108 = arith.constant 0 : index
    %107 = vector.load %arg5[%c8_106, %c0_107, %c0_108] : memref<9x128x128xbf16, #tpu.memory_space<vmem>>, vector<1x128x128xbf16>
    %108 = vector.shape_cast %107 : vector<1x128x128xbf16> to vector<128x128xbf16>
    %cst_109 = arith.constant dense<0.000000e+00> : vector<328x128xf32>
    %109 = tpu.matmul %106, %108, %cst_109 {dimension_numbers = #tpu.dot_dimension_numbers<[1], [0], [0], [1], [0, 0, 1, 1], [], []>} : vector<328x128xbf16>, vector<128x128xbf16>, vector<328x128xf32> -> vector<328x128xf32>
    %110 = arith.addf %105, %109 : vector<328x128xf32>
    %c0_110 = arith.constant 0 : index
    %c24_111 = arith.constant 24 : index
    %c0_112 = arith.constant 0 : index
    %111 = vector.load %arg1[%c0_110, %c24_111, %c0_112] : memref<1x376x128xbf16, #tpu.memory_space<vmem>>, vector<1x328x128xbf16>
    %112 = vector.shape_cast %111 : vector<1x328x128xbf16> to vector<328x128xbf16>
    %113 = arith.extf %112 : vector<328x128xbf16> to vector<328x128xf32>
    %c0_113 = arith.constant 0 : index
    %c0_114 = arith.constant 0 : index
    %114 = vector.load %arg6[%c0_113, %c0_114] : memref<1x128xf32, #tpu.memory_space<vmem>>, vector<1x128xf32>
    %115 = vector.broadcast %114 : vector<1x128xf32> to vector<328x128xf32>
    %116 = arith.addf %110, %115 : vector<328x128xf32>
    %117 = arith.addf %116, %113 : vector<328x128xf32>
    %cst_115 = arith.constant 0.000000e+00 : f32
    %118 = vector.broadcast %cst_115 : f32 to vector<328x128xf32>
    %119 = arith.maximumf %117, %118 : vector<328x128xf32>
    %120 = vector.shape_cast %119 : vector<328x128xf32> to vector<1x328x128xf32>
    %c0_116 = arith.constant 0 : index
    %c0_117 = arith.constant 0 : index
    %c0_118 = arith.constant 0 : index
    %121 = vector.load %arg7[%c0_116, %c0_117, %c0_118] : memref<1x328x128xf32, #tpu.memory_space<vmem>>, vector<1x328x128xf32>
    tpu.vector_store %arg7[%c0_116, %c0_117, %c0_118], %120 {strides = array<i32>} : memref<1x328x128xf32, #tpu.memory_space<vmem>>, vector<1x328x128xf32>,
    return
  }
  func.func @transform_0(%arg0: i32) -> (i32, i32, i32) {
    %c0_i32 = arith.constant 0 : i32
    %c0_i32_0 = arith.constant 0 : i32
    %c0_i32_1 = arith.constant 0 : i32
    return %arg0, %c0_i32, %c0_i32_0 : i32, i32, i32
  }
  func.func @transform_1(%arg0: i32) -> (i32, i32) {
    %c0_i32 = arith.constant 0 : i32
    %c0_i32_0 = arith.constant 0 : i32
    %c0_i32_1 = arith.constant 0 : i32
    return %c0_i32, %c0_i32_0 : i32, i32
  }
  func.func @transform_2(%arg0: i32) -> (i32, i32, i32) {
    %c0_i32 = arith.constant 0 : i32
    %c0_i32_0 = arith.constant 0 : i32
    %c0_i32_1 = arith.constant 0 : i32
    %c0_i32_2 = arith.constant 0 : i32
    return %c0_i32, %c0_i32_0, %c0_i32_1 : i32, i32, i32
  }
  func.func @transform_3(%arg0: i32) -> (i32, i32) {
    %c0_i32 = arith.constant 0 : i32
    %c0_i32_0 = arith.constant 0 : i32
    %c0_i32_1 = arith.constant 0 : i32
    return %c0_i32, %c0_i32_0 : i32, i32
  }
  func.func @transform_4(%arg0: i32) -> (i32, i32, i32) {
    %c0_i32 = arith.constant 0 : i32
    %c0_i32_0 = arith.constant 0 : i32
    %c0_i32_1 = arith.constant 0 : i32
    %c0_i32_2 = arith.constant 0 : i32
    return %c0_i32, %c0_i32_0, %c0_i32_1 : i32, i32, i32
  }
  func.func @transform_5(%arg0: i32) -> (i32, i32) {
    %c0_i32 = arith.constant 0 : i32
    %c0_i32_0 = arith.constant 0 : i32
    %c0_i32_1 = arith.constant 0 : i32
    return %c0_i32, %c0_i32_0 : i32, i32
  }
  func.func @transform_6(%arg0: i32) -> (i32, i32, i32) {
    %c0_i32 = arith.constant 0 : i32
    %c0_i32_0 = arith.constant 0 : i32
    %c0_i32_1 = arith.constant 0 : i32
    return %arg0, %c0_i32, %c0_i32_0 : i32, i32, i32
  }
}

</mosaic_0001>

<llo_original>
// kernel: tpu_custom_call.1
$region0: #{tpu_custom_call.1}
  #allocation0 [shape = 'u32[]', space=smem, size = 0x4, offset = 0x4, fixed_abs, tag = 'smem constant byte address 0x4 - core index']
  #allocation1 [shape = 'u32[144,128]{1,0:T(1,128)}', space=vmem, size = 0x12000, scoped, tag = 'internal scratch']
  #allocation2 [shape = 'bf16[376,128]{1,0:T(8,128)(2,1)}', space=vmem, size = 0x17800, scoped, tag = 'scratch operand']
  %s0 = inlined_call_operand.hbm [shape: bf16[2,376,128], index: 0, kind: input, shape index: {}]
  %s1 = inlined_call_operand.vmem [shape: f32[328,1], index: 1, kind: input, shape index: {}]
  %s2 = inlined_call_operand.hbm [shape: bf16[9,128,128], index: 2, kind: input, shape index: {}]
  %s3 = inlined_call_operand.vmem [shape: f32[1,128], index: 3, kind: input, shape index: {}]
  %s4 = inlined_call_operand.hbm [shape: bf16[9,128,128], index: 4, kind: input, shape index: {}]
  %s5 = inlined_call_operand.vmem [shape: f32[1,128], index: 5, kind: input, shape index: {}]
  %s6 = inlined_call_operand.hbm [shape: f32[2,328,128], index: 6, kind: output, shape index: {}]
  %s7 = sld [smem:[#allocation0]]
  $region69: #{tpu_custom_call.1} parent=0
    _
  %s9 = ssub.s32 1, %s7
  %s10 = scalar_select 0, %s9, %s7
  $region1: #{tpu_custom_call.1} parent=0
    #allocation3 [shape = 'u8[192512]{0}', space=vmem, size = 0x2f000, scoped, tag = 'input window, operand 0']
    #allocation4 [shape = 's32[2]{0}', space=sflag, size = 0x8, scoped, tag = 'scoped memory for tpu_custom_call.1']
    #allocation5 [shape = 's32[2]{0}', space=sflag, size = 0x8, scoped, tag = 'scoped memory for tpu_custom_call.1']
    #allocation6 [shape = 'u8[294912]{0}', space=vmem, size = 0x48000, scoped, tag = 'input window, operand 2, single buffered']
    #allocation7 [shape = 's32[1]{0}', space=sflag, size = 0x4, scoped, tag = 'scoped memory for tpu_custom_call.1']
    #allocation8 [shape = 'u8[294912]{0}', space=vmem, size = 0x48000, scoped, tag = 'input window, operand 4, single buffered']
    #allocation9 [shape = 'u8[335872]{0}', space=vmem, size = 0x52000, scoped, tag = 'output window, operand 0']
    %11 = vsyncpa [#allocation4], 0
    %s12 = scalar_lea.sflag [#allocation4], 1
    %13 = vsyncpa %s12, 0
    %14 = vsyncpa [#allocation7], 0
    %15 = vsyncpa [#allocation5], 0
    %s16 = scalar_lea.sflag [#allocation5], 1
    %17 = vsyncpa %s16, 0
    loop: start=0, step=1, limit=4
    $region2: #{tpu_custom_call.1} parent=1 // loop_pre_header
      _
    $region3: #{tpu_custom_call.1} parent=1 // loop_header
      %s19 = sphi 0, %s23
      %p20 = scmp.ge.s32.totalorder %s19, 4
      %s29 = sphi 0, %s31
      %s32 = sphi 0, %s29
      %s33 = sphi 0, %s32
      %s49 = sphi 0, %s33
      %s53 = sphi 0, %s53
      %s55 = sphi 0, %s53
      %s56 = sphi 0, %s55
      %s70 = sphi 0, %s56
      %s74 = sphi 0, %s74
      %s76 = sphi 0, %s74
      %s77 = sphi 0, %s76
      %s91 = sphi 0, %s77
      %s95 = sphi 0, %s95
      %s97 = sphi 0, %s95
      %s98 = sphi 0, %s97
      %s112 = sphi 0, %s98
      %s116 = sphi 0, %s116
      %s118 = sphi 0, %s116
      %s119 = sphi 0, %s118
      %s133 = sphi 0, %s119
      %s137 = sphi 0, %s137
      %s139 = sphi 0, %s137
      %s140 = sphi 0, %s139
      %s154 = sphi 0, %s140
      %s160 = sphi 0, %s162
      %s163 = sphi 0, %s160
      %s164 = sphi 0, %s163
      %s180 = sphi 0, %s164
    $region4: #{tpu_custom_call.1} parent=1 // loop_header_branch
      %22 = sbr.rel (%p20) target = $region8
    $region5: #{tpu_custom_call.1} parent=1 // loop_body
      %s24 = ssub.s32 %s19, 1
      %s25 = ssub.s32 %s19, 2
      %s26 = sadd.s32 %s19, 1
      %s27 = ssub.s32 %s19, %s26
      %p28 = scmp.eq.s32.totalorder %s27, 0
      %s30 = sadd.s32 %s29, 1
      %s31 = scalar_select %p28, %s29, %s30
      %p34 = pneg %p28
      %p35 = scmp.eq.s32.totalorder %s19, 1
      %p36 = por %p34, %p35
      %p37 = scmp.ne.s32.totalorder %s29, %s32
      %p38 = scmp.eq.s32.totalorder %s19, 0
      %p39 = por %p37, %p38
      %p40 = scmp.ne.s32.totalorder %s29, %s32
      %p41 = scmp.eq.s32.totalorder %s24, 1
      %p42 = por %p40, %p41
      %p43 = scmp.ne.s32.totalorder %s32, %s33
      %p44 = scmp.eq.s32.totalorder %s24, 0
      %p45 = por %p43, %p44
      %p46 = scmp.ne.s32.totalorder %s32, %s33
      %p47 = scmp.eq.s32.totalorder %s25, 1
      %p48 = por %p46, %p47
      %p50 = scmp.ne.s32.totalorder %s33, %s49
      %p51 = scmp.eq.s32.totalorder %s25, 0
      %p52 = por %p50, %p51
      %s54 = sadd.s32 %s53, 1
      %p57 = scmp.eq.s32.totalorder %s19, 1
      %p58 = scmp.ne.s32.totalorder %s53, %s55
      %p59 = scmp.eq.s32.totalorder %s19, 0
      %p60 = por %p58, %p59
      %p61 = scmp.ne.s32.totalorder %s53, %s55
      %p62 = scmp.eq.s32.totalorder %s24, 1
      %p63 = por %p61, %p62
      %p64 = scmp.ne.s32.totalorder %s55, %s56
      %p65 = scmp.eq.s32.totalorder %s24, 0
      %p66 = por %p64, %p65
      %p67 = scmp.ne.s32.totalorder %s55, %s56
      %p68 = scmp.eq.s32.totalorder %s25, 1
      %p69 = por %p67, %p68
      %p71 = scmp.ne.s32.totalorder %s56, %s70
      %p72 = scmp.eq.s32.totalorder %s25, 0
      %p73 = por %p71, %p72
      %s75 = sadd.s32 %s74, 1
      %p78 = scmp.eq.s32.totalorder %s19, 1
      %p79 = scmp.ne.s32.totalorder %s74, %s76
      %p80 = scmp.eq.s32.totalorder %s19, 0
      %p81 = por %p79, %p80
      %p82 = scmp.ne.s32.totalorder %s74, %s76
      %p83 = scmp.eq.s32.totalorder %s24, 1
      %p84 = por %p82, %p83
      %p85 = scmp.ne.s32.totalorder %s76, %s77
      %p86 = scmp.eq.s32.totalorder %s24, 0
      %p87 = por %p85, %p86
      %p88 = scmp.ne.s32.totalorder %s76, %s77
      %p89 = scmp.eq.s32.totalorder %s25, 1
      %p90 = por %p88, %p89
      %p92 = scmp.ne.s32.totalorder %s77, %s91
      %p93 = scmp.eq.s32.totalorder %s25, 0
      %p94 = por %p92, %p93
      %s96 = sadd.s32 %s95, 1
      %p99 = scmp.eq.s32.totalorder %s19, 1
      %p100 = scmp.ne.s32.totalorder %s95, %s97
      %p101 = scmp.eq.s32.totalorder %s19, 0
      %p102 = por %p100, %p101
      %p103 = scmp.ne.s32.totalorder %s95, %s97
      %p104 = scmp.eq.s32.totalorder %s24, 1
      %p105 = por %p103, %p104
      %p106 = scmp.ne.s32.totalorder %s97, %s98
      %p107 = scmp.eq.s32.totalorder %s24, 0
      %p108 = por %p106, %p107
      %p109 = scmp.ne.s32.totalorder %s97, %s98
      %p110 = scmp.eq.s32.totalorder %s25, 1
      %p111 = por %p109, %p110
      %p113 = scmp.ne.s32.totalorder %s98, %s112
      %p114 = scmp.eq.s32.totalorder %s25, 0
      %p115 = por %p113, %p114
      %s117 = sadd.s32 %s116, 1
      %p120 = scmp.eq.s32.totalorder %s19, 1
      %p121 = scmp.ne.s32.totalorder %s116, %s118
      %p122 = scmp.eq.s32.totalorder %s19, 0
      %p123 = por %p121, %p122
      %p124 = scmp.ne.s32.totalorder %s116, %s118
      %p125 = scmp.eq.s32.totalorder %s24, 1
      %p126 = por %p124, %p125
      %p127 = scmp.ne.s32.totalorder %s118, %s119
      %p128 = scmp.eq.s32.totalorder %s24, 0
      %p129 = por %p127, %p128
      %p130 = scmp.ne.s32.totalorder %s118, %s119
      %p131 = scmp.eq.s32.totalorder %s25, 1
      %p132 = por %p130, %p131
      %p134 = scmp.ne.s32.totalorder %s119, %s133
      %p135 = scmp.eq.s32.totalorder %s25, 0
      %p136 = por %p134, %p135
      %s138 = sadd.s32 %s137, 1
      %p141 = scmp.eq.s32.totalorder %s19, 1
      %p142 = scmp.ne.s32.totalorder %s137, %s139
      %p143 = scmp.eq.s32.totalorder %s19, 0
      %p144 = por %p142, %p143
      %p145 = scmp.ne.s32.totalorder %s137, %s139
      %p146 = scmp.eq.s32.totalorder %s24, 1
      %p147 = por %p145, %p146
      %p148 = scmp.ne.s32.totalorder %s139, %s140
      %p149 = scmp.eq.s32.totalorder %s24, 0
      %p150 = por %p148, %p149
      %p151 = scmp.ne.s32.totalorder %s139, %s140
      %p152 = scmp.eq.s32.totalorder %s25, 1
      %p153 = por %p151, %p152
      %p155 = scmp.ne.s32.totalorder %s140, %s154
      %p156 = scmp.eq.s32.totalorder %s25, 0
      %p157 = por %p155, %p156
      %s158 = ssub.s32 %s19, %s26
      %p159 = scmp.eq.s32.totalorder %s158, 0
      %s161 = sadd.s32 %s160, 1
      %s162 = scalar_select %p159, %s160, %s161
      %p165 = pneg %p159
      %p166 = scmp.eq.s32.totalorder %s19, 1
      %p167 = por %p165, %p166
      %p168 = scmp.ne.s32.totalorder %s160, %s163
      %p169 = scmp.eq.s32.totalorder %s19, 0
      %p170 = por %p168, %p169
      %p171 = scmp.ne.s32.totalorder %s160, %s163
      %p172 = scmp.eq.s32.totalorder %s24, 1
      %p173 = por %p171, %p172
      %p174 = scmp.ne.s32.totalorder %s163, %s164
      %p175 = scmp.eq.s32.totalorder %s24, 0
      %p176 = por %p174, %p175
      %p177 = scmp.ne.s32.totalorder %s163, %s164
      %p178 = scmp.eq.s32.totalorder %s25, 1
      %p179 = por %p177, %p178
      %p181 = scmp.ne.s32.totalorder %s164, %s180
      %p182 = scmp.eq.s32.totalorder %s25, 0
      %p183 = por %p181, %p182
      %p184 = scmp.le.s32.totalorder 1, %s19
      %p185 = scmp.lt.s32.totalorder %s19, 3
      %p186 = pnand %p184, %p185
      %p187 = pneg %p186
      // Predicated region
      $region9: #{tpu_custom_call.1} parent=5 // pred_check
        _
      $region10: #{tpu_custom_call.1} parent=5 // pred_check_branch
        %189 = sbr.rel (%p186) target = $region12
      $region11: #{tpu_custom_call.1} parent=5 // pred_region
        %s190 = ssub.s32 %s19, 1
        // Predicated region
        $region13: #{tpu_custom_call.1} parent=11 // pred_check
          %p191 = pneg %p66
        $region14: #{tpu_custom_call.1} parent=11 // pred_check_branch
          %193 = sbr.rel (%p191) target = $region16
        $region15: #{tpu_custom_call.1} parent=11 // pred_region
          _
        $region16: #{tpu_custom_call.1} parent=11 // pred_fallthru
          _
        // Predicated region
        $region17: #{tpu_custom_call.1} parent=11 // pred_check
          %p194 = pneg %p87
        $region18: #{tpu_custom_call.1} parent=11 // pred_check_branch
          %196 = sbr.rel (%p194) target = $region20
        $region19: #{tpu_custom_call.1} parent=11 // pred_region
          %s198 = ssub.s32 9216, 9216
          %199 = vsyncadd [#allocation7], %s198
          %s200 = sshll.u32 [#allocation6], 4
          %s201 = int_to_ptr.vmem [resolvable:$true] %s200
          %206 = dma.hbm_to_vmem [thread:$0]  %s2, 9216, %s201, [#allocation7], 64, 64, 4
        $region20: #{tpu_custom_call.1} parent=11 // pred_fallthru
          _
        // Predicated region
        $region21: #{tpu_custom_call.1} parent=11 // pred_check
          %p207 = pneg %p108
        $region22: #{tpu_custom_call.1} parent=11 // pred_check_branch
          %209 = sbr.rel (%p207) target = $region24
        $region23: #{tpu_custom_call.1} parent=11 // pred_region
          _
        $region24: #{tpu_custom_call.1} parent=11 // pred_fallthru
          _
        // Predicated region
        $region25: #{tpu_custom_call.1} parent=11 // pred_check
          %p210 = pneg %p129
        $region26: #{tpu_custom_call.1} parent=11 // pred_check_branch
          %212 = sbr.rel (%p210) target = $region28
        $region27: #{tpu_custom_call.1} parent=11 // pred_region
          %s214 = ssub.s32 9216, 9216
          %215 = vsyncadd [#allocation7], %s214
          %s216 = sshll.u32 [#allocation8], 4
          %s217 = int_to_ptr.vmem [resolvable:$true] %s216
          %222 = dma.hbm_to_vmem [thread:$0]  %s4, 9216, %s217, [#allocation7], 64, 64, 4
        $region28: #{tpu_custom_call.1} parent=11 // pred_fallthru
          _
        // Predicated region
        $region29: #{tpu_custom_call.1} parent=11 // pred_check
          %p223 = pneg %p150
        $region30: #{tpu_custom_call.1} parent=11 // pred_check_branch
          %225 = sbr.rel (%p223) target = $region32
        $region31: #{tpu_custom_call.1} parent=11 // pred_region
          _
        $region32: #{tpu_custom_call.1} parent=11 // pred_fallthru
          _
      $region12: #{tpu_custom_call.1} parent=5 // pred_fallthru
        _
      %p226 = scmp.lt.s32.totalorder %s19, 2
      // Predicated region
      $region33: #{tpu_custom_call.1} parent=5 // pred_check
        %p227 = pneg %p226
      $region34: #{tpu_custom_call.1} parent=5 // pred_check_branch
        %229 = sbr.rel (%p227) target = $region36
      $region35: #{tpu_custom_call.1} parent=5 // pred_region
        // Predicated region
        $region37: #{tpu_custom_call.1} parent=35 // pred_check
          %p230 = pneg %p39
        $region38: #{tpu_custom_call.1} parent=35 // pred_check_branch
          %232 = sbr.rel (%p230) target = $region40
        $region39: #{tpu_custom_call.1} parent=35 // pred_region
          %s233 = sand.u32 %s29, 1
          %s234 = scalar_lea.sflag [#allocation4], %s233
          %s235 = sand.u32 %s29, 1
          %s236 = smul.addr %s235, 188
          %s237 = scalar_lea.vmem [#allocation3], %s236
          %s239 = ssub.s32 3008, 3008
          %240 = vsyncadd %s234, %s239
          %s241 = smul.addr %s19, 47
          %s242 = smul.addr %s241, 64
          %s243 = scalar_lea.hbm %s0, %s242
          %s244 = sshll.u32 %s237, 4
          %s245 = int_to_ptr.vmem [resolvable:$true] %s244
          %250 = dma.hbm_to_vmem [thread:$0]  %s243, 3008, %s245, %s234, 64, 64, 4
        $region40: #{tpu_custom_call.1} parent=35 // pred_fallthru
          _
      $region36: #{tpu_custom_call.1} parent=5 // pred_fallthru
        _
      %p251 = scmp.le.s32.totalorder 1, %s19
      %p252 = scmp.lt.s32.totalorder %s19, 3
      %p253 = pnand %p251, %p252
      %p254 = pneg %p253
      // Predicated region
      $region41: #{tpu_custom_call.1} parent=5 // pred_check
        _
      $region42: #{tpu_custom_call.1} parent=5 // pred_check_branch
        %256 = sbr.rel (%p253) target = $region44
      $region43: #{tpu_custom_call.1} parent=5 // pred_region
        %s257 = ssub.s32 %s19, 1
        %s258 = sand.u32 %s32, 1
        %s259 = scalar_lea.sflag [#allocation4], %s258
        %s260 = sand.u32 %s32, 1
        %s261 = smul.addr %s260, 188
        %s262 = scalar_lea.vmem [#allocation3], %s261
        // Predicated region
        $region45: #{tpu_custom_call.1} parent=43 // pred_check
          %p263 = pneg %p45
        $region46: #{tpu_custom_call.1} parent=43 // pred_check_branch
          %265 = sbr.rel (%p263) target = $region48
        $region47: #{tpu_custom_call.1} parent=43 // pred_region
          %266 = dma.done %s259, 3008
        $region48: #{tpu_custom_call.1} parent=43 // pred_fallthru
          _
        // Predicated region
        $region49: #{tpu_custom_call.1} parent=43 // pred_check
          %p267 = pneg %p87
        $region50: #{tpu_custom_call.1} parent=43 // pred_check_branch
          %269 = sbr.rel (%p267) target = $region52
        $region51: #{tpu_custom_call.1} parent=43 // pred_region
          %270 = dma.done [#allocation7], 9216
        $region52: #{tpu_custom_call.1} parent=43 // pred_fallthru
          _
        // Predicated region
        $region53: #{tpu_custom_call.1} parent=43 // pred_check
          %p271 = pneg %p129
        $region54: #{tpu_custom_call.1} parent=43 // pred_check_branch
          %273 = sbr.rel (%p271) target = $region56
        $region55: #{tpu_custom_call.1} parent=43 // pred_region
          %274 = dma.done [#allocation7], 9216
        $region56: #{tpu_custom_call.1} parent=43 // pred_fallthru
          _
        %s275 = sand.u32 %s32, 1
        %s276 = scalar_lea.sflag [#allocation4], %s275
        %s277 = sand.u32 %s32, 1
        %s278 = smul.addr %s277, 188
        %s279 = scalar_lea.vmem [#allocation3], %s278
        %p280 = pneg %p45
        %p281 = pneg %p42
        %p282 = pneg %p66
        %p283 = pneg %p63
        %p284 = pneg %p87
        %p285 = pneg %p84
        %p286 = pneg %p108
        %p287 = pneg %p105
        %p288 = pneg %p129
        %p289 = pneg %p126
        %p290 = pneg %p150
        %p291 = pneg %p147
        %p292 = pneg %p176
        %p293 = pneg %p173
        %s294 = sand.u32 %s163, 1
        %s295 = scalar_lea.sflag [#allocation5], %s294
        %s296 = sand.u32 %s163, 1
        %s297 = smul.addr %s296, 328
        %s298 = scalar_lea.vmem [#allocation9], %s297
        %v300 = vld [vmem:[%s262] sm:$0xc]
        %v301 = vld [vmem:[%s262 + $0x4] sm:$0xf]
        %v302 = vld [vmem:[%s262 + $0x8] sm:$0xf]
        %v303 = vld [vmem:[%s262 + $0xc] sm:$0xf]
        %v304 = vld [vmem:[%s262 + $0x10] sm:$0xf]
        %v305 = vld [vmem:[%s262 + $0x14] sm:$0xf]
        %v306 = vld [vmem:[%s262 + $0x18] sm:$0xf]
        %v307 = vld [vmem:[%s262 + $0x1c] sm:$0xf]
        %v308 = vld [vmem:[%s262 + $0x20] sm:$0xf]
        %v309 = vld [vmem:[%s262 + $0x24] sm:$0xf]
        %v310 = vld [vmem:[%s262 + $0x28] sm:$0xf]
        %v311 = vld [vmem:[%s262 + $0x2c] sm:$0xf]
        %v312 = vld [vmem:[%s262 + $0x30] sm:$0xf]
        %v313 = vld [vmem:[%s262 + $0x34] sm:$0xf]
        %v314 = vld [vmem:[%s262 + $0x38] sm:$0xf]
        %v315 = vld [vmem:[%s262 + $0x3c] sm:$0xf]
        %v316 = vld [vmem:[%s262 + $0x40] sm:$0xf]
        %v317 = vld [vmem:[%s262 + $0x44] sm:$0xf]
        %v318 = vld [vmem:[%s262 + $0x48] sm:$0xf]
        %v319 = vld [vmem:[%s262 + $0x4c] sm:$0xf]
        %v320 = vld [vmem:[%s262 + $0x50] sm:$0xf]
        %v321 = vld [vmem:[%s262 + $0x54] sm:$0xf]
        %v322 = vld [vmem:[%s262 + $0x58] sm:$0xf]
        %v323 = vld [vmem:[%s262 + $0x5c] sm:$0xf]
        %v324 = vld [vmem:[%s262 + $0x60] sm:$0xf]
        %v325 = vld [vmem:[%s262 + $0x64] sm:$0xf]
        %v326 = vld [vmem:[%s262 + $0x68] sm:$0xf]
        %v327 = vld [vmem:[%s262 + $0x6c] sm:$0xf]
        %v328 = vld [vmem:[%s262 + $0x70] sm:$0xf]
        %v329 = vld [vmem:[%s262 + $0x74] sm:$0xf]
        %v330 = vld [vmem:[%s262 + $0x78] sm:$0xf]
        %v331 = vld [vmem:[%s262 + $0x7c] sm:$0xf]
        %v332 = vld [vmem:[%s262 + $0x80] sm:$0xf]
        %v333 = vld [vmem:[%s262 + $0x84] sm:$0xf]
        %v334 = vld [vmem:[%s262 + $0x88] sm:$0xf]
        %v335 = vld [vmem:[%s262 + $0x8c] sm:$0xf]
        %v336 = vld [vmem:[%s262 + $0x90] sm:$0xf]
        %v337 = vld [vmem:[%s262 + $0x94] sm:$0xf]
        %v338 = vld [vmem:[%s262 + $0x98] sm:$0xf]
        %v339 = vld [vmem:[%s262 + $0x9c] sm:$0xf]
        %v340 = vld [vmem:[%s262 + $0xa0] sm:$0xf]
        %v341 = vld [vmem:[%s262 + $0xa4] sm:$0x7]
        %v342 = vld [vmem:[#allocation6] sm:$0xf]
        %v343 = vld [vmem:[#allocation6 + $0x4] sm:$0xf]
        %v344 = vld [vmem:[#allocation6 + $0x8] sm:$0xf]
        %v345 = vld [vmem:[#allocation6 + $0xc] sm:$0xf]
        %v346 = vld [vmem:[#allocation6 + $0x10] sm:$0xf]
        %v347 = vld [vmem:[#allocation6 + $0x14] sm:$0xf]
        %v348 = vld [vmem:[#allocation6 + $0x18] sm:$0xf]
        %v349 = vld [vmem:[#allocation6 + $0x1c] sm:$0xf]
        %v350 = vld [vmem:[#allocation6 + $0x20] sm:$0xf]
        %v351 = vld [vmem:[#allocation6 + $0x24] sm:$0xf]
        %v352 = vld [vmem:[#allocation6 + $0x28] sm:$0xf]
        %v353 = vld [vmem:[#allocation6 + $0x2c] sm:$0xf]
        %v354 = vld [vmem:[#allocation6 + $0x30] sm:$0xf]
        %v355 = vld [vmem:[#allocation6 + $0x34] sm:$0xf]
        %v356 = vld [vmem:[#allocation6 + $0x38] sm:$0xf]
        %v357 = vld [vmem:[#allocation6 + $0x3c] sm:$0xf]
        %v358 = vld [vmem:[%s262] sm:$0x8]
        %s359 = scalar_lea.vmem [#allocation6], 64
        %v360 = vld [vmem:[%s359] sm:$0xf]
        %v361 = vld [vmem:[%s359 + $0x4] sm:$0xf]
        %v362 = vld [vmem:[%s359 + $0x8] sm:$0xf]
        %v363 = vld [vmem:[%s359 + $0xc] sm:$0xf]
        %v364 = vld [vmem:[%s359 + $0x10] sm:$0xf]
        %v365 = vld [vmem:[%s359 + $0x14] sm:$0xf]
        %v366 = vld [vmem:[%s359 + $0x18] sm:$0xf]
        %v367 = vld [vmem:[%s359 + $0x1c] sm:$0xf]
        %v368 = vld [vmem:[%s359 + $0x20] sm:$0xf]
        %v369 = vld [vmem:[%s359 + $0x24] sm:$0xf]
        %v370 = vld [vmem:[%s359 + $0x28] sm:$0xf]
        %v371 = vld [vmem:[%s359 + $0x2c] sm:$0xf]
        %v372 = vld [vmem:[%s359 + $0x30] sm:$0xf]
        %v373 = vld [vmem:[%s359 + $0x34] sm:$0xf]
        %v374 = vld [vmem:[%s359 + $0x38] sm:$0xf]
        %v375 = vld [vmem:[%s359 + $0x3c] sm:$0xf]
        %v418 = vunpack.c.l.b16 %v358
        %v419 = vunpack.c.l.b16 %v301
        %v420 = vunpack.c.l.b16 %v302
        %v421 = vunpack.c.l.b16 %v303
        %v422 = vunpack.c.l.b16 %v304
        %v423 = vunpack.c.l.b16 %v305
        %v424 = vunpack.c.l.b16 %v306
        %v425 = vunpack.c.l.b16 %v307
        %v426 = vunpack.c.l.b16 %v308
        %v427 = vunpack.c.l.b16 %v309
        %v428 = vunpack.c.l.b16 %v310
        %v429 = vunpack.c.l.b16 %v311
        %v430 = vunpack.c.l.b16 %v312
        %v431 = vunpack.c.l.b16 %v313
        %v432 = vunpack.c.l.b16 %v314
        %v433 = vunpack.c.l.b16 %v315
        %v434 = vunpack.c.l.b16 %v316
        %v435 = vunpack.c.l.b16 %v317
        %v436 = vunpack.c.l.b16 %v318
        %v437 = vunpack.c.l.b16 %v319
        %v438 = vunpack.c.l.b16 %v320
        %v439 = vunpack.c.l.b16 %v321
        %v440 = vunpack.c.l.b16 %v322
        %v441 = vunpack.c.l.b16 %v323
        %v442 = vunpack.c.l.b16 %v324
        %v443 = vunpack.c.l.b16 %v325
        %v444 = vunpack.c.l.b16 %v326
        %v445 = vunpack.c.l.b16 %v327
        %v446 = vunpack.c.l.b16 %v328
        %v447 = vunpack.c.l.b16 %v329
        %v448 = vunpack.c.l.b16 %v330
        %v449 = vunpack.c.l.b16 %v331
        %v450 = vunpack.c.l.b16 %v332
        %v451 = vunpack.c.l.b16 %v333
        %v452 = vunpack.c.l.b16 %v334
        %v453 = vunpack.c.l.b16 %v335
        %v454 = vunpack.c.l.b16 %v336
        %v455 = vunpack.c.l.b16 %v337
        %v456 = vunpack.c.l.b16 %v338
        %v457 = vunpack.c.l.b16 %v339
        %v458 = vunpack.c.l.b16 %v340
        %v459 = vunpack.c.l.b16 %v341
        %v460 = vpack.c.b16 %v419, %v418
        %v461 = vpack.c.b16 %v421, %v420
        %v462 = vpack.c.b16 %v423, %v422
        %v463 = vpack.c.b16 %v425, %v424
        %v464 = vpack.c.b16 %v427, %v426
        %v465 = vpack.c.b16 %v429, %v428
        %v466 = vpack.c.b16 %v431, %v430
        %v467 = vpack.c.b16 %v433, %v432
        %v468 = vpack.c.b16 %v435, %v434
        %v469 = vpack.c.b16 %v437, %v436
        %v470 = vpack.c.b16 %v439, %v438
        %v471 = vpack.c.b16 %v441, %v440
        %v472 = vpack.c.b16 %v443, %v442
        %v473 = vpack.c.b16 %v445, %v444
        %v474 = vpack.c.b16 %v447, %v446
        %v475 = vpack.c.b16 %v449, %v448
        %v476 = vpack.c.b16 %v451, %v450
        %v477 = vpack.c.b16 %v453, %v452
        %v478 = vpack.c.b16 %v455, %v454
        %v479 = vpack.c.b16 %v457, %v456
        %v480 = vpack.c.b16 %v459, %v458
        %vm481 = vcmask 1044480
        %v482 = vrot.slane %v460, 3
        %v483 = vrot.slane %v461, 3
        %v484 = vsel %vm481, %v482, %v483
        %v485 = vrot.slane %v462, 3
        %v486 = vsel %vm481, %v483, %v485
        %v487 = vrot.slane %v463, 3
        %v488 = vsel %vm481, %v485, %v487
        %v489 = vrot.slane %v464, 3
        %v490 = vsel %vm481, %v487, %v489
        %v491 = vrot.slane %v465, 3
        %v492 = vsel %vm481, %v489, %v491
        %v493 = vrot.slane %v466, 3
        %v494 = vsel %vm481, %v491, %v493
        %v495 = vrot.slane %v467, 3
        %v496 = vsel %vm481, %v493, %v495
        %v497 = vrot.slane %v468, 3
        %v498 = vsel %vm481, %v495, %v497
        %v499 = vrot.slane %v469, 3
        %v500 = vsel %vm481, %v497, %v499
        %v501 = vrot.slane %v470, 3
        %v502 = vsel %vm481, %v499, %v501
        %v503 = vrot.slane %v471, 3
        %v504 = vsel %vm481, %v501, %v503
        %v505 = vrot.slane %v472, 3
        %v506 = vsel %vm481, %v503, %v505
        %v507 = vrot.slane %v473, 3
        %v508 = vsel %vm481, %v505, %v507
        %v509 = vrot.slane %v474, 3
        %v510 = vsel %vm481, %v507, %v509
        %v511 = vrot.slane %v475, 3
        %v512 = vsel %vm481, %v509, %v511
        %v513 = vrot.slane %v476, 3
        %v514 = vsel %vm481, %v511, %v513
        %v515 = vrot.slane %v477, 3
        %v516 = vsel %vm481, %v513, %v515
        %v517 = vrot.slane %v478, 3
        %v518 = vsel %vm481, %v515, %v517
        %v519 = vrot.slane %v479, 3
        %v520 = vsel %vm481, %v517, %v519
        %v521 = vrot.slane %v480, 3
        %v522 = vsel %vm481, %v519, %v521
        %v560 = vunpack.c.l.b16 %v360
        %v561 = vunpack.c.l.b16 %v361
        %v562 = vunpack.c.l.b16 %v362
        %v563 = vunpack.c.l.b16 %v363
        %v564 = vunpack.c.l.b16 %v364
        %v565 = vunpack.c.l.b16 %v365
        %v566 = vunpack.c.l.b16 %v366
        %v567 = vunpack.c.l.b16 %v367
        %v568 = vunpack.c.l.b16 %v368
        %v569 = vunpack.c.l.b16 %v369
        %v570 = vunpack.c.l.b16 %v370
        %v571 = vunpack.c.l.b16 %v371
        %v572 = vunpack.c.l.b16 %v372
        %v573 = vunpack.c.l.b16 %v373
        %v574 = vunpack.c.l.b16 %v374
        %v575 = vunpack.c.l.b16 %v375
        %v576 = vpack.c.b16 %v561, %v560
        %v577 = vpack.c.b16 %v563, %v562
        %v578 = vpack.c.b16 %v565, %v564
        %v579 = vpack.c.b16 %v567, %v566
        %v580 = vpack.c.b16 %v569, %v568
        %v581 = vpack.c.b16 %v571, %v570
        %v582 = vpack.c.b16 %v573, %v572
        %v583 = vpack.c.b16 %v575, %v574
        %592 = vmatprep.subr.bf16.mxu0 0
        %593 = vmatpush1.bf16.msra.mxu0 %v576
        %594 = vmatprep.subr.bf16.mxu0 0
        %595 = vmatpush1.bf16.msra.mxu0 %v577
        %596 = vmatprep.subr.bf16.mxu0 0
        %597 = vmatpush1.bf16.msra.mxu0 %v578
        %598 = vmatprep.subr.bf16.mxu0 0
        %599 = vmatpush1.bf16.msra.mxu0 %v579
        %600 = vmatprep.subr.bf16.mxu0 0
        %601 = vmatpush1.bf16.msra.mxu0 %v580
        %602 = vmatprep.subr.bf16.mxu0 0
        %603 = vmatpush1.bf16.msra.mxu0 %v581
        %604 = vmatprep.subr.bf16.mxu0 0
        %605 = vmatpush1.bf16.msra.mxu0 %v582
        %606 = vmatprep.subr.bf16.mxu0 0
        %607 = vmatpush1.bf16.msra.mxu0 %v583
        %608 = vmatprep.subr.bf16.mxu0 0
        %609 = vmatpush1.bf16.msra.mxu0 0
        %610 = vmatprep.subr.bf16.mxu0 0
        %611 = vmatpush1.bf16.msra.mxu0 0
        %612 = vmatprep.subr.bf16.mxu0 0
        %613 = vmatpush1.bf16.msra.mxu0 0
        %614 = vmatprep.subr.bf16.mxu0 0
        %615 = vmatpush1.bf16.msra.mxu0 0
        %616 = vmatprep.subr.bf16.mxu0 0
        %617 = vmatpush1.bf16.msra.mxu0 0
        %618 = vmatprep.subr.bf16.mxu0 0
        %619 = vmatpush1.bf16.msra.mxu0 0
        %620 = vmatprep.subr.bf16.mxu0 0
        %621 = vmatpush1.bf16.msra.mxu0 0
        %622 = vmatprep.subr.bf16.mxu0 0
        %623 = vmatpush1.bf16.msra.mxu0 0
        %624 = vmatprep.mubr.bf16.mxu0 0
        %625 = vmatmul.mubr.bf16.gmra.mrb[0].mxu0 %v484
        %v626 = vpop.f32.mrb[0].mxu0
        %v627 = vadd.f32 0.0, %v626
        %v628 = vpop.f32.mrb[0].mxu0
        %v629 = vpop.f32.mrb[0].mxu0
        %v630 = vadd.f32 0.0, %v629
        %v631 = vpop.f32.mrb[0].mxu0
        %632 = vmatprep.mubr.bf16.mxu0 0
        %633 = vmatmul.mubr.bf16.gmra.mrb[0].mxu0 %v486
        %v634 = vpop.f32.mrb[0].mxu0
        %v635 = vadd.f32 0.0, %v634
        %v636 = vpop.f32.mrb[0].mxu0
        %v637 = vpop.f32.mrb[0].mxu0
        %v638 = vadd.f32 0.0, %v637
        %v639 = vpop.f32.mrb[0].mxu0
        %640 = vmatprep.mubr.bf16.mxu0 0
        %641 = vmatmul.mubr.bf16.gmra.mrb[0].mxu0 %v488
        %v642 = vpop.f32.mrb[0].mxu0
        %v643 = vadd.f32 0.0, %v642
        %v644 = vpop.f32.mrb[0].mxu0
        %v645 = vpop.f32.mrb[0].mxu0
        %v646 = vadd.f32 0.0, %v645
        %v647 = vpop.f32.mrb[0].mxu0
        %648 = vmatprep.mubr.bf16.mxu0 0
        %649 = vmatmul.mubr.bf16.gmra.mrb[0].mxu0 %v490
        %v650 = vpop.f32.mrb[0].mxu0
        %v651 = vadd.f32 0.0, %v650
        %v652 = vpop.f32.mrb[0].mxu0
        %v653 = vpop.f32.mrb[0].mxu0
        %v654 = vadd.f32 0.0, %v653
        %v655 = vpop.f32.mrb[0].mxu0
        %656 = vmatprep.mubr.bf16.mxu0 0
        %657 = vmatmul.mubr.bf16.gmra.mrb[0].mxu0 %v492
        %v658 = vpop.f32.mrb[0].mxu0
        %v659 = vadd.f32 0.0, %v658
        %v660 = vpop.f32.mrb[0].mxu0
        %v661 = vpop.f32.mrb[0].mxu0
        %v662 = vadd.f32 0.0, %v661
        %v663 = vpop.f32.mrb[0].mxu0
        %664 = vmatprep.mubr.bf16.mxu0 0
        %665 = vmatmul.mubr.bf16.gmra.mrb[0].mxu0 %v494
        %v666 = vpop.f32.mrb[0].mxu0
        %v667 = vadd.f32 0.0, %v666
        %v668 = vpop.f32.mrb[0].mxu0
        %v669 = vpop.f32.mrb[0].mxu0
        %v670 = vadd.f32 0.0, %v669
        %v671 = vpop.f32.mrb[0].mxu0
        %672 = vmatprep.mubr.bf16.mxu0 0
        %673 = vmatmul.mubr.bf16.gmra.mrb[0].mxu0 %v496
        %v674 = vpop.f32.mrb[0].mxu0
        %v675 = vadd.f32 0.0, %v674
        %v676 = vpop.f32.mrb[0].mxu0
        %v677 = vpop.f32.mrb[0].mxu0
        %v678 = vadd.f32 0.0, %v677
        %v679 = vpop.f32.mrb[0].mxu0
        %680 = vmatprep.mubr.bf16.mxu0 0
        %681 = vmatmul.mubr.bf16.gmra.mrb[0].mxu0 %v498
        %v682 = vpop.f32.mrb[0].mxu0
        %v683 = vadd.f32 0.0, %v682
        %v684 = vpop.f32.mrb[0].mxu0
        %v685 = vpop.f32.mrb[0].mxu0
        %v686 = vadd.f32 0.0, %v685
        %v687 = vpop.f32.mrb[0].mxu0
        %688 = vmatprep.mubr.bf16.mxu0 0
        %689 = vmatmul.mubr.bf16.gmra.mrb[0].mxu0 %v500
        %v690 = vpop.f32.mrb[0].mxu0
        %v691 = vadd.f32 0.0, %v690
        %v692 = vpop.f32.mrb[0].mxu0
        %v693 = vpop.f32.mrb[0].mxu0
        %v694 = vadd.f32 0.0, %v693
        %v695 = vpop.f32.mrb[0].mxu0
        %696 = vmatprep.mubr.bf16.mxu0 0
        %697 = vmatmul.mubr.bf16.gmra.mrb[0].mxu0 %v502
        %v698 = vpop.f32.mrb[0].mxu0
        %v699 = vadd.f32 0.0, %v698
        %v700 = vpop.f32.mrb[0].mxu0
        %v701 = vpop.f32.mrb[0].mxu0
        %v702 = vadd.f32 0.0, %v701
        %v703 = vpop.f32.mrb[0].mxu0
        %704 = vmatprep.mubr.bf16.mxu0 0
        %705 = vmatmul.mubr.bf16.gmra.mrb[0].mxu0 %v504
        %v706 = vpop.f32.mrb[0].mxu0
        %v707 = vadd.f32 0.0, %v706
        %v708 = vpop.f32.mrb[0].mxu0
        %v709 = vpop.f32.mrb[0].mxu0
        %v710 = vadd.f32 0.0, %v709
        %v711 = vpop.f32.mrb[0].mxu0
        %712 = vmatprep.mubr.bf16.mxu0 0
        %713 = vmatmul.mubr.bf16.gmra.mrb[0].mxu0 %v506
        %v714 = vpop.f32.mrb[0].mxu0
        %v715 = vadd.f32 0.0, %v714
        %v716 = vpop.f32.mrb[0].mxu0
        %v717 = vpop.f32.mrb[0].mxu0
        %v718 = vadd.f32 0.0, %v717
        %v719 = vpop.f32.mrb[0].mxu0
        %720 = vmatprep.mubr.bf16.mxu0 0
        %721 = vmatmul.mubr.bf16.gmra.mrb[0].mxu0 %v508
        %v722 = vpop.f32.mrb[0].mxu0
        %v723 = vadd.f32 0.0, %v722
        %v724 = vpop.f32.mrb[0].mxu0
        %v725 = vpop.f32.mrb[0].mxu0
        %v726 = vadd.f32 0.0, %v725
        %v727 = vpop.f32.mrb[0].mxu0
        %728 = vmatprep.mubr.bf16.mxu0 0
        %729 = vmatmul.mubr.bf16.gmra.mrb[0].mxu0 %v510
        %v730 = vpop.f32.mrb[0].mxu0
        %v731 = vadd.f32 0.0, %v730
        %v732 = vpop.f32.mrb[0].mxu0
        %v733 = vpop.f32.mrb[0].mxu0
        %v734 = vadd.f32 0.0, %v733
        %v735 = vpop.f32.mrb[0].mxu0
        %736 = vmatprep.mubr.bf16.mxu0 0
        %737 = vmatmul.mubr.bf16.gmra.mrb[0].mxu0 %v512
        %v738 = vpop.f32.mrb[0].mxu0
        %v739 = vadd.f32 0.0, %v738
        %v740 = vpop.f32.mrb[0].mxu0
        %v741 = vpop.f32.mrb[0].mxu0
        %v742 = vadd.f32 0.0, %v741
        %v743 = vpop.f32.mrb[0].mxu0
        %744 = vmatprep.mubr.bf16.mxu0 0
        %745 = vmatmul.mubr.bf16.gmra.mrb[0].mxu0 %v514
        %v746 = vpop.f32.mrb[0].mxu0
        %v747 = vadd.f32 0.0, %v746
        %v748 = vpop.f32.mrb[0].mxu0
        %v749 = vpop.f32.mrb[0].mxu0
        %v750 = vadd.f32 0.0, %v749
        %v751 = vpop.f32.mrb[0].mxu0
        %752 = vmatprep.mubr.bf16.mxu0 0
        %753 = vmatmul.mubr.bf16.gmra.mrb[0].mxu0 %v516
        %v754 = vpop.f32.mrb[0].mxu0
        %v755 = vadd.f32 0.0, %v754
        %v756 = vpop.f32.mrb[0].mxu0
        %v757 = vpop.f32.mrb[0].mxu0
        %v758 = vadd.f32 0.0, %v757
        %v759 = vpop.f32.mrb[0].mxu0
        %760 = vmatprep.mubr.bf16.mxu0 0
        %761 = vmatmul.mubr.bf16.gmra.mrb[0].mxu0 %v518
        %v762 = vpop.f32.mrb[0].mxu0
        %v763 = vadd.f32 0.0, %v762
        %v764 = vpop.f32.mrb[0].mxu0
        %v765 = vpop.f32.mrb[0].mxu0
        %v766 = vadd.f32 0.0, %v765
        %v767 = vpop.f32.mrb[0].mxu0
        %768 = vmatprep.mubr.bf16.mxu0 0
        %769 = vmatmul.mubr.bf16.gmra.mrb[0].mxu0 %v520
        %v770 = vpop.f32.mrb[0].mxu0
        %v771 = vadd.f32 0.0, %v770
        %v772 = vpop.f32.mrb[0].mxu0
        %v773 = vpop.f32.mrb[0].mxu0
        %v774 = vadd.f32 0.0, %v773
        %v775 = vpop.f32.mrb[0].mxu0
        %776 = vmatprep.mubr.bf16.mxu0 0
        %777 = vmatmul.mubr.bf16.gmra.mrb[0].mxu0 %v522
        %v778 = vpop.f32.mrb[0].mxu0
        %v779 = vadd.f32 0.0, %v778
        %v780 = vpop.f32.mrb[0].mxu0
        %v781 = vpop.f32.mrb[0].mxu0
        %v782 = vadd.f32 0.0, %v781
        %v783 = vpop.f32.mrb[0].mxu0
        %784 = vmatprep.mubr.bf16.mxu0 0
        %785 = vmatmul.mubr.bf16.gmra.mrb[0].mxu0 %v521
        %v786 = vpop.f32.mrb[0].mxu0
        %v787 = vadd.f32 0.0, %v786
        %v788 = vpop.f32.mrb[0].mxu0
        %v789 = vpop.f32.mrb[0].mxu0
        %v790 = vpop.f32.mrb[0].mxu0
        %791 = vdwg.mxu0
        %v793 = vunpack.c.l.b16 %v300
        %v794 = vpack.c.b16 %v419, %v793
        %vm795 = vsmask.f32 5376
        %v797 = vshrl.u32 %v794, 16
        %v799 = vrot.slane %v797, 2
        %v800 = vshll.u32 %v794, 16
        %v802 = vrot.slane %v800, 3
        %v803 = vor.u32 %v799, %v802
        %v805 = vshrl.u32 %v461, 16
        %v807 = vrot.slane %v805, 2
        %v808 = vshll.u32 %v461, 16
        %v810 = vrot.slane %v808, 3
        %v811 = vor.u32 %v807, %v810
        %v812 = vsel %vm795, %v803, %v811
        %v814 = vshrl.u32 %v462, 16
        %v816 = vrot.slane %v814, 2
        %v817 = vshll.u32 %v462, 16
        %v819 = vrot.slane %v817, 3
        %v820 = vor.u32 %v816, %v819
        %v821 = vsel %vm795, %v811, %v820
        %v823 = vshrl.u32 %v463, 16
        %v825 = vrot.slane %v823, 2
        %v826 = vshll.u32 %v463, 16
        %v828 = vrot.slane %v826, 3
        %v829 = vor.u32 %v825, %v828
        %v830 = vsel %vm795, %v820, %v829
        %v832 = vshrl.u32 %v464, 16
        %v834 = vrot.slane %v832, 2
        %v835 = vshll.u32 %v464, 16
        %v837 = vrot.slane %v835, 3
        %v838 = vor.u32 %v834, %v837
        %v839 = vsel %vm795, %v829, %v838
        %v841 = vshrl.u32 %v465, 16
        %v843 = vrot.slane %v841, 2
        %v844 = vshll.u32 %v465, 16
        %v846 = vrot.slane %v844, 3
        %v847 = vor.u32 %v843, %v846
        %v848 = vsel %vm795, %v838, %v847
        %v850 = vshrl.u32 %v466, 16
        %v852 = vrot.slane %v850, 2
        %v853 = vshll.u32 %v466, 16
        %v855 = vrot.slane %v853, 3
        %v856 = vor.u32 %v852, %v855
        %v857 = vsel %vm795, %v847, %v856
        %v859 = vshrl.u32 %v467, 16
        %v861 = vrot.slane %v859, 2
        %v862 = vshll.u32 %v467, 16
        %v864 = vrot.slane %v862, 3
        %v865 = vor.u32 %v861, %v864
        %v866 = vsel %vm795, %v856, %v865
        %v868 = vshrl.u32 %v468, 16
        %v870 = vrot.slane %v868, 2
        %v871 = vshll.u32 %v468, 16
        %v873 = vrot.slane %v871, 3
        %v874 = vor.u32 %v870, %v873
        %v875 = vsel %vm795, %v865, %v874
        %v877 = vshrl.u32 %v469, 16
        %v879 = vrot.slane %v877, 2
        %v880 = vshll.u32 %v469, 16
        %v882 = vrot.slane %v880, 3
        %v883 = vor.u32 %v879, %v882
        %v884 = vsel %vm795, %v874, %v883
        %v886 = vshrl.u32 %v470, 16
        %v888 = vrot.slane %v886, 2
        %v889 = vshll.u32 %v470, 16
        %v891 = vrot.slane %v889, 3
        %v892 = vor.u32 %v888, %v891
        %v893 = vsel %vm795, %v883, %v892
        %v895 = vshrl.u32 %v471, 16
        %v897 = vrot.slane %v895, 2
        %v898 = vshll.u32 %v471, 16
        %v900 = vrot.slane %v898, 3
        %v901 = vor.u32 %v897, %v900
        %v902 = vsel %vm795, %v892, %v901
        %v904 = vshrl.u32 %v472, 16
        %v906 = vrot.slane %v904, 2
        %v907 = vshll.u32 %v472, 16
        %v909 = vrot.slane %v907, 3
        %v910 = vor.u32 %v906, %v909
        %v911 = vsel %vm795, %v901, %v910
        %v913 = vshrl.u32 %v473, 16
        %v915 = vrot.slane %v913, 2
        %v916 = vshll.u32 %v473, 16
        %v918 = vrot.slane %v916, 3
        %v919 = vor.u32 %v915, %v918
        %v920 = vsel %vm795, %v910, %v919
        %v922 = vshrl.u32 %v474, 16
        %v924 = vrot.slane %v922, 2
        %v925 = vshll.u32 %v474, 16
        %v927 = vrot.slane %v925, 3
        %v928 = vor.u32 %v924, %v927
        %v929 = vsel %vm795, %v919, %v928
        %v931 = vshrl.u32 %v475, 16
        %v933 = vrot.slane %v931, 2
        %v934 = vshll.u32 %v475, 16
        %v936 = vrot.slane %v934, 3
        %v937 = vor.u32 %v933, %v936
        %v938 = vsel %vm795, %v928, %v937
        %v940 = vshrl.u32 %v476, 16
        %v942 = vrot.slane %v940, 2
        %v943 = vshll.u32 %v476, 16
        %v945 = vrot.slane %v943, 3
        %v946 = vor.u32 %v942, %v945
        %v947 = vsel %vm795, %v937, %v946
        %v949 = vshrl.u32 %v477, 16
        %v951 = vrot.slane %v949, 2
        %v952 = vshll.u32 %v477, 16
        %v954 = vrot.slane %v952, 3
        %v955 = vor.u32 %v951, %v954
        %v956 = vsel %vm795, %v946, %v955
        %v958 = vshrl.u32 %v478, 16
        %v960 = vrot.slane %v958, 2
        %v961 = vshll.u32 %v478, 16
        %v963 = vrot.slane %v961, 3
        %v964 = vor.u32 %v960, %v963
        %v965 = vsel %vm795, %v955, %v964
        %v967 = vshrl.u32 %v479, 16
        %v969 = vrot.slane %v967, 2
        %v970 = vshll.u32 %v479, 16
        %v972 = vrot.slane %v970, 3
        %v973 = vor.u32 %v969, %v972
        %v974 = vsel %vm795, %v964, %v973
        %v976 = vshrl.u32 %v480, 16
        %v978 = vrot.slane %v976, 2
        %v979 = vshll.u32 %v480, 16
        %v981 = vrot.slane %v979, 3
        %v982 = vor.u32 %v978, %v981
        %v983 = vsel %vm795, %v973, %v982
        %v1021 = vunpack.c.l.b16 %v342
        %v1022 = vunpack.c.l.b16 %v343
        %v1023 = vunpack.c.l.b16 %v344
        %v1024 = vunpack.c.l.b16 %v345
        %v1025 = vunpack.c.l.b16 %v346
        %v1026 = vunpack.c.l.b16 %v347
        %v1027 = vunpack.c.l.b16 %v348
        %v1028 = vunpack.c.l.b16 %v349
        %v1029 = vunpack.c.l.b16 %v350
        %v1030 = vunpack.c.l.b16 %v351
        %v1031 = vunpack.c.l.b16 %v352
        %v1032 = vunpack.c.l.b16 %v353
        %v1033 = vunpack.c.l.b16 %v354
        %v1034 = vunpack.c.l.b16 %v355
        %v1035 = vunpack.c.l.b16 %v356
        %v1036 = vunpack.c.l.b16 %v357
        %v1037 = vpack.c.b16 %v1022, %v1021
        %v1038 = vpack.c.b16 %v1024, %v1023
        %v1039 = vpack.c.b16 %v1026, %v1025
        %v1040 = vpack.c.b16 %v1028, %v1027
        %v1041 = vpack.c.b16 %v1030, %v1029
        %v1042 = vpack.c.b16 %v1032, %v1031
        %v1043 = vpack.c.b16 %v1034, %v1033
        %v1044 = vpack.c.b16 %v1036, %v1035
        %1053 = vmatprep.subr.bf16.mxu0 0
        %1054 = vmatpush1.bf16.msra.mxu0 %v1037
        %1055 = vmatprep.subr.bf16.mxu0 0
        %1056 = vmatpush1.bf16.msra.mxu0 %v1038
        %1057 = vmatprep.subr.bf16.mxu0 0
        %1058 = vmatpush1.bf16.msra.mxu0 %v1039
        %1059 = vmatprep.subr.bf16.mxu0 0
        %1060 = vmatpush1.bf16.msra.mxu0 %v1040
        %1061 = vmatprep.subr.bf16.mxu0 0
        %1062 = vmatpush1.bf16.msra.mxu0 %v1041
        %1063 = vmatprep.subr.bf16.mxu0 0
        %1064 = vmatpush1.bf16.msra.mxu0 %v1042
        %1065 = vmatprep.subr.bf16.mxu0 0
        %1066 = vmatpush1.bf16.msra.mxu0 %v1043
        %1067 = vmatprep.subr.bf16.mxu0 0
        %1068 = vmatpush1.bf16.msra.mxu0 %v1044
        %1069 = vmatprep.subr.bf16.mxu0 0
        %1070 = vmatpush1.bf16.msra.mxu0 0
        %1071 = vmatprep.subr.bf16.mxu0 0
        %1072 = vmatpush1.bf16.msra.mxu0 0
        %1073 = vmatprep.subr.bf16.mxu0 0
        %1074 = vmatpush1.bf16.msra.mxu0 0
        %1075 = vmatprep.subr.bf16.mxu0 0
        %1076 = vmatpush1.bf16.msra.mxu0 0
        %1077 = vmatprep.subr.bf16.mxu0 0
        %1078 = vmatpush1.bf16.msra.mxu0 0
        %1079 = vmatprep.subr.bf16.mxu0 0
        %1080 = vmatpush1.bf16.msra.mxu0 0
        %1081 = vmatprep.subr.bf16.mxu0 0
        %1082 = vmatpush1.bf16.msra.mxu0 0
        %1083 = vmatprep.subr.bf16.mxu0 0
        %1084 = vmatpush1.bf16.msra.mxu0 0
        %1085 = vmatprep.mubr.bf16.mxu0 0
        %1086 = vmatmul.mubr.bf16.gmra.mrb[0].mxu0 %v812
        %v1087 = vpop.f32.mrb[0].mxu0
        %v1088 = vadd.f32 %v627, %v1087
        %v1089 = vpop.f32.mrb[0].mxu0
        %v1090 = vpop.f32.mrb[0].mxu0
        %v1091 = vadd.f32 %v630, %v1090
        %v1092 = vpop.f32.mrb[0].mxu0
        %1093 = vmatprep.mubr.bf16.mxu0 0
        %1094 = vmatmul.mubr.bf16.gmra.mrb[0].mxu0 %v821
        %v1095 = vpop.f32.mrb[0].mxu0
        %v1096 = vadd.f32 %v635, %v1095
        %v1097 = vpop.f32.mrb[0].mxu0
        %v1098 = vpop.f32.mrb[0].mxu0
        %v1099 = vadd.f32 %v638, %v1098
        %v1100 = vpop.f32.mrb[0].mxu0
        %1101 = vmatprep.mubr.bf16.mxu0 0
        %1102 = vmatmul.mubr.bf16.gmra.mrb[0].mxu0 %v830
        %v1103 = vpop.f32.mrb[0].mxu0
        %v1104 = vadd.f32 %v643, %v1103
        %v1105 = vpop.f32.mrb[0].mxu0
        %v1106 = vpop.f32.mrb[0].mxu0
        %v1107 = vadd.f32 %v646, %v1106
        %v1108 = vpop.f32.mrb[0].mxu0
        %1109 = vmatprep.mubr.bf16.mxu0 0
        %1110 = vmatmul.mubr.bf16.gmra.mrb[0].mxu0 %v839
        %v1111 = vpop.f32.mrb[0].mxu0
        %v1112 = vadd.f32 %v651, %v1111
        %v1113 = vpop.f32.mrb[0].mxu0
        %v1114 = vpop.f32.mrb[0].mxu0
        %v1115 = vadd.f32 %v654, %v1114
        %v1116 = vpop.f32.mrb[0].mxu0
        %1117 = vmatprep.mubr.bf16.mxu0 0
        %1118 = vmatmul.mubr.bf16.gmra.mrb[0].mxu0 %v848
        %v1119 = vpop.f32.mrb[0].mxu0
        %v1120 = vadd.f32 %v659, %v1119
        %v1121 = vpop.f32.mrb[0].mxu0
        %v1122 = vpop.f32.mrb[0].mxu0
        %v1123 = vadd.f32 %v662, %v1122
        %v1124 = vpop.f32.mrb[0].mxu0
        %1125 = vmatprep.mubr.bf16.mxu0 0
        %1126 = vmatmul.mubr.bf16.gmra.mrb[0].mxu0 %v857
        %v1127 = vpop.f32.mrb[0].mxu0
        %v1128 = vadd.f32 %v667, %v1127
        %v1129 = vpop.f32.mrb[0].mxu0
        %v1130 = vpop.f32.mrb[0].mxu0
        %v1131 = vadd.f32 %v670, %v1130
        %v1132 = vpop.f32.mrb[0].mxu0
        %1133 = vmatprep.mubr.bf16.mxu0 0
        %1134 = vmatmul.mubr.bf16.gmra.mrb[0].mxu0 %v866
        %v1135 = vpop.f32.mrb[0].mxu0
        %v1136 = vadd.f32 %v675, %v1135
        %v1137 = vpop.f32.mrb[0].mxu0
        %v1138 = vpop.f32.mrb[0].mxu0
        %v1139 = vadd.f32 %v678, %v1138
        %v1140 = vpop.f32.mrb[0].mxu0
        %1141 = vmatprep.mubr.bf16.mxu0 0
        %1142 = vmatmul.mubr.bf16.gmra.mrb[0].mxu0 %v875
        %v1143 = vpop.f32.mrb[0].mxu0
        %v1144 = vadd.f32 %v683, %v1143
        %v1145 = vpop.f32.mrb[0].mxu0
        %v1146 = vpop.f32.mrb[0].mxu0
        %v1147 = vadd.f32 %v686, %v1146
        %v1148 = vpop.f32.mrb[0].mxu0
        %1149 = vmatprep.mubr.bf16.mxu0 0
        %1150 = vmatmul.mubr.bf16.gmra.mrb[0].mxu0 %v884
        %v1151 = vpop.f32.mrb[0].mxu0
        %v1152 = vadd.f32 %v691, %v1151
        %v1153 = vpop.f32.mrb[0].mxu0
        %v1154 = vpop.f32.mrb[0].mxu0
        %v1155 = vadd.f32 %v694, %v1154
        %v1156 = vpop.f32.mrb[0].mxu0
        %1157 = vmatprep.mubr.bf16.mxu0 0
        %1158 = vmatmul.mubr.bf16.gmra.mrb[0].mxu0 %v893
        %v1159 = vpop.f32.mrb[0].mxu0
        %v1160 = vadd.f32 %v699, %v1159
        %v1161 = vpop.f32.mrb[0].mxu0
        %v1162 = vpop.f32.mrb[0].mxu0
        %v1163 = vadd.f32 %v702, %v1162
        %v1164 = vpop.f32.mrb[0].mxu0
        %1165 = vmatprep.mubr.bf16.mxu0 0
        %1166 = vmatmul.mubr.bf16.gmra.mrb[0].mxu0 %v902
        %v1167 = vpop.f32.mrb[0].mxu0
        %v1168 = vadd.f32 %v707, %v1167
        %v1169 = vpop.f32.mrb[0].mxu0
        %v1170 = vpop.f32.mrb[0].mxu0
        %v1171 = vadd.f32 %v710, %v1170
        %v1172 = vpop.f32.mrb[0].mxu0
        %1173 = vmatprep.mubr.bf16.mxu0 0
        %1174 = vmatmul.mubr.bf16.gmra.mrb[0].mxu0 %v911
        %v1175 = vpop.f32.mrb[0].mxu0
        %v1176 = vadd.f32 %v715, %v1175
        %v1177 = vpop.f32.mrb[0].mxu0
        %v1178 = vpop.f32.mrb[0].mxu0
        %v1179 = vadd.f32 %v718, %v1178
        %v1180 = vpop.f32.mrb[0].mxu0
        %1181 = vmatprep.mubr.bf16.mxu0 0
        %1182 = vmatmul.mubr.bf16.gmra.mrb[0].mxu0 %v920
        %v1183 = vpop.f32.mrb[0].mxu0
        %v1184 = vadd.f32 %v723, %v1183
        %v1185 = vpop.f32.mrb[0].mxu0
        %v1186 = vpop.f32.mrb[0].mxu0
        %v1187 = vadd.f32 %v726, %v1186
        %v1188 = vpop.f32.mrb[0].mxu0
        %1189 = vmatprep.mubr.bf16.mxu0 0
        %1190 = vmatmul.mubr.bf16.gmra.mrb[0].mxu0 %v929
        %v1191 = vpop.f32.mrb[0].mxu0
        %v1192 = vadd.f32 %v731, %v1191
        %v1193 = vpop.f32.mrb[0].mxu0
        %v1194 = vpop.f32.mrb[0].mxu0
        %v1195 = vadd.f32 %v734, %v1194
        %v1196 = vpop.f32.mrb[0].mxu0
        %1197 = vmatprep.mubr.bf16.mxu0 0
        %1198 = vmatmul.mubr.bf16.gmra.mrb[0].mxu0 %v938
        %v1199 = vpop.f32.mrb[0].mxu0
        %v1200 = vadd.f32 %v739, %v1199
        %v1201 = vpop.f32.mrb[0].mxu0
        %v1202 = vpop.f32.mrb[0].mxu0
        %v1203 = vadd.f32 %v742, %v1202
        %v1204 = vpop.f32.mrb[0].mxu0
        %1205 = vmatprep.mubr.bf16.mxu0 0
        %1206 = vmatmul.mubr.bf16.gmra.mrb[0].mxu0 %v947
        %v1207 = vpop.f32.mrb[0].mxu0
        %v1208 = vadd.f32 %v747, %v1207
        %v1209 = vpop.f32.mrb[0].mxu0
        %v1210 = vpop.f32.mrb[0].mxu0
        %v1211 = vadd.f32 %v750, %v1210
        %v1212 = vpop.f32.mrb[0].mxu0
        %1213 = vmatprep.mubr.bf16.mxu0 0
        %1214 = vmatmul.mubr.bf16.gmra.mrb[0].mxu0 %v956
        %v1215 = vpop.f32.mrb[0].mxu0
        %v1216 = vadd.f32 %v755, %v1215
        %v1217 = vpop.f32.mrb[0].mxu0
        %v1218 = vpop.f32.mrb[0].mxu0
        %v1219 = vadd.f32 %v758, %v1218
        %v1220 = vpop.f32.mrb[0].mxu0
        %1221 = vmatprep.mubr.bf16.mxu0 0
        %1222 = vmatmul.mubr.bf16.gmra.mrb[0].mxu0 %v965
        %v1223 = vpop.f32.mrb[0].mxu0
        %v1224 = vadd.f32 %v763, %v1223
        %v1225 = vpop.f32.mrb[0].mxu0
        %v1226 = vpop.f32.mrb[0].mxu0
        %v1227 = vadd.f32 %v766, %v1226
        %v1228 = vpop.f32.mrb[0].mxu0
        %1229 = vmatprep.mubr.bf16.mxu0 0
        %1230 = vmatmul.mubr.bf16.gmra.mrb[0].mxu0 %v974
        %v1231 = vpop.f32.mrb[0].mxu0
        %v1232 = vadd.f32 %v771, %v1231
        %v1233 = vpop.f32.mrb[0].mxu0
        %v1234 = vpop.f32.mrb[0].mxu0
        %v1235 = vadd.f32 %v774, %v1234
        %v1236 = vpop.f32.mrb[0].mxu0
        %1237 = vmatprep.mubr.bf16.mxu0 0
        %1238 = vmatmul.mubr.bf16.gmra.mrb[0].mxu0 %v983
        %v1239 = vpop.f32.mrb[0].mxu0
        %v1240 = vadd.f32 %v779, %v1239
        %v1241 = vpop.f32.mrb[0].mxu0
        %v1242 = vpop.f32.mrb[0].mxu0
        %v1243 = vadd.f32 %v782, %v1242
        %v1244 = vpop.f32.mrb[0].mxu0
        %1245 = vmatprep.mubr.bf16.mxu0 0
        %1246 = vmatmul.mubr.bf16.gmra.mrb[0].mxu0 %v982
        %v1247 = vpop.f32.mrb[0].mxu0
        %v1248 = vadd.f32 %v787, %v1247
        %v1249 = vpop.f32.mrb[0].mxu0
        %v1250 = vpop.f32.mrb[0].mxu0
        %v1251 = vpop.f32.mrb[0].mxu0
        %1252 = vdwg.mxu0
        %v1253 = vld [vmem:[%s262 + $0xa4] sm:$0xf]
        %s1254 = scalar_lea.vmem [#allocation6], 128
        %v1255 = vld [vmem:[%s1254] sm:$0xf]
        %v1256 = vld [vmem:[%s1254 + $0x4] sm:$0xf]
        %v1257 = vld [vmem:[%s1254 + $0x8] sm:$0xf]
        %v1258 = vld [vmem:[%s1254 + $0xc] sm:$0xf]
        %v1259 = vld [vmem:[%s1254 + $0x10] sm:$0xf]
        %v1260 = vld [vmem:[%s1254 + $0x14] sm:$0xf]
        %v1261 = vld [vmem:[%s1254 + $0x18] sm:$0xf]
        %v1262 = vld [vmem:[%s1254 + $0x1c] sm:$0xf]
        %v1263 = vld [vmem:[%s1254 + $0x20] sm:$0xf]
        %v1264 = vld [vmem:[%s1254 + $0x24] sm:$0xf]
        %v1265 = vld [vmem:[%s1254 + $0x28] sm:$0xf]
        %v1266 = vld [vmem:[%s1254 + $0x2c] sm:$0xf]
        %v1267 = vld [vmem:[%s1254 + $0x30] sm:$0xf]
        %v1268 = vld [vmem:[%s1254 + $0x34] sm:$0xf]
        %v1269 = vld [vmem:[%s1254 + $0x38] sm:$0xf]
        %v1270 = vld [vmem:[%s1254 + $0x3c] sm:$0xf]
        %v1272 = vunpack.c.l.b16 %v1253
        %v1273 = vpack.c.b16 %v1272, %v458
        %vm1274 = vsmask.f32 4352
        %v1276 = vshrl.u32 %v460, 16
        %v1278 = vrot.slane %v1276, 3
        %v1279 = vshll.u32 %v460, 16
        %v1281 = vrot.slane %v1279, 4
        %v1282 = vor.u32 %v1278, %v1281
        %v1283 = vrot.slane %v805, 3
        %v1284 = vrot.slane %v808, 4
        %v1285 = vor.u32 %v1283, %v1284
        %v1286 = vsel %vm1274, %v1282, %v1285
        %v1287 = vrot.slane %v814, 3
        %v1288 = vrot.slane %v817, 4
        %v1289 = vor.u32 %v1287, %v1288
        %v1290 = vsel %vm1274, %v1285, %v1289
        %v1291 = vrot.slane %v823, 3
        %v1292 = vrot.slane %v826, 4
        %v1293 = vor.u32 %v1291, %v1292
        %v1294 = vsel %vm1274, %v1289, %v1293
        %v1295 = vrot.slane %v832, 3
        %v1296 = vrot.slane %v835, 4
        %v1297 = vor.u32 %v1295, %v1296
        %v1298 = vsel %vm1274, %v1293, %v1297
        %v1299 = vrot.slane %v841, 3
        %v1300 = vrot.slane %v844, 4
        %v1301 = vor.u32 %v1299, %v1300
        %v1302 = vsel %vm1274, %v1297, %v1301
        %v1303 = vrot.slane %v850, 3
        %v1304 = vrot.slane %v853, 4
        %v1305 = vor.u32 %v1303, %v1304
        %v1306 = vsel %vm1274, %v1301, %v1305
        %v1307 = vrot.slane %v859, 3
        %v1308 = vrot.slane %v862, 4
        %v1309 = vor.u32 %v1307, %v1308
        %v1310 = vsel %vm1274, %v1305, %v1309
        %v1311 = vrot.slane %v868, 3
        %v1312 = vrot.slane %v871, 4
        %v1313 = vor.u32 %v1311, %v1312
        %v1314 = vsel %vm1274, %v1309, %v1313
        %v1315 = vrot.slane %v877, 3
        %v1316 = vrot.slane %v880, 4
        %v1317 = vor.u32 %v1315, %v1316
        %v1318 = vsel %vm1274, %v1313, %v1317
        %v1319 = vrot.slane %v886, 3
        %v1320 = vrot.slane %v889, 4
        %v1321 = vor.u32 %v1319, %v1320
        %v1322 = vsel %vm1274, %v1317, %v1321
        %v1323 = vrot.slane %v895, 3
        %v1324 = vrot.slane %v898, 4
        %v1325 = vor.u32 %v1323, %v1324
        %v1326 = vsel %vm1274, %v1321, %v1325
        %v1327 = vrot.slane %v904, 3
        %v1328 = vrot.slane %v907, 4
        %v1329 = vor.u32 %v1327, %v1328
        %v1330 = vsel %vm1274, %v1325, %v1329
        %v1331 = vrot.slane %v913, 3
        %v1332 = vrot.slane %v916, 4
        %v1333 = vor.u32 %v1331, %v1332
        %v1334 = vsel %vm1274, %v1329, %v1333
        %v1335 = vrot.slane %v922, 3
        %v1336 = vrot.slane %v925, 4
        %v1337 = vor.u32 %v1335, %v1336
        %v1338 = vsel %vm1274, %v1333, %v1337
        %v1339 = vrot.slane %v931, 3
        %v1340 = vrot.slane %v934, 4
        %v1341 = vor.u32 %v1339, %v1340
        %v1342 = vsel %vm1274, %v1337, %v1341
        %v1343 = vrot.slane %v940, 3
        %v1344 = vrot.slane %v943, 4
        %v1345 = vor.u32 %v1343, %v1344
        %v1346 = vsel %vm1274, %v1341, %v1345
        %v1347 = vrot.slane %v949, 3
        %v1348 = vrot.slane %v952, 4
        %v1349 = vor.u32 %v1347, %v1348
        %v1350 = vsel %vm1274, %v1345, %v1349
        %v1351 = vrot.slane %v958, 3
        %v1352 = vrot.slane %v961, 4
        %v1353 = vor.u32 %v1351, %v1352
        %v1354 = vsel %vm1274, %v1349, %v1353
        %v1355 = vrot.slane %v967, 3
        %v1356 = vrot.slane %v970, 4
        %v1357 = vor.u32 %v1355, %v1356
        %v1358 = vsel %vm1274, %v1353, %v1357
        %v1360 = vshrl.u32 %v1273, 16
        %v1362 = vrot.slane %v1360, 3
        %v1363 = vshll.u32 %v1273, 16
        %v1365 = vrot.slane %v1363, 4
        %v1366 = vor.u32 %v1362, %v1365
        %v1367 = vsel %vm1274, %v1357, %v1366
        %v1405 = vunpack.c.l.b16 %v1255
        %v1406 = vunpack.c.l.b16 %v1256
        %v1407 = vunpack.c.l.b16 %v1257
        %v1408 = vunpack.c.l.b16 %v1258
        %v1409 = vunpack.c.l.b16 %v1259
        %v1410 = vunpack.c.l.b16 %v1260
        %v1411 = vunpack.c.l.b16 %v1261
        %v1412 = vunpack.c.l.b16 %v1262
        %v1413 = vunpack.c.l.b16 %v1263
        %v1414 = vunpack.c.l.b16 %v1264
        %v1415 = vunpack.c.l.b16 %v1265
        %v1416 = vunpack.c.l.b16 %v1266
        %v1417 = vunpack.c.l.b16 %v1267
        %v1418 = vunpack.c.l.b16 %v1268
        %v1419 = vunpack.c.l.b16 %v1269
        %v1420 = vunpack.c.l.b16 %v1270
        %v1421 = vpack.c.b16 %v1406, %v1405
        %v1422 = vpack.c.b16 %v1408, %v1407
        %v1423 = vpack.c.b16 %v1410, %v1409
        %v1424 = vpack.c.b16 %v1412, %v1411
        %v1425 = vpack.c.b16 %v1414, %v1413
        %v1426 = vpack.c.b16 %v1416, %v1415
        %v1427 = vpack.c.b16 %v1418, %v1417
        %v1428 = vpack.c.b16 %v1420, %v1419
        %1437 = vmatprep.subr.bf16.mxu0 0
        %1438 = vmatpush1.bf16.msra.mxu0 %v1421
        %1439 = vmatprep.subr.bf16.mxu0 0
        %1440 = vmatpush1.bf16.msra.mxu0 %v1422
        %1441 = vmatprep.subr.bf16.mxu0 0
        %1442 = vmatpush1.bf16.msra.mxu0 %v1423
        %1443 = vmatprep.subr.bf16.mxu0 0
        %1444 = vmatpush1.bf16.msra.mxu0 %v1424
        %1445 = vmatprep.subr.bf16.mxu0 0
        %1446 = vmatpush1.bf16.msra.mxu0 %v1425
        %1447 = vmatprep.subr.bf16.mxu0 0
        %1448 = vmatpush1.bf16.msra.mxu0 %v1426
        %1449 = vmatprep.subr.bf16.mxu0 0
        %1450 = vmatpush1.bf16.msra.mxu0 %v1427
        %1451 = vmatprep.subr.bf16.mxu0 0
        %1452 = vmatpush1.bf16.msra.mxu0 %v1428
        %1453 = vmatprep.subr.bf16.mxu0 0
        %1454 = vmatpush1.bf16.msra.mxu0 0
        %1455 = vmatprep.subr.bf16.mxu0 0
        %1456 = vmatpush1.bf16.msra.mxu0 0
        %1457 = vmatprep.subr.bf16.mxu0 0
        %1458 = vmatpush1.bf16.msra.mxu0 0
        %1459 = vmatprep.subr.bf16.mxu0 0
        %1460 = vmatpush1.bf16.msra.mxu0 0
        %1461 = vmatprep.subr.bf16.mxu0 0
        %1462 = vmatpush1.bf16.msra.mxu0 0
        %1463 = vmatprep.subr.bf16.mxu0 0
        %1464 = vmatpush1.bf16.msra.mxu0 0
        %1465 = vmatprep.subr.bf16.mxu0 0
        %1466 = vmatpush1.bf16.msra.mxu0 0
        %1467 = vmatprep.subr.bf16.mxu0 0
        %1468 = vmatpush1.bf16.msra.mxu0 0
        %1469 = vmatprep.mubr.bf16.mxu0 0
        %1470 = vmatmul.mubr.bf16.gmra.mrb[0].mxu0 %v1286
        %v1471 = vpop.f32.mrb[0].mxu0
        %v1472 = vadd.f32 0.0, %v1471
        %v1473 = vpop.f32.mrb[0].mxu0
        %v1474 = vpop.f32.mrb[0].mxu0
        %v1475 = vadd.f32 0.0, %v1474
        %v1476 = vpop.f32.mrb[0].mxu0
        %1477 = vmatprep.mubr.bf16.mxu0 0
        %1478 = vmatmul.mubr.bf16.gmra.mrb[0].mxu0 %v1290
        %v1479 = vpop.f32.mrb[0].mxu0
        %v1480 = vadd.f32 0.0, %v1479
        %v1481 = vpop.f32.mrb[0].mxu0
        %v1482 = vpop.f32.mrb[0].mxu0
        %v1483 = vadd.f32 0.0, %v1482
        %v1484 = vpop.f32.mrb[0].mxu0
        %1485 = vmatprep.mubr.bf16.mxu0 0
        %1486 = vmatmul.mubr.bf16.gmra.mrb[0].mxu0 %v1294
        %v1487 = vpop.f32.mrb[0].mxu0
        %v1488 = vadd.f32 0.0, %v1487
        %v1489 = vpop.f32.mrb[0].mxu0
        %v1490 = vpop.f32.mrb[0].mxu0
        %v1491 = vadd.f32 0.0, %v1490
        %v1492 = vpop.f32.mrb[0].mxu0
        %1493 = vmatprep.mubr.bf16.mxu0 0
        %1494 = vmatmul.mubr.bf16.gmra.mrb[0].mxu0 %v1298
        %v1495 = vpop.f32.mrb[0].mxu0
        %v1496 = vadd.f32 0.0, %v1495
        %v1497 = vpop.f32.mrb[0].mxu0
        %v1498 = vpop.f32.mrb[0].mxu0
        %v1499 = vadd.f32 0.0, %v1498
        %v1500 = vpop.f32.mrb[0].mxu0
        %1501 = vmatprep.mubr.bf16.mxu0 0
        %1502 = vmatmul.mubr.bf16.gmra.mrb[0].mxu0 %v1302
        %v1503 = vpop.f32.mrb[0].mxu0
        %v1504 = vadd.f32 0.0, %v1503
        %v1505 = vpop.f32.mrb[0].mxu0
        %v1506 = vpop.f32.mrb[0].mxu0
        %v1507 = vadd.f32 0.0, %v1506
        %v1508 = vpop.f32.mrb[0].mxu0
        %1509 = vmatprep.mubr.bf16.mxu0 0
        %1510 = vmatmul.mubr.bf16.gmra.mrb[0].mxu0 %v1306
        %v1511 = vpop.f32.mrb[0].mxu0
        %v1512 = vadd.f32 0.0, %v1511
        %v1513 = vpop.f32.mrb[0].mxu0
        %v1514 = vpop.f32.mrb[0].mxu0
        %v1515 = vadd.f32 0.0, %v1514
        %v1516 = vpop.f32.mrb[0].mxu0
        %1517 = vmatprep.mubr.bf16.mxu0 0
        %1518 = vmatmul.mubr.bf16.gmra.mrb[0].mxu0 %v1310
        %v1519 = vpop.f32.mrb[0].mxu0
        %v1520 = vadd.f32 0.0, %v1519
        %v1521 = vpop.f32.mrb[0].mxu0
        %v1522 = vpop.f32.mrb[0].mxu0
        %v1523 = vadd.f32 0.0, %v1522
        %v1524 = vpop.f32.mrb[0].mxu0
        %1525 = vmatprep.mubr.bf16.mxu0 0
        %1526 = vmatmul.mubr.bf16.gmra.mrb[0].mxu0 %v1314
        %v1527 = vpop.f32.mrb[0].mxu0
        %v1528 = vadd.f32 0.0, %v1527
        %v1529 = vpop.f32.mrb[0].mxu0
        %v1530 = vpop.f32.mrb[0].mxu0
        %v1531 = vadd.f32 0.0, %v1530
        %v1532 = vpop.f32.mrb[0].mxu0
        %1533 = vmatprep.mubr.bf16.mxu0 0
        %1534 = vmatmul.mubr.bf16.gmra.mrb[0].mxu0 %v1318
        %v1535 = vpop.f32.mrb[0].mxu0
        %v1536 = vadd.f32 0.0, %v1535
        %v1537 = vpop.f32.mrb[0].mxu0
        %v1538 = vpop.f32.mrb[0].mxu0
        %v1539 = vadd.f32 0.0, %v1538
        %v1540 = vpop.f32.mrb[0].mxu0
        %1541 = vmatprep.mubr.bf16.mxu0 0
        %1542 = vmatmul.mubr.bf16.gmra.mrb[0].mxu0 %v1322
        %v1543 = vpop.f32.mrb[0].mxu0
        %v1544 = vadd.f32 0.0, %v1543
        %v1545 = vpop.f32.mrb[0].mxu0
        %v1546 = vpop.f32.mrb[0].mxu0
        %v1547 = vadd.f32 0.0, %v1546
        %v1548 = vpop.f32.mrb[0].mxu0
        %1549 = vmatprep.mubr.bf16.mxu0 0
        %1550 = vmatmul.mubr.bf16.gmra.mrb[0].mxu0 %v1326
        %v1551 = vpop.f32.mrb[0].mxu0
        %v1552 = vadd.f32 0.0, %v1551
        %v1553 = vpop.f32.mrb[0].mxu0
        %v1554 = vpop.f32.mrb[0].mxu0
        %v1555 = vadd.f32 0.0, %v1554
        %v1556 = vpop.f32.mrb[0].mxu0
        %1557 = vmatprep.mubr.bf16.mxu0 0
        %1558 = vmatmul.mubr.bf16.gmra.mrb[0].mxu0 %v1330
        %v1559 = vpop.f32.mrb[0].mxu0
        %v1560 = vadd.f32 0.0, %v1559
        %v1561 = vpop.f32.mrb[0].mxu0
        %v1562 = vpop.f32.mrb[0].mxu0
        %v1563 = vadd.f32 0.0, %v1562
        %v1564 = vpop.f32.mrb[0].mxu0
        %1565 = vmatprep.mubr.bf16.mxu0 0
        %1566 = vmatmul.mubr.bf16.gmra.mrb[0].mxu0 %v1334
        %v1567 = vpop.f32.mrb[0].mxu0
        %v1568 = vadd.f32 0.0, %v1567
        %v1569 = vpop.f32.mrb[0].mxu0
        %v1570 = vpop.f32.mrb[0].mxu0
        %v1571 = vadd.f32 0.0, %v1570
        %v1572 = vpop.f32.mrb[0].mxu0
        %1573 = vmatprep.mubr.bf16.mxu0 0
        %1574 = vmatmul.mubr.bf16.gmra.mrb[0].mxu0 %v1338
        %v1575 = vpop.f32.mrb[0].mxu0
        %v1576 = vadd.f32 0.0, %v1575
        %v1577 = vpop.f32.mrb[0].mxu0
        %v1578 = vpop.f32.mrb[0].mxu0
        %v1579 = vadd.f32 0.0, %v1578
        %v1580 = vpop.f32.mrb[0].mxu0
        %1581 = vmatprep.mubr.bf16.mxu0 0
        %1582 = vmatmul.mubr.bf16.gmra.mrb[0].mxu0 %v1342
        %v1583 = vpop.f32.mrb[0].mxu0
        %v1584 = vadd.f32 0.0, %v1583
        %v1585 = vpop.f32.mrb[0].mxu0
        %v1586 = vpop.f32.mrb[0].mxu0
        %v1587 = vadd.f32 0.0, %v1586
        %v1588 = vpop.f32.mrb[0].mxu0
        %1589 = vmatprep.mubr.bf16.mxu0 0
        %1590 = vmatmul.mubr.bf16.gmra.mrb[0].mxu0 %v1346
        %v1591 = vpop.f32.mrb[0].mxu0
        %v1592 = vadd.f32 0.0, %v1591
        %v1593 = vpop.f32.mrb[0].mxu0
        %v1594 = vpop.f32.mrb[0].mxu0
        %v1595 = vadd.f32 0.0, %v1594
        %v1596 = vpop.f32.mrb[0].mxu0
        %1597 = vmatprep.mubr.bf16.mxu0 0
        %1598 = vmatmul.mubr.bf16.gmra.mrb[0].mxu0 %v1350
        %v1599 = vpop.f32.mrb[0].mxu0
        %v1600 = vadd.f32 0.0, %v1599
        %v1601 = vpop.f32.mrb[0].mxu0
        %v1602 = vpop.f32.mrb[0].mxu0
        %v1603 = vadd.f32 0.0, %v1602
        %v1604 = vpop.f32.mrb[0].mxu0
        %1605 = vmatprep.mubr.bf16.mxu0 0
        %1606 = vmatmul.mubr.bf16.gmra.mrb[0].mxu0 %v1354
        %v1607 = vpop.f32.mrb[0].mxu0
        %v1608 = vadd.f32 0.0, %v1607
        %v1609 = vpop.f32.mrb[0].mxu0
        %v1610 = vpop.f32.mrb[0].mxu0
        %v1611 = vadd.f32 0.0, %v1610
        %v1612 = vpop.f32.mrb[0].mxu0
        %1613 = vmatprep.mubr.bf16.mxu0 0
        %1614 = vmatmul.mubr.bf16.gmra.mrb[0].mxu0 %v1358
        %v1615 = vpop.f32.mrb[0].mxu0
        %v1616 = vadd.f32 0.0, %v1615
        %v1617 = vpop.f32.mrb[0].mxu0
        %v1618 = vpop.f32.mrb[0].mxu0
        %v1619 = vadd.f32 0.0, %v1618
        %v1620 = vpop.f32.mrb[0].mxu0
        %1621 = vmatprep.mubr.bf16.mxu0 0
        %1622 = vmatmul.mubr.bf16.gmra.mrb[0].mxu0 %v1367
        %v1623 = vpop.f32.mrb[0].mxu0
        %v1624 = vadd.f32 0.0, %v1623
        %v1625 = vpop.f32.mrb[0].mxu0
        %v1626 = vpop.f32.mrb[0].mxu0
        %v1627 = vadd.f32 0.0, %v1626
        %v1628 = vpop.f32.mrb[0].mxu0
        %1629 = vmatprep.mubr.bf16.mxu0 0
        %1630 = vmatmul.mubr.bf16.gmra.mrb[0].mxu0 %v1366
        %v1631 = vpop.f32.mrb[0].mxu0
        %v1632 = vadd.f32 0.0, %v1631
        %v1633 = vpop.f32.mrb[0].mxu0
        %v1634 = vpop.f32.mrb[0].mxu0
        %v1635 = vpop.f32.mrb[0].mxu0
        %1636 = vdwg.mxu0
        %v1637 = vadd.f32 %v1088, %v1472
        %v1638 = vadd.f32 %v1091, %v1475
        %v1639 = vadd.f32 %v1096, %v1480
        %v1640 = vadd.f32 %v1099, %v1483
        %v1641 = vadd.f32 %v1104, %v1488
        %v1642 = vadd.f32 %v1107, %v1491
        %v1643 = vadd.f32 %v1112, %v1496
        %v1644 = vadd.f32 %v1115, %v1499
        %v1645 = vadd.f32 %v1120, %v1504
        %v1646 = vadd.f32 %v1123, %v1507
        %v1647 = vadd.f32 %v1128, %v1512
        %v1648 = vadd.f32 %v1131, %v1515
        %v1649 = vadd.f32 %v1136, %v1520
        %v1650 = vadd.f32 %v1139, %v1523
        %v1651 = vadd.f32 %v1144, %v1528
        %v1652 = vadd.f32 %v1147, %v1531
        %v1653 = vadd.f32 %v1152, %v1536
        %v1654 = vadd.f32 %v1155, %v1539
        %v1655 = vadd.f32 %v1160, %v1544
        %v1656 = vadd.f32 %v1163, %v1547
        %v1657 = vadd.f32 %v1168, %v1552
        %v1658 = vadd.f32 %v1171, %v1555
        %v1659 = vadd.f32 %v1176, %v1560
        %v1660 = vadd.f32 %v1179, %v1563
        %v1661 = vadd.f32 %v1184, %v1568
        %v1662 = vadd.f32 %v1187, %v1571
        %v1663 = vadd.f32 %v1192, %v1576
        %v1664 = vadd.f32 %v1195, %v1579
        %v1665 = vadd.f32 %v1200, %v1584
        %v1666 = vadd.f32 %v1203, %v1587
        %v1667 = vadd.f32 %v1208, %v1592
        %v1668 = vadd.f32 %v1211, %v1595
        %v1669 = vadd.f32 %v1216, %v1600
        %v1670 = vadd.f32 %v1219, %v1603
        %v1671 = vadd.f32 %v1224, %v1608
        %v1672 = vadd.f32 %v1227, %v1611
        %v1673 = vadd.f32 %v1232, %v1616
        %v1674 = vadd.f32 %v1235, %v1619
        %v1675 = vadd.f32 %v1240, %v1624
        %v1676 = vadd.f32 %v1243, %v1627
        %v1677 = vadd.f32 %v1248, %v1632
        %v1678 = vld [vmem:[%s262 + $0x8] sm:$0x8]
        %v1679 = vld [vmem:[%s262 + $0xc] sm:$0xf]
        %v1680 = vld [vmem:[%s262 + $0x10] sm:$0xf]
        %v1681 = vld [vmem:[%s262 + $0x14] sm:$0xf]
        %v1682 = vld [vmem:[%s262 + $0x18] sm:$0xf]
        %v1683 = vld [vmem:[%s262 + $0x1c] sm:$0xf]
        %v1684 = vld [vmem:[%s262 + $0x20] sm:$0xf]
        %v1685 = vld [vmem:[%s262 + $0x24] sm:$0xf]
        %v1686 = vld [vmem:[%s262 + $0x28] sm:$0xf]
        %v1687 = vld [vmem:[%s262 + $0x2c] sm:$0xf]
        %v1688 = vld [vmem:[%s262 + $0x30] sm:$0xf]
        %v1689 = vld [vmem:[%s262 + $0x34] sm:$0xf]
        %v1690 = vld [vmem:[%s262 + $0x38] sm:$0xf]
        %v1691 = vld [vmem:[%s262 + $0x3c] sm:$0xf]
        %v1692 = vld [vmem:[%s262 + $0x40] sm:$0xf]
        %v1693 = vld [vmem:[%s262 + $0x44] sm:$0xf]
        %v1694 = vld [vmem:[%s262 + $0x48] sm:$0xf]
        %v1695 = vld [vmem:[%s262 + $0x4c] sm:$0xf]
        %v1696 = vld [vmem:[%s262 + $0x50] sm:$0xf]
        %v1697 = vld [vmem:[%s262 + $0x54] sm:$0xf]
        %v1698 = vld [vmem:[%s262 + $0x58] sm:$0xf]
        %v1699 = vld [vmem:[%s262 + $0x5c] sm:$0xf]
        %v1700 = vld [vmem:[%s262 + $0x60] sm:$0xf]
        %v1701 = vld [vmem:[%s262 + $0x64] sm:$0xf]
        %v1702 = vld [vmem:[%s262 + $0x68] sm:$0xf]
        %v1703 = vld [vmem:[%s262 + $0x6c] sm:$0xf]
        %v1704 = vld [vmem:[%s262 + $0x70] sm:$0xf]
        %v1705 = vld [vmem:[%s262 + $0x74] sm:$0xf]
        %v1706 = vld [vmem:[%s262 + $0x78] sm:$0xf]
        %v1707 = vld [vmem:[%s262 + $0x7c] sm:$0xf]
        %v1708 = vld [vmem:[%s262 + $0x80] sm:$0xf]
        %v1709 = vld [vmem:[%s262 + $0x84] sm:$0xf]
        %v1710 = vld [vmem:[%s262 + $0x88] sm:$0xf]
        %v1711 = vld [vmem:[%s262 + $0x8c] sm:$0xf]
        %v1712 = vld [vmem:[%s262 + $0x90] sm:$0xf]
        %v1713 = vld [vmem:[%s262 + $0x94] sm:$0xf]
        %v1714 = vld [vmem:[%s262 + $0x98] sm:$0xf]
        %v1715 = vld [vmem:[%s262 + $0x9c] sm:$0xf]
        %v1716 = vld [vmem:[%s262 + $0xa0] sm:$0xf]
        %v1717 = vld [vmem:[%s262 + $0xa4] sm:$0xf]
        %v1718 = vld [vmem:[%s262 + $0xa8] sm:$0xf]
        %v1719 = vld [vmem:[%s262 + $0xac] sm:$0xf]
        %s1720 = scalar_lea.vmem [#allocation6], 192
        %v1721 = vld [vmem:[%s1720] sm:$0xf]
        %v1722 = vld [vmem:[%s1720 + $0x4] sm:$0xf]
        %v1723 = vld [vmem:[%s1720 + $0x8] sm:$0xf]
        %v1724 = vld [vmem:[%s1720 + $0xc] sm:$0xf]
        %v1725 = vld [vmem:[%s1720 + $0x10] sm:$0xf]
        %v1726 = vld [vmem:[%s1720 + $0x14] sm:$0xf]
        %v1727 = vld [vmem:[%s1720 + $0x18] sm:$0xf]
        %v1728 = vld [vmem:[%s1720 + $0x1c] sm:$0xf]
        %v1729 = vld [vmem:[%s1720 + $0x20] sm:$0xf]
        %v1730 = vld [vmem:[%s1720 + $0x24] sm:$0xf]
        %v1731 = vld [vmem:[%s1720 + $0x28] sm:$0xf]
        %v1732 = vld [vmem:[%s1720 + $0x2c] sm:$0xf]
        %v1733 = vld [vmem:[%s1720 + $0x30] sm:$0xf]
        %v1734 = vld [vmem:[%s1720 + $0x34] sm:$0xf]
        %v1735 = vld [vmem:[%s1720 + $0x38] sm:$0xf]
        %v1736 = vld [vmem:[%s1720 + $0x3c] sm:$0xf]
        %v1779 = vunpack.c.l.b16 %v1678
        %v1780 = vunpack.c.l.b16 %v1679
        %v1781 = vunpack.c.l.b16 %v1680
        %v1782 = vunpack.c.l.b16 %v1681
        %v1783 = vunpack.c.l.b16 %v1682
        %v1784 = vunpack.c.l.b16 %v1683
        %v1785 = vunpack.c.l.b16 %v1684
        %v1786 = vunpack.c.l.b16 %v1685
        %v1787 = vunpack.c.l.b16 %v1686
        %v1788 = vunpack.c.l.b16 %v1687
        %v1789 = vunpack.c.l.b16 %v1688
        %v1790 = vunpack.c.l.b16 %v1689
        %v1791 = vunpack.c.l.b16 %v1690
        %v1792 = vunpack.c.l.b16 %v1691
        %v1793 = vunpack.c.l.b16 %v1692
        %v1794 = vunpack.c.l.b16 %v1693
        %v1795 = vunpack.c.l.b16 %v1694
        %v1796 = vunpack.c.l.b16 %v1695
        %v1797 = vunpack.c.l.b16 %v1696
        %v1798 = vunpack.c.l.b16 %v1697
        %v1799 = vunpack.c.l.b16 %v1698
        %v1800 = vunpack.c.l.b16 %v1699
        %v1801 = vunpack.c.l.b16 %v1700
        %v1802 = vunpack.c.l.b16 %v1701
        %v1803 = vunpack.c.l.b16 %v1702
        %v1804 = vunpack.c.l.b16 %v1703
        %v1805 = vunpack.c.l.b16 %v1704
        %v1806 = vunpack.c.l.b16 %v1705
        %v1807 = vunpack.c.l.b16 %v1706
        %v1808 = vunpack.c.l.b16 %v1707
        %v1809 = vunpack.c.l.b16 %v1708
        %v1810 = vunpack.c.l.b16 %v1709
        %v1811 = vunpack.c.l.b16 %v1710
        %v1812 = vunpack.c.l.b16 %v1711
        %v1813 = vunpack.c.l.b16 %v1712
        %v1814 = vunpack.c.l.b16 %v1713
        %v1815 = vunpack.c.l.b16 %v1714
        %v1816 = vunpack.c.l.b16 %v1715
        %v1817 = vunpack.c.l.b16 %v1716
        %v1818 = vunpack.c.l.b16 %v1717
        %v1819 = vunpack.c.l.b16 %v1718
        %v1820 = vunpack.c.l.b16 %v1719
        %v1821 = vpack.c.b16 %v1780, %v1779
        %v1822 = vpack.c.b16 %v1782, %v1781
        %v1823 = vpack.c.b16 %v1784, %v1783
        %v1824 = vpack.c.b16 %v1786, %v1785
        %v1825 = vpack.c.b16 %v1788, %v1787
        %v1826 = vpack.c.b16 %v1790, %v1789
        %v1827 = vpack.c.b16 %v1792, %v1791
        %v1828 = vpack.c.b16 %v1794, %v1793
        %v1829 = vpack.c.b16 %v1796, %v1795
        %v1830 = vpack.c.b16 %v1798, %v1797
        %v1831 = vpack.c.b16 %v1800, %v1799
        %v1832 = vpack.c.b16 %v1802, %v1801
        %v1833 = vpack.c.b16 %v1804, %v1803
        %v1834 = vpack.c.b16 %v1806, %v1805
        %v1835 = vpack.c.b16 %v1808, %v1807
        %v1836 = vpack.c.b16 %v1810, %v1809
        %v1837 = vpack.c.b16 %v1812, %v1811
        %v1838 = vpack.c.b16 %v1814, %v1813
        %v1839 = vpack.c.b16 %v1816, %v1815
        %v1840 = vpack.c.b16 %v1818, %v1817
        %v1841 = vpack.c.b16 %v1820, %v1819
        %v1843 = vshrl.u32 %v1821, 16
        %v1845 = vrot.slane %v1843, 3
        %v1846 = vshll.u32 %v1821, 16
        %v1848 = vrot.slane %v1846, 4
        %v1849 = vor.u32 %v1845, %v1848
        %v1851 = vshrl.u32 %v1822, 16
        %v1853 = vrot.slane %v1851, 3
        %v1854 = vshll.u32 %v1822, 16
        %v1856 = vrot.slane %v1854, 4
        %v1857 = vor.u32 %v1853, %v1856
        %v1858 = vsel %vm1274, %v1849, %v1857
        %v1860 = vshrl.u32 %v1823, 16
        %v1862 = vrot.slane %v1860, 3
        %v1863 = vshll.u32 %v1823, 16
        %v1865 = vrot.slane %v1863, 4
        %v1866 = vor.u32 %v1862, %v1865
        %v1867 = vsel %vm1274, %v1857, %v1866
        %v1869 = vshrl.u32 %v1824, 16
        %v1871 = vrot.slane %v1869, 3
        %v1872 = vshll.u32 %v1824, 16
        %v1874 = vrot.slane %v1872, 4
        %v1875 = vor.u32 %v1871, %v1874
        %v1876 = vsel %vm1274, %v1866, %v1875
        %v1878 = vshrl.u32 %v1825, 16
        %v1880 = vrot.slane %v1878, 3
        %v1881 = vshll.u32 %v1825, 16
        %v1883 = vrot.slane %v1881, 4
        %v1884 = vor.u32 %v1880, %v1883
        %v1885 = vsel %vm1274, %v1875, %v1884
        %v1887 = vshrl.u32 %v1826, 16
        %v1889 = vrot.slane %v1887, 3
        %v1890 = vshll.u32 %v1826, 16
        %v1892 = vrot.slane %v1890, 4
        %v1893 = vor.u32 %v1889, %v1892
        %v1894 = vsel %vm1274, %v1884, %v1893
        %v1896 = vshrl.u32 %v1827, 16
        %v1898 = vrot.slane %v1896, 3
        %v1899 = vshll.u32 %v1827, 16
        %v1901 = vrot.slane %v1899, 4
        %v1902 = vor.u32 %v1898, %v1901
        %v1903 = vsel %vm1274, %v1893, %v1902
        %v1905 = vshrl.u32 %v1828, 16
        %v1907 = vrot.slane %v1905, 3
        %v1908 = vshll.u32 %v1828, 16
        %v1910 = vrot.slane %v1908, 4
        %v1911 = vor.u32 %v1907, %v1910
        %v1912 = vsel %vm1274, %v1902, %v1911
        %v1914 = vshrl.u32 %v1829, 16
        %v1916 = vrot.slane %v1914, 3
        %v1917 = vshll.u32 %v1829, 16
        %v1919 = vrot.slane %v1917, 4
        %v1920 = vor.u32 %v1916, %v1919
        %v1921 = vsel %vm1274, %v1911, %v1920
        %v1923 = vshrl.u32 %v1830, 16
        %v1925 = vrot.slane %v1923, 3
        %v1926 = vshll.u32 %v1830, 16
        %v1928 = vrot.slane %v1926, 4
        %v1929 = vor.u32 %v1925, %v1928
        %v1930 = vsel %vm1274, %v1920, %v1929
        %v1932 = vshrl.u32 %v1831, 16
        %v1934 = vrot.slane %v1932, 3
        %v1935 = vshll.u32 %v1831, 16
        %v1937 = vrot.slane %v1935, 4
        %v1938 = vor.u32 %v1934, %v1937
        %v1939 = vsel %vm1274, %v1929, %v1938
        %v1941 = vshrl.u32 %v1832, 16
        %v1943 = vrot.slane %v1941, 3
        %v1944 = vshll.u32 %v1832, 16
        %v1946 = vrot.slane %v1944, 4
        %v1947 = vor.u32 %v1943, %v1946
        %v1948 = vsel %vm1274, %v1938, %v1947
        %v1950 = vshrl.u32 %v1833, 16
        %v1952 = vrot.slane %v1950, 3
        %v1953 = vshll.u32 %v1833, 16
        %v1955 = vrot.slane %v1953, 4
        %v1956 = vor.u32 %v1952, %v1955
        %v1957 = vsel %vm1274, %v1947, %v1956
        %v1959 = vshrl.u32 %v1834, 16
        %v1961 = vrot.slane %v1959, 3
        %v1962 = vshll.u32 %v1834, 16
        %v1964 = vrot.slane %v1962, 4
        %v1965 = vor.u32 %v1961, %v1964
        %v1966 = vsel %vm1274, %v1956, %v1965
        %v1968 = vshrl.u32 %v1835, 16
        %v1970 = vrot.slane %v1968, 3
        %v1971 = vshll.u32 %v1835, 16
        %v1973 = vrot.slane %v1971, 4
        %v1974 = vor.u32 %v1970, %v1973
        %v1975 = vsel %vm1274, %v1965, %v1974
        %v1977 = vshrl.u32 %v1836, 16
        %v1979 = vrot.slane %v1977, 3
        %v1980 = vshll.u32 %v1836, 16
        %v1982 = vrot.slane %v1980, 4
        %v1983 = vor.u32 %v1979, %v1982
        %v1984 = vsel %vm1274, %v1974, %v1983
        %v1986 = vshrl.u32 %v1837, 16
        %v1988 = vrot.slane %v1986, 3
        %v1989 = vshll.u32 %v1837, 16
        %v1991 = vrot.slane %v1989, 4
        %v1992 = vor.u32 %v1988, %v1991
        %v1993 = vsel %vm1274, %v1983, %v1992
        %v1995 = vshrl.u32 %v1838, 16
        %v1997 = vrot.slane %v1995, 3
        %v1998 = vshll.u32 %v1838, 16
        %v2000 = vrot.slane %v1998, 4
        %v2001 = vor.u32 %v1997, %v2000
        %v2002 = vsel %vm1274, %v1992, %v2001
        %v2004 = vshrl.u32 %v1839, 16
        %v2006 = vrot.slane %v2004, 3
        %v2007 = vshll.u32 %v1839, 16
        %v2009 = vrot.slane %v2007, 4
        %v2010 = vor.u32 %v2006, %v2009
        %v2011 = vsel %vm1274, %v2001, %v2010
        %v2013 = vshrl.u32 %v1840, 16
        %v2015 = vrot.slane %v2013, 3
        %v2016 = vshll.u32 %v1840, 16
        %v2018 = vrot.slane %v2016, 4
        %v2019 = vor.u32 %v2015, %v2018
        %v2020 = vsel %vm1274, %v2010, %v2019
        %v2022 = vshrl.u32 %v1841, 16
        %v2024 = vrot.slane %v2022, 3
        %v2025 = vshll.u32 %v1841, 16
        %v2027 = vrot.slane %v2025, 4
        %v2028 = vor.u32 %v2024, %v2027
        %v2029 = vsel %vm1274, %v2019, %v2028
        %v2067 = vunpack.c.l.b16 %v1721
        %v2068 = vunpack.c.l.b16 %v1722
        %v2069 = vunpack.c.l.b16 %v1723
        %v2070 = vunpack.c.l.b16 %v1724
        %v2071 = vunpack.c.l.b16 %v1725
        %v2072 = vunpack.c.l.b16 %v1726
        %v2073 = vunpack.c.l.b16 %v1727
        %v2074 = vunpack.c.l.b16 %v1728
        %v2075 = vunpack.c.l.b16 %v1729
        %v2076 = vunpack.c.l.b16 %v1730
        %v2077 = vunpack.c.l.b16 %v1731
        %v2078 = vunpack.c.l.b16 %v1732
        %v2079 = vunpack.c.l.b16 %v1733
        %v2080 = vunpack.c.l.b16 %v1734
        %v2081 = vunpack.c.l.b16 %v1735
        %v2082 = vunpack.c.l.b16 %v1736
        %v2083 = vpack.c.b16 %v2068, %v2067
        %v2084 = vpack.c.b16 %v2070, %v2069
        %v2085 = vpack.c.b16 %v2072, %v2071
        %v2086 = vpack.c.b16 %v2074, %v2073
        %v2087 = vpack.c.b16 %v2076, %v2075
        %v2088 = vpack.c.b16 %v2078, %v2077
        %v2089 = vpack.c.b16 %v2080, %v2079
        %v2090 = vpack.c.b16 %v2082, %v2081
        %2099 = vmatprep.subr.bf16.mxu0 0
        %2100 = vmatpush1.bf16.msra.mxu0 %v2083
        %2101 = vmatprep.subr.bf16.mxu0 0
        %2102 = vmatpush1.bf16.msra.mxu0 %v2084
        %2103 = vmatprep.subr.bf16.mxu0 0
        %2104 = vmatpush1.bf16.msra.mxu0 %v2085
        %2105 = vmatprep.subr.bf16.mxu0 0
        %2106 = vmatpush1.bf16.msra.mxu0 %v2086
        %2107 = vmatprep.subr.bf16.mxu0 0
        %2108 = vmatpush1.bf16.msra.mxu0 %v2087
        %2109 = vmatprep.subr.bf16.mxu0 0
        %2110 = vmatpush1.bf16.msra.mxu0 %v2088
        %2111 = vmatprep.subr.bf16.mxu0 0
        %2112 = vmatpush1.bf16.msra.mxu0 %v2089
        %2113 = vmatprep.subr.bf16.mxu0 0
        %2114 = vmatpush1.bf16.msra.mxu0 %v2090
        %2115 = vmatprep.subr.bf16.mxu0 0
        %2116 = vmatpush1.bf16.msra.mxu0 0
        %2117 = vmatprep.subr.bf16.mxu0 0
        %2118 = vmatpush1.bf16.msra.mxu0 0
        %2119 = vmatprep.subr.bf16.mxu0 0
        %2120 = vmatpush1.bf16.msra.mxu0 0
        %2121 = vmatprep.subr.bf16.mxu0 0
        %2122 = vmatpush1.bf16.msra.mxu0 0
        %2123 = vmatprep.subr.bf16.mxu0 0
        %2124 = vmatpush1.bf16.msra.mxu0 0
        %2125 = vmatprep.subr.bf16.mxu0 0
        %2126 = vmatpush1.bf16.msra.mxu0 0
        %2127 = vmatprep.subr.bf16.mxu0 0
        %2128 = vmatpush1.bf16.msra.mxu0 0
        %2129 = vmatprep.subr.bf16.mxu0 0
        %2130 = vmatpush1.bf16.msra.mxu0 0
        %2131 = vmatprep.mubr.bf16.mxu0 0
        %2132 = vmatmul.mubr.bf16.gmra.mrb[0].mxu0 %v1858
        %v2133 = vpop.f32.mrb[0].mxu0
        %v2134 = vadd.f32 0.0, %v2133
        %v2135 = vpop.f32.mrb[0].mxu0
        %v2136 = vpop.f32.mrb[0].mxu0
        %v2137 = vadd.f32 0.0, %v2136
        %v2138 = vpop.f32.mrb[0].mxu0
        %2139 = vmatprep.mubr.bf16.mxu0 0
        %2140 = vmatmul.mubr.bf16.gmra.mrb[0].mxu0 %v1867
        %v2141 = vpop.f32.mrb[0].mxu0
        %v2142 = vadd.f32 0.0, %v2141
        %v2143 = vpop.f32.mrb[0].mxu0
        %v2144 = vpop.f32.mrb[0].mxu0
        %v2145 = vadd.f32 0.0, %v2144
        %v2146 = vpop.f32.mrb[0].mxu0
        %2147 = vmatprep.mubr.bf16.mxu0 0
        %2148 = vmatmul.mubr.bf16.gmra.mrb[0].mxu0 %v1876
        %v2149 = vpop.f32.mrb[0].mxu0
        %v2150 = vadd.f32 0.0, %v2149
        %v2151 = vpop.f32.mrb[0].mxu0
        %v2152 = vpop.f32.mrb[0].mxu0
        %v2153 = vadd.f32 0.0, %v2152
        %v2154 = vpop.f32.mrb[0].mxu0
        %2155 = vmatprep.mubr.bf16.mxu0 0
        %2156 = vmatmul.mubr.bf16.gmra.mrb[0].mxu0 %v1885
        %v2157 = vpop.f32.mrb[0].mxu0
        %v2158 = vadd.f32 0.0, %v2157
        %v2159 = vpop.f32.mrb[0].mxu0
        %v2160 = vpop.f32.mrb[0].mxu0
        %v2161 = vadd.f32 0.0, %v2160
        %v2162 = vpop.f32.mrb[0].mxu0
        %2163 = vmatprep.mubr.bf16.mxu0 0
        %2164 = vmatmul.mubr.bf16.gmra.mrb[0].mxu0 %v1894
        %v2165 = vpop.f32.mrb[0].mxu0
        %v2166 = vadd.f32 0.0, %v2165
        %v2167 = vpop.f32.mrb[0].mxu0
        %v2168 = vpop.f32.mrb[0].mxu0
        %v2169 = vadd.f32 0.0, %v2168
        %v2170 = vpop.f32.mrb[0].mxu0
        %2171 = vmatprep.mubr.bf16.mxu0 0
        %2172 = vmatmul.mubr.bf16.gmra.mrb[0].mxu0 %v1903
        %v2173 = vpop.f32.mrb[0].mxu0
        %v2174 = vadd.f32 0.0, %v2173
        %v2175 = vpop.f32.mrb[0].mxu0
        %v2176 = vpop.f32.mrb[0].mxu0
        %v2177 = vadd.f32 0.0, %v2176
        %v2178 = vpop.f32.mrb[0].mxu0
        %2179 = vmatprep.mubr.bf16.mxu0 0
        %2180 = vmatmul.mubr.bf16.gmra.mrb[0].mxu0 %v1912
        %v2181 = vpop.f32.mrb[0].mxu0
        %v2182 = vadd.f32 0.0, %v2181
        %v2183 = vpop.f32.mrb[0].mxu0
        %v2184 = vpop.f32.mrb[0].mxu0
        %v2185 = vadd.f32 0.0, %v2184
        %v2186 = vpop.f32.mrb[0].mxu0
        %2187 = vmatprep.mubr.bf16.mxu0 0
        %2188 = vmatmul.mubr.bf16.gmra.mrb[0].mxu0 %v1921
        %v2189 = vpop.f32.mrb[0].mxu0
        %v2190 = vadd.f32 0.0, %v2189
        %v2191 = vpop.f32.mrb[0].mxu0
        %v2192 = vpop.f32.mrb[0].mxu0
        %v2193 = vadd.f32 0.0, %v2192
        %v2194 = vpop.f32.mrb[0].mxu0
        %2195 = vmatprep.mubr.bf16.mxu0 0
        %2196 = vmatmul.mubr.bf16.gmra.mrb[0].mxu0 %v1930
        %v2197 = vpop.f32.mrb[0].mxu0
        %v2198 = vadd.f32 0.0, %v2197
        %v2199 = vpop.f32.mrb[0].mxu0
        %v2200 = vpop.f32.mrb[0].mxu0
        %v2201 = vadd.f32 0.0, %v2200
        %v2202 = vpop.f32.mrb[0].mxu0
        %2203 = vmatprep.mubr.bf16.mxu0 0
        %2204 = vmatmul.mubr.bf16.gmra.mrb[0].mxu0 %v1939
        %v2205 = vpop.f32.mrb[0].mxu0
        %v2206 = vadd.f32 0.0, %v2205
        %v2207 = vpop.f32.mrb[0].mxu0
        %v2208 = vpop.f32.mrb[0].mxu0
        %v2209 = vadd.f32 0.0, %v2208
        %v2210 = vpop.f32.mrb[0].mxu0
        %2211 = vmatprep.mubr.bf16.mxu0 0
        %2212 = vmatmul.mubr.bf16.gmra.mrb[0].mxu0 %v1948
        %v2213 = vpop.f32.mrb[0].mxu0
        %v2214 = vadd.f32 0.0, %v2213
        %v2215 = vpop.f32.mrb[0].mxu0
        %v2216 = vpop.f32.mrb[0].mxu0
        %v2217 = vadd.f32 0.0, %v2216
        %v2218 = vpop.f32.mrb[0].mxu0
        %2219 = vmatprep.mubr.bf16.mxu0 0
        %2220 = vmatmul.mubr.bf16.gmra.mrb[0].mxu0 %v1957
        %v2221 = vpop.f32.mrb[0].mxu0
        %v2222 = vadd.f32 0.0, %v2221
        %v2223 = vpop.f32.mrb[0].mxu0
        %v2224 = vpop.f32.mrb[0].mxu0
        %v2225 = vadd.f32 0.0, %v2224
        %v2226 = vpop.f32.mrb[0].mxu0
        %2227 = vmatprep.mubr.bf16.mxu0 0
        %2228 = vmatmul.mubr.bf16.gmra.mrb[0].mxu0 %v1966
        %v2229 = vpop.f32.mrb[0].mxu0
        %v2230 = vadd.f32 0.0, %v2229
        %v2231 = vpop.f32.mrb[0].mxu0
        %v2232 = vpop.f32.mrb[0].mxu0
        %v2233 = vadd.f32 0.0, %v2232
        %v2234 = vpop.f32.mrb[0].mxu0
        %2235 = vmatprep.mubr.bf16.mxu0 0
        %2236 = vmatmul.mubr.bf16.gmra.mrb[0].mxu0 %v1975
        %v2237 = vpop.f32.mrb[0].mxu0
        %v2238 = vadd.f32 0.0, %v2237
        %v2239 = vpop.f32.mrb[0].mxu0
        %v2240 = vpop.f32.mrb[0].mxu0
        %v2241 = vadd.f32 0.0, %v2240
        %v2242 = vpop.f32.mrb[0].mxu0
        %2243 = vmatprep.mubr.bf16.mxu0 0
        %2244 = vmatmul.mubr.bf16.gmra.mrb[0].mxu0 %v1984
        %v2245 = vpop.f32.mrb[0].mxu0
        %v2246 = vadd.f32 0.0, %v2245
        %v2247 = vpop.f32.mrb[0].mxu0
        %v2248 = vpop.f32.mrb[0].mxu0
        %v2249 = vadd.f32 0.0, %v2248
        %v2250 = vpop.f32.mrb[0].mxu0
        %2251 = vmatprep.mubr.bf16.mxu0 0
        %2252 = vmatmul.mubr.bf16.gmra.mrb[0].mxu0 %v1993
        %v2253 = vpop.f32.mrb[0].mxu0
        %v2254 = vadd.f32 0.0, %v2253
        %v2255 = vpop.f32.mrb[0].mxu0
        %v2256 = vpop.f32.mrb[0].mxu0
        %v2257 = vadd.f32 0.0, %v2256
        %v2258 = vpop.f32.mrb[0].mxu0
        %2259 = vmatprep.mubr.bf16.mxu0 0
        %2260 = vmatmul.mubr.bf16.gmra.mrb[0].mxu0 %v2002
        %v2261 = vpop.f32.mrb[0].mxu0
        %v2262 = vadd.f32 0.0, %v2261
        %v2263 = vpop.f32.mrb[0].mxu0
        %v2264 = vpop.f32.mrb[0].mxu0
        %v2265 = vadd.f32 0.0, %v2264
        %v2266 = vpop.f32.mrb[0].mxu0
        %2267 = vmatprep.mubr.bf16.mxu0 0
        %2268 = vmatmul.mubr.bf16.gmra.mrb[0].mxu0 %v2011
        %v2269 = vpop.f32.mrb[0].mxu0
        %v2270 = vadd.f32 0.0, %v2269
        %v2271 = vpop.f32.mrb[0].mxu0
        %v2272 = vpop.f32.mrb[0].mxu0
        %v2273 = vadd.f32 0.0, %v2272
        %v2274 = vpop.f32.mrb[0].mxu0
        %2275 = vmatprep.mubr.bf16.mxu0 0
        %2276 = vmatmul.mubr.bf16.gmra.mrb[0].mxu0 %v2020
        %v2277 = vpop.f32.mrb[0].mxu0
        %v2278 = vadd.f32 0.0, %v2277
        %v2279 = vpop.f32.mrb[0].mxu0
        %v2280 = vpop.f32.mrb[0].mxu0
        %v2281 = vadd.f32 0.0, %v2280
        %v2282 = vpop.f32.mrb[0].mxu0
        %2283 = vmatprep.mubr.bf16.mxu0 0
        %2284 = vmatmul.mubr.bf16.gmra.mrb[0].mxu0 %v2029
        %v2285 = vpop.f32.mrb[0].mxu0
        %v2286 = vadd.f32 0.0, %v2285
        %v2287 = vpop.f32.mrb[0].mxu0
        %v2288 = vpop.f32.mrb[0].mxu0
        %v2289 = vadd.f32 0.0, %v2288
        %v2290 = vpop.f32.mrb[0].mxu0
        %2291 = vmatprep.mubr.bf16.mxu0 0
        %2292 = vmatmul.mubr.bf16.gmra.mrb[0].mxu0 %v2028
        %v2293 = vpop.f32.mrb[0].mxu0
        %v2294 = vadd.f32 0.0, %v2293
        %v2295 = vpop.f32.mrb[0].mxu0
        %v2296 = vpop.f32.mrb[0].mxu0
        %v2297 = vpop.f32.mrb[0].mxu0
        %2298 = vdwg.mxu0
        %v2299 = vadd.f32 %v1637, %v2134
        %v2300 = vadd.f32 %v1638, %v2137
        %v2301 = vadd.f32 %v1639, %v2142
        %v2302 = vadd.f32 %v1640, %v2145
        %v2303 = vadd.f32 %v1641, %v2150
        %v2304 = vadd.f32 %v1642, %v2153
        %v2305 = vadd.f32 %v1643, %v2158
        %v2306 = vadd.f32 %v1644, %v2161
        %v2307 = vadd.f32 %v1645, %v2166
        %v2308 = vadd.f32 %v1646, %v2169
        %v2309 = vadd.f32 %v1647, %v2174
        %v2310 = vadd.f32 %v1648, %v2177
        %v2311 = vadd.f32 %v1649, %v2182
        %v2312 = vadd.f32 %v1650, %v2185
        %v2313 = vadd.f32 %v1651, %v2190
        %v2314 = vadd.f32 %v1652, %v2193
        %v2315 = vadd.f32 %v1653, %v2198
        %v2316 = vadd.f32 %v1654, %v2201
        %v2317 = vadd.f32 %v1655, %v2206
        %v2318 = vadd.f32 %v1656, %v2209
        %v2319 = vadd.f32 %v1657, %v2214
        %v2320 = vadd.f32 %v1658, %v2217
        %v2321 = vadd.f32 %v1659, %v2222
        %v2322 = vadd.f32 %v1660, %v2225
        %v2323 = vadd.f32 %v1661, %v2230
        %v2324 = vadd.f32 %v1662, %v2233
        %v2325 = vadd.f32 %v1663, %v2238
        %v2326 = vadd.f32 %v1664, %v2241
        %v2327 = vadd.f32 %v1665, %v2246
        %v2328 = vadd.f32 %v1666, %v2249
        %v2329 = vadd.f32 %v1667, %v2254
        %v2330 = vadd.f32 %v1668, %v2257
        %v2331 = vadd.f32 %v1669, %v2262
        %v2332 = vadd.f32 %v1670, %v2265
        %v2333 = vadd.f32 %v1671, %v2270
        %v2334 = vadd.f32 %v1672, %v2273
        %v2335 = vadd.f32 %v1673, %v2278
        %v2336 = vadd.f32 %v1674, %v2281
        %v2337 = vadd.f32 %v1675, %v2286
        %v2338 = vadd.f32 %v1676, %v2289
        %v2339 = vadd.f32 %v1677, %v2294
        %s2340 = scalar_lea.vmem [#allocation6], 256
        %v2341 = vld [vmem:[%s2340] sm:$0xf]
        %v2342 = vld [vmem:[%s2340 + $0x4] sm:$0xf]
        %v2343 = vld [vmem:[%s2340 + $0x8] sm:$0xf]
        %v2344 = vld [vmem:[%s2340 + $0xc] sm:$0xf]
        %v2345 = vld [vmem:[%s2340 + $0x10] sm:$0xf]
        %v2346 = vld [vmem:[%s2340 + $0x14] sm:$0xf]
        %v2347 = vld [vmem:[%s2340 + $0x18] sm:$0xf]
        %v2348 = vld [vmem:[%s2340 + $0x1c] sm:$0xf]
        %v2349 = vld [vmem:[%s2340 + $0x20] sm:$0xf]
        %v2350 = vld [vmem:[%s2340 + $0x24] sm:$0xf]
        %v2351 = vld [vmem:[%s2340 + $0x28] sm:$0xf]
        %v2352 = vld [vmem:[%s2340 + $0x2c] sm:$0xf]
        %v2353 = vld [vmem:[%s2340 + $0x30] sm:$0xf]
        %v2354 = vld [vmem:[%s2340 + $0x34] sm:$0xf]
        %v2355 = vld [vmem:[%s2340 + $0x38] sm:$0xf]
        %v2356 = vld [vmem:[%s2340 + $0x3c] sm:$0xf]
        %v2357 = vpack.c.b16 %v1781, %v1780
        %v2358 = vpack.c.b16 %v1783, %v1782
        %v2359 = vpack.c.b16 %v1785, %v1784
        %v2360 = vpack.c.b16 %v1787, %v1786
        %v2361 = vpack.c.b16 %v1789, %v1788
        %v2362 = vpack.c.b16 %v1791, %v1790
        %v2363 = vpack.c.b16 %v1793, %v1792
        %v2364 = vpack.c.b16 %v1795, %v1794
        %v2365 = vpack.c.b16 %v1797, %v1796
        %v2366 = vpack.c.b16 %v1799, %v1798
        %v2367 = vpack.c.b16 %v1801, %v1800
        %v2368 = vpack.c.b16 %v1803, %v1802
        %v2369 = vpack.c.b16 %v1805, %v1804
        %v2370 = vpack.c.b16 %v1807, %v1806
        %v2371 = vpack.c.b16 %v1809, %v1808
        %v2372 = vpack.c.b16 %v1811, %v1810
        %v2373 = vpack.c.b16 %v1813, %v1812
        %v2374 = vpack.c.b16 %v1815, %v1814
        %v2375 = vpack.c.b16 %v1817, %v1816
        %v2376 = vpack.c.b16 %v1819, %v1818
        %v2377 = vpack.c.b16 %v1820, %v1820
        %v2415 = vunpack.c.l.b16 %v2341
        %v2416 = vunpack.c.l.b16 %v2342
        %v2417 = vunpack.c.l.b16 %v2343
        %v2418 = vunpack.c.l.b16 %v2344
        %v2419 = vunpack.c.l.b16 %v2345
        %v2420 = vunpack.c.l.b16 %v2346
        %v2421 = vunpack.c.l.b16 %v2347
        %v2422 = vunpack.c.l.b16 %v2348
        %v2423 = vunpack.c.l.b16 %v2349
        %v2424 = vunpack.c.l.b16 %v2350
        %v2425 = vunpack.c.l.b16 %v2351
        %v2426 = vunpack.c.l.b16 %v2352
        %v2427 = vunpack.c.l.b16 %v2353
        %v2428 = vunpack.c.l.b16 %v2354
        %v2429 = vunpack.c.l.b16 %v2355
        %v2430 = vunpack.c.l.b16 %v2356
        %v2431 = vpack.c.b16 %v2416, %v2415
        %v2432 = vpack.c.b16 %v2418, %v2417
        %v2433 = vpack.c.b16 %v2420, %v2419
        %v2434 = vpack.c.b16 %v2422, %v2421
        %v2435 = vpack.c.b16 %v2424, %v2423
        %v2436 = vpack.c.b16 %v2426, %v2425
        %v2437 = vpack.c.b16 %v2428, %v2427
        %v2438 = vpack.c.b16 %v2430, %v2429
        %2447 = vmatprep.subr.bf16.mxu0 0
        %2448 = vmatpush1.bf16.msra.mxu0 %v2431
        %2449 = vmatprep.subr.bf16.mxu0 0
        %2450 = vmatpush1.bf16.msra.mxu0 %v2432
        %2451 = vmatprep.subr.bf16.mxu0 0
        %2452 = vmatpush1.bf16.msra.mxu0 %v2433
        %2453 = vmatprep.subr.bf16.mxu0 0
        %2454 = vmatpush1.bf16.msra.mxu0 %v2434
        %2455 = vmatprep.subr.bf16.mxu0 0
        %2456 = vmatpush1.bf16.msra.mxu0 %v2435
        %2457 = vmatprep.subr.bf16.mxu0 0
        %2458 = vmatpush1.bf16.msra.mxu0 %v2436
        %2459 = vmatprep.subr.bf16.mxu0 0
        %2460 = vmatpush1.bf16.msra.mxu0 %v2437
        %2461 = vmatprep.subr.bf16.mxu0 0
        %2462 = vmatpush1.bf16.msra.mxu0 %v2438
        %2463 = vmatprep.subr.bf16.mxu0 0
        %2464 = vmatpush1.bf16.msra.mxu0 0
        %2465 = vmatprep.subr.bf16.mxu0 0
        %2466 = vmatpush1.bf16.msra.mxu0 0
        %2467 = vmatprep.subr.bf16.mxu0 0
        %2468 = vmatpush1.bf16.msra.mxu0 0
        %2469 = vmatprep.subr.bf16.mxu0 0
        %2470 = vmatpush1.bf16.msra.mxu0 0
        %2471 = vmatprep.subr.bf16.mxu0 0
        %2472 = vmatpush1.bf16.msra.mxu0 0
        %2473 = vmatprep.subr.bf16.mxu0 0
        %2474 = vmatpush1.bf16.msra.mxu0 0
        %2475 = vmatprep.subr.bf16.mxu0 0
        %2476 = vmatpush1.bf16.msra.mxu0 0
        %2477 = vmatprep.subr.bf16.mxu0 0
        %2478 = vmatpush1.bf16.msra.mxu0 0
        %2479 = vmatprep.mubr.bf16.mxu0 0
        %2480 = vmatmul.mubr.bf16.gmra.mrb[0].mxu0 %v2357
        %v2481 = vpop.f32.mrb[0].mxu0
        %v2482 = vadd.f32 0.0, %v2481
        %v2483 = vpop.f32.mrb[0].mxu0
        %v2484 = vpop.f32.mrb[0].mxu0
        %v2485 = vadd.f32 0.0, %v2484
        %v2486 = vpop.f32.mrb[0].mxu0
        %2487 = vmatprep.mubr.bf16.mxu0 0
        %2488 = vmatmul.mubr.bf16.gmra.mrb[0].mxu0 %v2358
        %v2489 = vpop.f32.mrb[0].mxu0
        %v2490 = vadd.f32 0.0, %v2489
        %v2491 = vpop.f32.mrb[0].mxu0
        %v2492 = vpop.f32.mrb[0].mxu0
        %v2493 = vadd.f32 0.0, %v2492
        %v2494 = vpop.f32.mrb[0].mxu0
        %2495 = vmatprep.mubr.bf16.mxu0 0
        %2496 = vmatmul.mubr.bf16.gmra.mrb[0].mxu0 %v2359
        %v2497 = vpop.f32.mrb[0].mxu0
        %v2498 = vadd.f32 0.0, %v2497
        %v2499 = vpop.f32.mrb[0].mxu0
        %v2500 = vpop.f32.mrb[0].mxu0
        %v2501 = vadd.f32 0.0, %v2500
        %v2502 = vpop.f32.mrb[0].mxu0
        %2503 = vmatprep.mubr.bf16.mxu0 0
        %2504 = vmatmul.mubr.bf16.gmra.mrb[0].mxu0 %v2360
        %v2505 = vpop.f32.mrb[0].mxu0
        %v2506 = vadd.f32 0.0, %v2505
        %v2507 = vpop.f32.mrb[0].mxu0
        %v2508 = vpop.f32.mrb[0].mxu0
        %v2509 = vadd.f32 0.0, %v2508
        %v2510 = vpop.f32.mrb[0].mxu0
        %2511 = vmatprep.mubr.bf16.mxu0 0
        %2512 = vmatmul.mubr.bf16.gmra.mrb[0].mxu0 %v2361
        %v2513 = vpop.f32.mrb[0].mxu0
        %v2514 = vadd.f32 0.0, %v2513
        %v2515 = vpop.f32.mrb[0].mxu0
        %v2516 = vpop.f32.mrb[0].mxu0
        %v2517 = vadd.f32 0.0, %v2516
        %v2518 = vpop.f32.mrb[0].mxu0
        %2519 = vmatprep.mubr.bf16.mxu0 0
        %2520 = vmatmul.mubr.bf16.gmra.mrb[0].mxu0 %v2362
        %v2521 = vpop.f32.mrb[0].mxu0
        %v2522 = vadd.f32 0.0, %v2521
        %v2523 = vpop.f32.mrb[0].mxu0
        %v2524 = vpop.f32.mrb[0].mxu0
        %v2525 = vadd.f32 0.0, %v2524
        %v2526 = vpop.f32.mrb[0].mxu0
        %2527 = vmatprep.mubr.bf16.mxu0 0
        %2528 = vmatmul.mubr.bf16.gmra.mrb[0].mxu0 %v2363
        %v2529 = vpop.f32.mrb[0].mxu0
        %v2530 = vadd.f32 0.0, %v2529
        %v2531 = vpop.f32.mrb[0].mxu0
        %v2532 = vpop.f32.mrb[0].mxu0
        %v2533 = vadd.f32 0.0, %v2532
        %v2534 = vpop.f32.mrb[0].mxu0
        %2535 = vmatprep.mubr.bf16.mxu0 0
        %2536 = vmatmul.mubr.bf16.gmra.mrb[0].mxu0 %v2364
        %v2537 = vpop.f32.mrb[0].mxu0
        %v2538 = vadd.f32 0.0, %v2537
        %v2539 = vpop.f32.mrb[0].mxu0
        %v2540 = vpop.f32.mrb[0].mxu0
        %v2541 = vadd.f32 0.0, %v2540
        %v2542 = vpop.f32.mrb[0].mxu0
        %2543 = vmatprep.mubr.bf16.mxu0 0
        %2544 = vmatmul.mubr.bf16.gmra.mrb[0].mxu0 %v2365
        %v2545 = vpop.f32.mrb[0].mxu0
        %v2546 = vadd.f32 0.0, %v2545
        %v2547 = vpop.f32.mrb[0].mxu0
        %v2548 = vpop.f32.mrb[0].mxu0
        %v2549 = vadd.f32 0.0, %v2548
        %v2550 = vpop.f32.mrb[0].mxu0
        %2551 = vmatprep.mubr.bf16.mxu0 0
        %2552 = vmatmul.mubr.bf16.gmra.mrb[0].mxu0 %v2366
        %v2553 = vpop.f32.mrb[0].mxu0
        %v2554 = vadd.f32 0.0, %v2553
        %v2555 = vpop.f32.mrb[0].mxu0
        %v2556 = vpop.f32.mrb[0].mxu0
        %v2557 = vadd.f32 0.0, %v2556
        %v2558 = vpop.f32.mrb[0].mxu0
        %2559 = vmatprep.mubr.bf16.mxu0 0
        %2560 = vmatmul.mubr.bf16.gmra.mrb[0].mxu0 %v2367
        %v2561 = vpop.f32.mrb[0].mxu0
        %v2562 = vadd.f32 0.0, %v2561
        %v2563 = vpop.f32.mrb[0].mxu0
        %v2564 = vpop.f32.mrb[0].mxu0
        %v2565 = vadd.f32 0.0, %v2564
        %v2566 = vpop.f32.mrb[0].mxu0
        %2567 = vmatprep.mubr.bf16.mxu0 0
        %2568 = vmatmul.mubr.bf16.gmra.mrb[0].mxu0 %v2368
        %v2569 = vpop.f32.mrb[0].mxu0
        %v2570 = vadd.f32 0.0, %v2569
        %v2571 = vpop.f32.mrb[0].mxu0
        %v2572 = vpop.f32.mrb[0].mxu0
        %v2573 = vadd.f32 0.0, %v2572
        %v2574 = vpop.f32.mrb[0].mxu0
        %2575 = vmatprep.mubr.bf16.mxu0 0
        %2576 = vmatmul.mubr.bf16.gmra.mrb[0].mxu0 %v2369
        %v2577 = vpop.f32.mrb[0].mxu0
        %v2578 = vadd.f32 0.0, %v2577
        %v2579 = vpop.f32.mrb[0].mxu0
        %v2580 = vpop.f32.mrb[0].mxu0
        %v2581 = vadd.f32 0.0, %v2580
        %v2582 = vpop.f32.mrb[0].mxu0
        %2583 = vmatprep.mubr.bf16.mxu0 0
        %2584 = vmatmul.mubr.bf16.gmra.mrb[0].mxu0 %v2370
        %v2585 = vpop.f32.mrb[0].mxu0
        %v2586 = vadd.f32 0.0, %v2585
        %v2587 = vpop.f32.mrb[0].mxu0
        %v2588 = vpop.f32.mrb[0].mxu0
        %v2589 = vadd.f32 0.0, %v2588
        %v2590 = vpop.f32.mrb[0].mxu0
        %2591 = vmatprep.mubr.bf16.mxu0 0
        %2592 = vmatmul.mubr.bf16.gmra.mrb[0].mxu0 %v2371
        %v2593 = vpop.f32.mrb[0].mxu0
        %v2594 = vadd.f32 0.0, %v2593
        %v2595 = vpop.f32.mrb[0].mxu0
        %v2596 = vpop.f32.mrb[0].mxu0
        %v2597 = vadd.f32 0.0, %v2596
        %v2598 = vpop.f32.mrb[0].mxu0
        %2599 = vmatprep.mubr.bf16.mxu0 0
        %2600 = vmatmul.mubr.bf16.gmra.mrb[0].mxu0 %v2372
        %v2601 = vpop.f32.mrb[0].mxu0
        %v2602 = vadd.f32 0.0, %v2601
        %v2603 = vpop.f32.mrb[0].mxu0
        %v2604 = vpop.f32.mrb[0].mxu0
        %v2605 = vadd.f32 0.0, %v2604
        %v2606 = vpop.f32.mrb[0].mxu0
        %2607 = vmatprep.mubr.bf16.mxu0 0
        %2608 = vmatmul.mubr.bf16.gmra.mrb[0].mxu0 %v2373
        %v2609 = vpop.f32.mrb[0].mxu0
        %v2610 = vadd.f32 0.0, %v2609
        %v2611 = vpop.f32.mrb[0].mxu0
        %v2612 = vpop.f32.mrb[0].mxu0
        %v2613 = vadd.f32 0.0, %v2612
        %v2614 = vpop.f32.mrb[0].mxu0
        %2615 = vmatprep.mubr.bf16.mxu0 0
        %2616 = vmatmul.mubr.bf16.gmra.mrb[0].mxu0 %v2374
        %v2617 = vpop.f32.mrb[0].mxu0
        %v2618 = vadd.f32 0.0, %v2617
        %v2619 = vpop.f32.mrb[0].mxu0
        %v2620 = vpop.f32.mrb[0].mxu0
        %v2621 = vadd.f32 0.0, %v2620
        %v2622 = vpop.f32.mrb[0].mxu0
        %2623 = vmatprep.mubr.bf16.mxu0 0
        %2624 = vmatmul.mubr.bf16.gmra.mrb[0].mxu0 %v2375
        %v2625 = vpop.f32.mrb[0].mxu0
        %v2626 = vadd.f32 0.0, %v2625
        %v2627 = vpop.f32.mrb[0].mxu0
        %v2628 = vpop.f32.mrb[0].mxu0
        %v2629 = vadd.f32 0.0, %v2628
        %v2630 = vpop.f32.mrb[0].mxu0
        %2631 = vmatprep.mubr.bf16.mxu0 0
        %2632 = vmatmul.mubr.bf16.gmra.mrb[0].mxu0 %v2376
        %v2633 = vpop.f32.mrb[0].mxu0
        %v2634 = vadd.f32 0.0, %v2633
        %v2635 = vpop.f32.mrb[0].mxu0
        %v2636 = vpop.f32.mrb[0].mxu0
        %v2637 = vadd.f32 0.0, %v2636
        %v2638 = vpop.f32.mrb[0].mxu0
        %2639 = vmatprep.mubr.bf16.mxu0 0
        %2640 = vmatmul.mubr.bf16.gmra.mrb[0].mxu0 %v2377
        %v2641 = vpop.f32.mrb[0].mxu0
        %v2642 = vadd.f32 0.0, %v2641
        %v2643 = vpop.f32.mrb[0].mxu0
        %v2644 = vpop.f32.mrb[0].mxu0
        %v2645 = vpop.f32.mrb[0].mxu0
        %2646 = vdwg.mxu0
        %v2647 = vadd.f32 %v2299, %v2482
        %v2648 = vadd.f32 %v2300, %v2485
        %v2649 = vadd.f32 %v2301, %v2490
        %v2650 = vadd.f32 %v2302, %v2493
        %v2651 = vadd.f32 %v2303, %v2498
        %v2652 = vadd.f32 %v2304, %v2501
        %v2653 = vadd.f32 %v2305, %v2506
        %v2654 = vadd.f32 %v2306, %v2509
        %v2655 = vadd.f32 %v2307, %v2514
        %v2656 = vadd.f32 %v2308, %v2517
        %v2657 = vadd.f32 %v2309, %v2522
        %v2658 = vadd.f32 %v2310, %v2525
        %v2659 = vadd.f32 %v2311, %v2530
        %v2660 = vadd.f32 %v2312, %v2533
        %v2661 = vadd.f32 %v2313, %v2538
        %v2662 = vadd.f32 %v2314, %v2541
        %v2663 = vadd.f32 %v2315, %v2546
        %v2664 = vadd.f32 %v2316, %v2549
        %v2665 = vadd.f32 %v2317, %v2554
        %v2666 = vadd.f32 %v2318, %v2557
        %v2667 = vadd.f32 %v2319, %v2562
        %v2668 = vadd.f32 %v2320, %v2565
        %v2669 = vadd.f32 %v2321, %v2570
        %v2670 = vadd.f32 %v2322, %v2573
        %v2671 = vadd.f32 %v2323, %v2578
        %v2672 = vadd.f32 %v2324, %v2581
        %v2673 = vadd.f32 %v2325, %v2586
        %v2674 = vadd.f32 %v2326, %v2589
        %v2675 = vadd.f32 %v2327, %v2594
        %v2676 = vadd.f32 %v2328, %v2597
        %v2677 = vadd.f32 %v2329, %v2602
        %v2678 = vadd.f32 %v2330, %v2605
        %v2679 = vadd.f32 %v2331, %v2610
        %v2680 = vadd.f32 %v2332, %v2613
        %v2681 = vadd.f32 %v2333, %v2618
        %v2682 = vadd.f32 %v2334, %v2621
        %v2683 = vadd.f32 %v2335, %v2626
        %v2684 = vadd.f32 %v2336, %v2629
        %v2685 = vadd.f32 %v2337, %v2634
        %v2686 = vadd.f32 %v2338, %v2637
        %v2687 = vadd.f32 %v2339, %v2642
        %v2688 = vld [vmem:[%s262 + $0xc] sm:$0xf]
        %v2689 = vld [vmem:[%s262 + $0x10] sm:$0xf]
        %v2690 = vld [vmem:[%s262 + $0x14] sm:$0xf]
        %v2691 = vld [vmem:[%s262 + $0x18] sm:$0xf]
        %v2692 = vld [vmem:[%s262 + $0x1c] sm:$0xf]
        %v2693 = vld [vmem:[%s262 + $0x20] sm:$0xf]
        %v2694 = vld [vmem:[%s262 + $0x24] sm:$0xf]
        %v2695 = vld [vmem:[%s262 + $0x28] sm:$0xf]
        %v2696 = vld [vmem:[%s262 + $0x2c] sm:$0xf]
        %v2697 = vld [vmem:[%s262 + $0x30] sm:$0xf]
        %v2698 = vld [vmem:[%s262 + $0x34] sm:$0xf]
        %v2699 = vld [vmem:[%s262 + $0x38] sm:$0xf]
        %v2700 = vld [vmem:[%s262 + $0x3c] sm:$0xf]
        %v2701 = vld [vmem:[%s262 + $0x40] sm:$0xf]
        %v2702 = vld [vmem:[%s262 + $0x44] sm:$0xf]
        %v2703 = vld [vmem:[%s262 + $0x48] sm:$0xf]
        %v2704 = vld [vmem:[%s262 + $0x4c] sm:$0xf]
        %v2705 = vld [vmem:[%s262 + $0x50] sm:$0xf]
        %v2706 = vld [vmem:[%s262 + $0x54] sm:$0xf]
        %v2707 = vld [vmem:[%s262 + $0x58] sm:$0xf]
        %v2708 = vld [vmem:[%s262 + $0x5c] sm:$0xf]
        %v2709 = vld [vmem:[%s262 + $0x60] sm:$0xf]
        %v2710 = vld [vmem:[%s262 + $0x64] sm:$0xf]
        %v2711 = vld [vmem:[%s262 + $0x68] sm:$0xf]
        %v2712 = vld [vmem:[%s262 + $0x6c] sm:$0xf]
        %v2713 = vld [vmem:[%s262 + $0x70] sm:$0xf]
        %v2714 = vld [vmem:[%s262 + $0x74] sm:$0xf]
        %v2715 = vld [vmem:[%s262 + $0x78] sm:$0xf]
        %v2716 = vld [vmem:[%s262 + $0x7c] sm:$0xf]
        %v2717 = vld [vmem:[%s262 + $0x80] sm:$0xf]
        %v2718 = vld [vmem:[%s262 + $0x84] sm:$0xf]
        %v2719 = vld [vmem:[%s262 + $0x88] sm:$0xf]
        %v2720 = vld [vmem:[%s262 + $0x8c] sm:$0xf]
        %v2721 = vld [vmem:[%s262 + $0x90] sm:$0xf]
        %v2722 = vld [vmem:[%s262 + $0x94] sm:$0xf]
        %v2723 = vld [vmem:[%s262 + $0x98] sm:$0xf]
        %v2724 = vld [vmem:[%s262 + $0x9c] sm:$0xf]
        %v2725 = vld [vmem:[%s262 + $0xa0] sm:$0xf]
        %v2726 = vld [vmem:[%s262 + $0xa4] sm:$0xf]
        %v2727 = vld [vmem:[%s262 + $0xa8] sm:$0xf]
        %v2728 = vld [vmem:[%s262 + $0xac] sm:$0xf]
        %v2729 = vld [vmem:[%s262 + $0xb0] sm:$0x1]
        %s2730 = scalar_lea.vmem [#allocation6], 320
        %v2731 = vld [vmem:[%s2730] sm:$0xf]
        %v2732 = vld [vmem:[%s2730 + $0x4] sm:$0xf]
        %v2733 = vld [vmem:[%s2730 + $0x8] sm:$0xf]
        %v2734 = vld [vmem:[%s2730 + $0xc] sm:$0xf]
        %v2735 = vld [vmem:[%s2730 + $0x10] sm:$0xf]
        %v2736 = vld [vmem:[%s2730 + $0x14] sm:$0xf]
        %v2737 = vld [vmem:[%s2730 + $0x18] sm:$0xf]
        %v2738 = vld [vmem:[%s2730 + $0x1c] sm:$0xf]
        %v2739 = vld [vmem:[%s2730 + $0x20] sm:$0xf]
        %v2740 = vld [vmem:[%s2730 + $0x24] sm:$0xf]
        %v2741 = vld [vmem:[%s2730 + $0x28] sm:$0xf]
        %v2742 = vld [vmem:[%s2730 + $0x2c] sm:$0xf]
        %v2743 = vld [vmem:[%s2730 + $0x30] sm:$0xf]
        %v2744 = vld [vmem:[%s2730 + $0x34] sm:$0xf]
        %v2745 = vld [vmem:[%s2730 + $0x38] sm:$0xf]
        %v2746 = vld [vmem:[%s2730 + $0x3c] sm:$0xf]
        %v2789 = vunpack.c.l.b16 %v2688
        %v2790 = vunpack.c.l.b16 %v2689
        %v2791 = vunpack.c.l.b16 %v2690
        %v2792 = vunpack.c.l.b16 %v2691
        %v2793 = vunpack.c.l.b16 %v2692
        %v2794 = vunpack.c.l.b16 %v2693
        %v2795 = vunpack.c.l.b16 %v2694
        %v2796 = vunpack.c.l.b16 %v2695
        %v2797 = vunpack.c.l.b16 %v2696
        %v2798 = vunpack.c.l.b16 %v2697
        %v2799 = vunpack.c.l.b16 %v2698
        %v2800 = vunpack.c.l.b16 %v2699
        %v2801 = vunpack.c.l.b16 %v2700
        %v2802 = vunpack.c.l.b16 %v2701
        %v2803 = vunpack.c.l.b16 %v2702
        %v2804 = vunpack.c.l.b16 %v2703
        %v2805 = vunpack.c.l.b16 %v2704
        %v2806 = vunpack.c.l.b16 %v2705
        %v2807 = vunpack.c.l.b16 %v2706
        %v2808 = vunpack.c.l.b16 %v2707
        %v2809 = vunpack.c.l.b16 %v2708
        %v2810 = vunpack.c.l.b16 %v2709
        %v2811 = vunpack.c.l.b16 %v2710
        %v2812 = vunpack.c.l.b16 %v2711
        %v2813 = vunpack.c.l.b16 %v2712
        %v2814 = vunpack.c.l.b16 %v2713
        %v2815 = vunpack.c.l.b16 %v2714
        %v2816 = vunpack.c.l.b16 %v2715
        %v2817 = vunpack.c.l.b16 %v2716
        %v2818 = vunpack.c.l.b16 %v2717
        %v2819 = vunpack.c.l.b16 %v2718
        %v2820 = vunpack.c.l.b16 %v2719
        %v2821 = vunpack.c.l.b16 %v2720
        %v2822 = vunpack.c.l.b16 %v2721
        %v2823 = vunpack.c.l.b16 %v2722
        %v2824 = vunpack.c.l.b16 %v2723
        %v2825 = vunpack.c.l.b16 %v2724
        %v2826 = vunpack.c.l.b16 %v2725
        %v2827 = vunpack.c.l.b16 %v2726
        %v2828 = vunpack.c.l.b16 %v2727
        %v2829 = vunpack.c.l.b16 %v2728
        %v2830 = vunpack.c.l.b16 %v2729
        %v2831 = vpack.c.b16 %v2790, %v2789
        %v2832 = vpack.c.b16 %v2792, %v2791
        %v2833 = vpack.c.b16 %v2794, %v2793
        %v2834 = vpack.c.b16 %v2796, %v2795
        %v2835 = vpack.c.b16 %v2798, %v2797
        %v2836 = vpack.c.b16 %v2800, %v2799
        %v2837 = vpack.c.b16 %v2802, %v2801
        %v2838 = vpack.c.b16 %v2804, %v2803
        %v2839 = vpack.c.b16 %v2806, %v2805
        %v2840 = vpack.c.b16 %v2808, %v2807
        %v2841 = vpack.c.b16 %v2810, %v2809
        %v2842 = vpack.c.b16 %v2812, %v2811
        %v2843 = vpack.c.b16 %v2814, %v2813
        %v2844 = vpack.c.b16 %v2816, %v2815
        %v2845 = vpack.c.b16 %v2818, %v2817
        %v2846 = vpack.c.b16 %v2820, %v2819
        %v2847 = vpack.c.b16 %v2822, %v2821
        %v2848 = vpack.c.b16 %v2824, %v2823
        %v2849 = vpack.c.b16 %v2826, %v2825
        %v2850 = vpack.c.b16 %v2828, %v2827
        %v2851 = vpack.c.b16 %v2830, %v2829
        %vm2852 = vsmask.f32 7424
        %v2854 = vshrl.u32 %v2831, 16
        %v2856 = vshll.u32 %v2831, 16
        %v2858 = vrot.slane %v2856, 1
        %v2859 = vor.u32 %v2854, %v2858
        %v2861 = vshll.u32 %v2832, 16
        %v2863 = vrot.slane %v2861, 1
        %v2864 = vsel %vm2852, %v2859, %v2863
        %v2865 = vshrl.u32 %v2832, 16
        %v2867 = vor.u32 %v2865, %v2863
        %v2869 = vshll.u32 %v2833, 16
        %v2871 = vrot.slane %v2869, 1
        %v2872 = vsel %vm2852, %v2867, %v2871
        %v2873 = vshrl.u32 %v2833, 16
        %v2875 = vor.u32 %v2873, %v2871
        %v2877 = vshll.u32 %v2834, 16
        %v2879 = vrot.slane %v2877, 1
        %v2880 = vsel %vm2852, %v2875, %v2879
        %v2881 = vshrl.u32 %v2834, 16
        %v2883 = vor.u32 %v2881, %v2879
        %v2885 = vshll.u32 %v2835, 16
        %v2887 = vrot.slane %v2885, 1
        %v2888 = vsel %vm2852, %v2883, %v2887
        %v2889 = vshrl.u32 %v2835, 16
        %v2891 = vor.u32 %v2889, %v2887
        %v2893 = vshll.u32 %v2836, 16
        %v2895 = vrot.slane %v2893, 1
        %v2896 = vsel %vm2852, %v2891, %v2895
        %v2897 = vshrl.u32 %v2836, 16
        %v2899 = vor.u32 %v2897, %v2895
        %v2901 = vshll.u32 %v2837, 16
        %v2903 = vrot.slane %v2901, 1
        %v2904 = vsel %vm2852, %v2899, %v2903
        %v2905 = vshrl.u32 %v2837, 16
        %v2907 = vor.u32 %v2905, %v2903
        %v2909 = vshll.u32 %v2838, 16
        %v2911 = vrot.slane %v2909, 1
        %v2912 = vsel %vm2852, %v2907, %v2911
        %v2913 = vshrl.u32 %v2838, 16
        %v2915 = vor.u32 %v2913, %v2911
        %v2917 = vshll.u32 %v2839, 16
        %v2919 = vrot.slane %v2917, 1
        %v2920 = vsel %vm2852, %v2915, %v2919
        %v2921 = vshrl.u32 %v2839, 16
        %v2923 = vor.u32 %v2921, %v2919
        %v2925 = vshll.u32 %v2840, 16
        %v2927 = vrot.slane %v2925, 1
        %v2928 = vsel %vm2852, %v2923, %v2927
        %v2929 = vshrl.u32 %v2840, 16
        %v2931 = vor.u32 %v2929, %v2927
        %v2933 = vshll.u32 %v2841, 16
        %v2935 = vrot.slane %v2933, 1
        %v2936 = vsel %vm2852, %v2931, %v2935
        %v2937 = vshrl.u32 %v2841, 16
        %v2939 = vor.u32 %v2937, %v2935
        %v2941 = vshll.u32 %v2842, 16
        %v2943 = vrot.slane %v2941, 1
        %v2944 = vsel %vm2852, %v2939, %v2943
        %v2945 = vshrl.u32 %v2842, 16
        %v2947 = vor.u32 %v2945, %v2943
        %v2949 = vshll.u32 %v2843, 16
        %v2951 = vrot.slane %v2949, 1
        %v2952 = vsel %vm2852, %v2947, %v2951
        %v2953 = vshrl.u32 %v2843, 16
        %v2955 = vor.u32 %v2953, %v2951
        %v2957 = vshll.u32 %v2844, 16
        %v2959 = vrot.slane %v2957, 1
        %v2960 = vsel %vm2852, %v2955, %v2959
        %v2961 = vshrl.u32 %v2844, 16
        %v2963 = vor.u32 %v2961, %v2959
        %v2965 = vshll.u32 %v2845, 16
        %v2967 = vrot.slane %v2965, 1
        %v2968 = vsel %vm2852, %v2963, %v2967
        %v2969 = vshrl.u32 %v2845, 16
        %v2971 = vor.u32 %v2969, %v2967
        %v2973 = vshll.u32 %v2846, 16
        %v2975 = vrot.slane %v2973, 1
        %v2976 = vsel %vm2852, %v2971, %v2975
        %v2977 = vshrl.u32 %v2846, 16
        %v2979 = vor.u32 %v2977, %v2975
        %v2981 = vshll.u32 %v2847, 16
        %v2983 = vrot.slane %v2981, 1
        %v2984 = vsel %vm2852, %v2979, %v2983
        %v2985 = vshrl.u32 %v2847, 16
        %v2987 = vor.u32 %v2985, %v2983
        %v2989 = vshll.u32 %v2848, 16
        %v2991 = vrot.slane %v2989, 1
        %v2992 = vsel %vm2852, %v2987, %v2991
        %v2993 = vshrl.u32 %v2848, 16
        %v2995 = vor.u32 %v2993, %v2991
        %v2997 = vshll.u32 %v2849, 16
        %v2999 = vrot.slane %v2997, 1
        %v3000 = vsel %vm2852, %v2995, %v2999
        %v3001 = vshrl.u32 %v2849, 16
        %v3003 = vor.u32 %v3001, %v2999
        %v3005 = vshll.u32 %v2850, 16
        %v3007 = vrot.slane %v3005, 1
        %v3008 = vsel %vm2852, %v3003, %v3007
        %v3009 = vshrl.u32 %v2850, 16
        %v3011 = vor.u32 %v3009, %v3007
        %v3013 = vshll.u32 %v2851, 16
        %v3015 = vrot.slane %v3013, 1
        %v3016 = vsel %vm2852, %v3011, %v3015
        %v3017 = vshrl.u32 %v2851, 16
        %v3019 = vor.u32 %v3017, %v3015
        %v3057 = vunpack.c.l.b16 %v2731
        %v3058 = vunpack.c.l.b16 %v2732
        %v3059 = vunpack.c.l.b16 %v2733
        %v3060 = vunpack.c.l.b16 %v2734
        %v3061 = vunpack.c.l.b16 %v2735
        %v3062 = vunpack.c.l.b16 %v2736
        %v3063 = vunpack.c.l.b16 %v2737
        %v3064 = vunpack.c.l.b16 %v2738
        %v3065 = vunpack.c.l.b16 %v2739
        %v3066 = vunpack.c.l.b16 %v2740
        %v3067 = vunpack.c.l.b16 %v2741
        %v3068 = vunpack.c.l.b16 %v2742
        %v3069 = vunpack.c.l.b16 %v2743
        %v3070 = vunpack.c.l.b16 %v2744
        %v3071 = vunpack.c.l.b16 %v2745
        %v3072 = vunpack.c.l.b16 %v2746
        %v3073 = vpack.c.b16 %v3058, %v3057
        %v3074 = vpack.c.b16 %v3060, %v3059
        %v3075 = vpack.c.b16 %v3062, %v3061
        %v3076 = vpack.c.b16 %v3064, %v3063
        %v3077 = vpack.c.b16 %v3066, %v3065
        %v3078 = vpack.c.b16 %v3068, %v3067
        %v3079 = vpack.c.b16 %v3070, %v3069
        %v3080 = vpack.c.b16 %v3072, %v3071
        %3089 = vmatprep.subr.bf16.mxu0 0
        %3090 = vmatpush1.bf16.msra.mxu0 %v3073
        %3091 = vmatprep.subr.bf16.mxu0 0
        %3092 = vmatpush1.bf16.msra.mxu0 %v3074
        %3093 = vmatprep.subr.bf16.mxu0 0
        %3094 = vmatpush1.bf16.msra.mxu0 %v3075
        %3095 = vmatprep.subr.bf16.mxu0 0
        %3096 = vmatpush1.bf16.msra.mxu0 %v3076
        %3097 = vmatprep.subr.bf16.mxu0 0
        %3098 = vmatpush1.bf16.msra.mxu0 %v3077
        %3099 = vmatprep.subr.bf16.mxu0 0
        %3100 = vmatpush1.bf16.msra.mxu0 %v3078
        %3101 = vmatprep.subr.bf16.mxu0 0
        %3102 = vmatpush1.bf16.msra.mxu0 %v3079
        %3103 = vmatprep.subr.bf16.mxu0 0
        %3104 = vmatpush1.bf16.msra.mxu0 %v3080
        %3105 = vmatprep.subr.bf16.mxu0 0
        %3106 = vmatpush1.bf16.msra.mxu0 0
        %3107 = vmatprep.subr.bf16.mxu0 0
        %3108 = vmatpush1.bf16.msra.mxu0 0
        %3109 = vmatprep.subr.bf16.mxu0 0
        %3110 = vmatpush1.bf16.msra.mxu0 0
        %3111 = vmatprep.subr.bf16.mxu0 0
        %3112 = vmatpush1.bf16.msra.mxu0 0
        %3113 = vmatprep.subr.bf16.mxu0 0
        %3114 = vmatpush1.bf16.msra.mxu0 0
        %3115 = vmatprep.subr.bf16.mxu0 0
        %3116 = vmatpush1.bf16.msra.mxu0 0
        %3117 = vmatprep.subr.bf16.mxu0 0
        %3118 = vmatpush1.bf16.msra.mxu0 0
        %3119 = vmatprep.subr.bf16.mxu0 0
        %3120 = vmatpush1.bf16.msra.mxu0 0
        %3121 = vmatprep.mubr.bf16.mxu0 0
        %3122 = vmatmul.mubr.bf16.gmra.mrb[0].mxu0 %v2864
        %v3123 = vpop.f32.mrb[0].mxu0
        %v3124 = vadd.f32 0.0, %v3123
        %v3125 = vpop.f32.mrb[0].mxu0
        %v3126 = vpop.f32.mrb[0].mxu0
        %v3127 = vadd.f32 0.0, %v3126
        %v3128 = vpop.f32.mrb[0].mxu0
        %3129 = vmatprep.mubr.bf16.mxu0 0
        %3130 = vmatmul.mubr.bf16.gmra.mrb[0].mxu0 %v2872
        %v3131 = vpop.f32.mrb[0].mxu0
        %v3132 = vadd.f32 0.0, %v3131
        %v3133 = vpop.f32.mrb[0].mxu0
        %v3134 = vpop.f32.mrb[0].mxu0
        %v3135 = vadd.f32 0.0, %v3134
        %v3136 = vpop.f32.mrb[0].mxu0
        %3137 = vmatprep.mubr.bf16.mxu0 0
        %3138 = vmatmul.mubr.bf16.gmra.mrb[0].mxu0 %v2880
        %v3139 = vpop.f32.mrb[0].mxu0
        %v3140 = vadd.f32 0.0, %v3139
        %v3141 = vpop.f32.mrb[0].mxu0
        %v3142 = vpop.f32.mrb[0].mxu0
        %v3143 = vadd.f32 0.0, %v3142
        %v3144 = vpop.f32.mrb[0].mxu0
        %3145 = vmatprep.mubr.bf16.mxu0 0
        %3146 = vmatmul.mubr.bf16.gmra.mrb[0].mxu0 %v2888
        %v3147 = vpop.f32.mrb[0].mxu0
        %v3148 = vadd.f32 0.0, %v3147
        %v3149 = vpop.f32.mrb[0].mxu0
        %v3150 = vpop.f32.mrb[0].mxu0
        %v3151 = vadd.f32 0.0, %v3150
        %v3152 = vpop.f32.mrb[0].mxu0
        %3153 = vmatprep.mubr.bf16.mxu0 0
        %3154 = vmatmul.mubr.bf16.gmra.mrb[0].mxu0 %v2896
        %v3155 = vpop.f32.mrb[0].mxu0
        %v3156 = vadd.f32 0.0, %v3155
        %v3157 = vpop.f32.mrb[0].mxu0
        %v3158 = vpop.f32.mrb[0].mxu0
        %v3159 = vadd.f32 0.0, %v3158
        %v3160 = vpop.f32.mrb[0].mxu0
        %3161 = vmatprep.mubr.bf16.mxu0 0
        %3162 = vmatmul.mubr.bf16.gmra.mrb[0].mxu0 %v2904
        %v3163 = vpop.f32.mrb[0].mxu0
        %v3164 = vadd.f32 0.0, %v3163
        %v3165 = vpop.f32.mrb[0].mxu0
        %v3166 = vpop.f32.mrb[0].mxu0
        %v3167 = vadd.f32 0.0, %v3166
        %v3168 = vpop.f32.mrb[0].mxu0
        %3169 = vmatprep.mubr.bf16.mxu0 0
        %3170 = vmatmul.mubr.bf16.gmra.mrb[0].mxu0 %v2912
        %v3171 = vpop.f32.mrb[0].mxu0
        %v3172 = vadd.f32 0.0, %v3171
        %v3173 = vpop.f32.mrb[0].mxu0
        %v3174 = vpop.f32.mrb[0].mxu0
        %v3175 = vadd.f32 0.0, %v3174
        %v3176 = vpop.f32.mrb[0].mxu0
        %3177 = vmatprep.mubr.bf16.mxu0 0
        %3178 = vmatmul.mubr.bf16.gmra.mrb[0].mxu0 %v2920
        %v3179 = vpop.f32.mrb[0].mxu0
        %v3180 = vadd.f32 0.0, %v3179
        %v3181 = vpop.f32.mrb[0].mxu0
        %v3182 = vpop.f32.mrb[0].mxu0
        %v3183 = vadd.f32 0.0, %v3182
        %v3184 = vpop.f32.mrb[0].mxu0
        %3185 = vmatprep.mubr.bf16.mxu0 0
        %3186 = vmatmul.mubr.bf16.gmra.mrb[0].mxu0 %v2928
        %v3187 = vpop.f32.mrb[0].mxu0
        %v3188 = vadd.f32 0.0, %v3187
        %v3189 = vpop.f32.mrb[0].mxu0
        %v3190 = vpop.f32.mrb[0].mxu0
        %v3191 = vadd.f32 0.0, %v3190
        %v3192 = vpop.f32.mrb[0].mxu0
        %3193 = vmatprep.mubr.bf16.mxu0 0
        %3194 = vmatmul.mubr.bf16.gmra.mrb[0].mxu0 %v2936
        %v3195 = vpop.f32.mrb[0].mxu0
        %v3196 = vadd.f32 0.0, %v3195
        %v3197 = vpop.f32.mrb[0].mxu0
        %v3198 = vpop.f32.mrb[0].mxu0
        %v3199 = vadd.f32 0.0, %v3198
        %v3200 = vpop.f32.mrb[0].mxu0
        %3201 = vmatprep.mubr.bf16.mxu0 0
        %3202 = vmatmul.mubr.bf16.gmra.mrb[0].mxu0 %v2944
        %v3203 = vpop.f32.mrb[0].mxu0
        %v3204 = vadd.f32 0.0, %v3203
        %v3205 = vpop.f32.mrb[0].mxu0
        %v3206 = vpop.f32.mrb[0].mxu0
        %v3207 = vadd.f32 0.0, %v3206
        %v3208 = vpop.f32.mrb[0].mxu0
        %3209 = vmatprep.mubr.bf16.mxu0 0
        %3210 = vmatmul.mubr.bf16.gmra.mrb[0].mxu0 %v2952
        %v3211 = vpop.f32.mrb[0].mxu0
        %v3212 = vadd.f32 0.0, %v3211
        %v3213 = vpop.f32.mrb[0].mxu0
        %v3214 = vpop.f32.mrb[0].mxu0
        %v3215 = vadd.f32 0.0, %v3214
        %v3216 = vpop.f32.mrb[0].mxu0
        %3217 = vmatprep.mubr.bf16.mxu0 0
        %3218 = vmatmul.mubr.bf16.gmra.mrb[0].mxu0 %v2960
        %v3219 = vpop.f32.mrb[0].mxu0
        %v3220 = vadd.f32 0.0, %v3219
        %v3221 = vpop.f32.mrb[0].mxu0
        %v3222 = vpop.f32.mrb[0].mxu0
        %v3223 = vadd.f32 0.0, %v3222
        %v3224 = vpop.f32.mrb[0].mxu0
        %3225 = vmatprep.mubr.bf16.mxu0 0
        %3226 = vmatmul.mubr.bf16.gmra.mrb[0].mxu0 %v2968
        %v3227 = vpop.f32.mrb[0].mxu0
        %v3228 = vadd.f32 0.0, %v3227
        %v3229 = vpop.f32.mrb[0].mxu0
        %v3230 = vpop.f32.mrb[0].mxu0
        %v3231 = vadd.f32 0.0, %v3230
        %v3232 = vpop.f32.mrb[0].mxu0
        %3233 = vmatprep.mubr.bf16.mxu0 0
        %3234 = vmatmul.mubr.bf16.gmra.mrb[0].mxu0 %v2976
        %v3235 = vpop.f32.mrb[0].mxu0
        %v3236 = vadd.f32 0.0, %v3235
        %v3237 = vpop.f32.mrb[0].mxu0
        %v3238 = vpop.f32.mrb[0].mxu0
        %v3239 = vadd.f32 0.0, %v3238
        %v3240 = vpop.f32.mrb[0].mxu0
        %3241 = vmatprep.mubr.bf16.mxu0 0
        %3242 = vmatmul.mubr.bf16.gmra.mrb[0].mxu0 %v2984
        %v3243 = vpop.f32.mrb[0].mxu0
        %v3244 = vadd.f32 0.0, %v3243
        %v3245 = vpop.f32.mrb[0].mxu0
        %v3246 = vpop.f32.mrb[0].mxu0
        %v3247 = vadd.f32 0.0, %v3246
        %v3248 = vpop.f32.mrb[0].mxu0
        %3249 = vmatprep.mubr.bf16.mxu0 0
        %3250 = vmatmul.mubr.bf16.gmra.mrb[0].mxu0 %v2992
        %v3251 = vpop.f32.mrb[0].mxu0
        %v3252 = vadd.f32 0.0, %v3251
        %v3253 = vpop.f32.mrb[0].mxu0
        %v3254 = vpop.f32.mrb[0].mxu0
        %v3255 = vadd.f32 0.0, %v3254
        %v3256 = vpop.f32.mrb[0].mxu0
        %3257 = vmatprep.mubr.bf16.mxu0 0
        %3258 = vmatmul.mubr.bf16.gmra.mrb[0].mxu0 %v3000
        %v3259 = vpop.f32.mrb[0].mxu0
        %v3260 = vadd.f32 0.0, %v3259
        %v3261 = vpop.f32.mrb[0].mxu0
        %v3262 = vpop.f32.mrb[0].mxu0
        %v3263 = vadd.f32 0.0, %v3262
        %v3264 = vpop.f32.mrb[0].mxu0
        %3265 = vmatprep.mubr.bf16.mxu0 0
        %3266 = vmatmul.mubr.bf16.gmra.mrb[0].mxu0 %v3008
        %v3267 = vpop.f32.mrb[0].mxu0
        %v3268 = vadd.f32 0.0, %v3267
        %v3269 = vpop.f32.mrb[0].mxu0
        %v3270 = vpop.f32.mrb[0].mxu0
        %v3271 = vadd.f32 0.0, %v3270
        %v3272 = vpop.f32.mrb[0].mxu0
        %3273 = vmatprep.mubr.bf16.mxu0 0
        %3274 = vmatmul.mubr.bf16.gmra.mrb[0].mxu0 %v3016
        %v3275 = vpop.f32.mrb[0].mxu0
        %v3276 = vadd.f32 0.0, %v3275
        %v3277 = vpop.f32.mrb[0].mxu0
        %v3278 = vpop.f32.mrb[0].mxu0
        %v3279 = vadd.f32 0.0, %v3278
        %v3280 = vpop.f32.mrb[0].mxu0
        %3281 = vmatprep.mubr.bf16.mxu0 0
        %3282 = vmatmul.mubr.bf16.gmra.mrb[0].mxu0 %v3019
        %v3283 = vpop.f32.mrb[0].mxu0
        %v3284 = vadd.f32 0.0, %v3283
        %v3285 = vpop.f32.mrb[0].mxu0
        %v3286 = vpop.f32.mrb[0].mxu0
        %v3287 = vpop.f32.mrb[0].mxu0
        %3288 = vdwg.mxu0
        %v3289 = vadd.f32 %v2647, %v3124
        %v3290 = vadd.f32 %v2648, %v3127
        %v3291 = vadd.f32 %v2649, %v3132
        %v3292 = vadd.f32 %v2650, %v3135
        %v3293 = vadd.f32 %v2651, %v3140
        %v3294 = vadd.f32 %v2652, %v3143
        %v3295 = vadd.f32 %v2653, %v3148
        %v3296 = vadd.f32 %v2654, %v3151
        %v3297 = vadd.f32 %v2655, %v3156
        %v3298 = vadd.f32 %v2656, %v3159
        %v3299 = vadd.f32 %v2657, %v3164
        %v3300 = vadd.f32 %v2658, %v3167
        %v3301 = vadd.f32 %v2659, %v3172
        %v3302 = vadd.f32 %v2660, %v3175
        %v3303 = vadd.f32 %v2661, %v3180
        %v3304 = vadd.f32 %v2662, %v3183
        %v3305 = vadd.f32 %v2663, %v3188
        %v3306 = vadd.f32 %v2664, %v3191
        %v3307 = vadd.f32 %v2665, %v3196
        %v3308 = vadd.f32 %v2666, %v3199
        %v3309 = vadd.f32 %v2667, %v3204
        %v3310 = vadd.f32 %v2668, %v3207
        %v3311 = vadd.f32 %v2669, %v3212
        %v3312 = vadd.f32 %v2670, %v3215
        %v3313 = vadd.f32 %v2671, %v3220
        %v3314 = vadd.f32 %v2672, %v3223
        %v3315 = vadd.f32 %v2673, %v3228
        %v3316 = vadd.f32 %v2674, %v3231
        %v3317 = vadd.f32 %v2675, %v3236
        %v3318 = vadd.f32 %v2676, %v3239
        %v3319 = vadd.f32 %v2677, %v3244
        %v3320 = vadd.f32 %v2678, %v3247
        %v3321 = vadd.f32 %v2679, %v3252
        %v3322 = vadd.f32 %v2680, %v3255
        %v3323 = vadd.f32 %v2681, %v3260
        %v3324 = vadd.f32 %v2682, %v3263
        %v3325 = vadd.f32 %v2683, %v3268
        %v3326 = vadd.f32 %v2684, %v3271
        %v3327 = vadd.f32 %v2685, %v3276
        %v3328 = vadd.f32 %v2686, %v3279
        %v3329 = vadd.f32 %v2687, %v3284
        %v3330 = vld [vmem:[%s262 + $0x14] sm:$0xf]
        %v3331 = vld [vmem:[%s262 + $0x18] sm:$0xf]
        %v3332 = vld [vmem:[%s262 + $0x1c] sm:$0xf]
        %v3333 = vld [vmem:[%s262 + $0x20] sm:$0xf]
        %v3334 = vld [vmem:[%s262 + $0x24] sm:$0xf]
        %v3335 = vld [vmem:[%s262 + $0x28] sm:$0xf]
        %v3336 = vld [vmem:[%s262 + $0x2c] sm:$0xf]
        %v3337 = vld [vmem:[%s262 + $0x30] sm:$0xf]
        %v3338 = vld [vmem:[%s262 + $0x34] sm:$0xf]
        %v3339 = vld [vmem:[%s262 + $0x38] sm:$0xf]
        %v3340 = vld [vmem:[%s262 + $0x3c] sm:$0xf]
        %v3341 = vld [vmem:[%s262 + $0x40] sm:$0xf]
        %v3342 = vld [vmem:[%s262 + $0x44] sm:$0xf]
        %v3343 = vld [vmem:[%s262 + $0x48] sm:$0xf]
        %v3344 = vld [vmem:[%s262 + $0x4c] sm:$0xf]
        %v3345 = vld [vmem:[%s262 + $0x50] sm:$0xf]
        %v3346 = vld [vmem:[%s262 + $0x54] sm:$0xf]
        %v3347 = vld [vmem:[%s262 + $0x58] sm:$0xf]
        %v3348 = vld [vmem:[%s262 + $0x5c] sm:$0xf]
        %v3349 = vld [vmem:[%s262 + $0x60] sm:$0xf]
        %v3350 = vld [vmem:[%s262 + $0x64] sm:$0xf]
        %v3351 = vld [vmem:[%s262 + $0x68] sm:$0xf]
        %v3352 = vld [vmem:[%s262 + $0x6c] sm:$0xf]
        %v3353 = vld [vmem:[%s262 + $0x70] sm:$0xf]
        %v3354 = vld [vmem:[%s262 + $0x74] sm:$0xf]
        %v3355 = vld [vmem:[%s262 + $0x78] sm:$0xf]
        %v3356 = vld [vmem:[%s262 + $0x7c] sm:$0xf]
        %v3357 = vld [vmem:[%s262 + $0x80] sm:$0xf]
        %v3358 = vld [vmem:[%s262 + $0x84] sm:$0xf]
        %v3359 = vld [vmem:[%s262 + $0x88] sm:$0xf]
        %v3360 = vld [vmem:[%s262 + $0x8c] sm:$0xf]
        %v3361 = vld [vmem:[%s262 + $0x90] sm:$0xf]
        %v3362 = vld [vmem:[%s262 + $0x94] sm:$0xf]
        %v3363 = vld [vmem:[%s262 + $0x98] sm:$0xf]
        %v3364 = vld [vmem:[%s262 + $0x9c] sm:$0xf]
        %v3365 = vld [vmem:[%s262 + $0xa0] sm:$0xf]
        %v3366 = vld [vmem:[%s262 + $0xa4] sm:$0xf]
        %v3367 = vld [vmem:[%s262 + $0xa8] sm:$0xf]
        %v3368 = vld [vmem:[%s262 + $0xac] sm:$0xf]
        %v3369 = vld [vmem:[%s262 + $0xb0] sm:$0xf]
        %v3370 = vld [vmem:[%s262 + $0xb4] sm:$0xf]
        %v3371 = vld [vmem:[%s262 + $0xb8] sm:$0x1]
        %s3372 = scalar_lea.vmem [#allocation6], 384
        %v3373 = vld [vmem:[%s3372] sm:$0xf]
        %v3374 = vld [vmem:[%s3372 + $0x4] sm:$0xf]
        %v3375 = vld [vmem:[%s3372 + $0x8] sm:$0xf]
        %v3376 = vld [vmem:[%s3372 + $0xc] sm:$0xf]
        %v3377 = vld [vmem:[%s3372 + $0x10] sm:$0xf]
        %v3378 = vld [vmem:[%s3372 + $0x14] sm:$0xf]
        %v3379 = vld [vmem:[%s3372 + $0x18] sm:$0xf]
        %v3380 = vld [vmem:[%s3372 + $0x1c] sm:$0xf]
        %v3381 = vld [vmem:[%s3372 + $0x20] sm:$0xf]
        %v3382 = vld [vmem:[%s3372 + $0x24] sm:$0xf]
        %v3383 = vld [vmem:[%s3372 + $0x28] sm:$0xf]
        %v3384 = vld [vmem:[%s3372 + $0x2c] sm:$0xf]
        %v3385 = vld [vmem:[%s3372 + $0x30] sm:$0xf]
        %v3386 = vld [vmem:[%s3372 + $0x34] sm:$0xf]
        %v3387 = vld [vmem:[%s3372 + $0x38] sm:$0xf]
        %v3388 = vld [vmem:[%s3372 + $0x3c] sm:$0xf]
        %v3431 = vunpack.c.l.b16 %v3330
        %v3432 = vunpack.c.l.b16 %v3331
        %v3433 = vunpack.c.l.b16 %v3332
        %v3434 = vunpack.c.l.b16 %v3333
        %v3435 = vunpack.c.l.b16 %v3334
        %v3436 = vunpack.c.l.b16 %v3335
        %v3437 = vunpack.c.l.b16 %v3336
        %v3438 = vunpack.c.l.b16 %v3337
        %v3439 = vunpack.c.l.b16 %v3338
        %v3440 = vunpack.c.l.b16 %v3339
        %v3441 = vunpack.c.l.b16 %v3340
        %v3442 = vunpack.c.l.b16 %v3341
        %v3443 = vunpack.c.l.b16 %v3342
        %v3444 = vunpack.c.l.b16 %v3343
        %v3445 = vunpack.c.l.b16 %v3344
        %v3446 = vunpack.c.l.b16 %v3345
        %v3447 = vunpack.c.l.b16 %v3346
        %v3448 = vunpack.c.l.b16 %v3347
        %v3449 = vunpack.c.l.b16 %v3348
        %v3450 = vunpack.c.l.b16 %v3349
        %v3451 = vunpack.c.l.b16 %v3350
        %v3452 = vunpack.c.l.b16 %v3351
        %v3453 = vunpack.c.l.b16 %v3352
        %v3454 = vunpack.c.l.b16 %v3353
        %v3455 = vunpack.c.l.b16 %v3354
        %v3456 = vunpack.c.l.b16 %v3355
        %v3457 = vunpack.c.l.b16 %v3356
        %v3458 = vunpack.c.l.b16 %v3357
        %v3459 = vunpack.c.l.b16 %v3358
        %v3460 = vunpack.c.l.b16 %v3359
        %v3461 = vunpack.c.l.b16 %v3360
        %v3462 = vunpack.c.l.b16 %v3361
        %v3463 = vunpack.c.l.b16 %v3362
        %v3464 = vunpack.c.l.b16 %v3363
        %v3465 = vunpack.c.l.b16 %v3364
        %v3466 = vunpack.c.l.b16 %v3365
        %v3467 = vunpack.c.l.b16 %v3366
        %v3468 = vunpack.c.l.b16 %v3367
        %v3469 = vunpack.c.l.b16 %v3368
        %v3470 = vunpack.c.l.b16 %v3369
        %v3471 = vunpack.c.l.b16 %v3370
        %v3472 = vunpack.c.l.b16 %v3371
        %v3473 = vpack.c.b16 %v3432, %v3431
        %v3474 = vpack.c.b16 %v3434, %v3433
        %v3475 = vpack.c.b16 %v3436, %v3435
        %v3476 = vpack.c.b16 %v3438, %v3437
        %v3477 = vpack.c.b16 %v3440, %v3439
        %v3478 = vpack.c.b16 %v3442, %v3441
        %v3479 = vpack.c.b16 %v3444, %v3443
        %v3480 = vpack.c.b16 %v3446, %v3445
        %v3481 = vpack.c.b16 %v3448, %v3447
        %v3482 = vpack.c.b16 %v3450, %v3449
        %v3483 = vpack.c.b16 %v3452, %v3451
        %v3484 = vpack.c.b16 %v3454, %v3453
        %v3485 = vpack.c.b16 %v3456, %v3455
        %v3486 = vpack.c.b16 %v3458, %v3457
        %v3487 = vpack.c.b16 %v3460, %v3459
        %v3488 = vpack.c.b16 %v3462, %v3461
        %v3489 = vpack.c.b16 %v3464, %v3463
        %v3490 = vpack.c.b16 %v3466, %v3465
        %v3491 = vpack.c.b16 %v3468, %v3467
        %v3492 = vpack.c.b16 %v3470, %v3469
        %v3493 = vpack.c.b16 %v3472, %v3471
        %v3495 = vshrl.u32 %v3473, 16
        %v3497 = vshll.u32 %v3473, 16
        %v3499 = vrot.slane %v3497, 1
        %v3500 = vor.u32 %v3495, %v3499
        %v3502 = vshll.u32 %v3474, 16
        %v3504 = vrot.slane %v3502, 1
        %v3505 = vsel %vm2852, %v3500, %v3504
        %v3506 = vshrl.u32 %v3474, 16
        %v3508 = vor.u32 %v3506, %v3504
        %v3510 = vshll.u32 %v3475, 16
        %v3512 = vrot.slane %v3510, 1
        %v3513 = vsel %vm2852, %v3508, %v3512
        %v3514 = vshrl.u32 %v3475, 16
        %v3516 = vor.u32 %v3514, %v3512
        %v3518 = vshll.u32 %v3476, 16
        %v3520 = vrot.slane %v3518, 1
        %v3521 = vsel %vm2852, %v3516, %v3520
        %v3522 = vshrl.u32 %v3476, 16
        %v3524 = vor.u32 %v3522, %v3520
        %v3526 = vshll.u32 %v3477, 16
        %v3528 = vrot.slane %v3526, 1
        %v3529 = vsel %vm2852, %v3524, %v3528
        %v3530 = vshrl.u32 %v3477, 16
        %v3532 = vor.u32 %v3530, %v3528
        %v3534 = vshll.u32 %v3478, 16
        %v3536 = vrot.slane %v3534, 1
        %v3537 = vsel %vm2852, %v3532, %v3536
        %v3538 = vshrl.u32 %v3478, 16
        %v3540 = vor.u32 %v3538, %v3536
        %v3542 = vshll.u32 %v3479, 16
        %v3544 = vrot.slane %v3542, 1
        %v3545 = vsel %vm2852, %v3540, %v3544
        %v3546 = vshrl.u32 %v3479, 16
        %v3548 = vor.u32 %v3546, %v3544
        %v3550 = vshll.u32 %v3480, 16
        %v3552 = vrot.slane %v3550, 1
        %v3553 = vsel %vm2852, %v3548, %v3552
        %v3554 = vshrl.u32 %v3480, 16
        %v3556 = vor.u32 %v3554, %v3552
        %v3558 = vshll.u32 %v3481, 16
        %v3560 = vrot.slane %v3558, 1
        %v3561 = vsel %vm2852, %v3556, %v3560
        %v3562 = vshrl.u32 %v3481, 16
        %v3564 = vor.u32 %v3562, %v3560
        %v3566 = vshll.u32 %v3482, 16
        %v3568 = vrot.slane %v3566, 1
        %v3569 = vsel %vm2852, %v3564, %v3568
        %v3570 = vshrl.u32 %v3482, 16
        %v3572 = vor.u32 %v3570, %v3568
        %v3574 = vshll.u32 %v3483, 16
        %v3576 = vrot.slane %v3574, 1
        %v3577 = vsel %vm2852, %v3572, %v3576
        %v3578 = vshrl.u32 %v3483, 16
        %v3580 = vor.u32 %v3578, %v3576
        %v3582 = vshll.u32 %v3484, 16
        %v3584 = vrot.slane %v3582, 1
        %v3585 = vsel %vm2852, %v3580, %v3584
        %v3586 = vshrl.u32 %v3484, 16
        %v3588 = vor.u32 %v3586, %v3584
        %v3590 = vshll.u32 %v3485, 16
        %v3592 = vrot.slane %v3590, 1
        %v3593 = vsel %vm2852, %v3588, %v3592
        %v3594 = vshrl.u32 %v3485, 16
        %v3596 = vor.u32 %v3594, %v3592
        %v3598 = vshll.u32 %v3486, 16
        %v3600 = vrot.slane %v3598, 1
        %v3601 = vsel %vm2852, %v3596, %v3600
        %v3602 = vshrl.u32 %v3486, 16
        %v3604 = vor.u32 %v3602, %v3600
        %v3606 = vshll.u32 %v3487, 16
        %v3608 = vrot.slane %v3606, 1
        %v3609 = vsel %vm2852, %v3604, %v3608
        %v3610 = vshrl.u32 %v3487, 16
        %v3612 = vor.u32 %v3610, %v3608
        %v3614 = vshll.u32 %v3488, 16
        %v3616 = vrot.slane %v3614, 1
        %v3617 = vsel %vm2852, %v3612, %v3616
        %v3618 = vshrl.u32 %v3488, 16
        %v3620 = vor.u32 %v3618, %v3616
        %v3622 = vshll.u32 %v3489, 16
        %v3624 = vrot.slane %v3622, 1
        %v3625 = vsel %vm2852, %v3620, %v3624
        %v3626 = vshrl.u32 %v3489, 16
        %v3628 = vor.u32 %v3626, %v3624
        %v3630 = vshll.u32 %v3490, 16
        %v3632 = vrot.slane %v3630, 1
        %v3633 = vsel %vm2852, %v3628, %v3632
        %v3634 = vshrl.u32 %v3490, 16
        %v3636 = vor.u32 %v3634, %v3632
        %v3638 = vshll.u32 %v3491, 16
        %v3640 = vrot.slane %v3638, 1
        %v3641 = vsel %vm2852, %v3636, %v3640
        %v3642 = vshrl.u32 %v3491, 16
        %v3644 = vor.u32 %v3642, %v3640
        %v3646 = vshll.u32 %v3492, 16
        %v3648 = vrot.slane %v3646, 1
        %v3649 = vsel %vm2852, %v3644, %v3648
        %v3650 = vshrl.u32 %v3492, 16
        %v3652 = vor.u32 %v3650, %v3648
        %v3654 = vshll.u32 %v3493, 16
        %v3656 = vrot.slane %v3654, 1
        %v3657 = vsel %vm2852, %v3652, %v3656
        %v3658 = vshrl.u32 %v3493, 16
        %v3660 = vor.u32 %v3658, %v3656
        %v3698 = vunpack.c.l.b16 %v3373
        %v3699 = vunpack.c.l.b16 %v3374
        %v3700 = vunpack.c.l.b16 %v3375
        %v3701 = vunpack.c.l.b16 %v3376
        %v3702 = vunpack.c.l.b16 %v3377
        %v3703 = vunpack.c.l.b16 %v3378
        %v3704 = vunpack.c.l.b16 %v3379
        %v3705 = vunpack.c.l.b16 %v3380
        %v3706 = vunpack.c.l.b16 %v3381
        %v3707 = vunpack.c.l.b16 %v3382
        %v3708 = vunpack.c.l.b16 %v3383
        %v3709 = vunpack.c.l.b16 %v3384
        %v3710 = vunpack.c.l.b16 %v3385
        %v3711 = vunpack.c.l.b16 %v3386
        %v3712 = vunpack.c.l.b16 %v3387
        %v3713 = vunpack.c.l.b16 %v3388
        %v3714 = vpack.c.b16 %v3699, %v3698
        %v3715 = vpack.c.b16 %v3701, %v3700
        %v3716 = vpack.c.b16 %v3703, %v3702
        %v3717 = vpack.c.b16 %v3705, %v3704
        %v3718 = vpack.c.b16 %v3707, %v3706
        %v3719 = vpack.c.b16 %v3709, %v3708
        %v3720 = vpack.c.b16 %v3711, %v3710
        %v3721 = vpack.c.b16 %v3713, %v3712
        %3730 = vmatprep.subr.bf16.mxu0 0
        %3731 = vmatpush1.bf16.msra.mxu0 %v3714
        %3732 = vmatprep.subr.bf16.mxu0 0
        %3733 = vmatpush1.bf16.msra.mxu0 %v3715
        %3734 = vmatprep.subr.bf16.mxu0 0
        %3735 = vmatpush1.bf16.msra.mxu0 %v3716
        %3736 = vmatprep.subr.bf16.mxu0 0
        %3737 = vmatpush1.bf16.msra.mxu0 %v3717
        %3738 = vmatprep.subr.bf16.mxu0 0
        %3739 = vmatpush1.bf16.msra.mxu0 %v3718
        %3740 = vmatprep.subr.bf16.mxu0 0
        %3741 = vmatpush1.bf16.msra.mxu0 %v3719
        %3742 = vmatprep.subr.bf16.mxu0 0
        %3743 = vmatpush1.bf16.msra.mxu0 %v3720
        %3744 = vmatprep.subr.bf16.mxu0 0
        %3745 = vmatpush1.bf16.msra.mxu0 %v3721
        %3746 = vmatprep.subr.bf16.mxu0 0
        %3747 = vmatpush1.bf16.msra.mxu0 0
        %3748 = vmatprep.subr.bf16.mxu0 0
        %3749 = vmatpush1.bf16.msra.mxu0 0
        %3750 = vmatprep.subr.bf16.mxu0 0
        %3751 = vmatpush1.bf16.msra.mxu0 0
        %3752 = vmatprep.subr.bf16.mxu0 0
        %3753 = vmatpush1.bf16.msra.mxu0 0
        %3754 = vmatprep.subr.bf16.mxu0 0
        %3755 = vmatpush1.bf16.msra.mxu0 0
        %3756 = vmatprep.subr.bf16.mxu0 0
        %3757 = vmatpush1.bf16.msra.mxu0 0
        %3758 = vmatprep.subr.bf16.mxu0 0
        %3759 = vmatpush1.bf16.msra.mxu0 0
        %3760 = vmatprep.subr.bf16.mxu0 0
        %3761 = vmatpush1.bf16.msra.mxu0 0
        %3762 = vmatprep.mubr.bf16.mxu0 0
        %3763 = vmatmul.mubr.bf16.gmra.mrb[0].mxu0 %v3505
        %v3764 = vpop.f32.mrb[0].mxu0
        %v3765 = vadd.f32 0.0, %v3764
        %v3766 = vpop.f32.mrb[0].mxu0
        %v3767 = vpop.f32.mrb[0].mxu0
        %v3768 = vadd.f32 0.0, %v3767
        %v3769 = vpop.f32.mrb[0].mxu0
        %3770 = vmatprep.mubr.bf16.mxu0 0
        %3771 = vmatmul.mubr.bf16.gmra.mrb[0].mxu0 %v3513
        %v3772 = vpop.f32.mrb[0].mxu0
        %v3773 = vadd.f32 0.0, %v3772
        %v3774 = vpop.f32.mrb[0].mxu0
        %v3775 = vpop.f32.mrb[0].mxu0
        %v3776 = vadd.f32 0.0, %v3775
        %v3777 = vpop.f32.mrb[0].mxu0
        %3778 = vmatprep.mubr.bf16.mxu0 0
        %3779 = vmatmul.mubr.bf16.gmra.mrb[0].mxu0 %v3521
        %v3780 = vpop.f32.mrb[0].mxu0
        %v3781 = vadd.f32 0.0, %v3780
        %v3782 = vpop.f32.mrb[0].mxu0
        %v3783 = vpop.f32.mrb[0].mxu0
        %v3784 = vadd.f32 0.0, %v3783
        %v3785 = vpop.f32.mrb[0].mxu0
        %3786 = vmatprep.mubr.bf16.mxu0 0
        %3787 = vmatmul.mubr.bf16.gmra.mrb[0].mxu0 %v3529
        %v3788 = vpop.f32.mrb[0].mxu0
        %v3789 = vadd.f32 0.0, %v3788
        %v3790 = vpop.f32.mrb[0].mxu0
        %v3791 = vpop.f32.mrb[0].mxu0
        %v3792 = vadd.f32 0.0, %v3791
        %v3793 = vpop.f32.mrb[0].mxu0
        %3794 = vmatprep.mubr.bf16.mxu0 0
        %3795 = vmatmul.mubr.bf16.gmra.mrb[0].mxu0 %v3537
        %v3796 = vpop.f32.mrb[0].mxu0
        %v3797 = vadd.f32 0.0, %v3796
        %v3798 = vpop.f32.mrb[0].mxu0
        %v3799 = vpop.f32.mrb[0].mxu0
        %v3800 = vadd.f32 0.0, %v3799
        %v3801 = vpop.f32.mrb[0].mxu0
        %3802 = vmatprep.mubr.bf16.mxu0 0
        %3803 = vmatmul.mubr.bf16.gmra.mrb[0].mxu0 %v3545
        %v3804 = vpop.f32.mrb[0].mxu0
        %v3805 = vadd.f32 0.0, %v3804
        %v3806 = vpop.f32.mrb[0].mxu0
        %v3807 = vpop.f32.mrb[0].mxu0
        %v3808 = vadd.f32 0.0, %v3807
        %v3809 = vpop.f32.mrb[0].mxu0
        %3810 = vmatprep.mubr.bf16.mxu0 0
        %3811 = vmatmul.mubr.bf16.gmra.mrb[0].mxu0 %v3553
        %v3812 = vpop.f32.mrb[0].mxu0
        %v3813 = vadd.f32 0.0, %v3812
        %v3814 = vpop.f32.mrb[0].mxu0
        %v3815 = vpop.f32.mrb[0].mxu0
        %v3816 = vadd.f32 0.0, %v3815
        %v3817 = vpop.f32.mrb[0].mxu0
        %3818 = vmatprep.mubr.bf16.mxu0 0
        %3819 = vmatmul.mubr.bf16.gmra.mrb[0].mxu0 %v3561
        %v3820 = vpop.f32.mrb[0].mxu0
        %v3821 = vadd.f32 0.0, %v3820
        %v3822 = vpop.f32.mrb[0].mxu0
        %v3823 = vpop.f32.mrb[0].mxu0
        %v3824 = vadd.f32 0.0, %v3823
        %v3825 = vpop.f32.mrb[0].mxu0
        %3826 = vmatprep.mubr.bf16.mxu0 0
        %3827 = vmatmul.mubr.bf16.gmra.mrb[0].mxu0 %v3569
        %v3828 = vpop.f32.mrb[0].mxu0
        %v3829 = vadd.f32 0.0, %v3828
        %v3830 = vpop.f32.mrb[0].mxu0
        %v3831 = vpop.f32.mrb[0].mxu0
        %v3832 = vadd.f32 0.0, %v3831
        %v3833 = vpop.f32.mrb[0].mxu0
        %3834 = vmatprep.mubr.bf16.mxu0 0
        %3835 = vmatmul.mubr.bf16.gmra.mrb[0].mxu0 %v3577
        %v3836 = vpop.f32.mrb[0].mxu0
        %v3837 = vadd.f32 0.0, %v3836
        %v3838 = vpop.f32.mrb[0].mxu0
        %v3839 = vpop.f32.mrb[0].mxu0
        %v3840 = vadd.f32 0.0, %v3839
        %v3841 = vpop.f32.mrb[0].mxu0
        %3842 = vmatprep.mubr.bf16.mxu0 0
        %3843 = vmatmul.mubr.bf16.gmra.mrb[0].mxu0 %v3585
        %v3844 = vpop.f32.mrb[0].mxu0
        %v3845 = vadd.f32 0.0, %v3844
        %v3846 = vpop.f32.mrb[0].mxu0
        %v3847 = vpop.f32.mrb[0].mxu0
        %v3848 = vadd.f32 0.0, %v3847
        %v3849 = vpop.f32.mrb[0].mxu0
        %3850 = vmatprep.mubr.bf16.mxu0 0
        %3851 = vmatmul.mubr.bf16.gmra.mrb[0].mxu0 %v3593
        %v3852 = vpop.f32.mrb[0].mxu0
        %v3853 = vadd.f32 0.0, %v3852
        %v3854 = vpop.f32.mrb[0].mxu0
        %v3855 = vpop.f32.mrb[0].mxu0
        %v3856 = vadd.f32 0.0, %v3855
        %v3857 = vpop.f32.mrb[0].mxu0
        %3858 = vmatprep.mubr.bf16.mxu0 0
        %3859 = vmatmul.mubr.bf16.gmra.mrb[0].mxu0 %v3601
        %v3860 = vpop.f32.mrb[0].mxu0
        %v3861 = vadd.f32 0.0, %v3860
        %v3862 = vpop.f32.mrb[0].mxu0
        %v3863 = vpop.f32.mrb[0].mxu0
        %v3864 = vadd.f32 0.0, %v3863
        %v3865 = vpop.f32.mrb[0].mxu0
        %3866 = vmatprep.mubr.bf16.mxu0 0
        %3867 = vmatmul.mubr.bf16.gmra.mrb[0].mxu0 %v3609
        %v3868 = vpop.f32.mrb[0].mxu0
        %v3869 = vadd.f32 0.0, %v3868
        %v3870 = vpop.f32.mrb[0].mxu0
        %v3871 = vpop.f32.mrb[0].mxu0
        %v3872 = vadd.f32 0.0, %v3871
        %v3873 = vpop.f32.mrb[0].mxu0
        %3874 = vmatprep.mubr.bf16.mxu0 0
        %3875 = vmatmul.mubr.bf16.gmra.mrb[0].mxu0 %v3617
        %v3876 = vpop.f32.mrb[0].mxu0
        %v3877 = vadd.f32 0.0, %v3876
        %v3878 = vpop.f32.mrb[0].mxu0
        %v3879 = vpop.f32.mrb[0].mxu0
        %v3880 = vadd.f32 0.0, %v3879
        %v3881 = vpop.f32.mrb[0].mxu0
        %3882 = vmatprep.mubr.bf16.mxu0 0
        %3883 = vmatmul.mubr.bf16.gmra.mrb[0].mxu0 %v3625
        %v3884 = vpop.f32.mrb[0].mxu0
        %v3885 = vadd.f32 0.0, %v3884
        %v3886 = vpop.f32.mrb[0].mxu0
        %v3887 = vpop.f32.mrb[0].mxu0
        %v3888 = vadd.f32 0.0, %v3887
        %v3889 = vpop.f32.mrb[0].mxu0
        %3890 = vmatprep.mubr.bf16.mxu0 0
        %3891 = vmatmul.mubr.bf16.gmra.mrb[0].mxu0 %v3633
        %v3892 = vpop.f32.mrb[0].mxu0
        %v3893 = vadd.f32 0.0, %v3892
        %v3894 = vpop.f32.mrb[0].mxu0
        %v3895 = vpop.f32.mrb[0].mxu0
        %v3896 = vadd.f32 0.0, %v3895
        %v3897 = vpop.f32.mrb[0].mxu0
        %3898 = vmatprep.mubr.bf16.mxu0 0
        %3899 = vmatmul.mubr.bf16.gmra.mrb[0].mxu0 %v3641
        %v3900 = vpop.f32.mrb[0].mxu0
        %v3901 = vadd.f32 0.0, %v3900
        %v3902 = vpop.f32.mrb[0].mxu0
        %v3903 = vpop.f32.mrb[0].mxu0
        %v3904 = vadd.f32 0.0, %v3903
        %v3905 = vpop.f32.mrb[0].mxu0
        %3906 = vmatprep.mubr.bf16.mxu0 0
        %3907 = vmatmul.mubr.bf16.gmra.mrb[0].mxu0 %v3649
        %v3908 = vpop.f32.mrb[0].mxu0
        %v3909 = vadd.f32 0.0, %v3908
        %v3910 = vpop.f32.mrb[0].mxu0
        %v3911 = vpop.f32.mrb[0].mxu0
        %v3912 = vadd.f32 0.0, %v3911
        %v3913 = vpop.f32.mrb[0].mxu0
        %3914 = vmatprep.mubr.bf16.mxu0 0
        %3915 = vmatmul.mubr.bf16.gmra.mrb[0].mxu0 %v3657
        %v3916 = vpop.f32.mrb[0].mxu0
        %v3917 = vadd.f32 0.0, %v3916
        %v3918 = vpop.f32.mrb[0].mxu0
        %v3919 = vpop.f32.mrb[0].mxu0
        %v3920 = vadd.f32 0.0, %v3919
        %v3921 = vpop.f32.mrb[0].mxu0
        %3922 = vmatprep.mubr.bf16.mxu0 0
        %3923 = vmatmul.mubr.bf16.gmra.mrb[0].mxu0 %v3660
        %v3924 = vpop.f32.mrb[0].mxu0
        %v3925 = vadd.f32 0.0, %v3924
        %v3926 = vpop.f32.mrb[0].mxu0
        %v3927 = vpop.f32.mrb[0].mxu0
        %v3928 = vpop.f32.mrb[0].mxu0
        %3929 = vdwg.mxu0
        %v3930 = vadd.f32 %v3289, %v3765
        %v3931 = vadd.f32 %v3290, %v3768
        %v3932 = vadd.f32 %v3291, %v3773
        %v3933 = vadd.f32 %v3292, %v3776
        %v3934 = vadd.f32 %v3293, %v3781
        %v3935 = vadd.f32 %v3294, %v3784
        %v3936 = vadd.f32 %v3295, %v3789
        %v3937 = vadd.f32 %v3296, %v3792
        %v3938 = vadd.f32 %v3297, %v3797
        %v3939 = vadd.f32 %v3298, %v3800
        %v3940 = vadd.f32 %v3299, %v3805
        %v3941 = vadd.f32 %v3300, %v3808
        %v3942 = vadd.f32 %v3301, %v3813
        %v3943 = vadd.f32 %v3302, %v3816
        %v3944 = vadd.f32 %v3303, %v3821
        %v3945 = vadd.f32 %v3304, %v3824
        %v3946 = vadd.f32 %v3305, %v3829
        %v3947 = vadd.f32 %v3306, %v3832
        %v3948 = vadd.f32 %v3307, %v3837
        %v3949 = vadd.f32 %v3308, %v3840
        %v3950 = vadd.f32 %v3309, %v3845
        %v3951 = vadd.f32 %v3310, %v3848
        %v3952 = vadd.f32 %v3311, %v3853
        %v3953 = vadd.f32 %v3312, %v3856
        %v3954 = vadd.f32 %v3313, %v3861
        %v3955 = vadd.f32 %v3314, %v3864
        %v3956 = vadd.f32 %v3315, %v3869
        %v3957 = vadd.f32 %v3316, %v3872
        %v3958 = vadd.f32 %v3317, %v3877
        %v3959 = vadd.f32 %v3318, %v3880
        %v3960 = vadd.f32 %v3319, %v3885
        %v3961 = vadd.f32 %v3320, %v3888
        %v3962 = vadd.f32 %v3321, %v3893
        %v3963 = vadd.f32 %v3322, %v3896
        %v3964 = vadd.f32 %v3323, %v3901
        %v3965 = vadd.f32 %v3324, %v3904
        %v3966 = vadd.f32 %v3325, %v3909
        %v3967 = vadd.f32 %v3326, %v3912
        %v3968 = vadd.f32 %v3327, %v3917
        %v3969 = vadd.f32 %v3328, %v3920
        %v3970 = vadd.f32 %v3329, %v3925
        %v3971 = vld [vmem:[%s262 + $0x14] sm:$0xe]
        %s3972 = scalar_lea.vmem [#allocation6], 448
        %v3973 = vld [vmem:[%s3972] sm:$0xf]
        %v3974 = vld [vmem:[%s3972 + $0x4] sm:$0xf]
        %v3975 = vld [vmem:[%s3972 + $0x8] sm:$0xf]
        %v3976 = vld [vmem:[%s3972 + $0xc] sm:$0xf]
        %v3977 = vld [vmem:[%s3972 + $0x10] sm:$0xf]
        %v3978 = vld [vmem:[%s3972 + $0x14] sm:$0xf]
        %v3979 = vld [vmem:[%s3972 + $0x18] sm:$0xf]
        %v3980 = vld [vmem:[%s3972 + $0x1c] sm:$0xf]
        %v3981 = vld [vmem:[%s3972 + $0x20] sm:$0xf]
        %v3982 = vld [vmem:[%s3972 + $0x24] sm:$0xf]
        %v3983 = vld [vmem:[%s3972 + $0x28] sm:$0xf]
        %v3984 = vld [vmem:[%s3972 + $0x2c] sm:$0xf]
        %v3985 = vld [vmem:[%s3972 + $0x30] sm:$0xf]
        %v3986 = vld [vmem:[%s3972 + $0x34] sm:$0xf]
        %v3987 = vld [vmem:[%s3972 + $0x38] sm:$0xf]
        %v3988 = vld [vmem:[%s3972 + $0x3c] sm:$0xf]
        %v3990 = vunpack.c.l.b16 %v3971
        %v3991 = vpack.c.b16 %v3432, %v3990
        %vm3992 = vcmask 1046528
        %v3993 = vrot.slane %v3991, 1
        %v3994 = vrot.slane %v3474, 1
        %v3995 = vsel %vm3992, %v3993, %v3994
        %v3996 = vrot.slane %v3475, 1
        %v3997 = vsel %vm3992, %v3994, %v3996
        %v3998 = vrot.slane %v3476, 1
        %v3999 = vsel %vm3992, %v3996, %v3998
        %v4000 = vrot.slane %v3477, 1
        %v4001 = vsel %vm3992, %v3998, %v4000
        %v4002 = vrot.slane %v3478, 1
        %v4003 = vsel %vm3992, %v4000, %v4002
        %v4004 = vrot.slane %v3479, 1
        %v4005 = vsel %vm3992, %v4002, %v4004
        %v4006 = vrot.slane %v3480, 1
        %v4007 = vsel %vm3992, %v4004, %v4006
        %v4008 = vrot.slane %v3481, 1
        %v4009 = vsel %vm3992, %v4006, %v4008
        %v4010 = vrot.slane %v3482, 1
        %v4011 = vsel %vm3992, %v4008, %v4010
        %v4012 = vrot.slane %v3483, 1
        %v4013 = vsel %vm3992, %v4010, %v4012
        %v4014 = vrot.slane %v3484, 1
        %v4015 = vsel %vm3992, %v4012, %v4014
        %v4016 = vrot.slane %v3485, 1
        %v4017 = vsel %vm3992, %v4014, %v4016
        %v4018 = vrot.slane %v3486, 1
        %v4019 = vsel %vm3992, %v4016, %v4018
        %v4020 = vrot.slane %v3487, 1
        %v4021 = vsel %vm3992, %v4018, %v4020
        %v4022 = vrot.slane %v3488, 1
        %v4023 = vsel %vm3992, %v4020, %v4022
        %v4024 = vrot.slane %v3489, 1
        %v4025 = vsel %vm3992, %v4022, %v4024
        %v4026 = vrot.slane %v3490, 1
        %v4027 = vsel %vm3992, %v4024, %v4026
        %v4028 = vrot.slane %v3491, 1
        %v4029 = vsel %vm3992, %v4026, %v4028
        %v4030 = vrot.slane %v3492, 1
        %v4031 = vsel %vm3992, %v4028, %v4030
        %v4032 = vrot.slane %v3493, 1
        %v4033 = vsel %vm3992, %v4030, %v4032
        %v4071 = vunpack.c.l.b16 %v3973
        %v4072 = vunpack.c.l.b16 %v3974
        %v4073 = vunpack.c.l.b16 %v3975
        %v4074 = vunpack.c.l.b16 %v3976
        %v4075 = vunpack.c.l.b16 %v3977
        %v4076 = vunpack.c.l.b16 %v3978
        %v4077 = vunpack.c.l.b16 %v3979
        %v4078 = vunpack.c.l.b16 %v3980
        %v4079 = vunpack.c.l.b16 %v3981
        %v4080 = vunpack.c.l.b16 %v3982
        %v4081 = vunpack.c.l.b16 %v3983
        %v4082 = vunpack.c.l.b16 %v3984
        %v4083 = vunpack.c.l.b16 %v3985
        %v4084 = vunpack.c.l.b16 %v3986
        %v4085 = vunpack.c.l.b16 %v3987
        %v4086 = vunpack.c.l.b16 %v3988
        %v4087 = vpack.c.b16 %v4072, %v4071
        %v4088 = vpack.c.b16 %v4074, %v4073
        %v4089 = vpack.c.b16 %v4076, %v4075
        %v4090 = vpack.c.b16 %v4078, %v4077
        %v4091 = vpack.c.b16 %v4080, %v4079
        %v4092 = vpack.c.b16 %v4082, %v4081
        %v4093 = vpack.c.b16 %v4084, %v4083
        %v4094 = vpack.c.b16 %v4086, %v4085
        %4103 = vmatprep.subr.bf16.mxu0 0
        %4104 = vmatpush1.bf16.msra.mxu0 %v4087
        %4105 = vmatprep.subr.bf16.mxu0 0
        %4106 = vmatpush1.bf16.msra.mxu0 %v4088
        %4107 = vmatprep.subr.bf16.mxu0 0
        %4108 = vmatpush1.bf16.msra.mxu0 %v4089
        %4109 = vmatprep.subr.bf16.mxu0 0
        %4110 = vmatpush1.bf16.msra.mxu0 %v4090
        %4111 = vmatprep.subr.bf16.mxu0 0
        %4112 = vmatpush1.bf16.msra.mxu0 %v4091
        %4113 = vmatprep.subr.bf16.mxu0 0
        %4114 = vmatpush1.bf16.msra.mxu0 %v4092
        %4115 = vmatprep.subr.bf16.mxu0 0
        %4116 = vmatpush1.bf16.msra.mxu0 %v4093
        %4117 = vmatprep.subr.bf16.mxu0 0
        %4118 = vmatpush1.bf16.msra.mxu0 %v4094
        %4119 = vmatprep.subr.bf16.mxu0 0
        %4120 = vmatpush1.bf16.msra.mxu0 0
        %4121 = vmatprep.subr.bf16.mxu0 0
        %4122 = vmatpush1.bf16.msra.mxu0 0
        %4123 = vmatprep.subr.bf16.mxu0 0
        %4124 = vmatpush1.bf16.msra.mxu0 0
        %4125 = vmatprep.subr.bf16.mxu0 0
        %4126 = vmatpush1.bf16.msra.mxu0 0
        %4127 = vmatprep.subr.bf16.mxu0 0
        %4128 = vmatpush1.bf16.msra.mxu0 0
        %4129 = vmatprep.subr.bf16.mxu0 0
        %4130 = vmatpush1.bf16.msra.mxu0 0
        %4131 = vmatprep.subr.bf16.mxu0 0
        %4132 = vmatpush1.bf16.msra.mxu0 0
        %4133 = vmatprep.subr.bf16.mxu0 0
        %4134 = vmatpush1.bf16.msra.mxu0 0
        %4135 = vmatprep.mubr.bf16.mxu0 0
        %4136 = vmatmul.mubr.bf16.gmra.mrb[0].mxu0 %v3995
        %v4137 = vpop.f32.mrb[0].mxu0
        %v4138 = vadd.f32 0.0, %v4137
        %v4139 = vpop.f32.mrb[0].mxu0
        %v4140 = vpop.f32.mrb[0].mxu0
        %v4141 = vadd.f32 0.0, %v4140
        %v4142 = vpop.f32.mrb[0].mxu0
        %4143 = vmatprep.mubr.bf16.mxu0 0
        %4144 = vmatmul.mubr.bf16.gmra.mrb[0].mxu0 %v3997
        %v4145 = vpop.f32.mrb[0].mxu0
        %v4146 = vadd.f32 0.0, %v4145
        %v4147 = vpop.f32.mrb[0].mxu0
        %v4148 = vpop.f32.mrb[0].mxu0
        %v4149 = vadd.f32 0.0, %v4148
        %v4150 = vpop.f32.mrb[0].mxu0
        %4151 = vmatprep.mubr.bf16.mxu0 0
        %4152 = vmatmul.mubr.bf16.gmra.mrb[0].mxu0 %v3999
        %v4153 = vpop.f32.mrb[0].mxu0
        %v4154 = vadd.f32 0.0, %v4153
        %v4155 = vpop.f32.mrb[0].mxu0
        %v4156 = vpop.f32.mrb[0].mxu0
        %v4157 = vadd.f32 0.0, %v4156
        %v4158 = vpop.f32.mrb[0].mxu0
        %4159 = vmatprep.mubr.bf16.mxu0 0
        %4160 = vmatmul.mubr.bf16.gmra.mrb[0].mxu0 %v4001
        %v4161 = vpop.f32.mrb[0].mxu0
        %v4162 = vadd.f32 0.0, %v4161
        %v4163 = vpop.f32.mrb[0].mxu0
        %v4164 = vpop.f32.mrb[0].mxu0
        %v4165 = vadd.f32 0.0, %v4164
        %v4166 = vpop.f32.mrb[0].mxu0
        %4167 = vmatprep.mubr.bf16.mxu0 0
        %4168 = vmatmul.mubr.bf16.gmra.mrb[0].mxu0 %v4003
        %v4169 = vpop.f32.mrb[0].mxu0
        %v4170 = vadd.f32 0.0, %v4169
        %v4171 = vpop.f32.mrb[0].mxu0
        %v4172 = vpop.f32.mrb[0].mxu0
        %v4173 = vadd.f32 0.0, %v4172
        %v4174 = vpop.f32.mrb[0].mxu0
        %4175 = vmatprep.mubr.bf16.mxu0 0
        %4176 = vmatmul.mubr.bf16.gmra.mrb[0].mxu0 %v4005
        %v4177 = vpop.f32.mrb[0].mxu0
        %v4178 = vadd.f32 0.0, %v4177
        %v4179 = vpop.f32.mrb[0].mxu0
        %v4180 = vpop.f32.mrb[0].mxu0
        %v4181 = vadd.f32 0.0, %v4180
        %v4182 = vpop.f32.mrb[0].mxu0
        %4183 = vmatprep.mubr.bf16.mxu0 0
        %4184 = vmatmul.mubr.bf16.gmra.mrb[0].mxu0 %v4007
        %v4185 = vpop.f32.mrb[0].mxu0
        %v4186 = vadd.f32 0.0, %v4185
        %v4187 = vpop.f32.mrb[0].mxu0
        %v4188 = vpop.f32.mrb[0].mxu0
        %v4189 = vadd.f32 0.0, %v4188
        %v4190 = vpop.f32.mrb[0].mxu0
        %4191 = vmatprep.mubr.bf16.mxu0 0
        %4192 = vmatmul.mubr.bf16.gmra.mrb[0].mxu0 %v4009
        %v4193 = vpop.f32.mrb[0].mxu0
        %v4194 = vadd.f32 0.0, %v4193
        %v4195 = vpop.f32.mrb[0].mxu0
        %v4196 = vpop.f32.mrb[0].mxu0
        %v4197 = vadd.f32 0.0, %v4196
        %v4198 = vpop.f32.mrb[0].mxu0
        %4199 = vmatprep.mubr.bf16.mxu0 0
        %4200 = vmatmul.mubr.bf16.gmra.mrb[0].mxu0 %v4011
        %v4201 = vpop.f32.mrb[0].mxu0
        %v4202 = vadd.f32 0.0, %v4201
        %v4203 = vpop.f32.mrb[0].mxu0
        %v4204 = vpop.f32.mrb[0].mxu0
        %v4205 = vadd.f32 0.0, %v4204
        %v4206 = vpop.f32.mrb[0].mxu0
        %4207 = vmatprep.mubr.bf16.mxu0 0
        %4208 = vmatmul.mubr.bf16.gmra.mrb[0].mxu0 %v4013
        %v4209 = vpop.f32.mrb[0].mxu0
        %v4210 = vadd.f32 0.0, %v4209
        %v4211 = vpop.f32.mrb[0].mxu0
        %v4212 = vpop.f32.mrb[0].mxu0
        %v4213 = vadd.f32 0.0, %v4212
        %v4214 = vpop.f32.mrb[0].mxu0
        %4215 = vmatprep.mubr.bf16.mxu0 0
        %4216 = vmatmul.mubr.bf16.gmra.mrb[0].mxu0 %v4015
        %v4217 = vpop.f32.mrb[0].mxu0
        %v4218 = vadd.f32 0.0, %v4217
        %v4219 = vpop.f32.mrb[0].mxu0
        %v4220 = vpop.f32.mrb[0].mxu0
        %v4221 = vadd.f32 0.0, %v4220
        %v4222 = vpop.f32.mrb[0].mxu0
        %4223 = vmatprep.mubr.bf16.mxu0 0
        %4224 = vmatmul.mubr.bf16.gmra.mrb[0].mxu0 %v4017
        %v4225 = vpop.f32.mrb[0].mxu0
        %v4226 = vadd.f32 0.0, %v4225
        %v4227 = vpop.f32.mrb[0].mxu0
        %v4228 = vpop.f32.mrb[0].mxu0
        %v4229 = vadd.f32 0.0, %v4228
        %v4230 = vpop.f32.mrb[0].mxu0
        %4231 = vmatprep.mubr.bf16.mxu0 0
        %4232 = vmatmul.mubr.bf16.gmra.mrb[0].mxu0 %v4019
        %v4233 = vpop.f32.mrb[0].mxu0
        %v4234 = vadd.f32 0.0, %v4233
        %v4235 = vpop.f32.mrb[0].mxu0
        %v4236 = vpop.f32.mrb[0].mxu0
        %v4237 = vadd.f32 0.0, %v4236
        %v4238 = vpop.f32.mrb[0].mxu0
        %4239 = vmatprep.mubr.bf16.mxu0 0
        %4240 = vmatmul.mubr.bf16.gmra.mrb[0].mxu0 %v4021
        %v4241 = vpop.f32.mrb[0].mxu0
        %v4242 = vadd.f32 0.0, %v4241
        %v4243 = vpop.f32.mrb[0].mxu0
        %v4244 = vpop.f32.mrb[0].mxu0
        %v4245 = vadd.f32 0.0, %v4244
        %v4246 = vpop.f32.mrb[0].mxu0
        %4247 = vmatprep.mubr.bf16.mxu0 0
        %4248 = vmatmul.mubr.bf16.gmra.mrb[0].mxu0 %v4023
        %v4249 = vpop.f32.mrb[0].mxu0
        %v4250 = vadd.f32 0.0, %v4249
        %v4251 = vpop.f32.mrb[0].mxu0
        %v4252 = vpop.f32.mrb[0].mxu0
        %v4253 = vadd.f32 0.0, %v4252
        %v4254 = vpop.f32.mrb[0].mxu0
        %4255 = vmatprep.mubr.bf16.mxu0 0
        %4256 = vmatmul.mubr.bf16.gmra.mrb[0].mxu0 %v4025
        %v4257 = vpop.f32.mrb[0].mxu0
        %v4258 = vadd.f32 0.0, %v4257
        %v4259 = vpop.f32.mrb[0].mxu0
        %v4260 = vpop.f32.mrb[0].mxu0
        %v4261 = vadd.f32 0.0, %v4260
        %v4262 = vpop.f32.mrb[0].mxu0
        %4263 = vmatprep.mubr.bf16.mxu0 0
        %4264 = vmatmul.mubr.bf16.gmra.mrb[0].mxu0 %v4027
        %v4265 = vpop.f32.mrb[0].mxu0
        %v4266 = vadd.f32 0.0, %v4265
        %v4267 = vpop.f32.mrb[0].mxu0
        %v4268 = vpop.f32.mrb[0].mxu0
        %v4269 = vadd.f32 0.0, %v4268
        %v4270 = vpop.f32.mrb[0].mxu0
        %4271 = vmatprep.mubr.bf16.mxu0 0
        %4272 = vmatmul.mubr.bf16.gmra.mrb[0].mxu0 %v4029
        %v4273 = vpop.f32.mrb[0].mxu0
        %v4274 = vadd.f32 0.0, %v4273
        %v4275 = vpop.f32.mrb[0].mxu0
        %v4276 = vpop.f32.mrb[0].mxu0
        %v4277 = vadd.f32 0.0, %v4276
        %v4278 = vpop.f32.mrb[0].mxu0
        %4279 = vmatprep.mubr.bf16.mxu0 0
        %4280 = vmatmul.mubr.bf16.gmra.mrb[0].mxu0 %v4031
        %v4281 = vpop.f32.mrb[0].mxu0
        %v4282 = vadd.f32 0.0, %v4281
        %v4283 = vpop.f32.mrb[0].mxu0
        %v4284 = vpop.f32.mrb[0].mxu0
        %v4285 = vadd.f32 0.0, %v4284
        %v4286 = vpop.f32.mrb[0].mxu0
        %4287 = vmatprep.mubr.bf16.mxu0 0
        %4288 = vmatmul.mubr.bf16.gmra.mrb[0].mxu0 %v4033
        %v4289 = vpop.f32.mrb[0].mxu0
        %v4290 = vadd.f32 0.0, %v4289
        %v4291 = vpop.f32.mrb[0].mxu0
        %v4292 = vpop.f32.mrb[0].mxu0
        %v4293 = vadd.f32 0.0, %v4292
        %v4294 = vpop.f32.mrb[0].mxu0
        %4295 = vmatprep.mubr.bf16.mxu0 0
        %4296 = vmatmul.mubr.bf16.gmra.mrb[0].mxu0 %v4032
        %v4297 = vpop.f32.mrb[0].mxu0
        %v4298 = vadd.f32 0.0, %v4297
        %v4299 = vpop.f32.mrb[0].mxu0
        %v4300 = vpop.f32.mrb[0].mxu0
        %v4301 = vpop.f32.mrb[0].mxu0
        %4302 = vdwg.mxu0
        %v4303 = vadd.f32 %v3930, %v4138
        %v4304 = vadd.f32 %v3931, %v4141
        %v4305 = vadd.f32 %v3932, %v4146
        %v4306 = vadd.f32 %v3933, %v4149
        %v4307 = vadd.f32 %v3934, %v4154
        %v4308 = vadd.f32 %v3935, %v4157
        %v4309 = vadd.f32 %v3936, %v4162
        %v4310 = vadd.f32 %v3937, %v4165
        %v4311 = vadd.f32 %v3938, %v4170
        %v4312 = vadd.f32 %v3939, %v4173
        %v4313 = vadd.f32 %v3940, %v4178
        %v4314 = vadd.f32 %v3941, %v4181
        %v4315 = vadd.f32 %v3942, %v4186
        %v4316 = vadd.f32 %v3943, %v4189
        %v4317 = vadd.f32 %v3944, %v4194
        %v4318 = vadd.f32 %v3945, %v4197
        %v4319 = vadd.f32 %v3946, %v4202
        %v4320 = vadd.f32 %v3947, %v4205
        %v4321 = vadd.f32 %v3948, %v4210
        %v4322 = vadd.f32 %v3949, %v4213
        %v4323 = vadd.f32 %v3950, %v4218
        %v4324 = vadd.f32 %v3951, %v4221
        %v4325 = vadd.f32 %v3952, %v4226
        %v4326 = vadd.f32 %v3953, %v4229
        %v4327 = vadd.f32 %v3954, %v4234
        %v4328 = vadd.f32 %v3955, %v4237
        %v4329 = vadd.f32 %v3956, %v4242
        %v4330 = vadd.f32 %v3957, %v4245
        %v4331 = vadd.f32 %v3958, %v4250
        %v4332 = vadd.f32 %v3959, %v4253
        %v4333 = vadd.f32 %v3960, %v4258
        %v4334 = vadd.f32 %v3961, %v4261
        %v4335 = vadd.f32 %v3962, %v4266
        %v4336 = vadd.f32 %v3963, %v4269
        %v4337 = vadd.f32 %v3964, %v4274
        %v4338 = vadd.f32 %v3965, %v4277
        %v4339 = vadd.f32 %v3966, %v4282
        %v4340 = vadd.f32 %v3967, %v4285
        %v4341 = vadd.f32 %v3968, %v4290
        %v4342 = vadd.f32 %v3969, %v4293
        %v4343 = vadd.f32 %v3970, %v4298
        %v4344 = vld [vmem:[%s262 + $0xb8] sm:$0x3]
        %s4345 = scalar_lea.vmem [#allocation6], 512
        %v4346 = vld [vmem:[%s4345] sm:$0xf]
        %v4347 = vld [vmem:[%s4345 + $0x4] sm:$0xf]
        %v4348 = vld [vmem:[%s4345 + $0x8] sm:$0xf]
        %v4349 = vld [vmem:[%s4345 + $0xc] sm:$0xf]
        %v4350 = vld [vmem:[%s4345 + $0x10] sm:$0xf]
        %v4351 = vld [vmem:[%s4345 + $0x14] sm:$0xf]
        %v4352 = vld [vmem:[%s4345 + $0x18] sm:$0xf]
        %v4353 = vld [vmem:[%s4345 + $0x1c] sm:$0xf]
        %v4354 = vld [vmem:[%s4345 + $0x20] sm:$0xf]
        %v4355 = vld [vmem:[%s4345 + $0x24] sm:$0xf]
        %v4356 = vld [vmem:[%s4345 + $0x28] sm:$0xf]
        %v4357 = vld [vmem:[%s4345 + $0x2c] sm:$0xf]
        %v4358 = vld [vmem:[%s4345 + $0x30] sm:$0xf]
        %v4359 = vld [vmem:[%s4345 + $0x34] sm:$0xf]
        %v4360 = vld [vmem:[%s4345 + $0x38] sm:$0xf]
        %v4361 = vld [vmem:[%s4345 + $0x3c] sm:$0xf]
        %v4363 = vunpack.c.l.b16 %v4344
        %v4364 = vpack.c.b16 %v4363, %v3471
        %vm4365 = vsmask.f32 6400
        %v4367 = vshrl.u32 %v3991, 16
        %v4369 = vrot.slane %v4367, 1
        %v4370 = vshll.u32 %v3991, 16
        %v4372 = vrot.slane %v4370, 2
        %v4373 = vor.u32 %v4369, %v4372
        %v4374 = vrot.slane %v3506, 1
        %v4375 = vrot.slane %v3502, 2
        %v4376 = vor.u32 %v4374, %v4375
        %v4377 = vsel %vm4365, %v4373, %v4376
        %v4378 = vrot.slane %v3514, 1
        %v4379 = vrot.slane %v3510, 2
        %v4380 = vor.u32 %v4378, %v4379
        %v4381 = vsel %vm4365, %v4376, %v4380
        %v4382 = vrot.slane %v3522, 1
        %v4383 = vrot.slane %v3518, 2
        %v4384 = vor.u32 %v4382, %v4383
        %v4385 = vsel %vm4365, %v4380, %v4384
        %v4386 = vrot.slane %v3530, 1
        %v4387 = vrot.slane %v3526, 2
        %v4388 = vor.u32 %v4386, %v4387
        %v4389 = vsel %vm4365, %v4384, %v4388
        %v4390 = vrot.slane %v3538, 1
        %v4391 = vrot.slane %v3534, 2
        %v4392 = vor.u32 %v4390, %v4391
        %v4393 = vsel %vm4365, %v4388, %v4392
        %v4394 = vrot.slane %v3546, 1
        %v4395 = vrot.slane %v3542, 2
        %v4396 = vor.u32 %v4394, %v4395
        %v4397 = vsel %vm4365, %v4392, %v4396
        %v4398 = vrot.slane %v3554, 1
        %v4399 = vrot.slane %v3550, 2
        %v4400 = vor.u32 %v4398, %v4399
        %v4401 = vsel %vm4365, %v4396, %v4400
        %v4402 = vrot.slane %v3562, 1
        %v4403 = vrot.slane %v3558, 2
        %v4404 = vor.u32 %v4402, %v4403
        %v4405 = vsel %vm4365, %v4400, %v4404
        %v4406 = vrot.slane %v3570, 1
        %v4407 = vrot.slane %v3566, 2
        %v4408 = vor.u32 %v4406, %v4407
        %v4409 = vsel %vm4365, %v4404, %v4408
        %v4410 = vrot.slane %v3578, 1
        %v4411 = vrot.slane %v3574, 2
        %v4412 = vor.u32 %v4410, %v4411
        %v4413 = vsel %vm4365, %v4408, %v4412
        %v4414 = vrot.slane %v3586, 1
        %v4415 = vrot.slane %v3582, 2
        %v4416 = vor.u32 %v4414, %v4415
        %v4417 = vsel %vm4365, %v4412, %v4416
        %v4418 = vrot.slane %v3594, 1
        %v4419 = vrot.slane %v3590, 2
        %v4420 = vor.u32 %v4418, %v4419
        %v4421 = vsel %vm4365, %v4416, %v4420
        %v4422 = vrot.slane %v3602, 1
        %v4423 = vrot.slane %v3598, 2
        %v4424 = vor.u32 %v4422, %v4423
        %v4425 = vsel %vm4365, %v4420, %v4424
        %v4426 = vrot.slane %v3610, 1
        %v4427 = vrot.slane %v3606, 2
        %v4428 = vor.u32 %v4426, %v4427
        %v4429 = vsel %vm4365, %v4424, %v4428
        %v4430 = vrot.slane %v3618, 1
        %v4431 = vrot.slane %v3614, 2
        %v4432 = vor.u32 %v4430, %v4431
        %v4433 = vsel %vm4365, %v4428, %v4432
        %v4434 = vrot.slane %v3626, 1
        %v4435 = vrot.slane %v3622, 2
        %v4436 = vor.u32 %v4434, %v4435
        %v4437 = vsel %vm4365, %v4432, %v4436
        %v4438 = vrot.slane %v3634, 1
        %v4439 = vrot.slane %v3630, 2
        %v4440 = vor.u32 %v4438, %v4439
        %v4441 = vsel %vm4365, %v4436, %v4440
        %v4442 = vrot.slane %v3642, 1
        %v4443 = vrot.slane %v3638, 2
        %v4444 = vor.u32 %v4442, %v4443
        %v4445 = vsel %vm4365, %v4440, %v4444
        %v4446 = vrot.slane %v3650, 1
        %v4447 = vrot.slane %v3646, 2
        %v4448 = vor.u32 %v4446, %v4447
        %v4449 = vsel %vm4365, %v4444, %v4448
        %v4451 = vshrl.u32 %v4364, 16
        %v4453 = vrot.slane %v4451, 1
        %v4454 = vshll.u32 %v4364, 16
        %v4456 = vrot.slane %v4454, 2
        %v4457 = vor.u32 %v4453, %v4456
        %v4458 = vsel %vm4365, %v4448, %v4457
        %v4496 = vunpack.c.l.b16 %v4346
        %v4497 = vunpack.c.l.b16 %v4347
        %v4498 = vunpack.c.l.b16 %v4348
        %v4499 = vunpack.c.l.b16 %v4349
        %v4500 = vunpack.c.l.b16 %v4350
        %v4501 = vunpack.c.l.b16 %v4351
        %v4502 = vunpack.c.l.b16 %v4352
        %v4503 = vunpack.c.l.b16 %v4353
        %v4504 = vunpack.c.l.b16 %v4354
        %v4505 = vunpack.c.l.b16 %v4355
        %v4506 = vunpack.c.l.b16 %v4356
        %v4507 = vunpack.c.l.b16 %v4357
        %v4508 = vunpack.c.l.b16 %v4358
        %v4509 = vunpack.c.l.b16 %v4359
        %v4510 = vunpack.c.l.b16 %v4360
        %v4511 = vunpack.c.l.b16 %v4361
        %v4512 = vpack.c.b16 %v4497, %v4496
        %v4513 = vpack.c.b16 %v4499, %v4498
        %v4514 = vpack.c.b16 %v4501, %v4500
        %v4515 = vpack.c.b16 %v4503, %v4502
        %v4516 = vpack.c.b16 %v4505, %v4504
        %v4517 = vpack.c.b16 %v4507, %v4506
        %v4518 = vpack.c.b16 %v4509, %v4508
        %v4519 = vpack.c.b16 %v4511, %v4510
        %4528 = vmatprep.subr.bf16.mxu0 0
        %4529 = vmatpush1.bf16.msra.mxu0 %v4512
        %4530 = vmatprep.subr.bf16.mxu0 0
        %4531 = vmatpush1.bf16.msra.mxu0 %v4513
        %4532 = vmatprep.subr.bf16.mxu0 0
        %4533 = vmatpush1.bf16.msra.mxu0 %v4514
        %4534 = vmatprep.subr.bf16.mxu0 0
        %4535 = vmatpush1.bf16.msra.mxu0 %v4515
        %4536 = vmatprep.subr.bf16.mxu0 0
        %4537 = vmatpush1.bf16.msra.mxu0 %v4516
        %4538 = vmatprep.subr.bf16.mxu0 0
        %4539 = vmatpush1.bf16.msra.mxu0 %v4517
        %4540 = vmatprep.subr.bf16.mxu0 0
        %4541 = vmatpush1.bf16.msra.mxu0 %v4518
        %4542 = vmatprep.subr.bf16.mxu0 0
        %4543 = vmatpush1.bf16.msra.mxu0 %v4519
        %4544 = vmatprep.subr.bf16.mxu0 0
        %4545 = vmatpush1.bf16.msra.mxu0 0
        %4546 = vmatprep.subr.bf16.mxu0 0
        %4547 = vmatpush1.bf16.msra.mxu0 0
        %4548 = vmatprep.subr.bf16.mxu0 0
        %4549 = vmatpush1.bf16.msra.mxu0 0
        %4550 = vmatprep.subr.bf16.mxu0 0
        %4551 = vmatpush1.bf16.msra.mxu0 0
        %4552 = vmatprep.subr.bf16.mxu0 0
        %4553 = vmatpush1.bf16.msra.mxu0 0
        %4554 = vmatprep.subr.bf16.mxu0 0
        %4555 = vmatpush1.bf16.msra.mxu0 0
        %4556 = vmatprep.subr.bf16.mxu0 0
        %4557 = vmatpush1.bf16.msra.mxu0 0
        %4558 = vmatprep.subr.bf16.mxu0 0
        %4559 = vmatpush1.bf16.msra.mxu0 0
        %4560 = vmatprep.mubr.bf16.mxu0 0
        %4561 = vmatmul.mubr.bf16.gmra.mrb[0].mxu0 %v4377
        %v4562 = vpop.f32.mrb[0].mxu0
        %v4563 = vadd.f32 0.0, %v4562
        %v4564 = vpop.f32.mrb[0].mxu0
        %v4565 = vpop.f32.mrb[0].mxu0
        %v4566 = vadd.f32 0.0, %v4565
        %v4567 = vpop.f32.mrb[0].mxu0
        %4568 = vmatprep.mubr.bf16.mxu0 0
        %4569 = vmatmul.mubr.bf16.gmra.mrb[0].mxu0 %v4381
        %v4570 = vpop.f32.mrb[0].mxu0
        %v4571 = vadd.f32 0.0, %v4570
        %v4572 = vpop.f32.mrb[0].mxu0
        %v4573 = vpop.f32.mrb[0].mxu0
        %v4574 = vadd.f32 0.0, %v4573
        %v4575 = vpop.f32.mrb[0].mxu0
        %4576 = vmatprep.mubr.bf16.mxu0 0
        %4577 = vmatmul.mubr.bf16.gmra.mrb[0].mxu0 %v4385
        %v4578 = vpop.f32.mrb[0].mxu0
        %v4579 = vadd.f32 0.0, %v4578
        %v4580 = vpop.f32.mrb[0].mxu0
        %v4581 = vpop.f32.mrb[0].mxu0
        %v4582 = vadd.f32 0.0, %v4581
        %v4583 = vpop.f32.mrb[0].mxu0
        %4584 = vmatprep.mubr.bf16.mxu0 0
        %4585 = vmatmul.mubr.bf16.gmra.mrb[0].mxu0 %v4389
        %v4586 = vpop.f32.mrb[0].mxu0
        %v4587 = vadd.f32 0.0, %v4586
        %v4588 = vpop.f32.mrb[0].mxu0
        %v4589 = vpop.f32.mrb[0].mxu0
        %v4590 = vadd.f32 0.0, %v4589
        %v4591 = vpop.f32.mrb[0].mxu0
        %4592 = vmatprep.mubr.bf16.mxu0 0
        %4593 = vmatmul.mubr.bf16.gmra.mrb[0].mxu0 %v4393
        %v4594 = vpop.f32.mrb[0].mxu0
        %v4595 = vadd.f32 0.0, %v4594
        %v4596 = vpop.f32.mrb[0].mxu0
        %v4597 = vpop.f32.mrb[0].mxu0
        %v4598 = vadd.f32 0.0, %v4597
        %v4599 = vpop.f32.mrb[0].mxu0
        %4600 = vmatprep.mubr.bf16.mxu0 0
        %4601 = vmatmul.mubr.bf16.gmra.mrb[0].mxu0 %v4397
        %v4602 = vpop.f32.mrb[0].mxu0
        %v4603 = vadd.f32 0.0, %v4602
        %v4604 = vpop.f32.mrb[0].mxu0
        %v4605 = vpop.f32.mrb[0].mxu0
        %v4606 = vadd.f32 0.0, %v4605
        %v4607 = vpop.f32.mrb[0].mxu0
        %4608 = vmatprep.mubr.bf16.mxu0 0
        %4609 = vmatmul.mubr.bf16.gmra.mrb[0].mxu0 %v4401
        %v4610 = vpop.f32.mrb[0].mxu0
        %v4611 = vadd.f32 0.0, %v4610
        %v4612 = vpop.f32.mrb[0].mxu0
        %v4613 = vpop.f32.mrb[0].mxu0
        %v4614 = vadd.f32 0.0, %v4613
        %v4615 = vpop.f32.mrb[0].mxu0
        %4616 = vmatprep.mubr.bf16.mxu0 0
        %4617 = vmatmul.mubr.bf16.gmra.mrb[0].mxu0 %v4405
        %v4618 = vpop.f32.mrb[0].mxu0
        %v4619 = vadd.f32 0.0, %v4618
        %v4620 = vpop.f32.mrb[0].mxu0
        %v4621 = vpop.f32.mrb[0].mxu0
        %v4622 = vadd.f32 0.0, %v4621
        %v4623 = vpop.f32.mrb[0].mxu0
        %4624 = vmatprep.mubr.bf16.mxu0 0
        %4625 = vmatmul.mubr.bf16.gmra.mrb[0].mxu0 %v4409
        %v4626 = vpop.f32.mrb[0].mxu0
        %v4627 = vadd.f32 0.0, %v4626
        %v4628 = vpop.f32.mrb[0].mxu0
        %v4629 = vpop.f32.mrb[0].mxu0
        %v4630 = vadd.f32 0.0, %v4629
        %v4631 = vpop.f32.mrb[0].mxu0
        %4632 = vmatprep.mubr.bf16.mxu0 0
        %4633 = vmatmul.mubr.bf16.gmra.mrb[0].mxu0 %v4413
        %v4634 = vpop.f32.mrb[0].mxu0
        %v4635 = vadd.f32 0.0, %v4634
        %v4636 = vpop.f32.mrb[0].mxu0
        %v4637 = vpop.f32.mrb[0].mxu0
        %v4638 = vadd.f32 0.0, %v4637
        %v4639 = vpop.f32.mrb[0].mxu0
        %4640 = vmatprep.mubr.bf16.mxu0 0
        %4641 = vmatmul.mubr.bf16.gmra.mrb[0].mxu0 %v4417
        %v4642 = vpop.f32.mrb[0].mxu0
        %v4643 = vadd.f32 0.0, %v4642
        %v4644 = vpop.f32.mrb[0].mxu0
        %v4645 = vpop.f32.mrb[0].mxu0
        %v4646 = vadd.f32 0.0, %v4645
        %v4647 = vpop.f32.mrb[0].mxu0
        %4648 = vmatprep.mubr.bf16.mxu0 0
        %4649 = vmatmul.mubr.bf16.gmra.mrb[0].mxu0 %v4421
        %v4650 = vpop.f32.mrb[0].mxu0
        %v4651 = vadd.f32 0.0, %v4650
        %v4652 = vpop.f32.mrb[0].mxu0
        %v4653 = vpop.f32.mrb[0].mxu0
        %v4654 = vadd.f32 0.0, %v4653
        %v4655 = vpop.f32.mrb[0].mxu0
        %4656 = vmatprep.mubr.bf16.mxu0 0
        %4657 = vmatmul.mubr.bf16.gmra.mrb[0].mxu0 %v4425
        %v4658 = vpop.f32.mrb[0].mxu0
        %v4659 = vadd.f32 0.0, %v4658
        %v4660 = vpop.f32.mrb[0].mxu0
        %v4661 = vpop.f32.mrb[0].mxu0
        %v4662 = vadd.f32 0.0, %v4661
        %v4663 = vpop.f32.mrb[0].mxu0
        %4664 = vmatprep.mubr.bf16.mxu0 0
        %4665 = vmatmul.mubr.bf16.gmra.mrb[0].mxu0 %v4429
        %v4666 = vpop.f32.mrb[0].mxu0
        %v4667 = vadd.f32 0.0, %v4666
        %v4668 = vpop.f32.mrb[0].mxu0
        %v4669 = vpop.f32.mrb[0].mxu0
        %v4670 = vadd.f32 0.0, %v4669
        %v4671 = vpop.f32.mrb[0].mxu0
        %4672 = vmatprep.mubr.bf16.mxu0 0
        %4673 = vmatmul.mubr.bf16.gmra.mrb[0].mxu0 %v4433
        %v4674 = vpop.f32.mrb[0].mxu0
        %v4675 = vadd.f32 0.0, %v4674
        %v4676 = vpop.f32.mrb[0].mxu0
        %v4677 = vpop.f32.mrb[0].mxu0
        %v4678 = vadd.f32 0.0, %v4677
        %v4679 = vpop.f32.mrb[0].mxu0
        %4680 = vmatprep.mubr.bf16.mxu0 0
        %4681 = vmatmul.mubr.bf16.gmra.mrb[0].mxu0 %v4437
        %v4682 = vpop.f32.mrb[0].mxu0
        %v4683 = vadd.f32 0.0, %v4682
        %v4684 = vpop.f32.mrb[0].mxu0
        %v4685 = vpop.f32.mrb[0].mxu0
        %v4686 = vadd.f32 0.0, %v4685
        %v4687 = vpop.f32.mrb[0].mxu0
        %4688 = vmatprep.mubr.bf16.mxu0 0
        %4689 = vmatmul.mubr.bf16.gmra.mrb[0].mxu0 %v4441
        %v4690 = vpop.f32.mrb[0].mxu0
        %v4691 = vadd.f32 0.0, %v4690
        %v4692 = vpop.f32.mrb[0].mxu0
        %v4693 = vpop.f32.mrb[0].mxu0
        %v4694 = vadd.f32 0.0, %v4693
        %v4695 = vpop.f32.mrb[0].mxu0
        %4696 = vmatprep.mubr.bf16.mxu0 0
        %4697 = vmatmul.mubr.bf16.gmra.mrb[0].mxu0 %v4445
        %v4698 = vpop.f32.mrb[0].mxu0
        %v4699 = vadd.f32 0.0, %v4698
        %v4700 = vpop.f32.mrb[0].mxu0
        %v4701 = vpop.f32.mrb[0].mxu0
        %v4702 = vadd.f32 0.0, %v4701
        %v4703 = vpop.f32.mrb[0].mxu0
        %4704 = vmatprep.mubr.bf16.mxu0 0
        %4705 = vmatmul.mubr.bf16.gmra.mrb[0].mxu0 %v4449
        %v4706 = vpop.f32.mrb[0].mxu0
        %v4707 = vadd.f32 0.0, %v4706
        %v4708 = vpop.f32.mrb[0].mxu0
        %v4709 = vpop.f32.mrb[0].mxu0
        %v4710 = vadd.f32 0.0, %v4709
        %v4711 = vpop.f32.mrb[0].mxu0
        %4712 = vmatprep.mubr.bf16.mxu0 0
        %4713 = vmatmul.mubr.bf16.gmra.mrb[0].mxu0 %v4458
        %v4714 = vpop.f32.mrb[0].mxu0
        %v4715 = vadd.f32 0.0, %v4714
        %v4716 = vpop.f32.mrb[0].mxu0
        %v4717 = vpop.f32.mrb[0].mxu0
        %v4718 = vadd.f32 0.0, %v4717
        %v4719 = vpop.f32.mrb[0].mxu0
        %4720 = vmatprep.mubr.bf16.mxu0 0
        %4721 = vmatmul.mubr.bf16.gmra.mrb[0].mxu0 %v4457
        %v4722 = vpop.f32.mrb[0].mxu0
        %v4723 = vadd.f32 0.0, %v4722
        %v4724 = vpop.f32.mrb[0].mxu0
        %v4725 = vpop.f32.mrb[0].mxu0
        %v4726 = vpop.f32.mrb[0].mxu0
        %4727 = vdwg.mxu0
        %v4728 = vadd.f32 %v4303, %v4563
        %v4729 = vadd.f32 %v4304, %v4566
        %v4730 = vadd.f32 %v4305, %v4571
        %v4731 = vadd.f32 %v4306, %v4574
        %v4732 = vadd.f32 %v4307, %v4579
        %v4733 = vadd.f32 %v4308, %v4582
        %v4734 = vadd.f32 %v4309, %v4587
        %v4735 = vadd.f32 %v4310, %v4590
        %v4736 = vadd.f32 %v4311, %v4595
        %v4737 = vadd.f32 %v4312, %v4598
        %v4738 = vadd.f32 %v4313, %v4603
        %v4739 = vadd.f32 %v4314, %v4606
        %v4740 = vadd.f32 %v4315, %v4611
        %v4741 = vadd.f32 %v4316, %v4614
        %v4742 = vadd.f32 %v4317, %v4619
        %v4743 = vadd.f32 %v4318, %v4622
        %v4744 = vadd.f32 %v4319, %v4627
        %v4745 = vadd.f32 %v4320, %v4630
        %v4746 = vadd.f32 %v4321, %v4635
        %v4747 = vadd.f32 %v4322, %v4638
        %v4748 = vadd.f32 %v4323, %v4643
        %v4749 = vadd.f32 %v4324, %v4646
        %v4750 = vadd.f32 %v4325, %v4651
        %v4751 = vadd.f32 %v4326, %v4654
        %v4752 = vadd.f32 %v4327, %v4659
        %v4753 = vadd.f32 %v4328, %v4662
        %v4754 = vadd.f32 %v4329, %v4667
        %v4755 = vadd.f32 %v4330, %v4670
        %v4756 = vadd.f32 %v4331, %v4675
        %v4757 = vadd.f32 %v4332, %v4678
        %v4758 = vadd.f32 %v4333, %v4683
        %v4759 = vadd.f32 %v4334, %v4686
        %v4760 = vadd.f32 %v4335, %v4691
        %v4761 = vadd.f32 %v4336, %v4694
        %v4762 = vadd.f32 %v4337, %v4699
        %v4763 = vadd.f32 %v4338, %v4702
        %v4764 = vadd.f32 %v4339, %v4707
        %v4765 = vadd.f32 %v4340, %v4710
        %v4766 = vadd.f32 %v4341, %v4715
        %v4767 = vadd.f32 %v4342, %v4718
        %v4768 = vadd.f32 %v4343, %v4723
        %v4769 = vld [vmem:[%s3] sm:$0x1]
        %v4771 = vlaneseq
        %v4772 = vshrl.u32 %v4771, 7
        %v4773 = vsub.s32 0, %v4772
        %v4774 = vrot.slane %v4769, %v4773
        %v4776 = vadd.f32 %v4728, %v4774
        %v4777 = vadd.f32 %v4729, %v4774
        %v4778 = vadd.f32 %v4730, %v4774
        %v4779 = vadd.f32 %v4731, %v4774
        %v4780 = vadd.f32 %v4732, %v4774
        %v4781 = vadd.f32 %v4733, %v4774
        %v4782 = vadd.f32 %v4734, %v4774
        %v4783 = vadd.f32 %v4735, %v4774
        %v4784 = vadd.f32 %v4736, %v4774
        %v4785 = vadd.f32 %v4737, %v4774
        %v4786 = vadd.f32 %v4738, %v4774
        %v4787 = vadd.f32 %v4739, %v4774
        %v4788 = vadd.f32 %v4740, %v4774
        %v4789 = vadd.f32 %v4741, %v4774
        %v4790 = vadd.f32 %v4742, %v4774
        %v4791 = vadd.f32 %v4743, %v4774
        %v4792 = vadd.f32 %v4744, %v4774
        %v4793 = vadd.f32 %v4745, %v4774
        %v4794 = vadd.f32 %v4746, %v4774
        %v4795 = vadd.f32 %v4747, %v4774
        %v4796 = vadd.f32 %v4748, %v4774
        %v4797 = vadd.f32 %v4749, %v4774
        %v4798 = vadd.f32 %v4750, %v4774
        %v4799 = vadd.f32 %v4751, %v4774
        %v4800 = vadd.f32 %v4752, %v4774
        %v4801 = vadd.f32 %v4753, %v4774
        %v4802 = vadd.f32 %v4754, %v4774
        %v4803 = vadd.f32 %v4755, %v4774
        %v4804 = vadd.f32 %v4756, %v4774
        %v4805 = vadd.f32 %v4757, %v4774
        %v4806 = vadd.f32 %v4758, %v4774
        %v4807 = vadd.f32 %v4759, %v4774
        %v4808 = vadd.f32 %v4760, %v4774
        %v4809 = vadd.f32 %v4761, %v4774
        %v4810 = vadd.f32 %v4762, %v4774
        %v4811 = vadd.f32 %v4763, %v4774
        %v4812 = vadd.f32 %v4764, %v4774
        %v4813 = vadd.f32 %v4765, %v4774
        %v4814 = vadd.f32 %v4766, %v4774
        %v4815 = vadd.f32 %v4767, %v4774
        %v4816 = vadd.f32 %v4768, %v4774
        %v4817 = vmax.f32 %v4776, 0.0
        %v4818 = vmax.f32 %v4777, 0.0
        %v4819 = vmax.f32 %v4778, 0.0
        %v4820 = vmax.f32 %v4779, 0.0
        %v4821 = vmax.f32 %v4780, 0.0
        %v4822 = vmax.f32 %v4781, 0.0
        %v4823 = vmax.f32 %v4782, 0.0
        %v4824 = vmax.f32 %v4783, 0.0
        %v4825 = vmax.f32 %v4784, 0.0
        %v4826 = vmax.f32 %v4785, 0.0
        %v4827 = vmax.f32 %v4786, 0.0
        %v4828 = vmax.f32 %v4787, 0.0
        %v4829 = vmax.f32 %v4788, 0.0
        %v4830 = vmax.f32 %v4789, 0.0
        %v4831 = vmax.f32 %v4790, 0.0
        %v4832 = vmax.f32 %v4791, 0.0
        %v4833 = vmax.f32 %v4792, 0.0
        %v4834 = vmax.f32 %v4793, 0.0
        %v4835 = vmax.f32 %v4794, 0.0
        %v4836 = vmax.f32 %v4795, 0.0
        %v4837 = vmax.f32 %v4796, 0.0
        %v4838 = vmax.f32 %v4797, 0.0
        %v4839 = vmax.f32 %v4798, 0.0
        %v4840 = vmax.f32 %v4799, 0.0
        %v4841 = vmax.f32 %v4800, 0.0
        %v4842 = vmax.f32 %v4801, 0.0
        %v4843 = vmax.f32 %v4802, 0.0
        %v4844 = vmax.f32 %v4803, 0.0
        %v4845 = vmax.f32 %v4804, 0.0
        %v4846 = vmax.f32 %v4805, 0.0
        %v4847 = vmax.f32 %v4806, 0.0
        %v4848 = vmax.f32 %v4807, 0.0
        %v4849 = vmax.f32 %v4808, 0.0
        %v4850 = vmax.f32 %v4809, 0.0
        %v4851 = vmax.f32 %v4810, 0.0
        %v4852 = vmax.f32 %v4811, 0.0
        %v4853 = vmax.f32 %v4812, 0.0
        %v4854 = vmax.f32 %v4813, 0.0
        %v4855 = vmax.f32 %v4814, 0.0
        %v4856 = vmax.f32 %v4815, 0.0
        %v4857 = vmax.f32 %v4816, 0.0
        %v4858 = vld [vmem:[%s1] sm:$0xff]
        %v4859 = vld [vmem:[%s1 + $0x8] sm:$0xff]
        %v4860 = vld [vmem:[%s1 + $0x10] sm:$0xff]
        %v4861 = vld [vmem:[%s1 + $0x18] sm:$0xff]
        %v4862 = vld [vmem:[%s1 + $0x20] sm:$0xff]
        %v4863 = vld [vmem:[%s1 + $0x28] sm:$0xff]
        %v4864 = vld [vmem:[%s1 + $0x30] sm:$0xff]
        %v4865 = vld [vmem:[%s1 + $0x38] sm:$0xff]
        %v4866 = vld [vmem:[%s1 + $0x40] sm:$0xff]
        %v4867 = vld [vmem:[%s1 + $0x48] sm:$0xff]
        %v4868 = vld [vmem:[%s1 + $0x50] sm:$0xff]
        %v4869 = vld [vmem:[%s1 + $0x58] sm:$0xff]
        %v4870 = vld [vmem:[%s1 + $0x60] sm:$0xff]
        %v4871 = vld [vmem:[%s1 + $0x68] sm:$0xff]
        %v4872 = vld [vmem:[%s1 + $0x70] sm:$0xff]
        %v4873 = vld [vmem:[%s1 + $0x78] sm:$0xff]
        %v4874 = vld [vmem:[%s1 + $0x80] sm:$0xff]
        %v4875 = vld [vmem:[%s1 + $0x88] sm:$0xff]
        %v4876 = vld [vmem:[%s1 + $0x90] sm:$0xff]
        %v4877 = vld [vmem:[%s1 + $0x98] sm:$0xff]
        %v4878 = vld [vmem:[%s1 + $0xa0] sm:$0xff]
        %v4879 = vld [vmem:[%s1 + $0xa8] sm:$0xff]
        %v4880 = vld [vmem:[%s1 + $0xb0] sm:$0xff]
        %v4881 = vld [vmem:[%s1 + $0xb8] sm:$0xff]
        %v4882 = vld [vmem:[%s1 + $0xc0] sm:$0xff]
        %v4883 = vld [vmem:[%s1 + $0xc8] sm:$0xff]
        %v4884 = vld [vmem:[%s1 + $0xd0] sm:$0xff]
        %v4885 = vld [vmem:[%s1 + $0xd8] sm:$0xff]
        %v4886 = vld [vmem:[%s1 + $0xe0] sm:$0xff]
        %v4887 = vld [vmem:[%s1 + $0xe8] sm:$0xff]
        %v4888 = vld [vmem:[%s1 + $0xf0] sm:$0xff]
        %v4889 = vld [vmem:[%s1 + $0xf8] sm:$0xff]
        %v4890 = vld [vmem:[%s1 + $0x100] sm:$0xff]
        %v4891 = vld [vmem:[%s1 + $0x108] sm:$0xff]
        %v4892 = vld [vmem:[%s1 + $0x110] sm:$0xff]
        %v4893 = vld [vmem:[%s1 + $0x118] sm:$0xff]
        %v4894 = vld [vmem:[%s1 + $0x120] sm:$0xff]
        %v4895 = vld [vmem:[%s1 + $0x128] sm:$0xff]
        %v4896 = vld [vmem:[%s1 + $0x130] sm:$0xff]
        %v4897 = vld [vmem:[%s1 + $0x138] sm:$0xff]
        %v4898 = vld [vmem:[%s1 + $0x140] sm:$0xff]
        %4900 = vset.pattern.permute.xlu0 0
        %4901 = vperm.xlu0 %4900, %v4858
        %v4902 = vpop.permute.xlu0 %4901
        %4905 = vset.pattern.permute.xlu0 0
        %4906 = vperm.xlu0 %4905, %v4859
        %v4907 = vpop.permute.xlu0 %4906
        %4910 = vset.pattern.permute.xlu0 0
        %4911 = vperm.xlu0 %4910, %v4860
        %v4912 = vpop.permute.xlu0 %4911
        %4915 = vset.pattern.permute.xlu0 0
        %4916 = vperm.xlu0 %4915, %v4861
        %v4917 = vpop.permute.xlu0 %4916
        %4920 = vset.pattern.permute.xlu0 0
        %4921 = vperm.xlu0 %4920, %v4862
        %v4922 = vpop.permute.xlu0 %4921
        %4925 = vset.pattern.permute.xlu0 0
        %4926 = vperm.xlu0 %4925, %v4863
        %v4927 = vpop.permute.xlu0 %4926
        %4930 = vset.pattern.permute.xlu0 0
        %4931 = vperm.xlu0 %4930, %v4864
        %v4932 = vpop.permute.xlu0 %4931
        %4935 = vset.pattern.permute.xlu0 0
        %4936 = vperm.xlu0 %4935, %v4865
        %v4937 = vpop.permute.xlu0 %4936
        %4940 = vset.pattern.permute.xlu0 0
        %4941 = vperm.xlu0 %4940, %v4866
        %v4942 = vpop.permute.xlu0 %4941
        %4945 = vset.pattern.permute.xlu0 0
        %4946 = vperm.xlu0 %4945, %v4867
        %v4947 = vpop.permute.xlu0 %4946
        %4950 = vset.pattern.permute.xlu0 0
        %4951 = vperm.xlu0 %4950, %v4868
        %v4952 = vpop.permute.xlu0 %4951
        %4955 = vset.pattern.permute.xlu0 0
        %4956 = vperm.xlu0 %4955, %v4869
        %v4957 = vpop.permute.xlu0 %4956
        %4960 = vset.pattern.permute.xlu0 0
        %4961 = vperm.xlu0 %4960, %v4870
        %v4962 = vpop.permute.xlu0 %4961
        %4965 = vset.pattern.permute.xlu0 0
        %4966 = vperm.xlu0 %4965, %v4871
        %v4967 = vpop.permute.xlu0 %4966
        %4970 = vset.pattern.permute.xlu0 0
        %4971 = vperm.xlu0 %4970, %v4872
        %v4972 = vpop.permute.xlu0 %4971
        %4975 = vset.pattern.permute.xlu0 0
        %4976 = vperm.xlu0 %4975, %v4873
        %v4977 = vpop.permute.xlu0 %4976
        %4980 = vset.pattern.permute.xlu0 0
        %4981 = vperm.xlu0 %4980, %v4874
        %v4982 = vpop.permute.xlu0 %4981
        %4985 = vset.pattern.permute.xlu0 0
        %4986 = vperm.xlu0 %4985, %v4875
        %v4987 = vpop.permute.xlu0 %4986
        %4990 = vset.pattern.permute.xlu0 0
        %4991 = vperm.xlu0 %4990, %v4876
        %v4992 = vpop.permute.xlu0 %4991
        %4995 = vset.pattern.permute.xlu0 0
        %4996 = vperm.xlu0 %4995, %v4877
        %v4997 = vpop.permute.xlu0 %4996
        %5000 = vset.pattern.permute.xlu0 0
        %5001 = vperm.xlu0 %5000, %v4878
        %v5002 = vpop.permute.xlu0 %5001
        %5005 = vset.pattern.permute.xlu0 0
        %5006 = vperm.xlu0 %5005, %v4879
        %v5007 = vpop.permute.xlu0 %5006
        %5010 = vset.pattern.permute.xlu0 0
        %5011 = vperm.xlu0 %5010, %v4880
        %v5012 = vpop.permute.xlu0 %5011
        %5015 = vset.pattern.permute.xlu0 0
        %5016 = vperm.xlu0 %5015, %v4881
        %v5017 = vpop.permute.xlu0 %5016
        %5020 = vset.pattern.permute.xlu0 0
        %5021 = vperm.xlu0 %5020, %v4882
        %v5022 = vpop.permute.xlu0 %5021
        %5025 = vset.pattern.permute.xlu0 0
        %5026 = vperm.xlu0 %5025, %v4883
        %v5027 = vpop.permute.xlu0 %5026
        %5030 = vset.pattern.permute.xlu0 0
        %5031 = vperm.xlu0 %5030, %v4884
        %v5032 = vpop.permute.xlu0 %5031
        %5035 = vset.pattern.permute.xlu0 0
        %5036 = vperm.xlu0 %5035, %v4885
        %v5037 = vpop.permute.xlu0 %5036
        %5040 = vset.pattern.permute.xlu0 0
        %5041 = vperm.xlu0 %5040, %v4886
        %v5042 = vpop.permute.xlu0 %5041
        %5045 = vset.pattern.permute.xlu0 0
        %5046 = vperm.xlu0 %5045, %v4887
        %v5047 = vpop.permute.xlu0 %5046
        %5050 = vset.pattern.permute.xlu0 0
        %5051 = vperm.xlu0 %5050, %v4888
        %v5052 = vpop.permute.xlu0 %5051
        %5055 = vset.pattern.permute.xlu0 0
        %5056 = vperm.xlu0 %5055, %v4889
        %v5057 = vpop.permute.xlu0 %5056
        %5060 = vset.pattern.permute.xlu0 0
        %5061 = vperm.xlu0 %5060, %v4890
        %v5062 = vpop.permute.xlu0 %5061
        %5065 = vset.pattern.permute.xlu0 0
        %5066 = vperm.xlu0 %5065, %v4891
        %v5067 = vpop.permute.xlu0 %5066
        %5070 = vset.pattern.permute.xlu0 0
        %5071 = vperm.xlu0 %5070, %v4892
        %v5072 = vpop.permute.xlu0 %5071
        %5075 = vset.pattern.permute.xlu0 0
        %5076 = vperm.xlu0 %5075, %v4893
        %v5077 = vpop.permute.xlu0 %5076
        %5080 = vset.pattern.permute.xlu0 0
        %5081 = vperm.xlu0 %5080, %v4894
        %v5082 = vpop.permute.xlu0 %5081
        %5085 = vset.pattern.permute.xlu0 0
        %5086 = vperm.xlu0 %5085, %v4895
        %v5087 = vpop.permute.xlu0 %5086
        %5090 = vset.pattern.permute.xlu0 0
        %5091 = vperm.xlu0 %5090, %v4896
        %v5092 = vpop.permute.xlu0 %5091
        %5095 = vset.pattern.permute.xlu0 0
        %5096 = vperm.xlu0 %5095, %v4897
        %v5097 = vpop.permute.xlu0 %5096
        %5100 = vset.pattern.permute.xlu0 0
        %5101 = vperm.xlu0 %5100, %v4898
        %v5102 = vpop.permute.xlu0 %5101
        %v5104 = vmul.f32 %v4817, %v4902
        %v5105 = vmul.f32 %v4818, %v4907
        %v5106 = vmul.f32 %v4819, %v4912
        %v5107 = vmul.f32 %v4820, %v4917
        %v5108 = vmul.f32 %v4821, %v4922
        %v5109 = vmul.f32 %v4822, %v4927
        %v5110 = vmul.f32 %v4823, %v4932
        %v5111 = vmul.f32 %v4824, %v4937
        %v5112 = vmul.f32 %v4825, %v4942
        %v5113 = vmul.f32 %v4826, %v4947
        %v5114 = vmul.f32 %v4827, %v4952
        %v5115 = vmul.f32 %v4828, %v4957
        %v5116 = vmul.f32 %v4829, %v4962
        %v5117 = vmul.f32 %v4830, %v4967
        %v5118 = vmul.f32 %v4831, %v4972
        %v5119 = vmul.f32 %v4832, %v4977
        %v5120 = vmul.f32 %v4833, %v4982
        %v5121 = vmul.f32 %v4834, %v4987
        %v5122 = vmul.f32 %v4835, %v4992
        %v5123 = vmul.f32 %v4836, %v4997
        %v5124 = vmul.f32 %v4837, %v5002
        %v5125 = vmul.f32 %v4838, %v5007
        %v5126 = vmul.f32 %v4839, %v5012
        %v5127 = vmul.f32 %v4840, %v5017
        %v5128 = vmul.f32 %v4841, %v5022
        %v5129 = vmul.f32 %v4842, %v5027
        %v5130 = vmul.f32 %v4843, %v5032
        %v5131 = vmul.f32 %v4844, %v5037
        %v5132 = vmul.f32 %v4845, %v5042
        %v5133 = vmul.f32 %v4846, %v5047
        %v5134 = vmul.f32 %v4847, %v5052
        %v5135 = vmul.f32 %v4848, %v5057
        %v5136 = vmul.f32 %v4849, %v5062
        %v5137 = vmul.f32 %v4850, %v5067
        %v5138 = vmul.f32 %v4851, %v5072
        %v5139 = vmul.f32 %v4852, %v5077
        %v5140 = vmul.f32 %v4853, %v5082
        %v5141 = vmul.f32 %v4854, %v5087
        %v5142 = vmul.f32 %v4855, %v5092
        %v5143 = vmul.f32 %v4856, %v5097
        %v5144 = vmul.f32 %v4857, %v5102
        %v5145 = vpack.c.bf16 %v5105, %v5104
        %v5146 = vpack.c.bf16 %v5107, %v5106
        %v5147 = vpack.c.bf16 %v5109, %v5108
        %v5148 = vpack.c.bf16 %v5111, %v5110
        %v5149 = vpack.c.bf16 %v5113, %v5112
        %v5150 = vpack.c.bf16 %v5115, %v5114
        %v5151 = vpack.c.bf16 %v5117, %v5116
        %v5152 = vpack.c.bf16 %v5119, %v5118
        %v5153 = vpack.c.bf16 %v5121, %v5120
        %v5154 = vpack.c.bf16 %v5123, %v5122
        %v5155 = vpack.c.bf16 %v5125, %v5124
        %v5156 = vpack.c.bf16 %v5127, %v5126
        %v5157 = vpack.c.bf16 %v5129, %v5128
        %v5158 = vpack.c.bf16 %v5131, %v5130
        %v5159 = vpack.c.bf16 %v5133, %v5132
        %v5160 = vpack.c.bf16 %v5135, %v5134
        %v5161 = vpack.c.bf16 %v5137, %v5136
        %v5162 = vpack.c.bf16 %v5139, %v5138
        %v5163 = vpack.c.bf16 %v5141, %v5140
        %v5164 = vpack.c.bf16 %v5143, %v5142
        %v5165 = vpack.c.bf16 %v5144, %v5144
        %v5187 = vunpack.c.l.b16 %v5145
        %v5188 = vunpack.c.h.b16 %v5145
        %v5189 = vunpack.c.l.b16 %v5146
        %v5190 = vunpack.c.h.b16 %v5146
        %v5191 = vunpack.c.l.b16 %v5147
        %v5192 = vunpack.c.h.b16 %v5147
        %v5193 = vunpack.c.l.b16 %v5148
        %v5194 = vunpack.c.h.b16 %v5148
        %v5195 = vunpack.c.l.b16 %v5149
        %v5196 = vunpack.c.h.b16 %v5149
        %v5197 = vunpack.c.l.b16 %v5150
        %v5198 = vunpack.c.h.b16 %v5150
        %v5199 = vunpack.c.l.b16 %v5151
        %v5200 = vunpack.c.h.b16 %v5151
        %v5201 = vunpack.c.l.b16 %v5152
        %v5202 = vunpack.c.h.b16 %v5152
        %v5203 = vunpack.c.l.b16 %v5153
        %v5204 = vunpack.c.h.b16 %v5153
        %v5205 = vunpack.c.l.b16 %v5154
        %v5206 = vunpack.c.h.b16 %v5154
        %v5207 = vunpack.c.l.b16 %v5155
        %v5208 = vunpack.c.h.b16 %v5155
        %v5209 = vunpack.c.l.b16 %v5156
        %v5210 = vunpack.c.h.b16 %v5156
        %v5211 = vunpack.c.l.b16 %v5157
        %v5212 = vunpack.c.h.b16 %v5157
        %v5213 = vunpack.c.l.b16 %v5158
        %v5214 = vunpack.c.h.b16 %v5158
        %v5215 = vunpack.c.l.b16 %v5159
        %v5216 = vunpack.c.h.b16 %v5159
        %v5217 = vunpack.c.l.b16 %v5160
        %v5218 = vunpack.c.h.b16 %v5160
        %v5219 = vunpack.c.l.b16 %v5161
        %v5220 = vunpack.c.h.b16 %v5161
        %v5221 = vunpack.c.l.b16 %v5162
        %v5222 = vunpack.c.h.b16 %v5162
        %v5223 = vunpack.c.l.b16 %v5163
        %v5224 = vunpack.c.h.b16 %v5163
        %v5225 = vunpack.c.l.b16 %v5164
        %v5226 = vunpack.c.h.b16 %v5164
        %v5227 = vunpack.c.l.b16 %v5165
        %v5228 = vpack.c.b16 %v5187, %v5187
        %v5229 = vpack.c.b16 %v5188, %v5188
        %v5230 = vpack.c.b16 %v5189, %v5189
        %v5231 = vpack.c.b16 %v5190, %v5190
        %v5232 = vpack.c.b16 %v5191, %v5191
        %v5233 = vpack.c.b16 %v5192, %v5192
        %v5234 = vpack.c.b16 %v5193, %v5193
        %v5235 = vpack.c.b16 %v5194, %v5194
        %v5236 = vpack.c.b16 %v5195, %v5195
        %v5237 = vpack.c.b16 %v5196, %v5196
        %v5238 = vpack.c.b16 %v5197, %v5197
        %v5239 = vpack.c.b16 %v5198, %v5198
        %v5240 = vpack.c.b16 %v5199, %v5199
        %v5241 = vpack.c.b16 %v5200, %v5200
        %v5242 = vpack.c.b16 %v5201, %v5201
        %v5243 = vpack.c.b16 %v5202, %v5202
        %v5244 = vpack.c.b16 %v5203, %v5203
        %v5245 = vpack.c.b16 %v5204, %v5204
        %v5246 = vpack.c.b16 %v5205, %v5205
        %v5247 = vpack.c.b16 %v5206, %v5206
        %v5248 = vpack.c.b16 %v5207, %v5207
        %v5249 = vpack.c.b16 %v5208, %v5208
        %v5250 = vpack.c.b16 %v5209, %v5209
        %v5251 = vpack.c.b16 %v5210, %v5210
        %v5252 = vpack.c.b16 %v5211, %v5211
        %v5253 = vpack.c.b16 %v5212, %v5212
        %v5254 = vpack.c.b16 %v5213, %v5213
        %v5255 = vpack.c.b16 %v5214, %v5214
        %v5256 = vpack.c.b16 %v5215, %v5215
        %v5257 = vpack.c.b16 %v5216, %v5216
        %v5258 = vpack.c.b16 %v5217, %v5217
        %v5259 = vpack.c.b16 %v5218, %v5218
        %v5260 = vpack.c.b16 %v5219, %v5219
        %v5261 = vpack.c.b16 %v5220, %v5220
        %v5262 = vpack.c.b16 %v5221, %v5221
        %v5263 = vpack.c.b16 %v5222, %v5222
        %v5264 = vpack.c.b16 %v5223, %v5223
        %v5265 = vpack.c.b16 %v5224, %v5224
        %v5266 = vpack.c.b16 %v5225, %v5225
        %v5267 = vpack.c.b16 %v5226, %v5226
        %v5268 = vpack.c.b16 %v5227, %v5227
        %5310 = vst [vmem:[#allocation2 + $0xc] sm:$0xf] %v5228
        %5311 = vst [vmem:[#allocation2 + $0x10] sm:$0xf] %v5229
        %5312 = vst [vmem:[#allocation2 + $0x14] sm:$0xf] %v5230
        %5313 = vst [vmem:[#allocation2 + $0x18] sm:$0xf] %v5231
        %5314 = vst [vmem:[#allocation2 + $0x1c] sm:$0xf] %v5232
        %5315 = vst [vmem:[#allocation2 + $0x20] sm:$0xf] %v5233
        %5316 = vst [vmem:[#allocation2 + $0x24] sm:$0xf] %v5234
        %5317 = vst [vmem:[#allocation2 + $0x28] sm:$0xf] %v5235
        %5318 = vst [vmem:[#allocation2 + $0x2c] sm:$0xf] %v5236
        %5319 = vst [vmem:[#allocation2 + $0x30] sm:$0xf] %v5237
        %5320 = vst [vmem:[#allocation2 + $0x34] sm:$0xf] %v5238
        %5321 = vst [vmem:[#allocation2 + $0x38] sm:$0xf] %v5239
        %5322 = vst [vmem:[#allocation2 + $0x3c] sm:$0xf] %v5240
        %5323 = vst [vmem:[#allocation2 + $0x40] sm:$0xf] %v5241
        %5324 = vst [vmem:[#allocation2 + $0x44] sm:$0xf] %v5242
        %5325 = vst [vmem:[#allocation2 + $0x48] sm:$0xf] %v5243
        %5326 = vst [vmem:[#allocation2 + $0x4c] sm:$0xf] %v5244
        %5327 = vst [vmem:[#allocation2 + $0x50] sm:$0xf] %v5245
        %5328 = vst [vmem:[#allocation2 + $0x54] sm:$0xf] %v5246
        %5329 = vst [vmem:[#allocation2 + $0x58] sm:$0xf] %v5247
        %5330 = vst [vmem:[#allocation2 + $0x5c] sm:$0xf] %v5248
        %5331 = vst [vmem:[#allocation2 + $0x60] sm:$0xf] %v5249
        %5332 = vst [vmem:[#allocation2 + $0x64] sm:$0xf] %v5250
        %5333 = vst [vmem:[#allocation2 + $0x68] sm:$0xf] %v5251
        %5334 = vst [vmem:[#allocation2 + $0x6c] sm:$0xf] %v5252
        %5335 = vst [vmem:[#allocation2 + $0x70] sm:$0xf] %v5253
        %5336 = vst [vmem:[#allocation2 + $0x74] sm:$0xf] %v5254
        %5337 = vst [vmem:[#allocation2 + $0x78] sm:$0xf] %v5255
        %5338 = vst [vmem:[#allocation2 + $0x7c] sm:$0xf] %v5256
        %5339 = vst [vmem:[#allocation2 + $0x80] sm:$0xf] %v5257
        %5340 = vst [vmem:[#allocation2 + $0x84] sm:$0xf] %v5258
        %5341 = vst [vmem:[#allocation2 + $0x88] sm:$0xf] %v5259
        %5342 = vst [vmem:[#allocation2 + $0x8c] sm:$0xf] %v5260
        %5343 = vst [vmem:[#allocation2 + $0x90] sm:$0xf] %v5261
        %5344 = vst [vmem:[#allocation2 + $0x94] sm:$0xf] %v5262
        %5345 = vst [vmem:[#allocation2 + $0x98] sm:$0xf] %v5263
        %5346 = vst [vmem:[#allocation2 + $0x9c] sm:$0xf] %v5264
        %5347 = vst [vmem:[#allocation2 + $0xa0] sm:$0xf] %v5265
        %5348 = vst [vmem:[#allocation2 + $0xa4] sm:$0xf] %v5266
        %5349 = vst [vmem:[#allocation2 + $0xa8] sm:$0xf] %v5267
        %5350 = vst [vmem:[#allocation2 + $0xac] sm:$0xf] %v5268
        %v5351 = vld [vmem:[#allocation2] sm:$0xc]
        %v5352 = vld [vmem:[#allocation2 + $0x4] sm:$0xf]
        %v5353 = vld [vmem:[#allocation2 + $0x8] sm:$0xf]
        %v5354 = vld [vmem:[#allocation2 + $0xc] sm:$0xf]
        %v5355 = vld [vmem:[#allocation2 + $0x10] sm:$0xf]
        %v5356 = vld [vmem:[#allocation2 + $0x14] sm:$0xf]
        %v5357 = vld [vmem:[#allocation2 + $0x18] sm:$0xf]
        %v5358 = vld [vmem:[#allocation2 + $0x1c] sm:$0xf]
        %v5359 = vld [vmem:[#allocation2 + $0x20] sm:$0xf]
        %v5360 = vld [vmem:[#allocation2 + $0x24] sm:$0xf]
        %v5361 = vld [vmem:[#allocation2 + $0x28] sm:$0xf]
        %v5362 = vld [vmem:[#allocation2 + $0x2c] sm:$0xf]
        %v5363 = vld [vmem:[#allocation2 + $0x30] sm:$0xf]
        %v5364 = vld [vmem:[#allocation2 + $0x34] sm:$0xf]
        %v5365 = vld [vmem:[#allocation2 + $0x38] sm:$0xf]
        %v5366 = vld [vmem:[#allocation2 + $0x3c] sm:$0xf]
        %v5367 = vld [vmem:[#allocation2 + $0x40] sm:$0xf]
        %v5368 = vld [vmem:[#allocation2 + $0x44] sm:$0xf]
        %v5369 = vld [vmem:[#allocation2 + $0x48] sm:$0xf]
        %v5370 = vld [vmem:[#allocation2 + $0x4c] sm:$0xf]
        %v5371 = vld [vmem:[#allocation2 + $0x50] sm:$0xf]
        %v5372 = vld [vmem:[#allocation2 + $0x54] sm:$0xf]
        %v5373 = vld [vmem:[#allocation2 + $0x58] sm:$0xf]
        %v5374 = vld [vmem:[#allocation2 + $0x5c] sm:$0xf]
        %v5375 = vld [vmem:[#allocation2 + $0x60] sm:$0xf]
        %v5376 = vld [vmem:[#allocation2 + $0x64] sm:$0xf]
        %v5377 = vld [vmem:[#allocation2 + $0x68] sm:$0xf]
        %v5378 = vld [vmem:[#allocation2 + $0x6c] sm:$0xf]
        %v5379 = vld [vmem:[#allocation2 + $0x70] sm:$0xf]
        %v5380 = vld [vmem:[#allocation2 + $0x74] sm:$0xf]
        %v5381 = vld [vmem:[#allocation2 + $0x78] sm:$0xf]
        %v5382 = vld [vmem:[#allocation2 + $0x7c] sm:$0xf]
        %v5383 = vld [vmem:[#allocation2 + $0x80] sm:$0xf]
        %v5384 = vld [vmem:[#allocation2 + $0x84] sm:$0xf]
        %v5385 = vld [vmem:[#allocation2 + $0x88] sm:$0xf]
        %v5386 = vld [vmem:[#allocation2 + $0x8c] sm:$0xf]
        %v5387 = vld [vmem:[#allocation2 + $0x90] sm:$0xf]
        %v5388 = vld [vmem:[#allocation2 + $0x94] sm:$0xf]
        %v5389 = vld [vmem:[#allocation2 + $0x98] sm:$0xf]
        %v5390 = vld [vmem:[#allocation2 + $0x9c] sm:$0xf]
        %v5391 = vld [vmem:[#allocation2 + $0xa0] sm:$0xf]
        %v5392 = vld [vmem:[#allocation2 + $0xa4] sm:$0x7]
        %v5393 = vld [vmem:[#allocation8] sm:$0xf]
        %v5394 = vld [vmem:[#allocation8 + $0x4] sm:$0xf]
        %v5395 = vld [vmem:[#allocation8 + $0x8] sm:$0xf]
        %v5396 = vld [vmem:[#allocation8 + $0xc] sm:$0xf]
        %v5397 = vld [vmem:[#allocation8 + $0x10] sm:$0xf]
        %v5398 = vld [vmem:[#allocation8 + $0x14] sm:$0xf]
        %v5399 = vld [vmem:[#allocation8 + $0x18] sm:$0xf]
        %v5400 = vld [vmem:[#allocation8 + $0x1c] sm:$0xf]
        %v5401 = vld [vmem:[#allocation8 + $0x20] sm:$0xf]
        %v5402 = vld [vmem:[#allocation8 + $0x24] sm:$0xf]
        %v5403 = vld [vmem:[#allocation8 + $0x28] sm:$0xf]
        %v5404 = vld [vmem:[#allocation8 + $0x2c] sm:$0xf]
        %v5405 = vld [vmem:[#allocation8 + $0x30] sm:$0xf]
        %v5406 = vld [vmem:[#allocation8 + $0x34] sm:$0xf]
        %v5407 = vld [vmem:[#allocation8 + $0x38] sm:$0xf]
        %v5408 = vld [vmem:[#allocation8 + $0x3c] sm:$0xf]
        %v5409 = vld [vmem:[#allocation2] sm:$0x8]
        %s5410 = scalar_lea.vmem [#allocation8], 64
        %v5411 = vld [vmem:[%s5410] sm:$0xf]
        %v5412 = vld [vmem:[%s5410 + $0x4] sm:$0xf]
        %v5413 = vld [vmem:[%s5410 + $0x8] sm:$0xf]
        %v5414 = vld [vmem:[%s5410 + $0xc] sm:$0xf]
        %v5415 = vld [vmem:[%s5410 + $0x10] sm:$0xf]
        %v5416 = vld [vmem:[%s5410 + $0x14] sm:$0xf]
        %v5417 = vld [vmem:[%s5410 + $0x18] sm:$0xf]
        %v5418 = vld [vmem:[%s5410 + $0x1c] sm:$0xf]
        %v5419 = vld [vmem:[%s5410 + $0x20] sm:$0xf]
        %v5420 = vld [vmem:[%s5410 + $0x24] sm:$0xf]
        %v5421 = vld [vmem:[%s5410 + $0x28] sm:$0xf]
        %v5422 = vld [vmem:[%s5410 + $0x2c] sm:$0xf]
        %v5423 = vld [vmem:[%s5410 + $0x30] sm:$0xf]
        %v5424 = vld [vmem:[%s5410 + $0x34] sm:$0xf]
        %v5425 = vld [vmem:[%s5410 + $0x38] sm:$0xf]
        %v5426 = vld [vmem:[%s5410 + $0x3c] sm:$0xf]
        %v5469 = vunpack.c.l.b16 %v5409
        %v5470 = vunpack.c.l.b16 %v5352
        %v5471 = vunpack.c.l.b16 %v5353
        %v5472 = vunpack.c.l.b16 %v5354
        %v5473 = vunpack.c.l.b16 %v5355
        %v5474 = vunpack.c.l.b16 %v5356
        %v5475 = vunpack.c.l.b16 %v5357
        %v5476 = vunpack.c.l.b16 %v5358
        %v5477 = vunpack.c.l.b16 %v5359
        %v5478 = vunpack.c.l.b16 %v5360
        %v5479 = vunpack.c.l.b16 %v5361
        %v5480 = vunpack.c.l.b16 %v5362
        %v5481 = vunpack.c.l.b16 %v5363
        %v5482 = vunpack.c.l.b16 %v5364
        %v5483 = vunpack.c.l.b16 %v5365
        %v5484 = vunpack.c.l.b16 %v5366
        %v5485 = vunpack.c.l.b16 %v5367
        %v5486 = vunpack.c.l.b16 %v5368
        %v5487 = vunpack.c.l.b16 %v5369
        %v5488 = vunpack.c.l.b16 %v5370
        %v5489 = vunpack.c.l.b16 %v5371
        %v5490 = vunpack.c.l.b16 %v5372
        %v5491 = vunpack.c.l.b16 %v5373
        %v5492 = vunpack.c.l.b16 %v5374
        %v5493 = vunpack.c.l.b16 %v5375
        %v5494 = vunpack.c.l.b16 %v5376
        %v5495 = vunpack.c.l.b16 %v5377
        %v5496 = vunpack.c.l.b16 %v5378
        %v5497 = vunpack.c.l.b16 %v5379
        %v5498 = vunpack.c.l.b16 %v5380
        %v5499 = vunpack.c.l.b16 %v5381
        %v5500 = vunpack.c.l.b16 %v5382
        %v5501 = vunpack.c.l.b16 %v5383
        %v5502 = vunpack.c.l.b16 %v5384
        %v5503 = vunpack.c.l.b16 %v5385
        %v5504 = vunpack.c.l.b16 %v5386
        %v5505 = vunpack.c.l.b16 %v5387
        %v5506 = vunpack.c.l.b16 %v5388
        %v5507 = vunpack.c.l.b16 %v5389
        %v5508 = vunpack.c.l.b16 %v5390
        %v5509 = vunpack.c.l.b16 %v5391
        %v5510 = vunpack.c.l.b16 %v5392
        %v5511 = vpack.c.b16 %v5470, %v5469
        %v5512 = vpack.c.b16 %v5472, %v5471
        %v5513 = vpack.c.b16 %v5474, %v5473
        %v5514 = vpack.c.b16 %v5476, %v5475
        %v5515 = vpack.c.b16 %v5478, %v5477
        %v5516 = vpack.c.b16 %v5480, %v5479
        %v5517 = vpack.c.b16 %v5482, %v5481
        %v5518 = vpack.c.b16 %v5484, %v5483
        %v5519 = vpack.c.b16 %v5486, %v5485
        %v5520 = vpack.c.b16 %v5488, %v5487
        %v5521 = vpack.c.b16 %v5490, %v5489
        %v5522 = vpack.c.b16 %v5492, %v5491
        %v5523 = vpack.c.b16 %v5494, %v5493
        %v5524 = vpack.c.b16 %v5496, %v5495
        %v5525 = vpack.c.b16 %v5498, %v5497
        %v5526 = vpack.c.b16 %v5500, %v5499
        %v5527 = vpack.c.b16 %v5502, %v5501
        %v5528 = vpack.c.b16 %v5504, %v5503
        %v5529 = vpack.c.b16 %v5506, %v5505
        %v5530 = vpack.c.b16 %v5508, %v5507
        %v5531 = vpack.c.b16 %v5510, %v5509
        %v5532 = vrot.slane %v5511, 3
        %v5533 = vrot.slane %v5512, 3
        %v5534 = vsel %vm481, %v5532, %v5533
        %v5535 = vrot.slane %v5513, 3
        %v5536 = vsel %vm481, %v5533, %v5535
        %v5537 = vrot.slane %v5514, 3
        %v5538 = vsel %vm481, %v5535, %v5537
        %v5539 = vrot.slane %v5515, 3
        %v5540 = vsel %vm481, %v5537, %v5539
        %v5541 = vrot.slane %v5516, 3
        %v5542 = vsel %vm481, %v5539, %v5541
        %v5543 = vrot.slane %v5517, 3
        %v5544 = vsel %vm481, %v5541, %v5543
        %v5545 = vrot.slane %v5518, 3
        %v5546 = vsel %vm481, %v5543, %v5545
        %v5547 = vrot.slane %v5519, 3
        %v5548 = vsel %vm481, %v5545, %v5547
        %v5549 = vrot.slane %v5520, 3
        %v5550 = vsel %vm481, %v5547, %v5549
        %v5551 = vrot.slane %v5521, 3
        %v5552 = vsel %vm481, %v5549, %v5551
        %v5553 = vrot.slane %v5522, 3
        %v5554 = vsel %vm481, %v5551, %v5553
        %v5555 = vrot.slane %v5523, 3
        %v5556 = vsel %vm481, %v5553, %v5555
        %v5557 = vrot.slane %v5524, 3
        %v5558 = vsel %vm481, %v5555, %v5557
        %v5559 = vrot.slane %v5525, 3
        %v5560 = vsel %vm481, %v5557, %v5559
        %v5561 = vrot.slane %v5526, 3
        %v5562 = vsel %vm481, %v5559, %v5561
        %v5563 = vrot.slane %v5527, 3
        %v5564 = vsel %vm481, %v5561, %v5563
        %v5565 = vrot.slane %v5528, 3
        %v5566 = vsel %vm481, %v5563, %v5565
        %v5567 = vrot.slane %v5529, 3
        %v5568 = vsel %vm481, %v5565, %v5567
        %v5569 = vrot.slane %v5530, 3
        %v5570 = vsel %vm481, %v5567, %v5569
        %v5571 = vrot.slane %v5531, 3
        %v5572 = vsel %vm481, %v5569, %v5571
        %v5610 = vunpack.c.l.b16 %v5411
        %v5611 = vunpack.c.l.b16 %v5412
        %v5612 = vunpack.c.l.b16 %v5413
        %v5613 = vunpack.c.l.b16 %v5414
        %v5614 = vunpack.c.l.b16 %v5415
        %v5615 = vunpack.c.l.b16 %v5416
        %v5616 = vunpack.c.l.b16 %v5417
        %v5617 = vunpack.c.l.b16 %v5418
        %v5618 = vunpack.c.l.b16 %v5419
        %v5619 = vunpack.c.l.b16 %v5420
        %v5620 = vunpack.c.l.b16 %v5421
        %v5621 = vunpack.c.l.b16 %v5422
        %v5622 = vunpack.c.l.b16 %v5423
        %v5623 = vunpack.c.l.b16 %v5424
        %v5624 = vunpack.c.l.b16 %v5425
        %v5625 = vunpack.c.l.b16 %v5426
        %v5626 = vpack.c.b16 %v5611, %v5610
        %v5627 = vpack.c.b16 %v5613, %v5612
        %v5628 = vpack.c.b16 %v5615, %v5614
        %v5629 = vpack.c.b16 %v5617, %v5616
        %v5630 = vpack.c.b16 %v5619, %v5618
        %v5631 = vpack.c.b16 %v5621, %v5620
        %v5632 = vpack.c.b16 %v5623, %v5622
        %v5633 = vpack.c.b16 %v5625, %v5624
        %5642 = vmatprep.subr.bf16.mxu0 0
        %5643 = vmatpush1.bf16.msra.mxu0 %v5626
        %5644 = vmatprep.subr.bf16.mxu0 0
        %5645 = vmatpush1.bf16.msra.mxu0 %v5627
        %5646 = vmatprep.subr.bf16.mxu0 0
        %5647 = vmatpush1.bf16.msra.mxu0 %v5628
        %5648 = vmatprep.subr.bf16.mxu0 0
        %5649 = vmatpush1.bf16.msra.mxu0 %v5629
        %5650 = vmatprep.subr.bf16.mxu0 0
        %5651 = vmatpush1.bf16.msra.mxu0 %v5630
        %5652 = vmatprep.subr.bf16.mxu0 0
        %5653 = vmatpush1.bf16.msra.mxu0 %v5631
        %5654 = vmatprep.subr.bf16.mxu0 0
        %5655 = vmatpush1.bf16.msra.mxu0 %v5632
        %5656 = vmatprep.subr.bf16.mxu0 0
        %5657 = vmatpush1.bf16.msra.mxu0 %v5633
        %5658 = vmatprep.subr.bf16.mxu0 0
        %5659 = vmatpush1.bf16.msra.mxu0 0
        %5660 = vmatprep.subr.bf16.mxu0 0
        %5661 = vmatpush1.bf16.msra.mxu0 0
        %5662 = vmatprep.subr.bf16.mxu0 0
        %5663 = vmatpush1.bf16.msra.mxu0 0
        %5664 = vmatprep.subr.bf16.mxu0 0
        %5665 = vmatpush1.bf16.msra.mxu0 0
        %5666 = vmatprep.subr.bf16.mxu0 0
        %5667 = vmatpush1.bf16.msra.mxu0 0
        %5668 = vmatprep.subr.bf16.mxu0 0
        %5669 = vmatpush1.bf16.msra.mxu0 0
        %5670 = vmatprep.subr.bf16.mxu0 0
        %5671 = vmatpush1.bf16.msra.mxu0 0
        %5672 = vmatprep.subr.bf16.mxu0 0
        %5673 = vmatpush1.bf16.msra.mxu0 0
        %5674 = vmatprep.mubr.bf16.mxu0 0
        %5675 = vmatmul.mubr.bf16.gmra.mrb[0].mxu0 %v5534
        %v5676 = vpop.f32.mrb[0].mxu0
        %v5677 = vadd.f32 0.0, %v5676
        %v5678 = vpop.f32.mrb[0].mxu0
        %v5679 = vpop.f32.mrb[0].mxu0
        %v5680 = vadd.f32 0.0, %v5679
        %v5681 = vpop.f32.mrb[0].mxu0
        %5682 = vmatprep.mubr.bf16.mxu0 0
        %5683 = vmatmul.mubr.bf16.gmra.mrb[0].mxu0 %v5536
        %v5684 = vpop.f32.mrb[0].mxu0
        %v5685 = vadd.f32 0.0, %v5684
        %v5686 = vpop.f32.mrb[0].mxu0
        %v5687 = vpop.f32.mrb[0].mxu0
        %v5688 = vadd.f32 0.0, %v5687
        %v5689 = vpop.f32.mrb[0].mxu0
        %5690 = vmatprep.mubr.bf16.mxu0 0
        %5691 = vmatmul.mubr.bf16.gmra.mrb[0].mxu0 %v5538
        %v5692 = vpop.f32.mrb[0].mxu0
        %v5693 = vadd.f32 0.0, %v5692
        %v5694 = vpop.f32.mrb[0].mxu0
        %v5695 = vpop.f32.mrb[0].mxu0
        %v5696 = vadd.f32 0.0, %v5695
        %v5697 = vpop.f32.mrb[0].mxu0
        %5698 = vmatprep.mubr.bf16.mxu0 0
        %5699 = vmatmul.mubr.bf16.gmra.mrb[0].mxu0 %v5540
        %v5700 = vpop.f32.mrb[0].mxu0
        %v5701 = vadd.f32 0.0, %v5700
        %v5702 = vpop.f32.mrb[0].mxu0
        %v5703 = vpop.f32.mrb[0].mxu0
        %v5704 = vadd.f32 0.0, %v5703
        %v5705 = vpop.f32.mrb[0].mxu0
        %5706 = vmatprep.mubr.bf16.mxu0 0
        %5707 = vmatmul.mubr.bf16.gmra.mrb[0].mxu0 %v5542
        %v5708 = vpop.f32.mrb[0].mxu0
        %v5709 = vadd.f32 0.0, %v5708
        %v5710 = vpop.f32.mrb[0].mxu0
        %v5711 = vpop.f32.mrb[0].mxu0
        %v5712 = vadd.f32 0.0, %v5711
        %v5713 = vpop.f32.mrb[0].mxu0
        %5714 = vmatprep.mubr.bf16.mxu0 0
        %5715 = vmatmul.mubr.bf16.gmra.mrb[0].mxu0 %v5544
        %v5716 = vpop.f32.mrb[0].mxu0
        %v5717 = vadd.f32 0.0, %v5716
        %v5718 = vpop.f32.mrb[0].mxu0
        %v5719 = vpop.f32.mrb[0].mxu0
        %v5720 = vadd.f32 0.0, %v5719
        %v5721 = vpop.f32.mrb[0].mxu0
        %5722 = vmatprep.mubr.bf16.mxu0 0
        %5723 = vmatmul.mubr.bf16.gmra.mrb[0].mxu0 %v5546
        %v5724 = vpop.f32.mrb[0].mxu0
        %v5725 = vadd.f32 0.0, %v5724
        %v5726 = vpop.f32.mrb[0].mxu0
        %v5727 = vpop.f32.mrb[0].mxu0
        %v5728 = vadd.f32 0.0, %v5727
        %v5729 = vpop.f32.mrb[0].mxu0
        %5730 = vmatprep.mubr.bf16.mxu0 0
        %5731 = vmatmul.mubr.bf16.gmra.mrb[0].mxu0 %v5548
        %v5732 = vpop.f32.mrb[0].mxu0
        %v5733 = vadd.f32 0.0, %v5732
        %v5734 = vpop.f32.mrb[0].mxu0
        %v5735 = vpop.f32.mrb[0].mxu0
        %v5736 = vadd.f32 0.0, %v5735
        %v5737 = vpop.f32.mrb[0].mxu0
        %5738 = vmatprep.mubr.bf16.mxu0 0
        %5739 = vmatmul.mubr.bf16.gmra.mrb[0].mxu0 %v5550
        %v5740 = vpop.f32.mrb[0].mxu0
        %v5741 = vadd.f32 0.0, %v5740
        %v5742 = vpop.f32.mrb[0].mxu0
        %v5743 = vpop.f32.mrb[0].mxu0
        %v5744 = vadd.f32 0.0, %v5743
        %v5745 = vpop.f32.mrb[0].mxu0
        %5746 = vmatprep.mubr.bf16.mxu0 0
        %5747 = vmatmul.mubr.bf16.gmra.mrb[0].mxu0 %v5552
        %v5748 = vpop.f32.mrb[0].mxu0
        %v5749 = vadd.f32 0.0, %v5748
        %v5750 = vpop.f32.mrb[0].mxu0
        %v5751 = vpop.f32.mrb[0].mxu0
        %v5752 = vadd.f32 0.0, %v5751
        %v5753 = vpop.f32.mrb[0].mxu0
        %5754 = vmatprep.mubr.bf16.mxu0 0
        %5755 = vmatmul.mubr.bf16.gmra.mrb[0].mxu0 %v5554
        %v5756 = vpop.f32.mrb[0].mxu0
        %v5757 = vadd.f32 0.0, %v5756
        %v5758 = vpop.f32.mrb[0].mxu0
        %v5759 = vpop.f32.mrb[0].mxu0
        %v5760 = vadd.f32 0.0, %v5759
        %v5761 = vpop.f32.mrb[0].mxu0
        %5762 = vmatprep.mubr.bf16.mxu0 0
        %5763 = vmatmul.mubr.bf16.gmra.mrb[0].mxu0 %v5556
        %v5764 = vpop.f32.mrb[0].mxu0
        %v5765 = vadd.f32 0.0, %v5764
        %v5766 = vpop.f32.mrb[0].mxu0
        %v5767 = vpop.f32.mrb[0].mxu0
        %v5768 = vadd.f32 0.0, %v5767
        %v5769 = vpop.f32.mrb[0].mxu0
        %5770 = vmatprep.mubr.bf16.mxu0 0
        %5771 = vmatmul.mubr.bf16.gmra.mrb[0].mxu0 %v5558
        %v5772 = vpop.f32.mrb[0].mxu0
        %v5773 = vadd.f32 0.0, %v5772
        %v5774 = vpop.f32.mrb[0].mxu0
        %v5775 = vpop.f32.mrb[0].mxu0
        %v5776 = vadd.f32 0.0, %v5775
        %v5777 = vpop.f32.mrb[0].mxu0
        %5778 = vmatprep.mubr.bf16.mxu0 0
        %5779 = vmatmul.mubr.bf16.gmra.mrb[0].mxu0 %v5560
        %v5780 = vpop.f32.mrb[0].mxu0
        %v5781 = vadd.f32 0.0, %v5780
        %v5782 = vpop.f32.mrb[0].mxu0
        %v5783 = vpop.f32.mrb[0].mxu0
        %v5784 = vadd.f32 0.0, %v5783
        %v5785 = vpop.f32.mrb[0].mxu0
        %5786 = vmatprep.mubr.bf16.mxu0 0
        %5787 = vmatmul.mubr.bf16.gmra.mrb[0].mxu0 %v5562
        %v5788 = vpop.f32.mrb[0].mxu0
        %v5789 = vadd.f32 0.0, %v5788
        %v5790 = vpop.f32.mrb[0].mxu0
        %v5791 = vpop.f32.mrb[0].mxu0
        %v5792 = vadd.f32 0.0, %v5791
        %v5793 = vpop.f32.mrb[0].mxu0
        %5794 = vmatprep.mubr.bf16.mxu0 0
        %5795 = vmatmul.mubr.bf16.gmra.mrb[0].mxu0 %v5564
        %v5796 = vpop.f32.mrb[0].mxu0
        %v5797 = vadd.f32 0.0, %v5796
        %v5798 = vpop.f32.mrb[0].mxu0
        %v5799 = vpop.f32.mrb[0].mxu0
        %v5800 = vadd.f32 0.0, %v5799
        %v5801 = vpop.f32.mrb[0].mxu0
        %5802 = vmatprep.mubr.bf16.mxu0 0
        %5803 = vmatmul.mubr.bf16.gmra.mrb[0].mxu0 %v5566
        %v5804 = vpop.f32.mrb[0].mxu0
        %v5805 = vadd.f32 0.0, %v5804
        %v5806 = vpop.f32.mrb[0].mxu0
        %v5807 = vpop.f32.mrb[0].mxu0
        %v5808 = vadd.f32 0.0, %v5807
        %v5809 = vpop.f32.mrb[0].mxu0
        %5810 = vmatprep.mubr.bf16.mxu0 0
        %5811 = vmatmul.mubr.bf16.gmra.mrb[0].mxu0 %v5568
        %v5812 = vpop.f32.mrb[0].mxu0
        %v5813 = vadd.f32 0.0, %v5812
        %v5814 = vpop.f32.mrb[0].mxu0
        %v5815 = vpop.f32.mrb[0].mxu0
        %v5816 = vadd.f32 0.0, %v5815
        %v5817 = vpop.f32.mrb[0].mxu0
        %5818 = vmatprep.mubr.bf16.mxu0 0
        %5819 = vmatmul.mubr.bf16.gmra.mrb[0].mxu0 %v5570
        %v5820 = vpop.f32.mrb[0].mxu0
        %v5821 = vadd.f32 0.0, %v5820
        %v5822 = vpop.f32.mrb[0].mxu0
        %v5823 = vpop.f32.mrb[0].mxu0
        %v5824 = vadd.f32 0.0, %v5823
        %v5825 = vpop.f32.mrb[0].mxu0
        %5826 = vmatprep.mubr.bf16.mxu0 0
        %5827 = vmatmul.mubr.bf16.gmra.mrb[0].mxu0 %v5572
        %v5828 = vpop.f32.mrb[0].mxu0
        %v5829 = vadd.f32 0.0, %v5828
        %v5830 = vpop.f32.mrb[0].mxu0
        %v5831 = vpop.f32.mrb[0].mxu0
        %v5832 = vadd.f32 0.0, %v5831
        %v5833 = vpop.f32.mrb[0].mxu0
        %5834 = vmatprep.mubr.bf16.mxu0 0
        %5835 = vmatmul.mubr.bf16.gmra.mrb[0].mxu0 %v5571
        %v5836 = vpop.f32.mrb[0].mxu0
        %v5837 = vadd.f32 0.0, %v5836
        %v5838 = vpop.f32.mrb[0].mxu0
        %v5839 = vpop.f32.mrb[0].mxu0
        %v5840 = vpop.f32.mrb[0].mxu0
        %5841 = vdwg.mxu0
        %v5843 = vunpack.c.l.b16 %v5351
        %v5844 = vpack.c.b16 %v5470, %v5843
        %v5846 = vshrl.u32 %v5844, 16
        %v5848 = vrot.slane %v5846, 2
        %v5849 = vshll.u32 %v5844, 16
        %v5851 = vrot.slane %v5849, 3
        %v5852 = vor.u32 %v5848, %v5851
        %v5854 = vshrl.u32 %v5512, 16
        %v5856 = vrot.slane %v5854, 2
        %v5857 = vshll.u32 %v5512, 16
        %v5859 = vrot.slane %v5857, 3
        %v5860 = vor.u32 %v5856, %v5859
        %v5861 = vsel %vm795, %v5852, %v5860
        %v5863 = vshrl.u32 %v5513, 16
        %v5865 = vrot.slane %v5863, 2
        %v5866 = vshll.u32 %v5513, 16
        %v5868 = vrot.slane %v5866, 3
        %v5869 = vor.u32 %v5865, %v5868
        %v5870 = vsel %vm795, %v5860, %v5869
        %v5872 = vshrl.u32 %v5514, 16
        %v5874 = vrot.slane %v5872, 2
        %v5875 = vshll.u32 %v5514, 16
        %v5877 = vrot.slane %v5875, 3
        %v5878 = vor.u32 %v5874, %v5877
        %v5879 = vsel %vm795, %v5869, %v5878
        %v5881 = vshrl.u32 %v5515, 16
        %v5883 = vrot.slane %v5881, 2
        %v5884 = vshll.u32 %v5515, 16
        %v5886 = vrot.slane %v5884, 3
        %v5887 = vor.u32 %v5883, %v5886
        %v5888 = vsel %vm795, %v5878, %v5887
        %v5890 = vshrl.u32 %v5516, 16
        %v5892 = vrot.slane %v5890, 2
        %v5893 = vshll.u32 %v5516, 16
        %v5895 = vrot.slane %v5893, 3
        %v5896 = vor.u32 %v5892, %v5895
        %v5897 = vsel %vm795, %v5887, %v5896
        %v5899 = vshrl.u32 %v5517, 16
        %v5901 = vrot.slane %v5899, 2
        %v5902 = vshll.u32 %v5517, 16
        %v5904 = vrot.slane %v5902, 3
        %v5905 = vor.u32 %v5901, %v5904
        %v5906 = vsel %vm795, %v5896, %v5905
        %v5908 = vshrl.u32 %v5518, 16
        %v5910 = vrot.slane %v5908, 2
        %v5911 = vshll.u32 %v5518, 16
        %v5913 = vrot.slane %v5911, 3
        %v5914 = vor.u32 %v5910, %v5913
        %v5915 = vsel %vm795, %v5905, %v5914
        %v5917 = vshrl.u32 %v5519, 16
        %v5919 = vrot.slane %v5917, 2
        %v5920 = vshll.u32 %v5519, 16
        %v5922 = vrot.slane %v5920, 3
        %v5923 = vor.u32 %v5919, %v5922
        %v5924 = vsel %vm795, %v5914, %v5923
        %v5926 = vshrl.u32 %v5520, 16
        %v5928 = vrot.slane %v5926, 2
        %v5929 = vshll.u32 %v5520, 16
        %v5931 = vrot.slane %v5929, 3
        %v5932 = vor.u32 %v5928, %v5931
        %v5933 = vsel %vm795, %v5923, %v5932
        %v5935 = vshrl.u32 %v5521, 16
        %v5937 = vrot.slane %v5935, 2
        %v5938 = vshll.u32 %v5521, 16
        %v5940 = vrot.slane %v5938, 3
        %v5941 = vor.u32 %v5937, %v5940
        %v5942 = vsel %vm795, %v5932, %v5941
        %v5944 = vshrl.u32 %v5522, 16
        %v5946 = vrot.slane %v5944, 2
        %v5947 = vshll.u32 %v5522, 16
        %v5949 = vrot.slane %v5947, 3
        %v5950 = vor.u32 %v5946, %v5949
        %v5951 = vsel %vm795, %v5941, %v5950
        %v5953 = vshrl.u32 %v5523, 16
        %v5955 = vrot.slane %v5953, 2
        %v5956 = vshll.u32 %v5523, 16
        %v5958 = vrot.slane %v5956, 3
        %v5959 = vor.u32 %v5955, %v5958
        %v5960 = vsel %vm795, %v5950, %v5959
        %v5962 = vshrl.u32 %v5524, 16
        %v5964 = vrot.slane %v5962, 2
        %v5965 = vshll.u32 %v5524, 16
        %v5967 = vrot.slane %v5965, 3
        %v5968 = vor.u32 %v5964, %v5967
        %v5969 = vsel %vm795, %v5959, %v5968
        %v5971 = vshrl.u32 %v5525, 16
        %v5973 = vrot.slane %v5971, 2
        %v5974 = vshll.u32 %v5525, 16
        %v5976 = vrot.slane %v5974, 3
        %v5977 = vor.u32 %v5973, %v5976
        %v5978 = vsel %vm795, %v5968, %v5977
        %v5980 = vshrl.u32 %v5526, 16
        %v5982 = vrot.slane %v5980, 2
        %v5983 = vshll.u32 %v5526, 16
        %v5985 = vrot.slane %v5983, 3
        %v5986 = vor.u32 %v5982, %v5985
        %v5987 = vsel %vm795, %v5977, %v5986
        %v5989 = vshrl.u32 %v5527, 16
        %v5991 = vrot.slane %v5989, 2
        %v5992 = vshll.u32 %v5527, 16
        %v5994 = vrot.slane %v5992, 3
        %v5995 = vor.u32 %v5991, %v5994
        %v5996 = vsel %vm795, %v5986, %v5995
        %v5998 = vshrl.u32 %v5528, 16
        %v6000 = vrot.slane %v5998, 2
        %v6001 = vshll.u32 %v5528, 16
        %v6003 = vrot.slane %v6001, 3
        %v6004 = vor.u32 %v6000, %v6003
        %v6005 = vsel %vm795, %v5995, %v6004
        %v6007 = vshrl.u32 %v5529, 16
        %v6009 = vrot.slane %v6007, 2
        %v6010 = vshll.u32 %v5529, 16
        %v6012 = vrot.slane %v6010, 3
        %v6013 = vor.u32 %v6009, %v6012
        %v6014 = vsel %vm795, %v6004, %v6013
        %v6016 = vshrl.u32 %v5530, 16
        %v6018 = vrot.slane %v6016, 2
        %v6019 = vshll.u32 %v5530, 16
        %v6021 = vrot.slane %v6019, 3
        %v6022 = vor.u32 %v6018, %v6021
        %v6023 = vsel %vm795, %v6013, %v6022
        %v6025 = vshrl.u32 %v5531, 16
        %v6027 = vrot.slane %v6025, 2
        %v6028 = vshll.u32 %v5531, 16
        %v6030 = vrot.slane %v6028, 3
        %v6031 = vor.u32 %v6027, %v6030
        %v6032 = vsel %vm795, %v6022, %v6031
        %v6070 = vunpack.c.l.b16 %v5393
        %v6071 = vunpack.c.l.b16 %v5394
        %v6072 = vunpack.c.l.b16 %v5395
        %v6073 = vunpack.c.l.b16 %v5396
        %v6074 = vunpack.c.l.b16 %v5397
        %v6075 = vunpack.c.l.b16 %v5398
        %v6076 = vunpack.c.l.b16 %v5399
        %v6077 = vunpack.c.l.b16 %v5400
        %v6078 = vunpack.c.l.b16 %v5401
        %v6079 = vunpack.c.l.b16 %v5402
        %v6080 = vunpack.c.l.b16 %v5403
        %v6081 = vunpack.c.l.b16 %v5404
        %v6082 = vunpack.c.l.b16 %v5405
        %v6083 = vunpack.c.l.b16 %v5406
        %v6084 = vunpack.c.l.b16 %v5407
        %v6085 = vunpack.c.l.b16 %v5408
        %v6086 = vpack.c.b16 %v6071, %v6070
        %v6087 = vpack.c.b16 %v6073, %v6072
        %v6088 = vpack.c.b16 %v6075, %v6074
        %v6089 = vpack.c.b16 %v6077, %v6076
        %v6090 = vpack.c.b16 %v6079, %v6078
        %v6091 = vpack.c.b16 %v6081, %v6080
        %v6092 = vpack.c.b16 %v6083, %v6082
        %v6093 = vpack.c.b16 %v6085, %v6084
        %6102 = vmatprep.subr.bf16.mxu0 0
        %6103 = vmatpush1.bf16.msra.mxu0 %v6086
        %6104 = vmatprep.subr.bf16.mxu0 0
        %6105 = vmatpush1.bf16.msra.mxu0 %v6087
        %6106 = vmatprep.subr.bf16.mxu0 0
        %6107 = vmatpush1.bf16.msra.mxu0 %v6088
        %6108 = vmatprep.subr.bf16.mxu0 0
        %6109 = vmatpush1.bf16.msra.mxu0 %v6089
        %6110 = vmatprep.subr.bf16.mxu0 0
        %6111 = vmatpush1.bf16.msra.mxu0 %v6090
        %6112 = vmatprep.subr.bf16.mxu0 0
        %6113 = vmatpush1.bf16.msra.mxu0 %v6091
        %6114 = vmatprep.subr.bf16.mxu0 0
        %6115 = vmatpush1.bf16.msra.mxu0 %v6092
        %6116 = vmatprep.subr.bf16.mxu0 0
        %6117 = vmatpush1.bf16.msra.mxu0 %v6093
        %6118 = vmatprep.subr.bf16.mxu0 0
        %6119 = vmatpush1.bf16.msra.mxu0 0
        %6120 = vmatprep.subr.bf16.mxu0 0
        %6121 = vmatpush1.bf16.msra.mxu0 0
        %6122 = vmatprep.subr.bf16.mxu0 0
        %6123 = vmatpush1.bf16.msra.mxu0 0
        %6124 = vmatprep.subr.bf16.mxu0 0
        %6125 = vmatpush1.bf16.msra.mxu0 0
        %6126 = vmatprep.subr.bf16.mxu0 0
        %6127 = vmatpush1.bf16.msra.mxu0 0
        %6128 = vmatprep.subr.bf16.mxu0 0
        %6129 = vmatpush1.bf16.msra.mxu0 0
        %6130 = vmatprep.subr.bf16.mxu0 0
        %6131 = vmatpush1.bf16.msra.mxu0 0
        %6132 = vmatprep.subr.bf16.mxu0 0
        %6133 = vmatpush1.bf16.msra.mxu0 0
        %6134 = vmatprep.mubr.bf16.mxu0 0
        %6135 = vmatmul.mubr.bf16.gmra.mrb[0].mxu0 %v5861
        %v6136 = vpop.f32.mrb[0].mxu0
        %v6137 = vadd.f32 %v5677, %v6136
        %v6138 = vpop.f32.mrb[0].mxu0
        %v6139 = vpop.f32.mrb[0].mxu0
        %v6140 = vadd.f32 %v5680, %v6139
        %v6141 = vpop.f32.mrb[0].mxu0
        %6142 = vmatprep.mubr.bf16.mxu0 0
        %6143 = vmatmul.mubr.bf16.gmra.mrb[0].mxu0 %v5870
        %v6144 = vpop.f32.mrb[0].mxu0
        %v6145 = vadd.f32 %v5685, %v6144
        %v6146 = vpop.f32.mrb[0].mxu0
        %v6147 = vpop.f32.mrb[0].mxu0
        %v6148 = vadd.f32 %v5688, %v6147
        %v6149 = vpop.f32.mrb[0].mxu0
        %6150 = vmatprep.mubr.bf16.mxu0 0
        %6151 = vmatmul.mubr.bf16.gmra.mrb[0].mxu0 %v5879
        %v6152 = vpop.f32.mrb[0].mxu0
        %v6153 = vadd.f32 %v5693, %v6152
        %v6154 = vpop.f32.mrb[0].mxu0
        %v6155 = vpop.f32.mrb[0].mxu0
        %v6156 = vadd.f32 %v5696, %v6155
        %v6157 = vpop.f32.mrb[0].mxu0
        %6158 = vmatprep.mubr.bf16.mxu0 0
        %6159 = vmatmul.mubr.bf16.gmra.mrb[0].mxu0 %v5888
        %v6160 = vpop.f32.mrb[0].mxu0
        %v6161 = vadd.f32 %v5701, %v6160
        %v6162 = vpop.f32.mrb[0].mxu0
        %v6163 = vpop.f32.mrb[0].mxu0
        %v6164 = vadd.f32 %v5704, %v6163
        %v6165 = vpop.f32.mrb[0].mxu0
        %6166 = vmatprep.mubr.bf16.mxu0 0
        %6167 = vmatmul.mubr.bf16.gmra.mrb[0].mxu0 %v5897
        %v6168 = vpop.f32.mrb[0].mxu0
        %v6169 = vadd.f32 %v5709, %v6168
        %v6170 = vpop.f32.mrb[0].mxu0
        %v6171 = vpop.f32.mrb[0].mxu0
        %v6172 = vadd.f32 %v5712, %v6171
        %v6173 = vpop.f32.mrb[0].mxu0
        %6174 = vmatprep.mubr.bf16.mxu0 0
        %6175 = vmatmul.mubr.bf16.gmra.mrb[0].mxu0 %v5906
        %v6176 = vpop.f32.mrb[0].mxu0
        %v6177 = vadd.f32 %v5717, %v6176
        %v6178 = vpop.f32.mrb[0].mxu0
        %v6179 = vpop.f32.mrb[0].mxu0
        %v6180 = vadd.f32 %v5720, %v6179
        %v6181 = vpop.f32.mrb[0].mxu0
        %6182 = vmatprep.mubr.bf16.mxu0 0
        %6183 = vmatmul.mubr.bf16.gmra.mrb[0].mxu0 %v5915
        %v6184 = vpop.f32.mrb[0].mxu0
        %v6185 = vadd.f32 %v5725, %v6184
        %v6186 = vpop.f32.mrb[0].mxu0
        %v6187 = vpop.f32.mrb[0].mxu0
        %v6188 = vadd.f32 %v5728, %v6187
        %v6189 = vpop.f32.mrb[0].mxu0
        %6190 = vmatprep.mubr.bf16.mxu0 0
        %6191 = vmatmul.mubr.bf16.gmra.mrb[0].mxu0 %v5924
        %v6192 = vpop.f32.mrb[0].mxu0
        %v6193 = vadd.f32 %v5733, %v6192
        %v6194 = vpop.f32.mrb[0].mxu0
        %v6195 = vpop.f32.mrb[0].mxu0
        %v6196 = vadd.f32 %v5736, %v6195
        %v6197 = vpop.f32.mrb[0].mxu0
        %6198 = vmatprep.mubr.bf16.mxu0 0
        %6199 = vmatmul.mubr.bf16.gmra.mrb[0].mxu0 %v5933
        %v6200 = vpop.f32.mrb[0].mxu0
        %v6201 = vadd.f32 %v5741, %v6200
        %v6202 = vpop.f32.mrb[0].mxu0
        %v6203 = vpop.f32.mrb[0].mxu0
        %v6204 = vadd.f32 %v5744, %v6203
        %v6205 = vpop.f32.mrb[0].mxu0
        %6206 = vmatprep.mubr.bf16.mxu0 0
        %6207 = vmatmul.mubr.bf16.gmra.mrb[0].mxu0 %v5942
        %v6208 = vpop.f32.mrb[0].mxu0
        %v6209 = vadd.f32 %v5749, %v6208
        %v6210 = vpop.f32.mrb[0].mxu0
        %v6211 = vpop.f32.mrb[0].mxu0
        %v6212 = vadd.f32 %v5752, %v6211
        %v6213 = vpop.f32.mrb[0].mxu0
        %6214 = vmatprep.mubr.bf16.mxu0 0
        %6215 = vmatmul.mubr.bf16.gmra.mrb[0].mxu0 %v5951
        %v6216 = vpop.f32.mrb[0].mxu0
        %v6217 = vadd.f32 %v5757, %v6216
        %v6218 = vpop.f32.mrb[0].mxu0
        %v6219 = vpop.f32.mrb[0].mxu0
        %v6220 = vadd.f32 %v5760, %v6219
        %v6221 = vpop.f32.mrb[0].mxu0
        %6222 = vmatprep.mubr.bf16.mxu0 0
        %6223 = vmatmul.mubr.bf16.gmra.mrb[0].mxu0 %v5960
        %v6224 = vpop.f32.mrb[0].mxu0
        %v6225 = vadd.f32 %v5765, %v6224
        %v6226 = vpop.f32.mrb[0].mxu0
        %v6227 = vpop.f32.mrb[0].mxu0
        %v6228 = vadd.f32 %v5768, %v6227
        %v6229 = vpop.f32.mrb[0].mxu0
        %6230 = vmatprep.mubr.bf16.mxu0 0
        %6231 = vmatmul.mubr.bf16.gmra.mrb[0].mxu0 %v5969
        %v6232 = vpop.f32.mrb[0].mxu0
        %v6233 = vadd.f32 %v5773, %v6232
        %v6234 = vpop.f32.mrb[0].mxu0
        %v6235 = vpop.f32.mrb[0].mxu0
        %v6236 = vadd.f32 %v5776, %v6235
        %v6237 = vpop.f32.mrb[0].mxu0
        %6238 = vmatprep.mubr.bf16.mxu0 0
        %6239 = vmatmul.mubr.bf16.gmra.mrb[0].mxu0 %v5978
        %v6240 = vpop.f32.mrb[0].mxu0
        %v6241 = vadd.f32 %v5781, %v6240
        %v6242 = vpop.f32.mrb[0].mxu0
        %v6243 = vpop.f32.mrb[0].mxu0
        %v6244 = vadd.f32 %v5784, %v6243
        %v6245 = vpop.f32.mrb[0].mxu0
        %6246 = vmatprep.mubr.bf16.mxu0 0
        %6247 = vmatmul.mubr.bf16.gmra.mrb[0].mxu0 %v5987
        %v6248 = vpop.f32.mrb[0].mxu0
        %v6249 = vadd.f32 %v5789, %v6248
        %v6250 = vpop.f32.mrb[0].mxu0
        %v6251 = vpop.f32.mrb[0].mxu0
        %v6252 = vadd.f32 %v5792, %v6251
        %v6253 = vpop.f32.mrb[0].mxu0
        %6254 = vmatprep.mubr.bf16.mxu0 0
        %6255 = vmatmul.mubr.bf16.gmra.mrb[0].mxu0 %v5996
        %v6256 = vpop.f32.mrb[0].mxu0
        %v6257 = vadd.f32 %v5797, %v6256
        %v6258 = vpop.f32.mrb[0].mxu0
        %v6259 = vpop.f32.mrb[0].mxu0
        %v6260 = vadd.f32 %v5800, %v6259
        %v6261 = vpop.f32.mrb[0].mxu0
        %6262 = vmatprep.mubr.bf16.mxu0 0
        %6263 = vmatmul.mubr.bf16.gmra.mrb[0].mxu0 %v6005
        %v6264 = vpop.f32.mrb[0].mxu0
        %v6265 = vadd.f32 %v5805, %v6264
        %v6266 = vpop.f32.mrb[0].mxu0
        %v6267 = vpop.f32.mrb[0].mxu0
        %v6268 = vadd.f32 %v5808, %v6267
        %v6269 = vpop.f32.mrb[0].mxu0
        %6270 = vmatprep.mubr.bf16.mxu0 0
        %6271 = vmatmul.mubr.bf16.gmra.mrb[0].mxu0 %v6014
        %v6272 = vpop.f32.mrb[0].mxu0
        %v6273 = vadd.f32 %v5813, %v6272
        %v6274 = vpop.f32.mrb[0].mxu0
        %v6275 = vpop.f32.mrb[0].mxu0
        %v6276 = vadd.f32 %v5816, %v6275
        %v6277 = vpop.f32.mrb[0].mxu0
        %6278 = vmatprep.mubr.bf16.mxu0 0
        %6279 = vmatmul.mubr.bf16.gmra.mrb[0].mxu0 %v6023
        %v6280 = vpop.f32.mrb[0].mxu0
        %v6281 = vadd.f32 %v5821, %v6280
        %v6282 = vpop.f32.mrb[0].mxu0
        %v6283 = vpop.f32.mrb[0].mxu0
        %v6284 = vadd.f32 %v5824, %v6283
        %v6285 = vpop.f32.mrb[0].mxu0
        %6286 = vmatprep.mubr.bf16.mxu0 0
        %6287 = vmatmul.mubr.bf16.gmra.mrb[0].mxu0 %v6032
        %v6288 = vpop.f32.mrb[0].mxu0
        %v6289 = vadd.f32 %v5829, %v6288
        %v6290 = vpop.f32.mrb[0].mxu0
        %v6291 = vpop.f32.mrb[0].mxu0
        %v6292 = vadd.f32 %v5832, %v6291
        %v6293 = vpop.f32.mrb[0].mxu0
        %6294 = vmatprep.mubr.bf16.mxu0 0
        %6295 = vmatmul.mubr.bf16.gmra.mrb[0].mxu0 %v6031
        %v6296 = vpop.f32.mrb[0].mxu0
        %v6297 = vadd.f32 %v5837, %v6296
        %v6298 = vpop.f32.mrb[0].mxu0
        %v6299 = vpop.f32.mrb[0].mxu0
        %v6300 = vpop.f32.mrb[0].mxu0
        %6301 = vdwg.mxu0
        %v6302 = vld [vmem:[#allocation2 + $0xa4] sm:$0xf]
        %s6303 = scalar_lea.vmem [#allocation8], 128
        %v6304 = vld [vmem:[%s6303] sm:$0xf]
        %v6305 = vld [vmem:[%s6303 + $0x4] sm:$0xf]
        %v6306 = vld [vmem:[%s6303 + $0x8] sm:$0xf]
        %v6307 = vld [vmem:[%s6303 + $0xc] sm:$0xf]
        %v6308 = vld [vmem:[%s6303 + $0x10] sm:$0xf]
        %v6309 = vld [vmem:[%s6303 + $0x14] sm:$0xf]
        %v6310 = vld [vmem:[%s6303 + $0x18] sm:$0xf]
        %v6311 = vld [vmem:[%s6303 + $0x1c] sm:$0xf]
        %v6312 = vld [vmem:[%s6303 + $0x20] sm:$0xf]
        %v6313 = vld [vmem:[%s6303 + $0x24] sm:$0xf]
        %v6314 = vld [vmem:[%s6303 + $0x28] sm:$0xf]
        %v6315 = vld [vmem:[%s6303 + $0x2c] sm:$0xf]
        %v6316 = vld [vmem:[%s6303 + $0x30] sm:$0xf]
        %v6317 = vld [vmem:[%s6303 + $0x34] sm:$0xf]
        %v6318 = vld [vmem:[%s6303 + $0x38] sm:$0xf]
        %v6319 = vld [vmem:[%s6303 + $0x3c] sm:$0xf]
        %v6321 = vunpack.c.l.b16 %v6302
        %v6322 = vpack.c.b16 %v6321, %v5509
        %v6324 = vshrl.u32 %v5511, 16
        %v6326 = vrot.slane %v6324, 3
        %v6327 = vshll.u32 %v5511, 16
        %v6329 = vrot.slane %v6327, 4
        %v6330 = vor.u32 %v6326, %v6329
        %v6331 = vrot.slane %v5854, 3
        %v6332 = vrot.slane %v5857, 4
        %v6333 = vor.u32 %v6331, %v6332
        %v6334 = vsel %vm1274, %v6330, %v6333
        %v6335 = vrot.slane %v5863, 3
        %v6336 = vrot.slane %v5866, 4
        %v6337 = vor.u32 %v6335, %v6336
        %v6338 = vsel %vm1274, %v6333, %v6337
        %v6339 = vrot.slane %v5872, 3
        %v6340 = vrot.slane %v5875, 4
        %v6341 = vor.u32 %v6339, %v6340
        %v6342 = vsel %vm1274, %v6337, %v6341
        %v6343 = vrot.slane %v5881, 3
        %v6344 = vrot.slane %v5884, 4
        %v6345 = vor.u32 %v6343, %v6344
        %v6346 = vsel %vm1274, %v6341, %v6345
        %v6347 = vrot.slane %v5890, 3
        %v6348 = vrot.slane %v5893, 4
        %v6349 = vor.u32 %v6347, %v6348
        %v6350 = vsel %vm1274, %v6345, %v6349
        %v6351 = vrot.slane %v5899, 3
        %v6352 = vrot.slane %v5902, 4
        %v6353 = vor.u32 %v6351, %v6352
        %v6354 = vsel %vm1274, %v6349, %v6353
        %v6355 = vrot.slane %v5908, 3
        %v6356 = vrot.slane %v5911, 4
        %v6357 = vor.u32 %v6355, %v6356
        %v6358 = vsel %vm1274, %v6353, %v6357
        %v6359 = vrot.slane %v5917, 3
        %v6360 = vrot.slane %v5920, 4
        %v6361 = vor.u32 %v6359, %v6360
        %v6362 = vsel %vm1274, %v6357, %v6361
        %v6363 = vrot.slane %v5926, 3
        %v6364 = vrot.slane %v5929, 4
        %v6365 = vor.u32 %v6363, %v6364
        %v6366 = vsel %vm1274, %v6361, %v6365
        %v6367 = vrot.slane %v5935, 3
        %v6368 = vrot.slane %v5938, 4
        %v6369 = vor.u32 %v6367, %v6368
        %v6370 = vsel %vm1274, %v6365, %v6369
        %v6371 = vrot.slane %v5944, 3
        %v6372 = vrot.slane %v5947, 4
        %v6373 = vor.u32 %v6371, %v6372
        %v6374 = vsel %vm1274, %v6369, %v6373
        %v6375 = vrot.slane %v5953, 3
        %v6376 = vrot.slane %v5956, 4
        %v6377 = vor.u32 %v6375, %v6376
        %v6378 = vsel %vm1274, %v6373, %v6377
        %v6379 = vrot.slane %v5962, 3
        %v6380 = vrot.slane %v5965, 4
        %v6381 = vor.u32 %v6379, %v6380
        %v6382 = vsel %vm1274, %v6377, %v6381
        %v6383 = vrot.slane %v5971, 3
        %v6384 = vrot.slane %v5974, 4
        %v6385 = vor.u32 %v6383, %v6384
        %v6386 = vsel %vm1274, %v6381, %v6385
        %v6387 = vrot.slane %v5980, 3
        %v6388 = vrot.slane %v5983, 4
        %v6389 = vor.u32 %v6387, %v6388
        %v6390 = vsel %vm1274, %v6385, %v6389
        %v6391 = vrot.slane %v5989, 3
        %v6392 = vrot.slane %v5992, 4
        %v6393 = vor.u32 %v6391, %v6392
        %v6394 = vsel %vm1274, %v6389, %v6393
        %v6395 = vrot.slane %v5998, 3
        %v6396 = vrot.slane %v6001, 4
        %v6397 = vor.u32 %v6395, %v6396
        %v6398 = vsel %vm1274, %v6393, %v6397
        %v6399 = vrot.slane %v6007, 3
        %v6400 = vrot.slane %v6010, 4
        %v6401 = vor.u32 %v6399, %v6400
        %v6402 = vsel %vm1274, %v6397, %v6401
        %v6403 = vrot.slane %v6016, 3
        %v6404 = vrot.slane %v6019, 4
        %v6405 = vor.u32 %v6403, %v6404
        %v6406 = vsel %vm1274, %v6401, %v6405
        %v6408 = vshrl.u32 %v6322, 16
        %v6410 = vrot.slane %v6408, 3
        %v6411 = vshll.u32 %v6322, 16
        %v6413 = vrot.slane %v6411, 4
        %v6414 = vor.u32 %v6410, %v6413
        %v6415 = vsel %vm1274, %v6405, %v6414
        %v6453 = vunpack.c.l.b16 %v6304
        %v6454 = vunpack.c.l.b16 %v6305
        %v6455 = vunpack.c.l.b16 %v6306
        %v6456 = vunpack.c.l.b16 %v6307
        %v6457 = vunpack.c.l.b16 %v6308
        %v6458 = vunpack.c.l.b16 %v6309
        %v6459 = vunpack.c.l.b16 %v6310
        %v6460 = vunpack.c.l.b16 %v6311
        %v6461 = vunpack.c.l.b16 %v6312
        %v6462 = vunpack.c.l.b16 %v6313
        %v6463 = vunpack.c.l.b16 %v6314
        %v6464 = vunpack.c.l.b16 %v6315
        %v6465 = vunpack.c.l.b16 %v6316
        %v6466 = vunpack.c.l.b16 %v6317
        %v6467 = vunpack.c.l.b16 %v6318
        %v6468 = vunpack.c.l.b16 %v6319
        %v6469 = vpack.c.b16 %v6454, %v6453
        %v6470 = vpack.c.b16 %v6456, %v6455
        %v6471 = vpack.c.b16 %v6458, %v6457
        %v6472 = vpack.c.b16 %v6460, %v6459
        %v6473 = vpack.c.b16 %v6462, %v6461
        %v6474 = vpack.c.b16 %v6464, %v6463
        %v6475 = vpack.c.b16 %v6466, %v6465
        %v6476 = vpack.c.b16 %v6468, %v6467
        %6485 = vmatprep.subr.bf16.mxu0 0
        %6486 = vmatpush1.bf16.msra.mxu0 %v6469
        %6487 = vmatprep.subr.bf16.mxu0 0
        %6488 = vmatpush1.bf16.msra.mxu0 %v6470
        %6489 = vmatprep.subr.bf16.mxu0 0
        %6490 = vmatpush1.bf16.msra.mxu0 %v6471
        %6491 = vmatprep.subr.bf16.mxu0 0
        %6492 = vmatpush1.bf16.msra.mxu0 %v6472
        %6493 = vmatprep.subr.bf16.mxu0 0
        %6494 = vmatpush1.bf16.msra.mxu0 %v6473
        %6495 = vmatprep.subr.bf16.mxu0 0
        %6496 = vmatpush1.bf16.msra.mxu0 %v6474
        %6497 = vmatprep.subr.bf16.mxu0 0
        %6498 = vmatpush1.bf16.msra.mxu0 %v6475
        %6499 = vmatprep.subr.bf16.mxu0 0
        %6500 = vmatpush1.bf16.msra.mxu0 %v6476
        %6501 = vmatprep.subr.bf16.mxu0 0
        %6502 = vmatpush1.bf16.msra.mxu0 0
        %6503 = vmatprep.subr.bf16.mxu0 0
        %6504 = vmatpush1.bf16.msra.mxu0 0
        %6505 = vmatprep.subr.bf16.mxu0 0
        %6506 = vmatpush1.bf16.msra.mxu0 0
        %6507 = vmatprep.subr.bf16.mxu0 0
        %6508 = vmatpush1.bf16.msra.mxu0 0
        %6509 = vmatprep.subr.bf16.mxu0 0
        %6510 = vmatpush1.bf16.msra.mxu0 0
        %6511 = vmatprep.subr.bf16.mxu0 0
        %6512 = vmatpush1.bf16.msra.mxu0 0
        %6513 = vmatprep.subr.bf16.mxu0 0
        %6514 = vmatpush1.bf16.msra.mxu0 0
        %6515 = vmatprep.subr.bf16.mxu0 0
        %6516 = vmatpush1.bf16.msra.mxu0 0
        %6517 = vmatprep.mubr.bf16.mxu0 0
        %6518 = vmatmul.mubr.bf16.gmra.mrb[0].mxu0 %v6334
        %v6519 = vpop.f32.mrb[0].mxu0
        %v6520 = vadd.f32 0.0, %v6519
        %v6521 = vpop.f32.mrb[0].mxu0
        %v6522 = vpop.f32.mrb[0].mxu0
        %v6523 = vadd.f32 0.0, %v6522
        %v6524 = vpop.f32.mrb[0].mxu0
        %6525 = vmatprep.mubr.bf16.mxu0 0
        %6526 = vmatmul.mubr.bf16.gmra.mrb[0].mxu0 %v6338
        %v6527 = vpop.f32.mrb[0].mxu0
        %v6528 = vadd.f32 0.0, %v6527
        %v6529 = vpop.f32.mrb[0].mxu0
        %v6530 = vpop.f32.mrb[0].mxu0
        %v6531 = vadd.f32 0.0, %v6530
        %v6532 = vpop.f32.mrb[0].mxu0
        %6533 = vmatprep.mubr.bf16.mxu0 0
        %6534 = vmatmul.mubr.bf16.gmra.mrb[0].mxu0 %v6342
        %v6535 = vpop.f32.mrb[0].mxu0
        %v6536 = vadd.f32 0.0, %v6535
        %v6537 = vpop.f32.mrb[0].mxu0
        %v6538 = vpop.f32.mrb[0].mxu0
        %v6539 = vadd.f32 0.0, %v6538
        %v6540 = vpop.f32.mrb[0].mxu0
        %6541 = vmatprep.mubr.bf16.mxu0 0
        %6542 = vmatmul.mubr.bf16.gmra.mrb[0].mxu0 %v6346
        %v6543 = vpop.f32.mrb[0].mxu0
        %v6544 = vadd.f32 0.0, %v6543
        %v6545 = vpop.f32.mrb[0].mxu0
        %v6546 = vpop.f32.mrb[0].mxu0
        %v6547 = vadd.f32 0.0, %v6546
        %v6548 = vpop.f32.mrb[0].mxu0
        %6549 = vmatprep.mubr.bf16.mxu0 0
        %6550 = vmatmul.mubr.bf16.gmra.mrb[0].mxu0 %v6350
        %v6551 = vpop.f32.mrb[0].mxu0
        %v6552 = vadd.f32 0.0, %v6551
        %v6553 = vpop.f32.mrb[0].mxu0
        %v6554 = vpop.f32.mrb[0].mxu0
        %v6555 = vadd.f32 0.0, %v6554
        %v6556 = vpop.f32.mrb[0].mxu0
        %6557 = vmatprep.mubr.bf16.mxu0 0
        %6558 = vmatmul.mubr.bf16.gmra.mrb[0].mxu0 %v6354
        %v6559 = vpop.f32.mrb[0].mxu0
        %v6560 = vadd.f32 0.0, %v6559
        %v6561 = vpop.f32.mrb[0].mxu0
        %v6562 = vpop.f32.mrb[0].mxu0
        %v6563 = vadd.f32 0.0, %v6562
        %v6564 = vpop.f32.mrb[0].mxu0
        %6565 = vmatprep.mubr.bf16.mxu0 0
        %6566 = vmatmul.mubr.bf16.gmra.mrb[0].mxu0 %v6358
        %v6567 = vpop.f32.mrb[0].mxu0
        %v6568 = vadd.f32 0.0, %v6567
        %v6569 = vpop.f32.mrb[0].mxu0
        %v6570 = vpop.f32.mrb[0].mxu0
        %v6571 = vadd.f32 0.0, %v6570
        %v6572 = vpop.f32.mrb[0].mxu0
        %6573 = vmatprep.mubr.bf16.mxu0 0
        %6574 = vmatmul.mubr.bf16.gmra.mrb[0].mxu0 %v6362
        %v6575 = vpop.f32.mrb[0].mxu0
        %v6576 = vadd.f32 0.0, %v6575
        %v6577 = vpop.f32.mrb[0].mxu0
        %v6578 = vpop.f32.mrb[0].mxu0
        %v6579 = vadd.f32 0.0, %v6578
        %v6580 = vpop.f32.mrb[0].mxu0
        %6581 = vmatprep.mubr.bf16.mxu0 0
        %6582 = vmatmul.mubr.bf16.gmra.mrb[0].mxu0 %v6366
        %v6583 = vpop.f32.mrb[0].mxu0
        %v6584 = vadd.f32 0.0, %v6583
        %v6585 = vpop.f32.mrb[0].mxu0
        %v6586 = vpop.f32.mrb[0].mxu0
        %v6587 = vadd.f32 0.0, %v6586
        %v6588 = vpop.f32.mrb[0].mxu0
        %6589 = vmatprep.mubr.bf16.mxu0 0
        %6590 = vmatmul.mubr.bf16.gmra.mrb[0].mxu0 %v6370
        %v6591 = vpop.f32.mrb[0].mxu0
        %v6592 = vadd.f32 0.0, %v6591
        %v6593 = vpop.f32.mrb[0].mxu0
        %v6594 = vpop.f32.mrb[0].mxu0
        %v6595 = vadd.f32 0.0, %v6594
        %v6596 = vpop.f32.mrb[0].mxu0
        %6597 = vmatprep.mubr.bf16.mxu0 0
        %6598 = vmatmul.mubr.bf16.gmra.mrb[0].mxu0 %v6374
        %v6599 = vpop.f32.mrb[0].mxu0
        %v6600 = vadd.f32 0.0, %v6599
        %v6601 = vpop.f32.mrb[0].mxu0
        %v6602 = vpop.f32.mrb[0].mxu0
        %v6603 = vadd.f32 0.0, %v6602
        %v6604 = vpop.f32.mrb[0].mxu0
        %6605 = vmatprep.mubr.bf16.mxu0 0
        %6606 = vmatmul.mubr.bf16.gmra.mrb[0].mxu0 %v6378
        %v6607 = vpop.f32.mrb[0].mxu0
        %v6608 = vadd.f32 0.0, %v6607
        %v6609 = vpop.f32.mrb[0].mxu0
        %v6610 = vpop.f32.mrb[0].mxu0
        %v6611 = vadd.f32 0.0, %v6610
        %v6612 = vpop.f32.mrb[0].mxu0
        %6613 = vmatprep.mubr.bf16.mxu0 0
        %6614 = vmatmul.mubr.bf16.gmra.mrb[0].mxu0 %v6382
        %v6615 = vpop.f32.mrb[0].mxu0
        %v6616 = vadd.f32 0.0, %v6615
        %v6617 = vpop.f32.mrb[0].mxu0
        %v6618 = vpop.f32.mrb[0].mxu0
        %v6619 = vadd.f32 0.0, %v6618
        %v6620 = vpop.f32.mrb[0].mxu0
        %6621 = vmatprep.mubr.bf16.mxu0 0
        %6622 = vmatmul.mubr.bf16.gmra.mrb[0].mxu0 %v6386
        %v6623 = vpop.f32.mrb[0].mxu0
        %v6624 = vadd.f32 0.0, %v6623
        %v6625 = vpop.f32.mrb[0].mxu0
        %v6626 = vpop.f32.mrb[0].mxu0
        %v6627 = vadd.f32 0.0, %v6626
        %v6628 = vpop.f32.mrb[0].mxu0
        %6629 = vmatprep.mubr.bf16.mxu0 0
        %6630 = vmatmul.mubr.bf16.gmra.mrb[0].mxu0 %v6390
        %v6631 = vpop.f32.mrb[0].mxu0
        %v6632 = vadd.f32 0.0, %v6631
        %v6633 = vpop.f32.mrb[0].mxu0
        %v6634 = vpop.f32.mrb[0].mxu0
        %v6635 = vadd.f32 0.0, %v6634
        %v6636 = vpop.f32.mrb[0].mxu0
        %6637 = vmatprep.mubr.bf16.mxu0 0
        %6638 = vmatmul.mubr.bf16.gmra.mrb[0].mxu0 %v6394
        %v6639 = vpop.f32.mrb[0].mxu0
        %v6640 = vadd.f32 0.0, %v6639
        %v6641 = vpop.f32.mrb[0].mxu0
        %v6642 = vpop.f32.mrb[0].mxu0
        %v6643 = vadd.f32 0.0, %v6642
        %v6644 = vpop.f32.mrb[0].mxu0
        %6645 = vmatprep.mubr.bf16.mxu0 0
        %6646 = vmatmul.mubr.bf16.gmra.mrb[0].mxu0 %v6398
        %v6647 = vpop.f32.mrb[0].mxu0
        %v6648 = vadd.f32 0.0, %v6647
        %v6649 = vpop.f32.mrb[0].mxu0
        %v6650 = vpop.f32.mrb[0].mxu0
        %v6651 = vadd.f32 0.0, %v6650
        %v6652 = vpop.f32.mrb[0].mxu0
        %6653 = vmatprep.mubr.bf16.mxu0 0
        %6654 = vmatmul.mubr.bf16.gmra.mrb[0].mxu0 %v6402
        %v6655 = vpop.f32.mrb[0].mxu0
        %v6656 = vadd.f32 0.0, %v6655
        %v6657 = vpop.f32.mrb[0].mxu0
        %v6658 = vpop.f32.mrb[0].mxu0
        %v6659 = vadd.f32 0.0, %v6658
        %v6660 = vpop.f32.mrb[0].mxu0
        %6661 = vmatprep.mubr.bf16.mxu0 0
        %6662 = vmatmul.mubr.bf16.gmra.mrb[0].mxu0 %v6406
        %v6663 = vpop.f32.mrb[0].mxu0
        %v6664 = vadd.f32 0.0, %v6663
        %v6665 = vpop.f32.mrb[0].mxu0
        %v6666 = vpop.f32.mrb[0].mxu0
        %v6667 = vadd.f32 0.0, %v6666
        %v6668 = vpop.f32.mrb[0].mxu0
        %6669 = vmatprep.mubr.bf16.mxu0 0
        %6670 = vmatmul.mubr.bf16.gmra.mrb[0].mxu0 %v6415
        %v6671 = vpop.f32.mrb[0].mxu0
        %v6672 = vadd.f32 0.0, %v6671
        %v6673 = vpop.f32.mrb[0].mxu0
        %v6674 = vpop.f32.mrb[0].mxu0
        %v6675 = vadd.f32 0.0, %v6674
        %v6676 = vpop.f32.mrb[0].mxu0
        %6677 = vmatprep.mubr.bf16.mxu0 0
        %6678 = vmatmul.mubr.bf16.gmra.mrb[0].mxu0 %v6414
        %v6679 = vpop.f32.mrb[0].mxu0
        %v6680 = vadd.f32 0.0, %v6679
        %v6681 = vpop.f32.mrb[0].mxu0
        %v6682 = vpop.f32.mrb[0].mxu0
        %v6683 = vpop.f32.mrb[0].mxu0
        %6684 = vdwg.mxu0
        %v6685 = vadd.f32 %v6137, %v6520
        %v6686 = vadd.f32 %v6140, %v6523
        %v6687 = vadd.f32 %v6145, %v6528
        %v6688 = vadd.f32 %v6148, %v6531
        %v6689 = vadd.f32 %v6153, %v6536
        %v6690 = vadd.f32 %v6156, %v6539
        %v6691 = vadd.f32 %v6161, %v6544
        %v6692 = vadd.f32 %v6164, %v6547
        %v6693 = vadd.f32 %v6169, %v6552
        %v6694 = vadd.f32 %v6172, %v6555
        %v6695 = vadd.f32 %v6177, %v6560
        %v6696 = vadd.f32 %v6180, %v6563
        %v6697 = vadd.f32 %v6185, %v6568
        %v6698 = vadd.f32 %v6188, %v6571
        %v6699 = vadd.f32 %v6193, %v6576
        %v6700 = vadd.f32 %v6196, %v6579
        %v6701 = vadd.f32 %v6201, %v6584
        %v6702 = vadd.f32 %v6204, %v6587
        %v6703 = vadd.f32 %v6209, %v6592
        %v6704 = vadd.f32 %v6212, %v6595
        %v6705 = vadd.f32 %v6217, %v6600
        %v6706 = vadd.f32 %v6220, %v6603
        %v6707 = vadd.f32 %v6225, %v6608
        %v6708 = vadd.f32 %v6228, %v6611
        %v6709 = vadd.f32 %v6233, %v6616
        %v6710 = vadd.f32 %v6236, %v6619
        %v6711 = vadd.f32 %v6241, %v6624
        %v6712 = vadd.f32 %v6244, %v6627
        %v6713 = vadd.f32 %v6249, %v6632
        %v6714 = vadd.f32 %v6252, %v6635
        %v6715 = vadd.f32 %v6257, %v6640
        %v6716 = vadd.f32 %v6260, %v6643
        %v6717 = vadd.f32 %v6265, %v6648
        %v6718 = vadd.f32 %v6268, %v6651
        %v6719 = vadd.f32 %v6273, %v6656
        %v6720 = vadd.f32 %v6276, %v6659
        %v6721 = vadd.f32 %v6281, %v6664
        %v6722 = vadd.f32 %v6284, %v6667
        %v6723 = vadd.f32 %v6289, %v6672
        %v6724 = vadd.f32 %v6292, %v6675
        %v6725 = vadd.f32 %v6297, %v6680
        %v6726 = vld [vmem:[#allocation2 + $0x8] sm:$0x8]
        %v6727 = vld [vmem:[#allocation2 + $0xc] sm:$0xf]
        %v6728 = vld [vmem:[#allocation2 + $0x10] sm:$0xf]
        %v6729 = vld [vmem:[#allocation2 + $0x14] sm:$0xf]
        %v6730 = vld [vmem:[#allocation2 + $0x18] sm:$0xf]
        %v6731 = vld [vmem:[#allocation2 + $0x1c] sm:$0xf]
        %v6732 = vld [vmem:[#allocation2 + $0x20] sm:$0xf]
        %v6733 = vld [vmem:[#allocation2 + $0x24] sm:$0xf]
        %v6734 = vld [vmem:[#allocation2 + $0x28] sm:$0xf]
        %v6735 = vld [vmem:[#allocation2 + $0x2c] sm:$0xf]
        %v6736 = vld [vmem:[#allocation2 + $0x30] sm:$0xf]
        %v6737 = vld [vmem:[#allocation2 + $0x34] sm:$0xf]
        %v6738 = vld [vmem:[#allocation2 + $0x38] sm:$0xf]
        %v6739 = vld [vmem:[#allocation2 + $0x3c] sm:$0xf]
        %v6740 = vld [vmem:[#allocation2 + $0x40] sm:$0xf]
        %v6741 = vld [vmem:[#allocation2 + $0x44] sm:$0xf]
        %v6742 = vld [vmem:[#allocation2 + $0x48] sm:$0xf]
        %v6743 = vld [vmem:[#allocation2 + $0x4c] sm:$0xf]
        %v6744 = vld [vmem:[#allocation2 + $0x50] sm:$0xf]
        %v6745 = vld [vmem:[#allocation2 + $0x54] sm:$0xf]
        %v6746 = vld [vmem:[#allocation2 + $0x58] sm:$0xf]
        %v6747 = vld [vmem:[#allocation2 + $0x5c] sm:$0xf]
        %v6748 = vld [vmem:[#allocation2 + $0x60] sm:$0xf]
        %v6749 = vld [vmem:[#allocation2 + $0x64] sm:$0xf]
        %v6750 = vld [vmem:[#allocation2 + $0x68] sm:$0xf]
        %v6751 = vld [vmem:[#allocation2 + $0x6c] sm:$0xf]
        %v6752 = vld [vmem:[#allocation2 + $0x70] sm:$0xf]
        %v6753 = vld [vmem:[#allocation2 + $0x74] sm:$0xf]
        %v6754 = vld [vmem:[#allocation2 + $0x78] sm:$0xf]
        %v6755 = vld [vmem:[#allocation2 + $0x7c] sm:$0xf]
        %v6756 = vld [vmem:[#allocation2 + $0x80] sm:$0xf]
        %v6757 = vld [vmem:[#allocation2 + $0x84] sm:$0xf]
        %v6758 = vld [vmem:[#allocation2 + $0x88] sm:$0xf]
        %v6759 = vld [vmem:[#allocation2 + $0x8c] sm:$0xf]
        %v6760 = vld [vmem:[#allocation2 + $0x90] sm:$0xf]
        %v6761 = vld [vmem:[#allocation2 + $0x94] sm:$0xf]
        %v6762 = vld [vmem:[#allocation2 + $0x98] sm:$0xf]
        %v6763 = vld [vmem:[#allocation2 + $0x9c] sm:$0xf]
        %v6764 = vld [vmem:[#allocation2 + $0xa0] sm:$0xf]
        %v6765 = vld [vmem:[#allocation2 + $0xa4] sm:$0xf]
        %v6766 = vld [vmem:[#allocation2 + $0xa8] sm:$0xf]
        %v6767 = vld [vmem:[#allocation2 + $0xac] sm:$0xf]
        %s6768 = scalar_lea.vmem [#allocation8], 192
        %v6769 = vld [vmem:[%s6768] sm:$0xf]
        %v6770 = vld [vmem:[%s6768 + $0x4] sm:$0xf]
        %v6771 = vld [vmem:[%s6768 + $0x8] sm:$0xf]
        %v6772 = vld [vmem:[%s6768 + $0xc] sm:$0xf]
        %v6773 = vld [vmem:[%s6768 + $0x10] sm:$0xf]
        %v6774 = vld [vmem:[%s6768 + $0x14] sm:$0xf]
        %v6775 = vld [vmem:[%s6768 + $0x18] sm:$0xf]
        %v6776 = vld [vmem:[%s6768 + $0x1c] sm:$0xf]
        %v6777 = vld [vmem:[%s6768 + $0x20] sm:$0xf]
        %v6778 = vld [vmem:[%s6768 + $0x24] sm:$0xf]
        %v6779 = vld [vmem:[%s6768 + $0x28] sm:$0xf]
        %v6780 = vld [vmem:[%s6768 + $0x2c] sm:$0xf]
        %v6781 = vld [vmem:[%s6768 + $0x30] sm:$0xf]
        %v6782 = vld [vmem:[%s6768 + $0x34] sm:$0xf]
        %v6783 = vld [vmem:[%s6768 + $0x38] sm:$0xf]
        %v6784 = vld [vmem:[%s6768 + $0x3c] sm:$0xf]
        %v6827 = vunpack.c.l.b16 %v6726
        %v6828 = vunpack.c.l.b16 %v6727
        %v6829 = vunpack.c.l.b16 %v6728
        %v6830 = vunpack.c.l.b16 %v6729
        %v6831 = vunpack.c.l.b16 %v6730
        %v6832 = vunpack.c.l.b16 %v6731
        %v6833 = vunpack.c.l.b16 %v6732
        %v6834 = vunpack.c.l.b16 %v6733
        %v6835 = vunpack.c.l.b16 %v6734
        %v6836 = vunpack.c.l.b16 %v6735
        %v6837 = vunpack.c.l.b16 %v6736
        %v6838 = vunpack.c.l.b16 %v6737
        %v6839 = vunpack.c.l.b16 %v6738
        %v6840 = vunpack.c.l.b16 %v6739
        %v6841 = vunpack.c.l.b16 %v6740
        %v6842 = vunpack.c.l.b16 %v6741
        %v6843 = vunpack.c.l.b16 %v6742
        %v6844 = vunpack.c.l.b16 %v6743
        %v6845 = vunpack.c.l.b16 %v6744
        %v6846 = vunpack.c.l.b16 %v6745
        %v6847 = vunpack.c.l.b16 %v6746
        %v6848 = vunpack.c.l.b16 %v6747
        %v6849 = vunpack.c.l.b16 %v6748
        %v6850 = vunpack.c.l.b16 %v6749
        %v6851 = vunpack.c.l.b16 %v6750
        %v6852 = vunpack.c.l.b16 %v6751
        %v6853 = vunpack.c.l.b16 %v6752
        %v6854 = vunpack.c.l.b16 %v6753
        %v6855 = vunpack.c.l.b16 %v6754
        %v6856 = vunpack.c.l.b16 %v6755
        %v6857 = vunpack.c.l.b16 %v6756
        %v6858 = vunpack.c.l.b16 %v6757
        %v6859 = vunpack.c.l.b16 %v6758
        %v6860 = vunpack.c.l.b16 %v6759
        %v6861 = vunpack.c.l.b16 %v6760
        %v6862 = vunpack.c.l.b16 %v6761
        %v6863 = vunpack.c.l.b16 %v6762
        %v6864 = vunpack.c.l.b16 %v6763
        %v6865 = vunpack.c.l.b16 %v6764
        %v6866 = vunpack.c.l.b16 %v6765
        %v6867 = vunpack.c.l.b16 %v6766
        %v6868 = vunpack.c.l.b16 %v6767
        %v6869 = vpack.c.b16 %v6828, %v6827
        %v6870 = vpack.c.b16 %v6830, %v6829
        %v6871 = vpack.c.b16 %v6832, %v6831
        %v6872 = vpack.c.b16 %v6834, %v6833
        %v6873 = vpack.c.b16 %v6836, %v6835
        %v6874 = vpack.c.b16 %v6838, %v6837
        %v6875 = vpack.c.b16 %v6840, %v6839
        %v6876 = vpack.c.b16 %v6842, %v6841
        %v6877 = vpack.c.b16 %v6844, %v6843
        %v6878 = vpack.c.b16 %v6846, %v6845
        %v6879 = vpack.c.b16 %v6848, %v6847
        %v6880 = vpack.c.b16 %v6850, %v6849
        %v6881 = vpack.c.b16 %v6852, %v6851
        %v6882 = vpack.c.b16 %v6854, %v6853
        %v6883 = vpack.c.b16 %v6856, %v6855
        %v6884 = vpack.c.b16 %v6858, %v6857
        %v6885 = vpack.c.b16 %v6860, %v6859
        %v6886 = vpack.c.b16 %v6862, %v6861
        %v6887 = vpack.c.b16 %v6864, %v6863
        %v6888 = vpack.c.b16 %v6866, %v6865
        %v6889 = vpack.c.b16 %v6868, %v6867
        %v6891 = vshrl.u32 %v6869, 16
        %v6893 = vrot.slane %v6891, 3
        %v6894 = vshll.u32 %v6869, 16
        %v6896 = vrot.slane %v6894, 4
        %v6897 = vor.u32 %v6893, %v6896
        %v6899 = vshrl.u32 %v6870, 16
        %v6901 = vrot.slane %v6899, 3
        %v6902 = vshll.u32 %v6870, 16
        %v6904 = vrot.slane %v6902, 4
        %v6905 = vor.u32 %v6901, %v6904
        %v6906 = vsel %vm1274, %v6897, %v6905
        %v6908 = vshrl.u32 %v6871, 16
        %v6910 = vrot.slane %v6908, 3
        %v6911 = vshll.u32 %v6871, 16
        %v6913 = vrot.slane %v6911, 4
        %v6914 = vor.u32 %v6910, %v6913
        %v6915 = vsel %vm1274, %v6905, %v6914
        %v6917 = vshrl.u32 %v6872, 16
        %v6919 = vrot.slane %v6917, 3
        %v6920 = vshll.u32 %v6872, 16
        %v6922 = vrot.slane %v6920, 4
        %v6923 = vor.u32 %v6919, %v6922
        %v6924 = vsel %vm1274, %v6914, %v6923
        %v6926 = vshrl.u32 %v6873, 16
        %v6928 = vrot.slane %v6926, 3
        %v6929 = vshll.u32 %v6873, 16
        %v6931 = vrot.slane %v6929, 4
        %v6932 = vor.u32 %v6928, %v6931
        %v6933 = vsel %vm1274, %v6923, %v6932
        %v6935 = vshrl.u32 %v6874, 16
        %v6937 = vrot.slane %v6935, 3
        %v6938 = vshll.u32 %v6874, 16
        %v6940 = vrot.slane %v6938, 4
        %v6941 = vor.u32 %v6937, %v6940
        %v6942 = vsel %vm1274, %v6932, %v6941
        %v6944 = vshrl.u32 %v6875, 16
        %v6946 = vrot.slane %v6944, 3
        %v6947 = vshll.u32 %v6875, 16
        %v6949 = vrot.slane %v6947, 4
        %v6950 = vor.u32 %v6946, %v6949
        %v6951 = vsel %vm1274, %v6941, %v6950
        %v6953 = vshrl.u32 %v6876, 16
        %v6955 = vrot.slane %v6953, 3
        %v6956 = vshll.u32 %v6876, 16
        %v6958 = vrot.slane %v6956, 4
        %v6959 = vor.u32 %v6955, %v6958
        %v6960 = vsel %vm1274, %v6950, %v6959
        %v6962 = vshrl.u32 %v6877, 16
        %v6964 = vrot.slane %v6962, 3
        %v6965 = vshll.u32 %v6877, 16
        %v6967 = vrot.slane %v6965, 4
        %v6968 = vor.u32 %v6964, %v6967
        %v6969 = vsel %vm1274, %v6959, %v6968
        %v6971 = vshrl.u32 %v6878, 16
        %v6973 = vrot.slane %v6971, 3
        %v6974 = vshll.u32 %v6878, 16
        %v6976 = vrot.slane %v6974, 4
        %v6977 = vor.u32 %v6973, %v6976
        %v6978 = vsel %vm1274, %v6968, %v6977
        %v6980 = vshrl.u32 %v6879, 16
        %v6982 = vrot.slane %v6980, 3
        %v6983 = vshll.u32 %v6879, 16
        %v6985 = vrot.slane %v6983, 4
        %v6986 = vor.u32 %v6982, %v6985
        %v6987 = vsel %vm1274, %v6977, %v6986
        %v6989 = vshrl.u32 %v6880, 16
        %v6991 = vrot.slane %v6989, 3
        %v6992 = vshll.u32 %v6880, 16
        %v6994 = vrot.slane %v6992, 4
        %v6995 = vor.u32 %v6991, %v6994
        %v6996 = vsel %vm1274, %v6986, %v6995
        %v6998 = vshrl.u32 %v6881, 16
        %v7000 = vrot.slane %v6998, 3
        %v7001 = vshll.u32 %v6881, 16
        %v7003 = vrot.slane %v7001, 4
        %v7004 = vor.u32 %v7000, %v7003
        %v7005 = vsel %vm1274, %v6995, %v7004
        %v7007 = vshrl.u32 %v6882, 16
        %v7009 = vrot.slane %v7007, 3
        %v7010 = vshll.u32 %v6882, 16
        %v7012 = vrot.slane %v7010, 4
        %v7013 = vor.u32 %v7009, %v7012
        %v7014 = vsel %vm1274, %v7004, %v7013
        %v7016 = vshrl.u32 %v6883, 16
        %v7018 = vrot.slane %v7016, 3
        %v7019 = vshll.u32 %v6883, 16
        %v7021 = vrot.slane %v7019, 4
        %v7022 = vor.u32 %v7018, %v7021
        %v7023 = vsel %vm1274, %v7013, %v7022
        %v7025 = vshrl.u32 %v6884, 16
        %v7027 = vrot.slane %v7025, 3
        %v7028 = vshll.u32 %v6884, 16
        %v7030 = vrot.slane %v7028, 4
        %v7031 = vor.u32 %v7027, %v7030
        %v7032 = vsel %vm1274, %v7022, %v7031
        %v7034 = vshrl.u32 %v6885, 16
        %v7036 = vrot.slane %v7034, 3
        %v7037 = vshll.u32 %v6885, 16
        %v7039 = vrot.slane %v7037, 4
        %v7040 = vor.u32 %v7036, %v7039
        %v7041 = vsel %vm1274, %v7031, %v7040
        %v7043 = vshrl.u32 %v6886, 16
        %v7045 = vrot.slane %v7043, 3
        %v7046 = vshll.u32 %v6886, 16
        %v7048 = vrot.slane %v7046, 4
        %v7049 = vor.u32 %v7045, %v7048
        %v7050 = vsel %vm1274, %v7040, %v7049
        %v7052 = vshrl.u32 %v6887, 16
        %v7054 = vrot.slane %v7052, 3
        %v7055 = vshll.u32 %v6887, 16
        %v7057 = vrot.slane %v7055, 4
        %v7058 = vor.u32 %v7054, %v7057
        %v7059 = vsel %vm1274, %v7049, %v7058
        %v7061 = vshrl.u32 %v6888, 16
        %v7063 = vrot.slane %v7061, 3
        %v7064 = vshll.u32 %v6888, 16
        %v7066 = vrot.slane %v7064, 4
        %v7067 = vor.u32 %v7063, %v7066
        %v7068 = vsel %vm1274, %v7058, %v7067
        %v7070 = vshrl.u32 %v6889, 16
        %v7072 = vrot.slane %v7070, 3
        %v7073 = vshll.u32 %v6889, 16
        %v7075 = vrot.slane %v7073, 4
        %v7076 = vor.u32 %v7072, %v7075
        %v7077 = vsel %vm1274, %v7067, %v7076
        %v7115 = vunpack.c.l.b16 %v6769
        %v7116 = vunpack.c.l.b16 %v6770
        %v7117 = vunpack.c.l.b16 %v6771
        %v7118 = vunpack.c.l.b16 %v6772
        %v7119 = vunpack.c.l.b16 %v6773
        %v7120 = vunpack.c.l.b16 %v6774
        %v7121 = vunpack.c.l.b16 %v6775
        %v7122 = vunpack.c.l.b16 %v6776
        %v7123 = vunpack.c.l.b16 %v6777
        %v7124 = vunpack.c.l.b16 %v6778
        %v7125 = vunpack.c.l.b16 %v6779
        %v7126 = vunpack.c.l.b16 %v6780
        %v7127 = vunpack.c.l.b16 %v6781
        %v7128 = vunpack.c.l.b16 %v6782
        %v7129 = vunpack.c.l.b16 %v6783
        %v7130 = vunpack.c.l.b16 %v6784
        %v7131 = vpack.c.b16 %v7116, %v7115
        %v7132 = vpack.c.b16 %v7118, %v7117
        %v7133 = vpack.c.b16 %v7120, %v7119
        %v7134 = vpack.c.b16 %v7122, %v7121
        %v7135 = vpack.c.b16 %v7124, %v7123
        %v7136 = vpack.c.b16 %v7126, %v7125
        %v7137 = vpack.c.b16 %v7128, %v7127
        %v7138 = vpack.c.b16 %v7130, %v7129
        %7147 = vmatprep.subr.bf16.mxu0 0
        %7148 = vmatpush1.bf16.msra.mxu0 %v7131
        %7149 = vmatprep.subr.bf16.mxu0 0
        %7150 = vmatpush1.bf16.msra.mxu0 %v7132
        %7151 = vmatprep.subr.bf16.mxu0 0
        %7152 = vmatpush1.bf16.msra.mxu0 %v7133
        %7153 = vmatprep.subr.bf16.mxu0 0
        %7154 = vmatpush1.bf16.msra.mxu0 %v7134
        %7155 = vmatprep.subr.bf16.mxu0 0
        %7156 = vmatpush1.bf16.msra.mxu0 %v7135
        %7157 = vmatprep.subr.bf16.mxu0 0
        %7158 = vmatpush1.bf16.msra.mxu0 %v7136
        %7159 = vmatprep.subr.bf16.mxu0 0
        %7160 = vmatpush1.bf16.msra.mxu0 %v7137
        %7161 = vmatprep.subr.bf16.mxu0 0
        %7162 = vmatpush1.bf16.msra.mxu0 %v7138
        %7163 = vmatprep.subr.bf16.mxu0 0
        %7164 = vmatpush1.bf16.msra.mxu0 0
        %7165 = vmatprep.subr.bf16.mxu0 0
        %7166 = vmatpush1.bf16.msra.mxu0 0
        %7167 = vmatprep.subr.bf16.mxu0 0
        %7168 = vmatpush1.bf16.msra.mxu0 0
        %7169 = vmatprep.subr.bf16.mxu0 0
        %7170 = vmatpush1.bf16.msra.mxu0 0
        %7171 = vmatprep.subr.bf16.mxu0 0
        %7172 = vmatpush1.bf16.msra.mxu0 0
        %7173 = vmatprep.subr.bf16.mxu0 0
        %7174 = vmatpush1.bf16.msra.mxu0 0
        %7175 = vmatprep.subr.bf16.mxu0 0
        %7176 = vmatpush1.bf16.msra.mxu0 0
        %7177 = vmatprep.subr.bf16.mxu0 0
        %7178 = vmatpush1.bf16.msra.mxu0 0
        %7179 = vmatprep.mubr.bf16.mxu0 0
        %7180 = vmatmul.mubr.bf16.gmra.mrb[0].mxu0 %v6906
        %v7181 = vpop.f32.mrb[0].mxu0
        %v7182 = vadd.f32 0.0, %v7181
        %v7183 = vpop.f32.mrb[0].mxu0
        %v7184 = vpop.f32.mrb[0].mxu0
        %v7185 = vadd.f32 0.0, %v7184
        %v7186 = vpop.f32.mrb[0].mxu0
        %7187 = vmatprep.mubr.bf16.mxu0 0
        %7188 = vmatmul.mubr.bf16.gmra.mrb[0].mxu0 %v6915
        %v7189 = vpop.f32.mrb[0].mxu0
        %v7190 = vadd.f32 0.0, %v7189
        %v7191 = vpop.f32.mrb[0].mxu0
        %v7192 = vpop.f32.mrb[0].mxu0
        %v7193 = vadd.f32 0.0, %v7192
        %v7194 = vpop.f32.mrb[0].mxu0
        %7195 = vmatprep.mubr.bf16.mxu0 0
        %7196 = vmatmul.mubr.bf16.gmra.mrb[0].mxu0 %v6924
        %v7197 = vpop.f32.mrb[0].mxu0
        %v7198 = vadd.f32 0.0, %v7197
        %v7199 = vpop.f32.mrb[0].mxu0
        %v7200 = vpop.f32.mrb[0].mxu0
        %v7201 = vadd.f32 0.0, %v7200
        %v7202 = vpop.f32.mrb[0].mxu0
        %7203 = vmatprep.mubr.bf16.mxu0 0
        %7204 = vmatmul.mubr.bf16.gmra.mrb[0].mxu0 %v6933
        %v7205 = vpop.f32.mrb[0].mxu0
        %v7206 = vadd.f32 0.0, %v7205
        %v7207 = vpop.f32.mrb[0].mxu0
        %v7208 = vpop.f32.mrb[0].mxu0
        %v7209 = vadd.f32 0.0, %v7208
        %v7210 = vpop.f32.mrb[0].mxu0
        %7211 = vmatprep.mubr.bf16.mxu0 0
        %7212 = vmatmul.mubr.bf16.gmra.mrb[0].mxu0 %v6942
        %v7213 = vpop.f32.mrb[0].mxu0
        %v7214 = vadd.f32 0.0, %v7213
        %v7215 = vpop.f32.mrb[0].mxu0
        %v7216 = vpop.f32.mrb[0].mxu0
        %v7217 = vadd.f32 0.0, %v7216
        %v7218 = vpop.f32.mrb[0].mxu0
        %7219 = vmatprep.mubr.bf16.mxu0 0
        %7220 = vmatmul.mubr.bf16.gmra.mrb[0].mxu0 %v6951
        %v7221 = vpop.f32.mrb[0].mxu0
        %v7222 = vadd.f32 0.0, %v7221
        %v7223 = vpop.f32.mrb[0].mxu0
        %v7224 = vpop.f32.mrb[0].mxu0
        %v7225 = vadd.f32 0.0, %v7224
        %v7226 = vpop.f32.mrb[0].mxu0
        %7227 = vmatprep.mubr.bf16.mxu0 0
        %7228 = vmatmul.mubr.bf16.gmra.mrb[0].mxu0 %v6960
        %v7229 = vpop.f32.mrb[0].mxu0
        %v7230 = vadd.f32 0.0, %v7229
        %v7231 = vpop.f32.mrb[0].mxu0
        %v7232 = vpop.f32.mrb[0].mxu0
        %v7233 = vadd.f32 0.0, %v7232
        %v7234 = vpop.f32.mrb[0].mxu0
        %7235 = vmatprep.mubr.bf16.mxu0 0
        %7236 = vmatmul.mubr.bf16.gmra.mrb[0].mxu0 %v6969
        %v7237 = vpop.f32.mrb[0].mxu0
        %v7238 = vadd.f32 0.0, %v7237
        %v7239 = vpop.f32.mrb[0].mxu0
        %v7240 = vpop.f32.mrb[0].mxu0
        %v7241 = vadd.f32 0.0, %v7240
        %v7242 = vpop.f32.mrb[0].mxu0
        %7243 = vmatprep.mubr.bf16.mxu0 0
        %7244 = vmatmul.mubr.bf16.gmra.mrb[0].mxu0 %v6978
        %v7245 = vpop.f32.mrb[0].mxu0
        %v7246 = vadd.f32 0.0, %v7245
        %v7247 = vpop.f32.mrb[0].mxu0
        %v7248 = vpop.f32.mrb[0].mxu0
        %v7249 = vadd.f32 0.0, %v7248
        %v7250 = vpop.f32.mrb[0].mxu0
        %7251 = vmatprep.mubr.bf16.mxu0 0
        %7252 = vmatmul.mubr.bf16.gmra.mrb[0].mxu0 %v6987
        %v7253 = vpop.f32.mrb[0].mxu0
        %v7254 = vadd.f32 0.0, %v7253
        %v7255 = vpop.f32.mrb[0].mxu0
        %v7256 = vpop.f32.mrb[0].mxu0
        %v7257 = vadd.f32 0.0, %v7256
        %v7258 = vpop.f32.mrb[0].mxu0
        %7259 = vmatprep.mubr.bf16.mxu0 0
        %7260 = vmatmul.mubr.bf16.gmra.mrb[0].mxu0 %v6996
        %v7261 = vpop.f32.mrb[0].mxu0
        %v7262 = vadd.f32 0.0, %v7261
        %v7263 = vpop.f32.mrb[0].mxu0
        %v7264 = vpop.f32.mrb[0].mxu0
        %v7265 = vadd.f32 0.0, %v7264
        %v7266 = vpop.f32.mrb[0].mxu0
        %7267 = vmatprep.mubr.bf16.mxu0 0
        %7268 = vmatmul.mubr.bf16.gmra.mrb[0].mxu0 %v7005
        %v7269 = vpop.f32.mrb[0].mxu0
        %v7270 = vadd.f32 0.0, %v7269
        %v7271 = vpop.f32.mrb[0].mxu0
        %v7272 = vpop.f32.mrb[0].mxu0
        %v7273 = vadd.f32 0.0, %v7272
        %v7274 = vpop.f32.mrb[0].mxu0
        %7275 = vmatprep.mubr.bf16.mxu0 0
        %7276 = vmatmul.mubr.bf16.gmra.mrb[0].mxu0 %v7014
        %v7277 = vpop.f32.mrb[0].mxu0
        %v7278 = vadd.f32 0.0, %v7277
        %v7279 = vpop.f32.mrb[0].mxu0
        %v7280 = vpop.f32.mrb[0].mxu0
        %v7281 = vadd.f32 0.0, %v7280
        %v7282 = vpop.f32.mrb[0].mxu0
        %7283 = vmatprep.mubr.bf16.mxu0 0
        %7284 = vmatmul.mubr.bf16.gmra.mrb[0].mxu0 %v7023
        %v7285 = vpop.f32.mrb[0].mxu0
        %v7286 = vadd.f32 0.0, %v7285
        %v7287 = vpop.f32.mrb[0].mxu0
        %v7288 = vpop.f32.mrb[0].mxu0
        %v7289 = vadd.f32 0.0, %v7288
        %v7290 = vpop.f32.mrb[0].mxu0
        %7291 = vmatprep.mubr.bf16.mxu0 0
        %7292 = vmatmul.mubr.bf16.gmra.mrb[0].mxu0 %v7032
        %v7293 = vpop.f32.mrb[0].mxu0
        %v7294 = vadd.f32 0.0, %v7293
        %v7295 = vpop.f32.mrb[0].mxu0
        %v7296 = vpop.f32.mrb[0].mxu0
        %v7297 = vadd.f32 0.0, %v7296
        %v7298 = vpop.f32.mrb[0].mxu0
        %7299 = vmatprep.mubr.bf16.mxu0 0
        %7300 = vmatmul.mubr.bf16.gmra.mrb[0].mxu0 %v7041
        %v7301 = vpop.f32.mrb[0].mxu0
        %v7302 = vadd.f32 0.0, %v7301
        %v7303 = vpop.f32.mrb[0].mxu0
        %v7304 = vpop.f32.mrb[0].mxu0
        %v7305 = vadd.f32 0.0, %v7304
        %v7306 = vpop.f32.mrb[0].mxu0
        %7307 = vmatprep.mubr.bf16.mxu0 0
        %7308 = vmatmul.mubr.bf16.gmra.mrb[0].mxu0 %v7050
        %v7309 = vpop.f32.mrb[0].mxu0
        %v7310 = vadd.f32 0.0, %v7309
        %v7311 = vpop.f32.mrb[0].mxu0
        %v7312 = vpop.f32.mrb[0].mxu0
        %v7313 = vadd.f32 0.0, %v7312
        %v7314 = vpop.f32.mrb[0].mxu0
        %7315 = vmatprep.mubr.bf16.mxu0 0
        %7316 = vmatmul.mubr.bf16.gmra.mrb[0].mxu0 %v7059
        %v7317 = vpop.f32.mrb[0].mxu0
        %v7318 = vadd.f32 0.0, %v7317
        %v7319 = vpop.f32.mrb[0].mxu0
        %v7320 = vpop.f32.mrb[0].mxu0
        %v7321 = vadd.f32 0.0, %v7320
        %v7322 = vpop.f32.mrb[0].mxu0
        %7323 = vmatprep.mubr.bf16.mxu0 0
        %7324 = vmatmul.mubr.bf16.gmra.mrb[0].mxu0 %v7068
        %v7325 = vpop.f32.mrb[0].mxu0
        %v7326 = vadd.f32 0.0, %v7325
        %v7327 = vpop.f32.mrb[0].mxu0
        %v7328 = vpop.f32.mrb[0].mxu0
        %v7329 = vadd.f32 0.0, %v7328
        %v7330 = vpop.f32.mrb[0].mxu0
        %7331 = vmatprep.mubr.bf16.mxu0 0
        %7332 = vmatmul.mubr.bf16.gmra.mrb[0].mxu0 %v7077
        %v7333 = vpop.f32.mrb[0].mxu0
        %v7334 = vadd.f32 0.0, %v7333
        %v7335 = vpop.f32.mrb[0].mxu0
        %v7336 = vpop.f32.mrb[0].mxu0
        %v7337 = vadd.f32 0.0, %v7336
        %v7338 = vpop.f32.mrb[0].mxu0
        %7339 = vmatprep.mubr.bf16.mxu0 0
        %7340 = vmatmul.mubr.bf16.gmra.mrb[0].mxu0 %v7076
        %v7341 = vpop.f32.mrb[0].mxu0
        %v7342 = vadd.f32 0.0, %v7341
        %v7343 = vpop.f32.mrb[0].mxu0
        %v7344 = vpop.f32.mrb[0].mxu0
        %v7345 = vpop.f32.mrb[0].mxu0
        %7346 = vdwg.mxu0
        %v7347 = vadd.f32 %v6685, %v7182
        %v7348 = vadd.f32 %v6686, %v7185
        %v7349 = vadd.f32 %v6687, %v7190
        %v7350 = vadd.f32 %v6688, %v7193
        %v7351 = vadd.f32 %v6689, %v7198
        %v7352 = vadd.f32 %v6690, %v7201
        %v7353 = vadd.f32 %v6691, %v7206
        %v7354 = vadd.f32 %v6692, %v7209
        %v7355 = vadd.f32 %v6693, %v7214
        %v7356 = vadd.f32 %v6694, %v7217
        %v7357 = vadd.f32 %v6695, %v7222
        %v7358 = vadd.f32 %v6696, %v7225
        %v7359 = vadd.f32 %v6697, %v7230
        %v7360 = vadd.f32 %v6698, %v7233
        %v7361 = vadd.f32 %v6699, %v7238
        %v7362 = vadd.f32 %v6700, %v7241
        %v7363 = vadd.f32 %v6701, %v7246
        %v7364 = vadd.f32 %v6702, %v7249
        %v7365 = vadd.f32 %v6703, %v7254
        %v7366 = vadd.f32 %v6704, %v7257
        %v7367 = vadd.f32 %v6705, %v7262
        %v7368 = vadd.f32 %v6706, %v7265
        %v7369 = vadd.f32 %v6707, %v7270
        %v7370 = vadd.f32 %v6708, %v7273
        %v7371 = vadd.f32 %v6709, %v7278
        %v7372 = vadd.f32 %v6710, %v7281
        %v7373 = vadd.f32 %v6711, %v7286
        %v7374 = vadd.f32 %v6712, %v7289
        %v7375 = vadd.f32 %v6713, %v7294
        %v7376 = vadd.f32 %v6714, %v7297
        %v7377 = vadd.f32 %v6715, %v7302
        %v7378 = vadd.f32 %v6716, %v7305
        %v7379 = vadd.f32 %v6717, %v7310
        %v7380 = vadd.f32 %v6718, %v7313
        %v7381 = vadd.f32 %v6719, %v7318
        %v7382 = vadd.f32 %v6720, %v7321
        %v7383 = vadd.f32 %v6721, %v7326
        %v7384 = vadd.f32 %v6722, %v7329
        %v7385 = vadd.f32 %v6723, %v7334
        %v7386 = vadd.f32 %v6724, %v7337
        %v7387 = vadd.f32 %v6725, %v7342
        %s7388 = scalar_lea.vmem [#allocation8], 256
        %v7389 = vld [vmem:[%s7388] sm:$0xf]
        %v7390 = vld [vmem:[%s7388 + $0x4] sm:$0xf]
        %v7391 = vld [vmem:[%s7388 + $0x8] sm:$0xf]
        %v7392 = vld [vmem:[%s7388 + $0xc] sm:$0xf]
        %v7393 = vld [vmem:[%s7388 + $0x10] sm:$0xf]
        %v7394 = vld [vmem:[%s7388 + $0x14] sm:$0xf]
        %v7395 = vld [vmem:[%s7388 + $0x18] sm:$0xf]
        %v7396 = vld [vmem:[%s7388 + $0x1c] sm:$0xf]
        %v7397 = vld [vmem:[%s7388 + $0x20] sm:$0xf]
        %v7398 = vld [vmem:[%s7388 + $0x24] sm:$0xf]
        %v7399 = vld [vmem:[%s7388 + $0x28] sm:$0xf]
        %v7400 = vld [vmem:[%s7388 + $0x2c] sm:$0xf]
        %v7401 = vld [vmem:[%s7388 + $0x30] sm:$0xf]
        %v7402 = vld [vmem:[%s7388 + $0x34] sm:$0xf]
        %v7403 = vld [vmem:[%s7388 + $0x38] sm:$0xf]
        %v7404 = vld [vmem:[%s7388 + $0x3c] sm:$0xf]
        %v7405 = vpack.c.b16 %v6829, %v6828
        %v7406 = vpack.c.b16 %v6831, %v6830
        %v7407 = vpack.c.b16 %v6833, %v6832
        %v7408 = vpack.c.b16 %v6835, %v6834
        %v7409 = vpack.c.b16 %v6837, %v6836
        %v7410 = vpack.c.b16 %v6839, %v6838
        %v7411 = vpack.c.b16 %v6841, %v6840
        %v7412 = vpack.c.b16 %v6843, %v6842
        %v7413 = vpack.c.b16 %v6845, %v6844
        %v7414 = vpack.c.b16 %v6847, %v6846
        %v7415 = vpack.c.b16 %v6849, %v6848
        %v7416 = vpack.c.b16 %v6851, %v6850
        %v7417 = vpack.c.b16 %v6853, %v6852
        %v7418 = vpack.c.b16 %v6855, %v6854
        %v7419 = vpack.c.b16 %v6857, %v6856
        %v7420 = vpack.c.b16 %v6859, %v6858
        %v7421 = vpack.c.b16 %v6861, %v6860
        %v7422 = vpack.c.b16 %v6863, %v6862
        %v7423 = vpack.c.b16 %v6865, %v6864
        %v7424 = vpack.c.b16 %v6867, %v6866
        %v7425 = vpack.c.b16 %v6868, %v6868
        %v7463 = vunpack.c.l.b16 %v7389
        %v7464 = vunpack.c.l.b16 %v7390
        %v7465 = vunpack.c.l.b16 %v7391
        %v7466 = vunpack.c.l.b16 %v7392
        %v7467 = vunpack.c.l.b16 %v7393
        %v7468 = vunpack.c.l.b16 %v7394
        %v7469 = vunpack.c.l.b16 %v7395
        %v7470 = vunpack.c.l.b16 %v7396
        %v7471 = vunpack.c.l.b16 %v7397
        %v7472 = vunpack.c.l.b16 %v7398
        %v7473 = vunpack.c.l.b16 %v7399
        %v7474 = vunpack.c.l.b16 %v7400
        %v7475 = vunpack.c.l.b16 %v7401
        %v7476 = vunpack.c.l.b16 %v7402
        %v7477 = vunpack.c.l.b16 %v7403
        %v7478 = vunpack.c.l.b16 %v7404
        %v7479 = vpack.c.b16 %v7464, %v7463
        %v7480 = vpack.c.b16 %v7466, %v7465
        %v7481 = vpack.c.b16 %v7468, %v7467
        %v7482 = vpack.c.b16 %v7470, %v7469
        %v7483 = vpack.c.b16 %v7472, %v7471
        %v7484 = vpack.c.b16 %v7474, %v7473
        %v7485 = vpack.c.b16 %v7476, %v7475
        %v7486 = vpack.c.b16 %v7478, %v7477
        %7495 = vmatprep.subr.bf16.mxu0 0
        %7496 = vmatpush1.bf16.msra.mxu0 %v7479
        %7497 = vmatprep.subr.bf16.mxu0 0
        %7498 = vmatpush1.bf16.msra.mxu0 %v7480
        %7499 = vmatprep.subr.bf16.mxu0 0
        %7500 = vmatpush1.bf16.msra.mxu0 %v7481
        %7501 = vmatprep.subr.bf16.mxu0 0
        %7502 = vmatpush1.bf16.msra.mxu0 %v7482
        %7503 = vmatprep.subr.bf16.mxu0 0
        %7504 = vmatpush1.bf16.msra.mxu0 %v7483
        %7505 = vmatprep.subr.bf16.mxu0 0
        %7506 = vmatpush1.bf16.msra.mxu0 %v7484
        %7507 = vmatprep.subr.bf16.mxu0 0
        %7508 = vmatpush1.bf16.msra.mxu0 %v7485
        %7509 = vmatprep.subr.bf16.mxu0 0
        %7510 = vmatpush1.bf16.msra.mxu0 %v7486
        %7511 = vmatprep.subr.bf16.mxu0 0
        %7512 = vmatpush1.bf16.msra.mxu0 0
        %7513 = vmatprep.subr.bf16.mxu0 0
        %7514 = vmatpush1.bf16.msra.mxu0 0
        %7515 = vmatprep.subr.bf16.mxu0 0
        %7516 = vmatpush1.bf16.msra.mxu0 0
        %7517 = vmatprep.subr.bf16.mxu0 0
        %7518 = vmatpush1.bf16.msra.mxu0 0
        %7519 = vmatprep.subr.bf16.mxu0 0
        %7520 = vmatpush1.bf16.msra.mxu0 0
        %7521 = vmatprep.subr.bf16.mxu0 0
        %7522 = vmatpush1.bf16.msra.mxu0 0
        %7523 = vmatprep.subr.bf16.mxu0 0
        %7524 = vmatpush1.bf16.msra.mxu0 0
        %7525 = vmatprep.subr.bf16.mxu0 0
        %7526 = vmatpush1.bf16.msra.mxu0 0
        %7527 = vmatprep.mubr.bf16.mxu0 0
        %7528 = vmatmul.mubr.bf16.gmra.mrb[0].mxu0 %v7405
        %v7529 = vpop.f32.mrb[0].mxu0
        %v7530 = vadd.f32 0.0, %v7529
        %v7531 = vpop.f32.mrb[0].mxu0
        %v7532 = vpop.f32.mrb[0].mxu0
        %v7533 = vadd.f32 0.0, %v7532
        %v7534 = vpop.f32.mrb[0].mxu0
        %7535 = vmatprep.mubr.bf16.mxu0 0
        %7536 = vmatmul.mubr.bf16.gmra.mrb[0].mxu0 %v7406
        %v7537 = vpop.f32.mrb[0].mxu0
        %v7538 = vadd.f32 0.0, %v7537
        %v7539 = vpop.f32.mrb[0].mxu0
        %v7540 = vpop.f32.mrb[0].mxu0
        %v7541 = vadd.f32 0.0, %v7540
        %v7542 = vpop.f32.mrb[0].mxu0
        %7543 = vmatprep.mubr.bf16.mxu0 0
        %7544 = vmatmul.mubr.bf16.gmra.mrb[0].mxu0 %v7407
        %v7545 = vpop.f32.mrb[0].mxu0
        %v7546 = vadd.f32 0.0, %v7545
        %v7547 = vpop.f32.mrb[0].mxu0
        %v7548 = vpop.f32.mrb[0].mxu0
        %v7549 = vadd.f32 0.0, %v7548
        %v7550 = vpop.f32.mrb[0].mxu0
        %7551 = vmatprep.mubr.bf16.mxu0 0
        %7552 = vmatmul.mubr.bf16.gmra.mrb[0].mxu0 %v7408
        %v7553 = vpop.f32.mrb[0].mxu0
        %v7554 = vadd.f32 0.0, %v7553
        %v7555 = vpop.f32.mrb[0].mxu0
        %v7556 = vpop.f32.mrb[0].mxu0
        %v7557 = vadd.f32 0.0, %v7556
        %v7558 = vpop.f32.mrb[0].mxu0
        %7559 = vmatprep.mubr.bf16.mxu0 0
        %7560 = vmatmul.mubr.bf16.gmra.mrb[0].mxu0 %v7409
        %v7561 = vpop.f32.mrb[0].mxu0
        %v7562 = vadd.f32 0.0, %v7561
        %v7563 = vpop.f32.mrb[0].mxu0
        %v7564 = vpop.f32.mrb[0].mxu0
        %v7565 = vadd.f32 0.0, %v7564
        %v7566 = vpop.f32.mrb[0].mxu0
        %7567 = vmatprep.mubr.bf16.mxu0 0
        %7568 = vmatmul.mubr.bf16.gmra.mrb[0].mxu0 %v7410
        %v7569 = vpop.f32.mrb[0].mxu0
        %v7570 = vadd.f32 0.0, %v7569
        %v7571 = vpop.f32.mrb[0].mxu0
        %v7572 = vpop.f32.mrb[0].mxu0
        %v7573 = vadd.f32 0.0, %v7572
        %v7574 = vpop.f32.mrb[0].mxu0
        %7575 = vmatprep.mubr.bf16.mxu0 0
        %7576 = vmatmul.mubr.bf16.gmra.mrb[0].mxu0 %v7411
        %v7577 = vpop.f32.mrb[0].mxu0
        %v7578 = vadd.f32 0.0, %v7577
        %v7579 = vpop.f32.mrb[0].mxu0
        %v7580 = vpop.f32.mrb[0].mxu0
        %v7581 = vadd.f32 0.0, %v7580
        %v7582 = vpop.f32.mrb[0].mxu0
        %7583 = vmatprep.mubr.bf16.mxu0 0
        %7584 = vmatmul.mubr.bf16.gmra.mrb[0].mxu0 %v7412
        %v7585 = vpop.f32.mrb[0].mxu0
        %v7586 = vadd.f32 0.0, %v7585
        %v7587 = vpop.f32.mrb[0].mxu0
        %v7588 = vpop.f32.mrb[0].mxu0
        %v7589 = vadd.f32 0.0, %v7588
        %v7590 = vpop.f32.mrb[0].mxu0
        %7591 = vmatprep.mubr.bf16.mxu0 0
        %7592 = vmatmul.mubr.bf16.gmra.mrb[0].mxu0 %v7413
        %v7593 = vpop.f32.mrb[0].mxu0
        %v7594 = vadd.f32 0.0, %v7593
        %v7595 = vpop.f32.mrb[0].mxu0
        %v7596 = vpop.f32.mrb[0].mxu0
        %v7597 = vadd.f32 0.0, %v7596
        %v7598 = vpop.f32.mrb[0].mxu0
        %7599 = vmatprep.mubr.bf16.mxu0 0
        %7600 = vmatmul.mubr.bf16.gmra.mrb[0].mxu0 %v7414
        %v7601 = vpop.f32.mrb[0].mxu0
        %v7602 = vadd.f32 0.0, %v7601
        %v7603 = vpop.f32.mrb[0].mxu0
        %v7604 = vpop.f32.mrb[0].mxu0
        %v7605 = vadd.f32 0.0, %v7604
        %v7606 = vpop.f32.mrb[0].mxu0
        %7607 = vmatprep.mubr.bf16.mxu0 0
        %7608 = vmatmul.mubr.bf16.gmra.mrb[0].mxu0 %v7415
        %v7609 = vpop.f32.mrb[0].mxu0
        %v7610 = vadd.f32 0.0, %v7609
        %v7611 = vpop.f32.mrb[0].mxu0
        %v7612 = vpop.f32.mrb[0].mxu0
        %v7613 = vadd.f32 0.0, %v7612
        %v7614 = vpop.f32.mrb[0].mxu0
        %7615 = vmatprep.mubr.bf16.mxu0 0
        %7616 = vmatmul.mubr.bf16.gmra.mrb[0].mxu0 %v7416
        %v7617 = vpop.f32.mrb[0].mxu0
        %v7618 = vadd.f32 0.0, %v7617
        %v7619 = vpop.f32.mrb[0].mxu0
        %v7620 = vpop.f32.mrb[0].mxu0
        %v7621 = vadd.f32 0.0, %v7620
        %v7622 = vpop.f32.mrb[0].mxu0
        %7623 = vmatprep.mubr.bf16.mxu0 0
        %7624 = vmatmul.mubr.bf16.gmra.mrb[0].mxu0 %v7417
        %v7625 = vpop.f32.mrb[0].mxu0
        %v7626 = vadd.f32 0.0, %v7625
        %v7627 = vpop.f32.mrb[0].mxu0
        %v7628 = vpop.f32.mrb[0].mxu0
        %v7629 = vadd.f32 0.0, %v7628
        %v7630 = vpop.f32.mrb[0].mxu0
        %7631 = vmatprep.mubr.bf16.mxu0 0
        %7632 = vmatmul.mubr.bf16.gmra.mrb[0].mxu0 %v7418
        %v7633 = vpop.f32.mrb[0].mxu0
        %v7634 = vadd.f32 0.0, %v7633
        %v7635 = vpop.f32.mrb[0].mxu0
        %v7636 = vpop.f32.mrb[0].mxu0
        %v7637 = vadd.f32 0.0, %v7636
        %v7638 = vpop.f32.mrb[0].mxu0
        %7639 = vmatprep.mubr.bf16.mxu0 0
        %7640 = vmatmul.mubr.bf16.gmra.mrb[0].mxu0 %v7419
        %v7641 = vpop.f32.mrb[0].mxu0
        %v7642 = vadd.f32 0.0, %v7641
        %v7643 = vpop.f32.mrb[0].mxu0
        %v7644 = vpop.f32.mrb[0].mxu0
        %v7645 = vadd.f32 0.0, %v7644
        %v7646 = vpop.f32.mrb[0].mxu0
        %7647 = vmatprep.mubr.bf16.mxu0 0
        %7648 = vmatmul.mubr.bf16.gmra.mrb[0].mxu0 %v7420
        %v7649 = vpop.f32.mrb[0].mxu0
        %v7650 = vadd.f32 0.0, %v7649
        %v7651 = vpop.f32.mrb[0].mxu0
        %v7652 = vpop.f32.mrb[0].mxu0
        %v7653 = vadd.f32 0.0, %v7652
        %v7654 = vpop.f32.mrb[0].mxu0
        %7655 = vmatprep.mubr.bf16.mxu0 0
        %7656 = vmatmul.mubr.bf16.gmra.mrb[0].mxu0 %v7421
        %v7657 = vpop.f32.mrb[0].mxu0
        %v7658 = vadd.f32 0.0, %v7657
        %v7659 = vpop.f32.mrb[0].mxu0
        %v7660 = vpop.f32.mrb[0].mxu0
        %v7661 = vadd.f32 0.0, %v7660
        %v7662 = vpop.f32.mrb[0].mxu0
        %7663 = vmatprep.mubr.bf16.mxu0 0
        %7664 = vmatmul.mubr.bf16.gmra.mrb[0].mxu0 %v7422
        %v7665 = vpop.f32.mrb[0].mxu0
        %v7666 = vadd.f32 0.0, %v7665
        %v7667 = vpop.f32.mrb[0].mxu0
        %v7668 = vpop.f32.mrb[0].mxu0
        %v7669 = vadd.f32 0.0, %v7668
        %v7670 = vpop.f32.mrb[0].mxu0
        %7671 = vmatprep.mubr.bf16.mxu0 0
        %7672 = vmatmul.mubr.bf16.gmra.mrb[0].mxu0 %v7423
        %v7673 = vpop.f32.mrb[0].mxu0
        %v7674 = vadd.f32 0.0, %v7673
        %v7675 = vpop.f32.mrb[0].mxu0
        %v7676 = vpop.f32.mrb[0].mxu0
        %v7677 = vadd.f32 0.0, %v7676
        %v7678 = vpop.f32.mrb[0].mxu0
        %7679 = vmatprep.mubr.bf16.mxu0 0
        %7680 = vmatmul.mubr.bf16.gmra.mrb[0].mxu0 %v7424
        %v7681 = vpop.f32.mrb[0].mxu0
        %v7682 = vadd.f32 0.0, %v7681
        %v7683 = vpop.f32.mrb[0].mxu0
        %v7684 = vpop.f32.mrb[0].mxu0
        %v7685 = vadd.f32 0.0, %v7684
        %v7686 = vpop.f32.mrb[0].mxu0
        %7687 = vmatprep.mubr.bf16.mxu0 0
        %7688 = vmatmul.mubr.bf16.gmra.mrb[0].mxu0 %v7425
        %v7689 = vpop.f32.mrb[0].mxu0
        %v7690 = vadd.f32 0.0, %v7689
        %v7691 = vpop.f32.mrb[0].mxu0
        %v7692 = vpop.f32.mrb[0].mxu0
        %v7693 = vpop.f32.mrb[0].mxu0
        %7694 = vdwg.mxu0
        %v7695 = vadd.f32 %v7347, %v7530
        %v7696 = vadd.f32 %v7348, %v7533
        %v7697 = vadd.f32 %v7349, %v7538
        %v7698 = vadd.f32 %v7350, %v7541
        %v7699 = vadd.f32 %v7351, %v7546
        %v7700 = vadd.f32 %v7352, %v7549
        %v7701 = vadd.f32 %v7353, %v7554
        %v7702 = vadd.f32 %v7354, %v7557
        %v7703 = vadd.f32 %v7355, %v7562
        %v7704 = vadd.f32 %v7356, %v7565
        %v7705 = vadd.f32 %v7357, %v7570
        %v7706 = vadd.f32 %v7358, %v7573
        %v7707 = vadd.f32 %v7359, %v7578
        %v7708 = vadd.f32 %v7360, %v7581
        %v7709 = vadd.f32 %v7361, %v7586
        %v7710 = vadd.f32 %v7362, %v7589
        %v7711 = vadd.f32 %v7363, %v7594
        %v7712 = vadd.f32 %v7364, %v7597
        %v7713 = vadd.f32 %v7365, %v7602
        %v7714 = vadd.f32 %v7366, %v7605
        %v7715 = vadd.f32 %v7367, %v7610
        %v7716 = vadd.f32 %v7368, %v7613
        %v7717 = vadd.f32 %v7369, %v7618
        %v7718 = vadd.f32 %v7370, %v7621
        %v7719 = vadd.f32 %v7371, %v7626
        %v7720 = vadd.f32 %v7372, %v7629
        %v7721 = vadd.f32 %v7373, %v7634
        %v7722 = vadd.f32 %v7374, %v7637
        %v7723 = vadd.f32 %v7375, %v7642
        %v7724 = vadd.f32 %v7376, %v7645
        %v7725 = vadd.f32 %v7377, %v7650
        %v7726 = vadd.f32 %v7378, %v7653
        %v7727 = vadd.f32 %v7379, %v7658
        %v7728 = vadd.f32 %v7380, %v7661
        %v7729 = vadd.f32 %v7381, %v7666
        %v7730 = vadd.f32 %v7382, %v7669
        %v7731 = vadd.f32 %v7383, %v7674
        %v7732 = vadd.f32 %v7384, %v7677
        %v7733 = vadd.f32 %v7385, %v7682
        %v7734 = vadd.f32 %v7386, %v7685
        %v7735 = vadd.f32 %v7387, %v7690
        %v7736 = vld [vmem:[#allocation2 + $0xc] sm:$0xf]
        %v7737 = vld [vmem:[#allocation2 + $0x10] sm:$0xf]
        %v7738 = vld [vmem:[#allocation2 + $0x14] sm:$0xf]
        %v7739 = vld [vmem:[#allocation2 + $0x18] sm:$0xf]
        %v7740 = vld [vmem:[#allocation2 + $0x1c] sm:$0xf]
        %v7741 = vld [vmem:[#allocation2 + $0x20] sm:$0xf]
        %v7742 = vld [vmem:[#allocation2 + $0x24] sm:$0xf]
        %v7743 = vld [vmem:[#allocation2 + $0x28] sm:$0xf]
        %v7744 = vld [vmem:[#allocation2 + $0x2c] sm:$0xf]
        %v7745 = vld [vmem:[#allocation2 + $0x30] sm:$0xf]
        %v7746 = vld [vmem:[#allocation2 + $0x34] sm:$0xf]
        %v7747 = vld [vmem:[#allocation2 + $0x38] sm:$0xf]
        %v7748 = vld [vmem:[#allocation2 + $0x3c] sm:$0xf]
        %v7749 = vld [vmem:[#allocation2 + $0x40] sm:$0xf]
        %v7750 = vld [vmem:[#allocation2 + $0x44] sm:$0xf]
        %v7751 = vld [vmem:[#allocation2 + $0x48] sm:$0xf]
        %v7752 = vld [vmem:[#allocation2 + $0x4c] sm:$0xf]
        %v7753 = vld [vmem:[#allocation2 + $0x50] sm:$0xf]
        %v7754 = vld [vmem:[#allocation2 + $0x54] sm:$0xf]
        %v7755 = vld [vmem:[#allocation2 + $0x58] sm:$0xf]
        %v7756 = vld [vmem:[#allocation2 + $0x5c] sm:$0xf]
        %v7757 = vld [vmem:[#allocation2 + $0x60] sm:$0xf]
        %v7758 = vld [vmem:[#allocation2 + $0x64] sm:$0xf]
        %v7759 = vld [vmem:[#allocation2 + $0x68] sm:$0xf]
        %v7760 = vld [vmem:[#allocation2 + $0x6c] sm:$0xf]
        %v7761 = vld [vmem:[#allocation2 + $0x70] sm:$0xf]
        %v7762 = vld [vmem:[#allocation2 + $0x74] sm:$0xf]
        %v7763 = vld [vmem:[#allocation2 + $0x78] sm:$0xf]
        %v7764 = vld [vmem:[#allocation2 + $0x7c] sm:$0xf]
        %v7765 = vld [vmem:[#allocation2 + $0x80] sm:$0xf]
        %v7766 = vld [vmem:[#allocation2 + $0x84] sm:$0xf]
        %v7767 = vld [vmem:[#allocation2 + $0x88] sm:$0xf]
        %v7768 = vld [vmem:[#allocation2 + $0x8c] sm:$0xf]
        %v7769 = vld [vmem:[#allocation2 + $0x90] sm:$0xf]
        %v7770 = vld [vmem:[#allocation2 + $0x94] sm:$0xf]
        %v7771 = vld [vmem:[#allocation2 + $0x98] sm:$0xf]
        %v7772 = vld [vmem:[#allocation2 + $0x9c] sm:$0xf]
        %v7773 = vld [vmem:[#allocation2 + $0xa0] sm:$0xf]
        %v7774 = vld [vmem:[#allocation2 + $0xa4] sm:$0xf]
        %v7775 = vld [vmem:[#allocation2 + $0xa8] sm:$0xf]
        %v7776 = vld [vmem:[#allocation2 + $0xac] sm:$0xf]
        %v7777 = vld [vmem:[#allocation2 + $0xb0] sm:$0x1]
        %s7778 = scalar_lea.vmem [#allocation8], 320
        %v7779 = vld [vmem:[%s7778] sm:$0xf]
        %v7780 = vld [vmem:[%s7778 + $0x4] sm:$0xf]
        %v7781 = vld [vmem:[%s7778 + $0x8] sm:$0xf]
        %v7782 = vld [vmem:[%s7778 + $0xc] sm:$0xf]
        %v7783 = vld [vmem:[%s7778 + $0x10] sm:$0xf]
        %v7784 = vld [vmem:[%s7778 + $0x14] sm:$0xf]
        %v7785 = vld [vmem:[%s7778 + $0x18] sm:$0xf]
        %v7786 = vld [vmem:[%s7778 + $0x1c] sm:$0xf]
        %v7787 = vld [vmem:[%s7778 + $0x20] sm:$0xf]
        %v7788 = vld [vmem:[%s7778 + $0x24] sm:$0xf]
        %v7789 = vld [vmem:[%s7778 + $0x28] sm:$0xf]
        %v7790 = vld [vmem:[%s7778 + $0x2c] sm:$0xf]
        %v7791 = vld [vmem:[%s7778 + $0x30] sm:$0xf]
        %v7792 = vld [vmem:[%s7778 + $0x34] sm:$0xf]
        %v7793 = vld [vmem:[%s7778 + $0x38] sm:$0xf]
        %v7794 = vld [vmem:[%s7778 + $0x3c] sm:$0xf]
        %v7837 = vunpack.c.l.b16 %v7736
        %v7838 = vunpack.c.l.b16 %v7737
        %v7839 = vunpack.c.l.b16 %v7738
        %v7840 = vunpack.c.l.b16 %v7739
        %v7841 = vunpack.c.l.b16 %v7740
        %v7842 = vunpack.c.l.b16 %v7741
        %v7843 = vunpack.c.l.b16 %v7742
        %v7844 = vunpack.c.l.b16 %v7743
        %v7845 = vunpack.c.l.b16 %v7744
        %v7846 = vunpack.c.l.b16 %v7745
        %v7847 = vunpack.c.l.b16 %v7746
        %v7848 = vunpack.c.l.b16 %v7747
        %v7849 = vunpack.c.l.b16 %v7748
        %v7850 = vunpack.c.l.b16 %v7749
        %v7851 = vunpack.c.l.b16 %v7750
        %v7852 = vunpack.c.l.b16 %v7751
        %v7853 = vunpack.c.l.b16 %v7752
        %v7854 = vunpack.c.l.b16 %v7753
        %v7855 = vunpack.c.l.b16 %v7754
        %v7856 = vunpack.c.l.b16 %v7755
        %v7857 = vunpack.c.l.b16 %v7756
        %v7858 = vunpack.c.l.b16 %v7757
        %v7859 = vunpack.c.l.b16 %v7758
        %v7860 = vunpack.c.l.b16 %v7759
        %v7861 = vunpack.c.l.b16 %v7760
        %v7862 = vunpack.c.l.b16 %v7761
        %v7863 = vunpack.c.l.b16 %v7762
        %v7864 = vunpack.c.l.b16 %v7763
        %v7865 = vunpack.c.l.b16 %v7764
        %v7866 = vunpack.c.l.b16 %v7765
        %v7867 = vunpack.c.l.b16 %v7766
        %v7868 = vunpack.c.l.b16 %v7767
        %v7869 = vunpack.c.l.b16 %v7768
        %v7870 = vunpack.c.l.b16 %v7769
        %v7871 = vunpack.c.l.b16 %v7770
        %v7872 = vunpack.c.l.b16 %v7771
        %v7873 = vunpack.c.l.b16 %v7772
        %v7874 = vunpack.c.l.b16 %v7773
        %v7875 = vunpack.c.l.b16 %v7774
        %v7876 = vunpack.c.l.b16 %v7775
        %v7877 = vunpack.c.l.b16 %v7776
        %v7878 = vunpack.c.l.b16 %v7777
        %v7879 = vpack.c.b16 %v7838, %v7837
        %v7880 = vpack.c.b16 %v7840, %v7839
        %v7881 = vpack.c.b16 %v7842, %v7841
        %v7882 = vpack.c.b16 %v7844, %v7843
        %v7883 = vpack.c.b16 %v7846, %v7845
        %v7884 = vpack.c.b16 %v7848, %v7847
        %v7885 = vpack.c.b16 %v7850, %v7849
        %v7886 = vpack.c.b16 %v7852, %v7851
        %v7887 = vpack.c.b16 %v7854, %v7853
        %v7888 = vpack.c.b16 %v7856, %v7855
        %v7889 = vpack.c.b16 %v7858, %v7857
        %v7890 = vpack.c.b16 %v7860, %v7859
        %v7891 = vpack.c.b16 %v7862, %v7861
        %v7892 = vpack.c.b16 %v7864, %v7863
        %v7893 = vpack.c.b16 %v7866, %v7865
        %v7894 = vpack.c.b16 %v7868, %v7867
        %v7895 = vpack.c.b16 %v7870, %v7869
        %v7896 = vpack.c.b16 %v7872, %v7871
        %v7897 = vpack.c.b16 %v7874, %v7873
        %v7898 = vpack.c.b16 %v7876, %v7875
        %v7899 = vpack.c.b16 %v7878, %v7877
        %v7901 = vshrl.u32 %v7879, 16
        %v7903 = vshll.u32 %v7879, 16
        %v7905 = vrot.slane %v7903, 1
        %v7906 = vor.u32 %v7901, %v7905
        %v7908 = vshll.u32 %v7880, 16
        %v7910 = vrot.slane %v7908, 1
        %v7911 = vsel %vm2852, %v7906, %v7910
        %v7912 = vshrl.u32 %v7880, 16
        %v7914 = vor.u32 %v7912, %v7910
        %v7916 = vshll.u32 %v7881, 16
        %v7918 = vrot.slane %v7916, 1
        %v7919 = vsel %vm2852, %v7914, %v7918
        %v7920 = vshrl.u32 %v7881, 16
        %v7922 = vor.u32 %v7920, %v7918
        %v7924 = vshll.u32 %v7882, 16
        %v7926 = vrot.slane %v7924, 1
        %v7927 = vsel %vm2852, %v7922, %v7926
        %v7928 = vshrl.u32 %v7882, 16
        %v7930 = vor.u32 %v7928, %v7926
        %v7932 = vshll.u32 %v7883, 16
        %v7934 = vrot.slane %v7932, 1
        %v7935 = vsel %vm2852, %v7930, %v7934
        %v7936 = vshrl.u32 %v7883, 16
        %v7938 = vor.u32 %v7936, %v7934
        %v7940 = vshll.u32 %v7884, 16
        %v7942 = vrot.slane %v7940, 1
        %v7943 = vsel %vm2852, %v7938, %v7942
        %v7944 = vshrl.u32 %v7884, 16
        %v7946 = vor.u32 %v7944, %v7942
        %v7948 = vshll.u32 %v7885, 16
        %v7950 = vrot.slane %v7948, 1
        %v7951 = vsel %vm2852, %v7946, %v7950
        %v7952 = vshrl.u32 %v7885, 16
        %v7954 = vor.u32 %v7952, %v7950
        %v7956 = vshll.u32 %v7886, 16
        %v7958 = vrot.slane %v7956, 1
        %v7959 = vsel %vm2852, %v7954, %v7958
        %v7960 = vshrl.u32 %v7886, 16
        %v7962 = vor.u32 %v7960, %v7958
        %v7964 = vshll.u32 %v7887, 16
        %v7966 = vrot.slane %v7964, 1
        %v7967 = vsel %vm2852, %v7962, %v7966
        %v7968 = vshrl.u32 %v7887, 16
        %v7970 = vor.u32 %v7968, %v7966
        %v7972 = vshll.u32 %v7888, 16
        %v7974 = vrot.slane %v7972, 1
        %v7975 = vsel %vm2852, %v7970, %v7974
        %v7976 = vshrl.u32 %v7888, 16
        %v7978 = vor.u32 %v7976, %v7974
        %v7980 = vshll.u32 %v7889, 16
        %v7982 = vrot.slane %v7980, 1
        %v7983 = vsel %vm2852, %v7978, %v7982
        %v7984 = vshrl.u32 %v7889, 16
        %v7986 = vor.u32 %v7984, %v7982
        %v7988 = vshll.u32 %v7890, 16
        %v7990 = vrot.slane %v7988, 1
        %v7991 = vsel %vm2852, %v7986, %v7990
        %v7992 = vshrl.u32 %v7890, 16
        %v7994 = vor.u32 %v7992, %v7990
        %v7996 = vshll.u32 %v7891, 16
        %v7998 = vrot.slane %v7996, 1
        %v7999 = vsel %vm2852, %v7994, %v7998
        %v8000 = vshrl.u32 %v7891, 16
        %v8002 = vor.u32 %v8000, %v7998
        %v8004 = vshll.u32 %v7892, 16
        %v8006 = vrot.slane %v8004, 1
        %v8007 = vsel %vm2852, %v8002, %v8006
        %v8008 = vshrl.u32 %v7892, 16
        %v8010 = vor.u32 %v8008, %v8006
        %v8012 = vshll.u32 %v7893, 16
        %v8014 = vrot.slane %v8012, 1
        %v8015 = vsel %vm2852, %v8010, %v8014
        %v8016 = vshrl.u32 %v7893, 16
        %v8018 = vor.u32 %v8016, %v8014
        %v8020 = vshll.u32 %v7894, 16
        %v8022 = vrot.slane %v8020, 1
        %v8023 = vsel %vm2852, %v8018, %v8022
        %v8024 = vshrl.u32 %v7894, 16
        %v8026 = vor.u32 %v8024, %v8022
        %v8028 = vshll.u32 %v7895, 16
        %v8030 = vrot.slane %v8028, 1
        %v8031 = vsel %vm2852, %v8026, %v8030
        %v8032 = vshrl.u32 %v7895, 16
        %v8034 = vor.u32 %v8032, %v8030
        %v8036 = vshll.u32 %v7896, 16
        %v8038 = vrot.slane %v8036, 1
        %v8039 = vsel %vm2852, %v8034, %v8038
        %v8040 = vshrl.u32 %v7896, 16
        %v8042 = vor.u32 %v8040, %v8038
        %v8044 = vshll.u32 %v7897, 16
        %v8046 = vrot.slane %v8044, 1
        %v8047 = vsel %vm2852, %v8042, %v8046
        %v8048 = vshrl.u32 %v7897, 16
        %v8050 = vor.u32 %v8048, %v8046
        %v8052 = vshll.u32 %v7898, 16
        %v8054 = vrot.slane %v8052, 1
        %v8055 = vsel %vm2852, %v8050, %v8054
        %v8056 = vshrl.u32 %v7898, 16
        %v8058 = vor.u32 %v8056, %v8054
        %v8060 = vshll.u32 %v7899, 16
        %v8062 = vrot.slane %v8060, 1
        %v8063 = vsel %vm2852, %v8058, %v8062
        %v8064 = vshrl.u32 %v7899, 16
        %v8066 = vor.u32 %v8064, %v8062
        %v8104 = vunpack.c.l.b16 %v7779
        %v8105 = vunpack.c.l.b16 %v7780
        %v8106 = vunpack.c.l.b16 %v7781
        %v8107 = vunpack.c.l.b16 %v7782
        %v8108 = vunpack.c.l.b16 %v7783
        %v8109 = vunpack.c.l.b16 %v7784
        %v8110 = vunpack.c.l.b16 %v7785
        %v8111 = vunpack.c.l.b16 %v7786
        %v8112 = vunpack.c.l.b16 %v7787
        %v8113 = vunpack.c.l.b16 %v7788
        %v8114 = vunpack.c.l.b16 %v7789
        %v8115 = vunpack.c.l.b16 %v7790
        %v8116 = vunpack.c.l.b16 %v7791
        %v8117 = vunpack.c.l.b16 %v7792
        %v8118 = vunpack.c.l.b16 %v7793
        %v8119 = vunpack.c.l.b16 %v7794
        %v8120 = vpack.c.b16 %v8105, %v8104
        %v8121 = vpack.c.b16 %v8107, %v8106
        %v8122 = vpack.c.b16 %v8109, %v8108
        %v8123 = vpack.c.b16 %v8111, %v8110
        %v8124 = vpack.c.b16 %v8113, %v8112
        %v8125 = vpack.c.b16 %v8115, %v8114
        %v8126 = vpack.c.b16 %v8117, %v8116
        %v8127 = vpack.c.b16 %v8119, %v8118
        %8136 = vmatprep.subr.bf16.mxu0 0
        %8137 = vmatpush1.bf16.msra.mxu0 %v8120
        %8138 = vmatprep.subr.bf16.mxu0 0
        %8139 = vmatpush1.bf16.msra.mxu0 %v8121
        %8140 = vmatprep.subr.bf16.mxu0 0
        %8141 = vmatpush1.bf16.msra.mxu0 %v8122
        %8142 = vmatprep.subr.bf16.mxu0 0
        %8143 = vmatpush1.bf16.msra.mxu0 %v8123
        %8144 = vmatprep.subr.bf16.mxu0 0
        %8145 = vmatpush1.bf16.msra.mxu0 %v8124
        %8146 = vmatprep.subr.bf16.mxu0 0
        %8147 = vmatpush1.bf16.msra.mxu0 %v8125
        %8148 = vmatprep.subr.bf16.mxu0 0
        %8149 = vmatpush1.bf16.msra.mxu0 %v8126
        %8150 = vmatprep.subr.bf16.mxu0 0
        %8151 = vmatpush1.bf16.msra.mxu0 %v8127
        %8152 = vmatprep.subr.bf16.mxu0 0
        %8153 = vmatpush1.bf16.msra.mxu0 0
        %8154 = vmatprep.subr.bf16.mxu0 0
        %8155 = vmatpush1.bf16.msra.mxu0 0
        %8156 = vmatprep.subr.bf16.mxu0 0
        %8157 = vmatpush1.bf16.msra.mxu0 0
        %8158 = vmatprep.subr.bf16.mxu0 0
        %8159 = vmatpush1.bf16.msra.mxu0 0
        %8160 = vmatprep.subr.bf16.mxu0 0
        %8161 = vmatpush1.bf16.msra.mxu0 0
        %8162 = vmatprep.subr.bf16.mxu0 0
        %8163 = vmatpush1.bf16.msra.mxu0 0
        %8164 = vmatprep.subr.bf16.mxu0 0
        %8165 = vmatpush1.bf16.msra.mxu0 0
        %8166 = vmatprep.subr.bf16.mxu0 0
        %8167 = vmatpush1.bf16.msra.mxu0 0
        %8168 = vmatprep.mubr.bf16.mxu0 0
        %8169 = vmatmul.mubr.bf16.gmra.mrb[0].mxu0 %v7911
        %v8170 = vpop.f32.mrb[0].mxu0
        %v8171 = vadd.f32 0.0, %v8170
        %v8172 = vpop.f32.mrb[0].mxu0
        %v8173 = vpop.f32.mrb[0].mxu0
        %v8174 = vadd.f32 0.0, %v8173
        %v8175 = vpop.f32.mrb[0].mxu0
        %8176 = vmatprep.mubr.bf16.mxu0 0
        %8177 = vmatmul.mubr.bf16.gmra.mrb[0].mxu0 %v7919
        %v8178 = vpop.f32.mrb[0].mxu0
        %v8179 = vadd.f32 0.0, %v8178
        %v8180 = vpop.f32.mrb[0].mxu0
        %v8181 = vpop.f32.mrb[0].mxu0
        %v8182 = vadd.f32 0.0, %v8181
        %v8183 = vpop.f32.mrb[0].mxu0
        %8184 = vmatprep.mubr.bf16.mxu0 0
        %8185 = vmatmul.mubr.bf16.gmra.mrb[0].mxu0 %v7927
        %v8186 = vpop.f32.mrb[0].mxu0
        %v8187 = vadd.f32 0.0, %v8186
        %v8188 = vpop.f32.mrb[0].mxu0
        %v8189 = vpop.f32.mrb[0].mxu0
        %v8190 = vadd.f32 0.0, %v8189
        %v8191 = vpop.f32.mrb[0].mxu0
        %8192 = vmatprep.mubr.bf16.mxu0 0
        %8193 = vmatmul.mubr.bf16.gmra.mrb[0].mxu0 %v7935
        %v8194 = vpop.f32.mrb[0].mxu0
        %v8195 = vadd.f32 0.0, %v8194
        %v8196 = vpop.f32.mrb[0].mxu0
        %v8197 = vpop.f32.mrb[0].mxu0
        %v8198 = vadd.f32 0.0, %v8197
        %v8199 = vpop.f32.mrb[0].mxu0
        %8200 = vmatprep.mubr.bf16.mxu0 0
        %8201 = vmatmul.mubr.bf16.gmra.mrb[0].mxu0 %v7943
        %v8202 = vpop.f32.mrb[0].mxu0
        %v8203 = vadd.f32 0.0, %v8202
        %v8204 = vpop.f32.mrb[0].mxu0
        %v8205 = vpop.f32.mrb[0].mxu0
        %v8206 = vadd.f32 0.0, %v8205
        %v8207 = vpop.f32.mrb[0].mxu0
        %8208 = vmatprep.mubr.bf16.mxu0 0
        %8209 = vmatmul.mubr.bf16.gmra.mrb[0].mxu0 %v7951
        %v8210 = vpop.f32.mrb[0].mxu0
        %v8211 = vadd.f32 0.0, %v8210
        %v8212 = vpop.f32.mrb[0].mxu0
        %v8213 = vpop.f32.mrb[0].mxu0
        %v8214 = vadd.f32 0.0, %v8213
        %v8215 = vpop.f32.mrb[0].mxu0
        %8216 = vmatprep.mubr.bf16.mxu0 0
        %8217 = vmatmul.mubr.bf16.gmra.mrb[0].mxu0 %v7959
        %v8218 = vpop.f32.mrb[0].mxu0
        %v8219 = vadd.f32 0.0, %v8218
        %v8220 = vpop.f32.mrb[0].mxu0
        %v8221 = vpop.f32.mrb[0].mxu0
        %v8222 = vadd.f32 0.0, %v8221
        %v8223 = vpop.f32.mrb[0].mxu0
        %8224 = vmatprep.mubr.bf16.mxu0 0
        %8225 = vmatmul.mubr.bf16.gmra.mrb[0].mxu0 %v7967
        %v8226 = vpop.f32.mrb[0].mxu0
        %v8227 = vadd.f32 0.0, %v8226
        %v8228 = vpop.f32.mrb[0].mxu0
        %v8229 = vpop.f32.mrb[0].mxu0
        %v8230 = vadd.f32 0.0, %v8229
        %v8231 = vpop.f32.mrb[0].mxu0
        %8232 = vmatprep.mubr.bf16.mxu0 0
        %8233 = vmatmul.mubr.bf16.gmra.mrb[0].mxu0 %v7975
        %v8234 = vpop.f32.mrb[0].mxu0
        %v8235 = vadd.f32 0.0, %v8234
        %v8236 = vpop.f32.mrb[0].mxu0
        %v8237 = vpop.f32.mrb[0].mxu0
        %v8238 = vadd.f32 0.0, %v8237
        %v8239 = vpop.f32.mrb[0].mxu0
        %8240 = vmatprep.mubr.bf16.mxu0 0
        %8241 = vmatmul.mubr.bf16.gmra.mrb[0].mxu0 %v7983
        %v8242 = vpop.f32.mrb[0].mxu0
        %v8243 = vadd.f32 0.0, %v8242
        %v8244 = vpop.f32.mrb[0].mxu0
        %v8245 = vpop.f32.mrb[0].mxu0
        %v8246 = vadd.f32 0.0, %v8245
        %v8247 = vpop.f32.mrb[0].mxu0
        %8248 = vmatprep.mubr.bf16.mxu0 0
        %8249 = vmatmul.mubr.bf16.gmra.mrb[0].mxu0 %v7991
        %v8250 = vpop.f32.mrb[0].mxu0
        %v8251 = vadd.f32 0.0, %v8250
        %v8252 = vpop.f32.mrb[0].mxu0
        %v8253 = vpop.f32.mrb[0].mxu0
        %v8254 = vadd.f32 0.0, %v8253
        %v8255 = vpop.f32.mrb[0].mxu0
        %8256 = vmatprep.mubr.bf16.mxu0 0
        %8257 = vmatmul.mubr.bf16.gmra.mrb[0].mxu0 %v7999
        %v8258 = vpop.f32.mrb[0].mxu0
        %v8259 = vadd.f32 0.0, %v8258
        %v8260 = vpop.f32.mrb[0].mxu0
        %v8261 = vpop.f32.mrb[0].mxu0
        %v8262 = vadd.f32 0.0, %v8261
        %v8263 = vpop.f32.mrb[0].mxu0
        %8264 = vmatprep.mubr.bf16.mxu0 0
        %8265 = vmatmul.mubr.bf16.gmra.mrb[0].mxu0 %v8007
        %v8266 = vpop.f32.mrb[0].mxu0
        %v8267 = vadd.f32 0.0, %v8266
        %v8268 = vpop.f32.mrb[0].mxu0
        %v8269 = vpop.f32.mrb[0].mxu0
        %v8270 = vadd.f32 0.0, %v8269
        %v8271 = vpop.f32.mrb[0].mxu0
        %8272 = vmatprep.mubr.bf16.mxu0 0
        %8273 = vmatmul.mubr.bf16.gmra.mrb[0].mxu0 %v8015
        %v8274 = vpop.f32.mrb[0].mxu0
        %v8275 = vadd.f32 0.0, %v8274
        %v8276 = vpop.f32.mrb[0].mxu0
        %v8277 = vpop.f32.mrb[0].mxu0
        %v8278 = vadd.f32 0.0, %v8277
        %v8279 = vpop.f32.mrb[0].mxu0
        %8280 = vmatprep.mubr.bf16.mxu0 0
        %8281 = vmatmul.mubr.bf16.gmra.mrb[0].mxu0 %v8023
        %v8282 = vpop.f32.mrb[0].mxu0
        %v8283 = vadd.f32 0.0, %v8282
        %v8284 = vpop.f32.mrb[0].mxu0
        %v8285 = vpop.f32.mrb[0].mxu0
        %v8286 = vadd.f32 0.0, %v8285
        %v8287 = vpop.f32.mrb[0].mxu0
        %8288 = vmatprep.mubr.bf16.mxu0 0
        %8289 = vmatmul.mubr.bf16.gmra.mrb[0].mxu0 %v8031
        %v8290 = vpop.f32.mrb[0].mxu0
        %v8291 = vadd.f32 0.0, %v8290
        %v8292 = vpop.f32.mrb[0].mxu0
        %v8293 = vpop.f32.mrb[0].mxu0
        %v8294 = vadd.f32 0.0, %v8293
        %v8295 = vpop.f32.mrb[0].mxu0
        %8296 = vmatprep.mubr.bf16.mxu0 0
        %8297 = vmatmul.mubr.bf16.gmra.mrb[0].mxu0 %v8039
        %v8298 = vpop.f32.mrb[0].mxu0
        %v8299 = vadd.f32 0.0, %v8298
        %v8300 = vpop.f32.mrb[0].mxu0
        %v8301 = vpop.f32.mrb[0].mxu0
        %v8302 = vadd.f32 0.0, %v8301
        %v8303 = vpop.f32.mrb[0].mxu0
        %8304 = vmatprep.mubr.bf16.mxu0 0
        %8305 = vmatmul.mubr.bf16.gmra.mrb[0].mxu0 %v8047
        %v8306 = vpop.f32.mrb[0].mxu0
        %v8307 = vadd.f32 0.0, %v8306
        %v8308 = vpop.f32.mrb[0].mxu0
        %v8309 = vpop.f32.mrb[0].mxu0
        %v8310 = vadd.f32 0.0, %v8309
        %v8311 = vpop.f32.mrb[0].mxu0
        %8312 = vmatprep.mubr.bf16.mxu0 0
        %8313 = vmatmul.mubr.bf16.gmra.mrb[0].mxu0 %v8055
        %v8314 = vpop.f32.mrb[0].mxu0
        %v8315 = vadd.f32 0.0, %v8314
        %v8316 = vpop.f32.mrb[0].mxu0
        %v8317 = vpop.f32.mrb[0].mxu0
        %v8318 = vadd.f32 0.0, %v8317
        %v8319 = vpop.f32.mrb[0].mxu0
        %8320 = vmatprep.mubr.bf16.mxu0 0
        %8321 = vmatmul.mubr.bf16.gmra.mrb[0].mxu0 %v8063
        %v8322 = vpop.f32.mrb[0].mxu0
        %v8323 = vadd.f32 0.0, %v8322
        %v8324 = vpop.f32.mrb[0].mxu0
        %v8325 = vpop.f32.mrb[0].mxu0
        %v8326 = vadd.f32 0.0, %v8325
        %v8327 = vpop.f32.mrb[0].mxu0
        %8328 = vmatprep.mubr.bf16.mxu0 0
        %8329 = vmatmul.mubr.bf16.gmra.mrb[0].mxu0 %v8066
        %v8330 = vpop.f32.mrb[0].mxu0
        %v8331 = vadd.f32 0.0, %v8330
        %v8332 = vpop.f32.mrb[0].mxu0
        %v8333 = vpop.f32.mrb[0].mxu0
        %v8334 = vpop.f32.mrb[0].mxu0
        %8335 = vdwg.mxu0
        %v8336 = vadd.f32 %v7695, %v8171
        %v8337 = vadd.f32 %v7696, %v8174
        %v8338 = vadd.f32 %v7697, %v8179
        %v8339 = vadd.f32 %v7698, %v8182
        %v8340 = vadd.f32 %v7699, %v8187
        %v8341 = vadd.f32 %v7700, %v8190
        %v8342 = vadd.f32 %v7701, %v8195
        %v8343 = vadd.f32 %v7702, %v8198
        %v8344 = vadd.f32 %v7703, %v8203
        %v8345 = vadd.f32 %v7704, %v8206
        %v8346 = vadd.f32 %v7705, %v8211
        %v8347 = vadd.f32 %v7706, %v8214
        %v8348 = vadd.f32 %v7707, %v8219
        %v8349 = vadd.f32 %v7708, %v8222
        %v8350 = vadd.f32 %v7709, %v8227
        %v8351 = vadd.f32 %v7710, %v8230
        %v8352 = vadd.f32 %v7711, %v8235
        %v8353 = vadd.f32 %v7712, %v8238
        %v8354 = vadd.f32 %v7713, %v8243
        %v8355 = vadd.f32 %v7714, %v8246
        %v8356 = vadd.f32 %v7715, %v8251
        %v8357 = vadd.f32 %v7716, %v8254
        %v8358 = vadd.f32 %v7717, %v8259
        %v8359 = vadd.f32 %v7718, %v8262
        %v8360 = vadd.f32 %v7719, %v8267
        %v8361 = vadd.f32 %v7720, %v8270
        %v8362 = vadd.f32 %v7721, %v8275
        %v8363 = vadd.f32 %v7722, %v8278
        %v8364 = vadd.f32 %v7723, %v8283
        %v8365 = vadd.f32 %v7724, %v8286
        %v8366 = vadd.f32 %v7725, %v8291
        %v8367 = vadd.f32 %v7726, %v8294
        %v8368 = vadd.f32 %v7727, %v8299
        %v8369 = vadd.f32 %v7728, %v8302
        %v8370 = vadd.f32 %v7729, %v8307
        %v8371 = vadd.f32 %v7730, %v8310
        %v8372 = vadd.f32 %v7731, %v8315
        %v8373 = vadd.f32 %v7732, %v8318
        %v8374 = vadd.f32 %v7733, %v8323
        %v8375 = vadd.f32 %v7734, %v8326
        %v8376 = vadd.f32 %v7735, %v8331
        %v8377 = vld [vmem:[#allocation2 + $0x14] sm:$0xf]
        %v8378 = vld [vmem:[#allocation2 + $0x18] sm:$0xf]
        %v8379 = vld [vmem:[#allocation2 + $0x1c] sm:$0xf]
        %v8380 = vld [vmem:[#allocation2 + $0x20] sm:$0xf]
        %v8381 = vld [vmem:[#allocation2 + $0x24] sm:$0xf]
        %v8382 = vld [vmem:[#allocation2 + $0x28] sm:$0xf]
        %v8383 = vld [vmem:[#allocation2 + $0x2c] sm:$0xf]
        %v8384 = vld [vmem:[#allocation2 + $0x30] sm:$0xf]
        %v8385 = vld [vmem:[#allocation2 + $0x34] sm:$0xf]
        %v8386 = vld [vmem:[#allocation2 + $0x38] sm:$0xf]
        %v8387 = vld [vmem:[#allocation2 + $0x3c] sm:$0xf]
        %v8388 = vld [vmem:[#allocation2 + $0x40] sm:$0xf]
        %v8389 = vld [vmem:[#allocation2 + $0x44] sm:$0xf]
        %v8390 = vld [vmem:[#allocation2 + $0x48] sm:$0xf]
        %v8391 = vld [vmem:[#allocation2 + $0x4c] sm:$0xf]
        %v8392 = vld [vmem:[#allocation2 + $0x50] sm:$0xf]
        %v8393 = vld [vmem:[#allocation2 + $0x54] sm:$0xf]
        %v8394 = vld [vmem:[#allocation2 + $0x58] sm:$0xf]
        %v8395 = vld [vmem:[#allocation2 + $0x5c] sm:$0xf]
        %v8396 = vld [vmem:[#allocation2 + $0x60] sm:$0xf]
        %v8397 = vld [vmem:[#allocation2 + $0x64] sm:$0xf]
        %v8398 = vld [vmem:[#allocation2 + $0x68] sm:$0xf]
        %v8399 = vld [vmem:[#allocation2 + $0x6c] sm:$0xf]
        %v8400 = vld [vmem:[#allocation2 + $0x70] sm:$0xf]
        %v8401 = vld [vmem:[#allocation2 + $0x74] sm:$0xf]
        %v8402 = vld [vmem:[#allocation2 + $0x78] sm:$0xf]
        %v8403 = vld [vmem:[#allocation2 + $0x7c] sm:$0xf]
        %v8404 = vld [vmem:[#allocation2 + $0x80] sm:$0xf]
        %v8405 = vld [vmem:[#allocation2 + $0x84] sm:$0xf]
        %v8406 = vld [vmem:[#allocation2 + $0x88] sm:$0xf]
        %v8407 = vld [vmem:[#allocation2 + $0x8c] sm:$0xf]
        %v8408 = vld [vmem:[#allocation2 + $0x90] sm:$0xf]
        %v8409 = vld [vmem:[#allocation2 + $0x94] sm:$0xf]
        %v8410 = vld [vmem:[#allocation2 + $0x98] sm:$0xf]
        %v8411 = vld [vmem:[#allocation2 + $0x9c] sm:$0xf]
        %v8412 = vld [vmem:[#allocation2 + $0xa0] sm:$0xf]
        %v8413 = vld [vmem:[#allocation2 + $0xa4] sm:$0xf]
        %v8414 = vld [vmem:[#allocation2 + $0xa8] sm:$0xf]
        %v8415 = vld [vmem:[#allocation2 + $0xac] sm:$0xf]
        %v8416 = vld [vmem:[#allocation2 + $0xb0] sm:$0xf]
        %v8417 = vld [vmem:[#allocation2 + $0xb4] sm:$0xf]
        %v8418 = vld [vmem:[#allocation2 + $0xb8] sm:$0x1]
        %s8419 = scalar_lea.vmem [#allocation8], 384
        %v8420 = vld [vmem:[%s8419] sm:$0xf]
        %v8421 = vld [vmem:[%s8419 + $0x4] sm:$0xf]
        %v8422 = vld [vmem:[%s8419 + $0x8] sm:$0xf]
        %v8423 = vld [vmem:[%s8419 + $0xc] sm:$0xf]
        %v8424 = vld [vmem:[%s8419 + $0x10] sm:$0xf]
        %v8425 = vld [vmem:[%s8419 + $0x14] sm:$0xf]
        %v8426 = vld [vmem:[%s8419 + $0x18] sm:$0xf]
        %v8427 = vld [vmem:[%s8419 + $0x1c] sm:$0xf]
        %v8428 = vld [vmem:[%s8419 + $0x20] sm:$0xf]
        %v8429 = vld [vmem:[%s8419 + $0x24] sm:$0xf]
        %v8430 = vld [vmem:[%s8419 + $0x28] sm:$0xf]
        %v8431 = vld [vmem:[%s8419 + $0x2c] sm:$0xf]
        %v8432 = vld [vmem:[%s8419 + $0x30] sm:$0xf]
        %v8433 = vld [vmem:[%s8419 + $0x34] sm:$0xf]
        %v8434 = vld [vmem:[%s8419 + $0x38] sm:$0xf]
        %v8435 = vld [vmem:[%s8419 + $0x3c] sm:$0xf]
        %v8478 = vunpack.c.l.b16 %v8377
        %v8479 = vunpack.c.l.b16 %v8378
        %v8480 = vunpack.c.l.b16 %v8379
        %v8481 = vunpack.c.l.b16 %v8380
        %v8482 = vunpack.c.l.b16 %v8381
        %v8483 = vunpack.c.l.b16 %v8382
        %v8484 = vunpack.c.l.b16 %v8383
        %v8485 = vunpack.c.l.b16 %v8384
        %v8486 = vunpack.c.l.b16 %v8385
        %v8487 = vunpack.c.l.b16 %v8386
        %v8488 = vunpack.c.l.b16 %v8387
        %v8489 = vunpack.c.l.b16 %v8388
        %v8490 = vunpack.c.l.b16 %v8389
        %v8491 = vunpack.c.l.b16 %v8390
        %v8492 = vunpack.c.l.b16 %v8391
        %v8493 = vunpack.c.l.b16 %v8392
        %v8494 = vunpack.c.l.b16 %v8393
        %v8495 = vunpack.c.l.b16 %v8394
        %v8496 = vunpack.c.l.b16 %v8395
        %v8497 = vunpack.c.l.b16 %v8396
        %v8498 = vunpack.c.l.b16 %v8397
        %v8499 = vunpack.c.l.b16 %v8398
        %v8500 = vunpack.c.l.b16 %v8399
        %v8501 = vunpack.c.l.b16 %v8400
        %v8502 = vunpack.c.l.b16 %v8401
        %v8503 = vunpack.c.l.b16 %v8402
        %v8504 = vunpack.c.l.b16 %v8403
        %v8505 = vunpack.c.l.b16 %v8404
        %v8506 = vunpack.c.l.b16 %v8405
        %v8507 = vunpack.c.l.b16 %v8406
        %v8508 = vunpack.c.l.b16 %v8407
        %v8509 = vunpack.c.l.b16 %v8408
        %v8510 = vunpack.c.l.b16 %v8409
        %v8511 = vunpack.c.l.b16 %v8410
        %v8512 = vunpack.c.l.b16 %v8411
        %v8513 = vunpack.c.l.b16 %v8412
        %v8514 = vunpack.c.l.b16 %v8413
        %v8515 = vunpack.c.l.b16 %v8414
        %v8516 = vunpack.c.l.b16 %v8415
        %v8517 = vunpack.c.l.b16 %v8416
        %v8518 = vunpack.c.l.b16 %v8417
        %v8519 = vunpack.c.l.b16 %v8418
        %v8520 = vpack.c.b16 %v8479, %v8478
        %v8521 = vpack.c.b16 %v8481, %v8480
        %v8522 = vpack.c.b16 %v8483, %v8482
        %v8523 = vpack.c.b16 %v8485, %v8484
        %v8524 = vpack.c.b16 %v8487, %v8486
        %v8525 = vpack.c.b16 %v8489, %v8488
        %v8526 = vpack.c.b16 %v8491, %v8490
        %v8527 = vpack.c.b16 %v8493, %v8492
        %v8528 = vpack.c.b16 %v8495, %v8494
        %v8529 = vpack.c.b16 %v8497, %v8496
        %v8530 = vpack.c.b16 %v8499, %v8498
        %v8531 = vpack.c.b16 %v8501, %v8500
        %v8532 = vpack.c.b16 %v8503, %v8502
        %v8533 = vpack.c.b16 %v8505, %v8504
        %v8534 = vpack.c.b16 %v8507, %v8506
        %v8535 = vpack.c.b16 %v8509, %v8508
        %v8536 = vpack.c.b16 %v8511, %v8510
        %v8537 = vpack.c.b16 %v8513, %v8512
        %v8538 = vpack.c.b16 %v8515, %v8514
        %v8539 = vpack.c.b16 %v8517, %v8516
        %v8540 = vpack.c.b16 %v8519, %v8518
        %v8542 = vshrl.u32 %v8520, 16
        %v8544 = vshll.u32 %v8520, 16
        %v8546 = vrot.slane %v8544, 1
        %v8547 = vor.u32 %v8542, %v8546
        %v8549 = vshll.u32 %v8521, 16
        %v8551 = vrot.slane %v8549, 1
        %v8552 = vsel %vm2852, %v8547, %v8551
        %v8553 = vshrl.u32 %v8521, 16
        %v8555 = vor.u32 %v8553, %v8551
        %v8557 = vshll.u32 %v8522, 16
        %v8559 = vrot.slane %v8557, 1
        %v8560 = vsel %vm2852, %v8555, %v8559
        %v8561 = vshrl.u32 %v8522, 16
        %v8563 = vor.u32 %v8561, %v8559
        %v8565 = vshll.u32 %v8523, 16
        %v8567 = vrot.slane %v8565, 1
        %v8568 = vsel %vm2852, %v8563, %v8567
        %v8569 = vshrl.u32 %v8523, 16
        %v8571 = vor.u32 %v8569, %v8567
        %v8573 = vshll.u32 %v8524, 16
        %v8575 = vrot.slane %v8573, 1
        %v8576 = vsel %vm2852, %v8571, %v8575
        %v8577 = vshrl.u32 %v8524, 16
        %v8579 = vor.u32 %v8577, %v8575
        %v8581 = vshll.u32 %v8525, 16
        %v8583 = vrot.slane %v8581, 1
        %v8584 = vsel %vm2852, %v8579, %v8583
        %v8585 = vshrl.u32 %v8525, 16
        %v8587 = vor.u32 %v8585, %v8583
        %v8589 = vshll.u32 %v8526, 16
        %v8591 = vrot.slane %v8589, 1
        %v8592 = vsel %vm2852, %v8587, %v8591
        %v8593 = vshrl.u32 %v8526, 16
        %v8595 = vor.u32 %v8593, %v8591
        %v8597 = vshll.u32 %v8527, 16
        %v8599 = vrot.slane %v8597, 1
        %v8600 = vsel %vm2852, %v8595, %v8599
        %v8601 = vshrl.u32 %v8527, 16
        %v8603 = vor.u32 %v8601, %v8599
        %v8605 = vshll.u32 %v8528, 16
        %v8607 = vrot.slane %v8605, 1
        %v8608 = vsel %vm2852, %v8603, %v8607
        %v8609 = vshrl.u32 %v8528, 16
        %v8611 = vor.u32 %v8609, %v8607
        %v8613 = vshll.u32 %v8529, 16
        %v8615 = vrot.slane %v8613, 1
        %v8616 = vsel %vm2852, %v8611, %v8615
        %v8617 = vshrl.u32 %v8529, 16
        %v8619 = vor.u32 %v8617, %v8615
        %v8621 = vshll.u32 %v8530, 16
        %v8623 = vrot.slane %v8621, 1
        %v8624 = vsel %vm2852, %v8619, %v8623
        %v8625 = vshrl.u32 %v8530, 16
        %v8627 = vor.u32 %v8625, %v8623
        %v8629 = vshll.u32 %v8531, 16
        %v8631 = vrot.slane %v8629, 1
        %v8632 = vsel %vm2852, %v8627, %v8631
        %v8633 = vshrl.u32 %v8531, 16
        %v8635 = vor.u32 %v8633, %v8631
        %v8637 = vshll.u32 %v8532, 16
        %v8639 = vrot.slane %v8637, 1
        %v8640 = vsel %vm2852, %v8635, %v8639
        %v8641 = vshrl.u32 %v8532, 16
        %v8643 = vor.u32 %v8641, %v8639
        %v8645 = vshll.u32 %v8533, 16
        %v8647 = vrot.slane %v8645, 1
        %v8648 = vsel %vm2852, %v8643, %v8647
        %v8649 = vshrl.u32 %v8533, 16
        %v8651 = vor.u32 %v8649, %v8647
        %v8653 = vshll.u32 %v8534, 16
        %v8655 = vrot.slane %v8653, 1
        %v8656 = vsel %vm2852, %v8651, %v8655
        %v8657 = vshrl.u32 %v8534, 16
        %v8659 = vor.u32 %v8657, %v8655
        %v8661 = vshll.u32 %v8535, 16
        %v8663 = vrot.slane %v8661, 1
        %v8664 = vsel %vm2852, %v8659, %v8663
        %v8665 = vshrl.u32 %v8535, 16
        %v8667 = vor.u32 %v8665, %v8663
        %v8669 = vshll.u32 %v8536, 16
        %v8671 = vrot.slane %v8669, 1
        %v8672 = vsel %vm2852, %v8667, %v8671
        %v8673 = vshrl.u32 %v8536, 16
        %v8675 = vor.u32 %v8673, %v8671
        %v8677 = vshll.u32 %v8537, 16
        %v8679 = vrot.slane %v8677, 1
        %v8680 = vsel %vm2852, %v8675, %v8679
        %v8681 = vshrl.u32 %v8537, 16
        %v8683 = vor.u32 %v8681, %v8679
        %v8685 = vshll.u32 %v8538, 16
        %v8687 = vrot.slane %v8685, 1
        %v8688 = vsel %vm2852, %v8683, %v8687
        %v8689 = vshrl.u32 %v8538, 16
        %v8691 = vor.u32 %v8689, %v8687
        %v8693 = vshll.u32 %v8539, 16
        %v8695 = vrot.slane %v8693, 1
        %v8696 = vsel %vm2852, %v8691, %v8695
        %v8697 = vshrl.u32 %v8539, 16
        %v8699 = vor.u32 %v8697, %v8695
        %v8701 = vshll.u32 %v8540, 16
        %v8703 = vrot.slane %v8701, 1
        %v8704 = vsel %vm2852, %v8699, %v8703
        %v8705 = vshrl.u32 %v8540, 16
        %v8707 = vor.u32 %v8705, %v8703
        %v8745 = vunpack.c.l.b16 %v8420
        %v8746 = vunpack.c.l.b16 %v8421
        %v8747 = vunpack.c.l.b16 %v8422
        %v8748 = vunpack.c.l.b16 %v8423
        %v8749 = vunpack.c.l.b16 %v8424
        %v8750 = vunpack.c.l.b16 %v8425
        %v8751 = vunpack.c.l.b16 %v8426
        %v8752 = vunpack.c.l.b16 %v8427
        %v8753 = vunpack.c.l.b16 %v8428
        %v8754 = vunpack.c.l.b16 %v8429
        %v8755 = vunpack.c.l.b16 %v8430
        %v8756 = vunpack.c.l.b16 %v8431
        %v8757 = vunpack.c.l.b16 %v8432
        %v8758 = vunpack.c.l.b16 %v8433
        %v8759 = vunpack.c.l.b16 %v8434
        %v8760 = vunpack.c.l.b16 %v8435
        %v8761 = vpack.c.b16 %v8746, %v8745
        %v8762 = vpack.c.b16 %v8748, %v8747
        %v8763 = vpack.c.b16 %v8750, %v8749
        %v8764 = vpack.c.b16 %v8752, %v8751
        %v8765 = vpack.c.b16 %v8754, %v8753
        %v8766 = vpack.c.b16 %v8756, %v8755
        %v8767 = vpack.c.b16 %v8758, %v8757
        %v8768 = vpack.c.b16 %v8760, %v8759
        %8777 = vmatprep.subr.bf16.mxu0 0
        %8778 = vmatpush1.bf16.msra.mxu0 %v8761
        %8779 = vmatprep.subr.bf16.mxu0 0
        %8780 = vmatpush1.bf16.msra.mxu0 %v8762
        %8781 = vmatprep.subr.bf16.mxu0 0
        %8782 = vmatpush1.bf16.msra.mxu0 %v8763
        %8783 = vmatprep.subr.bf16.mxu0 0
        %8784 = vmatpush1.bf16.msra.mxu0 %v8764
        %8785 = vmatprep.subr.bf16.mxu0 0
        %8786 = vmatpush1.bf16.msra.mxu0 %v8765
        %8787 = vmatprep.subr.bf16.mxu0 0
        %8788 = vmatpush1.bf16.msra.mxu0 %v8766
        %8789 = vmatprep.subr.bf16.mxu0 0
        %8790 = vmatpush1.bf16.msra.mxu0 %v8767
        %8791 = vmatprep.subr.bf16.mxu0 0
        %8792 = vmatpush1.bf16.msra.mxu0 %v8768
        %8793 = vmatprep.subr.bf16.mxu0 0
        %8794 = vmatpush1.bf16.msra.mxu0 0
        %8795 = vmatprep.subr.bf16.mxu0 0
        %8796 = vmatpush1.bf16.msra.mxu0 0
        %8797 = vmatprep.subr.bf16.mxu0 0
        %8798 = vmatpush1.bf16.msra.mxu0 0
        %8799 = vmatprep.subr.bf16.mxu0 0
        %8800 = vmatpush1.bf16.msra.mxu0 0
        %8801 = vmatprep.subr.bf16.mxu0 0
        %8802 = vmatpush1.bf16.msra.mxu0 0
        %8803 = vmatprep.subr.bf16.mxu0 0
        %8804 = vmatpush1.bf16.msra.mxu0 0
        %8805 = vmatprep.subr.bf16.mxu0 0
        %8806 = vmatpush1.bf16.msra.mxu0 0
        %8807 = vmatprep.subr.bf16.mxu0 0
        %8808 = vmatpush1.bf16.msra.mxu0 0
        %8809 = vmatprep.mubr.bf16.mxu0 0
        %8810 = vmatmul.mubr.bf16.gmra.mrb[0].mxu0 %v8552
        %v8811 = vpop.f32.mrb[0].mxu0
        %v8812 = vadd.f32 0.0, %v8811
        %v8813 = vpop.f32.mrb[0].mxu0
        %v8814 = vpop.f32.mrb[0].mxu0
        %v8815 = vadd.f32 0.0, %v8814
        %v8816 = vpop.f32.mrb[0].mxu0
        %8817 = vmatprep.mubr.bf16.mxu0 0
        %8818 = vmatmul.mubr.bf16.gmra.mrb[0].mxu0 %v8560
        %v8819 = vpop.f32.mrb[0].mxu0
        %v8820 = vadd.f32 0.0, %v8819
        %v8821 = vpop.f32.mrb[0].mxu0
        %v8822 = vpop.f32.mrb[0].mxu0
        %v8823 = vadd.f32 0.0, %v8822
        %v8824 = vpop.f32.mrb[0].mxu0
        %8825 = vmatprep.mubr.bf16.mxu0 0
        %8826 = vmatmul.mubr.bf16.gmra.mrb[0].mxu0 %v8568
        %v8827 = vpop.f32.mrb[0].mxu0
        %v8828 = vadd.f32 0.0, %v8827
        %v8829 = vpop.f32.mrb[0].mxu0
        %v8830 = vpop.f32.mrb[0].mxu0
        %v8831 = vadd.f32 0.0, %v8830
        %v8832 = vpop.f32.mrb[0].mxu0
        %8833 = vmatprep.mubr.bf16.mxu0 0
        %8834 = vmatmul.mubr.bf16.gmra.mrb[0].mxu0 %v8576
        %v8835 = vpop.f32.mrb[0].mxu0
        %v8836 = vadd.f32 0.0, %v8835
        %v8837 = vpop.f32.mrb[0].mxu0
        %v8838 = vpop.f32.mrb[0].mxu0
        %v8839 = vadd.f32 0.0, %v8838
        %v8840 = vpop.f32.mrb[0].mxu0
        %8841 = vmatprep.mubr.bf16.mxu0 0
        %8842 = vmatmul.mubr.bf16.gmra.mrb[0].mxu0 %v8584
        %v8843 = vpop.f32.mrb[0].mxu0
        %v8844 = vadd.f32 0.0, %v8843
        %v8845 = vpop.f32.mrb[0].mxu0
        %v8846 = vpop.f32.mrb[0].mxu0
        %v8847 = vadd.f32 0.0, %v8846
        %v8848 = vpop.f32.mrb[0].mxu0
        %8849 = vmatprep.mubr.bf16.mxu0 0
        %8850 = vmatmul.mubr.bf16.gmra.mrb[0].mxu0 %v8592
        %v8851 = vpop.f32.mrb[0].mxu0
        %v8852 = vadd.f32 0.0, %v8851
        %v8853 = vpop.f32.mrb[0].mxu0
        %v8854 = vpop.f32.mrb[0].mxu0
        %v8855 = vadd.f32 0.0, %v8854
        %v8856 = vpop.f32.mrb[0].mxu0
        %8857 = vmatprep.mubr.bf16.mxu0 0
        %8858 = vmatmul.mubr.bf16.gmra.mrb[0].mxu0 %v8600
        %v8859 = vpop.f32.mrb[0].mxu0
        %v8860 = vadd.f32 0.0, %v8859
        %v8861 = vpop.f32.mrb[0].mxu0
        %v8862 = vpop.f32.mrb[0].mxu0
        %v8863 = vadd.f32 0.0, %v8862
        %v8864 = vpop.f32.mrb[0].mxu0
        %8865 = vmatprep.mubr.bf16.mxu0 0
        %8866 = vmatmul.mubr.bf16.gmra.mrb[0].mxu0 %v8608
        %v8867 = vpop.f32.mrb[0].mxu0
        %v8868 = vadd.f32 0.0, %v8867
        %v8869 = vpop.f32.mrb[0].mxu0
        %v8870 = vpop.f32.mrb[0].mxu0
        %v8871 = vadd.f32 0.0, %v8870
        %v8872 = vpop.f32.mrb[0].mxu0
        %8873 = vmatprep.mubr.bf16.mxu0 0
        %8874 = vmatmul.mubr.bf16.gmra.mrb[0].mxu0 %v8616
        %v8875 = vpop.f32.mrb[0].mxu0
        %v8876 = vadd.f32 0.0, %v8875
        %v8877 = vpop.f32.mrb[0].mxu0
        %v8878 = vpop.f32.mrb[0].mxu0
        %v8879 = vadd.f32 0.0, %v8878
        %v8880 = vpop.f32.mrb[0].mxu0
        %8881 = vmatprep.mubr.bf16.mxu0 0
        %8882 = vmatmul.mubr.bf16.gmra.mrb[0].mxu0 %v8624
        %v8883 = vpop.f32.mrb[0].mxu0
        %v8884 = vadd.f32 0.0, %v8883
        %v8885 = vpop.f32.mrb[0].mxu0
        %v8886 = vpop.f32.mrb[0].mxu0
        %v8887 = vadd.f32 0.0, %v8886
        %v8888 = vpop.f32.mrb[0].mxu0
        %8889 = vmatprep.mubr.bf16.mxu0 0
        %8890 = vmatmul.mubr.bf16.gmra.mrb[0].mxu0 %v8632
        %v8891 = vpop.f32.mrb[0].mxu0
        %v8892 = vadd.f32 0.0, %v8891
        %v8893 = vpop.f32.mrb[0].mxu0
        %v8894 = vpop.f32.mrb[0].mxu0
        %v8895 = vadd.f32 0.0, %v8894
        %v8896 = vpop.f32.mrb[0].mxu0
        %8897 = vmatprep.mubr.bf16.mxu0 0
        %8898 = vmatmul.mubr.bf16.gmra.mrb[0].mxu0 %v8640
        %v8899 = vpop.f32.mrb[0].mxu0
        %v8900 = vadd.f32 0.0, %v8899
        %v8901 = vpop.f32.mrb[0].mxu0
        %v8902 = vpop.f32.mrb[0].mxu0
        %v8903 = vadd.f32 0.0, %v8902
        %v8904 = vpop.f32.mrb[0].mxu0
        %8905 = vmatprep.mubr.bf16.mxu0 0
        %8906 = vmatmul.mubr.bf16.gmra.mrb[0].mxu0 %v8648
        %v8907 = vpop.f32.mrb[0].mxu0
        %v8908 = vadd.f32 0.0, %v8907
        %v8909 = vpop.f32.mrb[0].mxu0
        %v8910 = vpop.f32.mrb[0].mxu0
        %v8911 = vadd.f32 0.0, %v8910
        %v8912 = vpop.f32.mrb[0].mxu0
        %8913 = vmatprep.mubr.bf16.mxu0 0
        %8914 = vmatmul.mubr.bf16.gmra.mrb[0].mxu0 %v8656
        %v8915 = vpop.f32.mrb[0].mxu0
        %v8916 = vadd.f32 0.0, %v8915
        %v8917 = vpop.f32.mrb[0].mxu0
        %v8918 = vpop.f32.mrb[0].mxu0
        %v8919 = vadd.f32 0.0, %v8918
        %v8920 = vpop.f32.mrb[0].mxu0
        %8921 = vmatprep.mubr.bf16.mxu0 0
        %8922 = vmatmul.mubr.bf16.gmra.mrb[0].mxu0 %v8664
        %v8923 = vpop.f32.mrb[0].mxu0
        %v8924 = vadd.f32 0.0, %v8923
        %v8925 = vpop.f32.mrb[0].mxu0
        %v8926 = vpop.f32.mrb[0].mxu0
        %v8927 = vadd.f32 0.0, %v8926
        %v8928 = vpop.f32.mrb[0].mxu0
        %8929 = vmatprep.mubr.bf16.mxu0 0
        %8930 = vmatmul.mubr.bf16.gmra.mrb[0].mxu0 %v8672
        %v8931 = vpop.f32.mrb[0].mxu0
        %v8932 = vadd.f32 0.0, %v8931
        %v8933 = vpop.f32.mrb[0].mxu0
        %v8934 = vpop.f32.mrb[0].mxu0
        %v8935 = vadd.f32 0.0, %v8934
        %v8936 = vpop.f32.mrb[0].mxu0
        %8937 = vmatprep.mubr.bf16.mxu0 0
        %8938 = vmatmul.mubr.bf16.gmra.mrb[0].mxu0 %v8680
        %v8939 = vpop.f32.mrb[0].mxu0
        %v8940 = vadd.f32 0.0, %v8939
        %v8941 = vpop.f32.mrb[0].mxu0
        %v8942 = vpop.f32.mrb[0].mxu0
        %v8943 = vadd.f32 0.0, %v8942
        %v8944 = vpop.f32.mrb[0].mxu0
        %8945 = vmatprep.mubr.bf16.mxu0 0
        %8946 = vmatmul.mubr.bf16.gmra.mrb[0].mxu0 %v8688
        %v8947 = vpop.f32.mrb[0].mxu0
        %v8948 = vadd.f32 0.0, %v8947
        %v8949 = vpop.f32.mrb[0].mxu0
        %v8950 = vpop.f32.mrb[0].mxu0
        %v8951 = vadd.f32 0.0, %v8950
        %v8952 = vpop.f32.mrb[0].mxu0
        %8953 = vmatprep.mubr.bf16.mxu0 0
        %8954 = vmatmul.mubr.bf16.gmra.mrb[0].mxu0 %v8696
        %v8955 = vpop.f32.mrb[0].mxu0
        %v8956 = vadd.f32 0.0, %v8955
        %v8957 = vpop.f32.mrb[0].mxu0
        %v8958 = vpop.f32.mrb[0].mxu0
        %v8959 = vadd.f32 0.0, %v8958
        %v8960 = vpop.f32.mrb[0].mxu0
        %8961 = vmatprep.mubr.bf16.mxu0 0
        %8962 = vmatmul.mubr.bf16.gmra.mrb[0].mxu0 %v8704
        %v8963 = vpop.f32.mrb[0].mxu0
        %v8964 = vadd.f32 0.0, %v8963
        %v8965 = vpop.f32.mrb[0].mxu0
        %v8966 = vpop.f32.mrb[0].mxu0
        %v8967 = vadd.f32 0.0, %v8966
        %v8968 = vpop.f32.mrb[0].mxu0
        %8969 = vmatprep.mubr.bf16.mxu0 0
        %8970 = vmatmul.mubr.bf16.gmra.mrb[0].mxu0 %v8707
        %v8971 = vpop.f32.mrb[0].mxu0
        %v8972 = vadd.f32 0.0, %v8971
        %v8973 = vpop.f32.mrb[0].mxu0
        %v8974 = vpop.f32.mrb[0].mxu0
        %v8975 = vpop.f32.mrb[0].mxu0
        %8976 = vdwg.mxu0
        %v8977 = vadd.f32 %v8336, %v8812
        %v8978 = vadd.f32 %v8337, %v8815
        %v8979 = vadd.f32 %v8338, %v8820
        %v8980 = vadd.f32 %v8339, %v8823
        %v8981 = vadd.f32 %v8340, %v8828
        %v8982 = vadd.f32 %v8341, %v8831
        %v8983 = vadd.f32 %v8342, %v8836
        %v8984 = vadd.f32 %v8343, %v8839
        %v8985 = vadd.f32 %v8344, %v8844
        %v8986 = vadd.f32 %v8345, %v8847
        %v8987 = vadd.f32 %v8346, %v8852
        %v8988 = vadd.f32 %v8347, %v8855
        %v8989 = vadd.f32 %v8348, %v8860
        %v8990 = vadd.f32 %v8349, %v8863
        %v8991 = vadd.f32 %v8350, %v8868
        %v8992 = vadd.f32 %v8351, %v8871
        %v8993 = vadd.f32 %v8352, %v8876
        %v8994 = vadd.f32 %v8353, %v8879
        %v8995 = vadd.f32 %v8354, %v8884
        %v8996 = vadd.f32 %v8355, %v8887
        %v8997 = vadd.f32 %v8356, %v8892
        %v8998 = vadd.f32 %v8357, %v8895
        %v8999 = vadd.f32 %v8358, %v8900
        %v9000 = vadd.f32 %v8359, %v8903
        %v9001 = vadd.f32 %v8360, %v8908
        %v9002 = vadd.f32 %v8361, %v8911
        %v9003 = vadd.f32 %v8362, %v8916
        %v9004 = vadd.f32 %v8363, %v8919
        %v9005 = vadd.f32 %v8364, %v8924
        %v9006 = vadd.f32 %v8365, %v8927
        %v9007 = vadd.f32 %v8366, %v8932
        %v9008 = vadd.f32 %v8367, %v8935
        %v9009 = vadd.f32 %v8368, %v8940
        %v9010 = vadd.f32 %v8369, %v8943
        %v9011 = vadd.f32 %v8370, %v8948
        %v9012 = vadd.f32 %v8371, %v8951
        %v9013 = vadd.f32 %v8372, %v8956
        %v9014 = vadd.f32 %v8373, %v8959
        %v9015 = vadd.f32 %v8374, %v8964
        %v9016 = vadd.f32 %v8375, %v8967
        %v9017 = vadd.f32 %v8376, %v8972
        %v9018 = vld [vmem:[#allocation2 + $0x14] sm:$0xe]
        %s9019 = scalar_lea.vmem [#allocation8], 448
        %v9020 = vld [vmem:[%s9019] sm:$0xf]
        %v9021 = vld [vmem:[%s9019 + $0x4] sm:$0xf]
        %v9022 = vld [vmem:[%s9019 + $0x8] sm:$0xf]
        %v9023 = vld [vmem:[%s9019 + $0xc] sm:$0xf]
        %v9024 = vld [vmem:[%s9019 + $0x10] sm:$0xf]
        %v9025 = vld [vmem:[%s9019 + $0x14] sm:$0xf]
        %v9026 = vld [vmem:[%s9019 + $0x18] sm:$0xf]
        %v9027 = vld [vmem:[%s9019 + $0x1c] sm:$0xf]
        %v9028 = vld [vmem:[%s9019 + $0x20] sm:$0xf]
        %v9029 = vld [vmem:[%s9019 + $0x24] sm:$0xf]
        %v9030 = vld [vmem:[%s9019 + $0x28] sm:$0xf]
        %v9031 = vld [vmem:[%s9019 + $0x2c] sm:$0xf]
        %v9032 = vld [vmem:[%s9019 + $0x30] sm:$0xf]
        %v9033 = vld [vmem:[%s9019 + $0x34] sm:$0xf]
        %v9034 = vld [vmem:[%s9019 + $0x38] sm:$0xf]
        %v9035 = vld [vmem:[%s9019 + $0x3c] sm:$0xf]
        %v9037 = vunpack.c.l.b16 %v9018
        %v9038 = vpack.c.b16 %v8479, %v9037
        %v9039 = vrot.slane %v9038, 1
        %v9040 = vrot.slane %v8521, 1
        %v9041 = vsel %vm3992, %v9039, %v9040
        %v9042 = vrot.slane %v8522, 1
        %v9043 = vsel %vm3992, %v9040, %v9042
        %v9044 = vrot.slane %v8523, 1
        %v9045 = vsel %vm3992, %v9042, %v9044
        %v9046 = vrot.slane %v8524, 1
        %v9047 = vsel %vm3992, %v9044, %v9046
        %v9048 = vrot.slane %v8525, 1
        %v9049 = vsel %vm3992, %v9046, %v9048
        %v9050 = vrot.slane %v8526, 1
        %v9051 = vsel %vm3992, %v9048, %v9050
        %v9052 = vrot.slane %v8527, 1
        %v9053 = vsel %vm3992, %v9050, %v9052
        %v9054 = vrot.slane %v8528, 1
        %v9055 = vsel %vm3992, %v9052, %v9054
        %v9056 = vrot.slane %v8529, 1
        %v9057 = vsel %vm3992, %v9054, %v9056
        %v9058 = vrot.slane %v8530, 1
        %v9059 = vsel %vm3992, %v9056, %v9058
        %v9060 = vrot.slane %v8531, 1
        %v9061 = vsel %vm3992, %v9058, %v9060
        %v9062 = vrot.slane %v8532, 1
        %v9063 = vsel %vm3992, %v9060, %v9062
        %v9064 = vrot.slane %v8533, 1
        %v9065 = vsel %vm3992, %v9062, %v9064
        %v9066 = vrot.slane %v8534, 1
        %v9067 = vsel %vm3992, %v9064, %v9066
        %v9068 = vrot.slane %v8535, 1
        %v9069 = vsel %vm3992, %v9066, %v9068
        %v9070 = vrot.slane %v8536, 1
        %v9071 = vsel %vm3992, %v9068, %v9070
        %v9072 = vrot.slane %v8537, 1
        %v9073 = vsel %vm3992, %v9070, %v9072
        %v9074 = vrot.slane %v8538, 1
        %v9075 = vsel %vm3992, %v9072, %v9074
        %v9076 = vrot.slane %v8539, 1
        %v9077 = vsel %vm3992, %v9074, %v9076
        %v9078 = vrot.slane %v8540, 1
        %v9079 = vsel %vm3992, %v9076, %v9078
        %v9117 = vunpack.c.l.b16 %v9020
        %v9118 = vunpack.c.l.b16 %v9021
        %v9119 = vunpack.c.l.b16 %v9022
        %v9120 = vunpack.c.l.b16 %v9023
        %v9121 = vunpack.c.l.b16 %v9024
        %v9122 = vunpack.c.l.b16 %v9025
        %v9123 = vunpack.c.l.b16 %v9026
        %v9124 = vunpack.c.l.b16 %v9027
        %v9125 = vunpack.c.l.b16 %v9028
        %v9126 = vunpack.c.l.b16 %v9029
        %v9127 = vunpack.c.l.b16 %v9030
        %v9128 = vunpack.c.l.b16 %v9031
        %v9129 = vunpack.c.l.b16 %v9032
        %v9130 = vunpack.c.l.b16 %v9033
        %v9131 = vunpack.c.l.b16 %v9034
        %v9132 = vunpack.c.l.b16 %v9035
        %v9133 = vpack.c.b16 %v9118, %v9117
        %v9134 = vpack.c.b16 %v9120, %v9119
        %v9135 = vpack.c.b16 %v9122, %v9121
        %v9136 = vpack.c.b16 %v9124, %v9123
        %v9137 = vpack.c.b16 %v9126, %v9125
        %v9138 = vpack.c.b16 %v9128, %v9127
        %v9139 = vpack.c.b16 %v9130, %v9129
        %v9140 = vpack.c.b16 %v9132, %v9131
        %9149 = vmatprep.subr.bf16.mxu0 0
        %9150 = vmatpush1.bf16.msra.mxu0 %v9133
        %9151 = vmatprep.subr.bf16.mxu0 0
        %9152 = vmatpush1.bf16.msra.mxu0 %v9134
        %9153 = vmatprep.subr.bf16.mxu0 0
        %9154 = vmatpush1.bf16.msra.mxu0 %v9135
        %9155 = vmatprep.subr.bf16.mxu0 0
        %9156 = vmatpush1.bf16.msra.mxu0 %v9136
        %9157 = vmatprep.subr.bf16.mxu0 0
        %9158 = vmatpush1.bf16.msra.mxu0 %v9137
        %9159 = vmatprep.subr.bf16.mxu0 0
        %9160 = vmatpush1.bf16.msra.mxu0 %v9138
        %9161 = vmatprep.subr.bf16.mxu0 0
        %9162 = vmatpush1.bf16.msra.mxu0 %v9139
        %9163 = vmatprep.subr.bf16.mxu0 0
        %9164 = vmatpush1.bf16.msra.mxu0 %v9140
        %9165 = vmatprep.subr.bf16.mxu0 0
        %9166 = vmatpush1.bf16.msra.mxu0 0
        %9167 = vmatprep.subr.bf16.mxu0 0
        %9168 = vmatpush1.bf16.msra.mxu0 0
        %9169 = vmatprep.subr.bf16.mxu0 0
        %9170 = vmatpush1.bf16.msra.mxu0 0
        %9171 = vmatprep.subr.bf16.mxu0 0
        %9172 = vmatpush1.bf16.msra.mxu0 0
        %9173 = vmatprep.subr.bf16.mxu0 0
        %9174 = vmatpush1.bf16.msra.mxu0 0
        %9175 = vmatprep.subr.bf16.mxu0 0
        %9176 = vmatpush1.bf16.msra.mxu0 0
        %9177 = vmatprep.subr.bf16.mxu0 0
        %9178 = vmatpush1.bf16.msra.mxu0 0
        %9179 = vmatprep.subr.bf16.mxu0 0
        %9180 = vmatpush1.bf16.msra.mxu0 0
        %9181 = vmatprep.mubr.bf16.mxu0 0
        %9182 = vmatmul.mubr.bf16.gmra.mrb[0].mxu0 %v9041
        %v9183 = vpop.f32.mrb[0].mxu0
        %v9184 = vadd.f32 0.0, %v9183
        %v9185 = vpop.f32.mrb[0].mxu0
        %v9186 = vpop.f32.mrb[0].mxu0
        %v9187 = vadd.f32 0.0, %v9186
        %v9188 = vpop.f32.mrb[0].mxu0
        %9189 = vmatprep.mubr.bf16.mxu0 0
        %9190 = vmatmul.mubr.bf16.gmra.mrb[0].mxu0 %v9043
        %v9191 = vpop.f32.mrb[0].mxu0
        %v9192 = vadd.f32 0.0, %v9191
        %v9193 = vpop.f32.mrb[0].mxu0
        %v9194 = vpop.f32.mrb[0].mxu0
        %v9195 = vadd.f32 0.0, %v9194
        %v9196 = vpop.f32.mrb[0].mxu0
        %9197 = vmatprep.mubr.bf16.mxu0 0
        %9198 = vmatmul.mubr.bf16.gmra.mrb[0].mxu0 %v9045
        %v9199 = vpop.f32.mrb[0].mxu0
        %v9200 = vadd.f32 0.0, %v9199
        %v9201 = vpop.f32.mrb[0].mxu0
        %v9202 = vpop.f32.mrb[0].mxu0
        %v9203 = vadd.f32 0.0, %v9202
        %v9204 = vpop.f32.mrb[0].mxu0
        %9205 = vmatprep.mubr.bf16.mxu0 0
        %9206 = vmatmul.mubr.bf16.gmra.mrb[0].mxu0 %v9047
        %v9207 = vpop.f32.mrb[0].mxu0
        %v9208 = vadd.f32 0.0, %v9207
        %v9209 = vpop.f32.mrb[0].mxu0
        %v9210 = vpop.f32.mrb[0].mxu0
        %v9211 = vadd.f32 0.0, %v9210
        %v9212 = vpop.f32.mrb[0].mxu0
        %9213 = vmatprep.mubr.bf16.mxu0 0
        %9214 = vmatmul.mubr.bf16.gmra.mrb[0].mxu0 %v9049
        %v9215 = vpop.f32.mrb[0].mxu0
        %v9216 = vadd.f32 0.0, %v9215
        %v9217 = vpop.f32.mrb[0].mxu0
        %v9218 = vpop.f32.mrb[0].mxu0
        %v9219 = vadd.f32 0.0, %v9218
        %v9220 = vpop.f32.mrb[0].mxu0
        %9221 = vmatprep.mubr.bf16.mxu0 0
        %9222 = vmatmul.mubr.bf16.gmra.mrb[0].mxu0 %v9051
        %v9223 = vpop.f32.mrb[0].mxu0
        %v9224 = vadd.f32 0.0, %v9223
        %v9225 = vpop.f32.mrb[0].mxu0
        %v9226 = vpop.f32.mrb[0].mxu0
        %v9227 = vadd.f32 0.0, %v9226
        %v9228 = vpop.f32.mrb[0].mxu0
        %9229 = vmatprep.mubr.bf16.mxu0 0
        %9230 = vmatmul.mubr.bf16.gmra.mrb[0].mxu0 %v9053
        %v9231 = vpop.f32.mrb[0].mxu0
        %v9232 = vadd.f32 0.0, %v9231
        %v9233 = vpop.f32.mrb[0].mxu0
        %v9234 = vpop.f32.mrb[0].mxu0
        %v9235 = vadd.f32 0.0, %v9234
        %v9236 = vpop.f32.mrb[0].mxu0
        %9237 = vmatprep.mubr.bf16.mxu0 0
        %9238 = vmatmul.mubr.bf16.gmra.mrb[0].mxu0 %v9055
        %v9239 = vpop.f32.mrb[0].mxu0
        %v9240 = vadd.f32 0.0, %v9239
        %v9241 = vpop.f32.mrb[0].mxu0
        %v9242 = vpop.f32.mrb[0].mxu0
        %v9243 = vadd.f32 0.0, %v9242
        %v9244 = vpop.f32.mrb[0].mxu0
        %9245 = vmatprep.mubr.bf16.mxu0 0
        %9246 = vmatmul.mubr.bf16.gmra.mrb[0].mxu0 %v9057
        %v9247 = vpop.f32.mrb[0].mxu0
        %v9248 = vadd.f32 0.0, %v9247
        %v9249 = vpop.f32.mrb[0].mxu0
        %v9250 = vpop.f32.mrb[0].mxu0
        %v9251 = vadd.f32 0.0, %v9250
        %v9252 = vpop.f32.mrb[0].mxu0
        %9253 = vmatprep.mubr.bf16.mxu0 0
        %9254 = vmatmul.mubr.bf16.gmra.mrb[0].mxu0 %v9059
        %v9255 = vpop.f32.mrb[0].mxu0
        %v9256 = vadd.f32 0.0, %v9255
        %v9257 = vpop.f32.mrb[0].mxu0
        %v9258 = vpop.f32.mrb[0].mxu0
        %v9259 = vadd.f32 0.0, %v9258
        %v9260 = vpop.f32.mrb[0].mxu0
        %9261 = vmatprep.mubr.bf16.mxu0 0
        %9262 = vmatmul.mubr.bf16.gmra.mrb[0].mxu0 %v9061
        %v9263 = vpop.f32.mrb[0].mxu0
        %v9264 = vadd.f32 0.0, %v9263
        %v9265 = vpop.f32.mrb[0].mxu0
        %v9266 = vpop.f32.mrb[0].mxu0
        %v9267 = vadd.f32 0.0, %v9266
        %v9268 = vpop.f32.mrb[0].mxu0
        %9269 = vmatprep.mubr.bf16.mxu0 0
        %9270 = vmatmul.mubr.bf16.gmra.mrb[0].mxu0 %v9063
        %v9271 = vpop.f32.mrb[0].mxu0
        %v9272 = vadd.f32 0.0, %v9271
        %v9273 = vpop.f32.mrb[0].mxu0
        %v9274 = vpop.f32.mrb[0].mxu0
        %v9275 = vadd.f32 0.0, %v9274
        %v9276 = vpop.f32.mrb[0].mxu0
        %9277 = vmatprep.mubr.bf16.mxu0 0
        %9278 = vmatmul.mubr.bf16.gmra.mrb[0].mxu0 %v9065
        %v9279 = vpop.f32.mrb[0].mxu0
        %v9280 = vadd.f32 0.0, %v9279
        %v9281 = vpop.f32.mrb[0].mxu0
        %v9282 = vpop.f32.mrb[0].mxu0
        %v9283 = vadd.f32 0.0, %v9282
        %v9284 = vpop.f32.mrb[0].mxu0
        %9285 = vmatprep.mubr.bf16.mxu0 0
        %9286 = vmatmul.mubr.bf16.gmra.mrb[0].mxu0 %v9067
        %v9287 = vpop.f32.mrb[0].mxu0
        %v9288 = vadd.f32 0.0, %v9287
        %v9289 = vpop.f32.mrb[0].mxu0
        %v9290 = vpop.f32.mrb[0].mxu0
        %v9291 = vadd.f32 0.0, %v9290
        %v9292 = vpop.f32.mrb[0].mxu0
        %9293 = vmatprep.mubr.bf16.mxu0 0
        %9294 = vmatmul.mubr.bf16.gmra.mrb[0].mxu0 %v9069
        %v9295 = vpop.f32.mrb[0].mxu0
        %v9296 = vadd.f32 0.0, %v9295
        %v9297 = vpop.f32.mrb[0].mxu0
        %v9298 = vpop.f32.mrb[0].mxu0
        %v9299 = vadd.f32 0.0, %v9298
        %v9300 = vpop.f32.mrb[0].mxu0
        %9301 = vmatprep.mubr.bf16.mxu0 0
        %9302 = vmatmul.mubr.bf16.gmra.mrb[0].mxu0 %v9071
        %v9303 = vpop.f32.mrb[0].mxu0
        %v9304 = vadd.f32 0.0, %v9303
        %v9305 = vpop.f32.mrb[0].mxu0
        %v9306 = vpop.f32.mrb[0].mxu0
        %v9307 = vadd.f32 0.0, %v9306
        %v9308 = vpop.f32.mrb[0].mxu0
        %9309 = vmatprep.mubr.bf16.mxu0 0
        %9310 = vmatmul.mubr.bf16.gmra.mrb[0].mxu0 %v9073
        %v9311 = vpop.f32.mrb[0].mxu0
        %v9312 = vadd.f32 0.0, %v9311
        %v9313 = vpop.f32.mrb[0].mxu0
        %v9314 = vpop.f32.mrb[0].mxu0
        %v9315 = vadd.f32 0.0, %v9314
        %v9316 = vpop.f32.mrb[0].mxu0
        %9317 = vmatprep.mubr.bf16.mxu0 0
        %9318 = vmatmul.mubr.bf16.gmra.mrb[0].mxu0 %v9075
        %v9319 = vpop.f32.mrb[0].mxu0
        %v9320 = vadd.f32 0.0, %v9319
        %v9321 = vpop.f32.mrb[0].mxu0
        %v9322 = vpop.f32.mrb[0].mxu0
        %v9323 = vadd.f32 0.0, %v9322
        %v9324 = vpop.f32.mrb[0].mxu0
        %9325 = vmatprep.mubr.bf16.mxu0 0
        %9326 = vmatmul.mubr.bf16.gmra.mrb[0].mxu0 %v9077
        %v9327 = vpop.f32.mrb[0].mxu0
        %v9328 = vadd.f32 0.0, %v9327
        %v9329 = vpop.f32.mrb[0].mxu0
        %v9330 = vpop.f32.mrb[0].mxu0
        %v9331 = vadd.f32 0.0, %v9330
        %v9332 = vpop.f32.mrb[0].mxu0
        %9333 = vmatprep.mubr.bf16.mxu0 0
        %9334 = vmatmul.mubr.bf16.gmra.mrb[0].mxu0 %v9079
        %v9335 = vpop.f32.mrb[0].mxu0
        %v9336 = vadd.f32 0.0, %v9335
        %v9337 = vpop.f32.mrb[0].mxu0
        %v9338 = vpop.f32.mrb[0].mxu0
        %v9339 = vadd.f32 0.0, %v9338
        %v9340 = vpop.f32.mrb[0].mxu0
        %9341 = vmatprep.mubr.bf16.mxu0 0
        %9342 = vmatmul.mubr.bf16.gmra.mrb[0].mxu0 %v9078
        %v9343 = vpop.f32.mrb[0].mxu0
        %v9344 = vadd.f32 0.0, %v9343
        %v9345 = vpop.f32.mrb[0].mxu0
        %v9346 = vpop.f32.mrb[0].mxu0
        %v9347 = vpop.f32.mrb[0].mxu0
        %9348 = vdwg.mxu0
        %v9349 = vadd.f32 %v8977, %v9184
        %v9350 = vadd.f32 %v8978, %v9187
        %v9351 = vadd.f32 %v8979, %v9192
        %v9352 = vadd.f32 %v8980, %v9195
        %v9353 = vadd.f32 %v8981, %v9200
        %v9354 = vadd.f32 %v8982, %v9203
        %v9355 = vadd.f32 %v8983, %v9208
        %v9356 = vadd.f32 %v8984, %v9211
        %v9357 = vadd.f32 %v8985, %v9216
        %v9358 = vadd.f32 %v8986, %v9219
        %v9359 = vadd.f32 %v8987, %v9224
        %v9360 = vadd.f32 %v8988, %v9227
        %v9361 = vadd.f32 %v8989, %v9232
        %v9362 = vadd.f32 %v8990, %v9235
        %v9363 = vadd.f32 %v8991, %v9240
        %v9364 = vadd.f32 %v8992, %v9243
        %v9365 = vadd.f32 %v8993, %v9248
        %v9366 = vadd.f32 %v8994, %v9251
        %v9367 = vadd.f32 %v8995, %v9256
        %v9368 = vadd.f32 %v8996, %v9259
        %v9369 = vadd.f32 %v8997, %v9264
        %v9370 = vadd.f32 %v8998, %v9267
        %v9371 = vadd.f32 %v8999, %v9272
        %v9372 = vadd.f32 %v9000, %v9275
        %v9373 = vadd.f32 %v9001, %v9280
        %v9374 = vadd.f32 %v9002, %v9283
        %v9375 = vadd.f32 %v9003, %v9288
        %v9376 = vadd.f32 %v9004, %v9291
        %v9377 = vadd.f32 %v9005, %v9296
        %v9378 = vadd.f32 %v9006, %v9299
        %v9379 = vadd.f32 %v9007, %v9304
        %v9380 = vadd.f32 %v9008, %v9307
        %v9381 = vadd.f32 %v9009, %v9312
        %v9382 = vadd.f32 %v9010, %v9315
        %v9383 = vadd.f32 %v9011, %v9320
        %v9384 = vadd.f32 %v9012, %v9323
        %v9385 = vadd.f32 %v9013, %v9328
        %v9386 = vadd.f32 %v9014, %v9331
        %v9387 = vadd.f32 %v9015, %v9336
        %v9388 = vadd.f32 %v9016, %v9339
        %v9389 = vadd.f32 %v9017, %v9344
        %v9390 = vld [vmem:[#allocation2 + $0xb8] sm:$0x3]
        %s9391 = scalar_lea.vmem [#allocation8], 512
        %v9392 = vld [vmem:[%s9391] sm:$0xf]
        %v9393 = vld [vmem:[%s9391 + $0x4] sm:$0xf]
        %v9394 = vld [vmem:[%s9391 + $0x8] sm:$0xf]
        %v9395 = vld [vmem:[%s9391 + $0xc] sm:$0xf]
        %v9396 = vld [vmem:[%s9391 + $0x10] sm:$0xf]
        %v9397 = vld [vmem:[%s9391 + $0x14] sm:$0xf]
        %v9398 = vld [vmem:[%s9391 + $0x18] sm:$0xf]
        %v9399 = vld [vmem:[%s9391 + $0x1c] sm:$0xf]
        %v9400 = vld [vmem:[%s9391 + $0x20] sm:$0xf]
        %v9401 = vld [vmem:[%s9391 + $0x24] sm:$0xf]
        %v9402 = vld [vmem:[%s9391 + $0x28] sm:$0xf]
        %v9403 = vld [vmem:[%s9391 + $0x2c] sm:$0xf]
        %v9404 = vld [vmem:[%s9391 + $0x30] sm:$0xf]
        %v9405 = vld [vmem:[%s9391 + $0x34] sm:$0xf]
        %v9406 = vld [vmem:[%s9391 + $0x38] sm:$0xf]
        %v9407 = vld [vmem:[%s9391 + $0x3c] sm:$0xf]
        %v9409 = vunpack.c.l.b16 %v9390
        %v9410 = vpack.c.b16 %v9409, %v8518
        %v9412 = vshrl.u32 %v9038, 16
        %v9414 = vrot.slane %v9412, 1
        %v9415 = vshll.u32 %v9038, 16
        %v9417 = vrot.slane %v9415, 2
        %v9418 = vor.u32 %v9414, %v9417
        %v9419 = vrot.slane %v8553, 1
        %v9420 = vrot.slane %v8549, 2
        %v9421 = vor.u32 %v9419, %v9420
        %v9422 = vsel %vm4365, %v9418, %v9421
        %v9423 = vrot.slane %v8561, 1
        %v9424 = vrot.slane %v8557, 2
        %v9425 = vor.u32 %v9423, %v9424
        %v9426 = vsel %vm4365, %v9421, %v9425
        %v9427 = vrot.slane %v8569, 1
        %v9428 = vrot.slane %v8565, 2
        %v9429 = vor.u32 %v9427, %v9428
        %v9430 = vsel %vm4365, %v9425, %v9429
        %v9431 = vrot.slane %v8577, 1
        %v9432 = vrot.slane %v8573, 2
        %v9433 = vor.u32 %v9431, %v9432
        %v9434 = vsel %vm4365, %v9429, %v9433
        %v9435 = vrot.slane %v8585, 1
        %v9436 = vrot.slane %v8581, 2
        %v9437 = vor.u32 %v9435, %v9436
        %v9438 = vsel %vm4365, %v9433, %v9437
        %v9439 = vrot.slane %v8593, 1
        %v9440 = vrot.slane %v8589, 2
        %v9441 = vor.u32 %v9439, %v9440
        %v9442 = vsel %vm4365, %v9437, %v9441
        %v9443 = vrot.slane %v8601, 1
        %v9444 = vrot.slane %v8597, 2
        %v9445 = vor.u32 %v9443, %v9444
        %v9446 = vsel %vm4365, %v9441, %v9445
        %v9447 = vrot.slane %v8609, 1
        %v9448 = vrot.slane %v8605, 2
        %v9449 = vor.u32 %v9447, %v9448
        %v9450 = vsel %vm4365, %v9445, %v9449
        %v9451 = vrot.slane %v8617, 1
        %v9452 = vrot.slane %v8613, 2
        %v9453 = vor.u32 %v9451, %v9452
        %v9454 = vsel %vm4365, %v9449, %v9453
        %v9455 = vrot.slane %v8625, 1
        %v9456 = vrot.slane %v8621, 2
        %v9457 = vor.u32 %v9455, %v9456
        %v9458 = vsel %vm4365, %v9453, %v9457
        %v9459 = vrot.slane %v8633, 1
        %v9460 = vrot.slane %v8629, 2
        %v9461 = vor.u32 %v9459, %v9460
        %v9462 = vsel %vm4365, %v9457, %v9461
        %v9463 = vrot.slane %v8641, 1
        %v9464 = vrot.slane %v8637, 2
        %v9465 = vor.u32 %v9463, %v9464
        %v9466 = vsel %vm4365, %v9461, %v9465
        %v9467 = vrot.slane %v8649, 1
        %v9468 = vrot.slane %v8645, 2
        %v9469 = vor.u32 %v9467, %v9468
        %v9470 = vsel %vm4365, %v9465, %v9469
        %v9471 = vrot.slane %v8657, 1
        %v9472 = vrot.slane %v8653, 2
        %v9473 = vor.u32 %v9471, %v9472
        %v9474 = vsel %vm4365, %v9469, %v9473
        %v9475 = vrot.slane %v8665, 1
        %v9476 = vrot.slane %v8661, 2
        %v9477 = vor.u32 %v9475, %v9476
        %v9478 = vsel %vm4365, %v9473, %v9477
        %v9479 = vrot.slane %v8673, 1
        %v9480 = vrot.slane %v8669, 2
        %v9481 = vor.u32 %v9479, %v9480
        %v9482 = vsel %vm4365, %v9477, %v9481
        %v9483 = vrot.slane %v8681, 1
        %v9484 = vrot.slane %v8677, 2
        %v9485 = vor.u32 %v9483, %v9484
        %v9486 = vsel %vm4365, %v9481, %v9485
        %v9487 = vrot.slane %v8689, 1
        %v9488 = vrot.slane %v8685, 2
        %v9489 = vor.u32 %v9487, %v9488
        %v9490 = vsel %vm4365, %v9485, %v9489
        %v9491 = vrot.slane %v8697, 1
        %v9492 = vrot.slane %v8693, 2
        %v9493 = vor.u32 %v9491, %v9492
        %v9494 = vsel %vm4365, %v9489, %v9493
        %v9496 = vshrl.u32 %v9410, 16
        %v9498 = vrot.slane %v9496, 1
        %v9499 = vshll.u32 %v9410, 16
        %v9501 = vrot.slane %v9499, 2
        %v9502 = vor.u32 %v9498, %v9501
        %v9503 = vsel %vm4365, %v9493, %v9502
        %v9541 = vunpack.c.l.b16 %v9392
        %v9542 = vunpack.c.l.b16 %v9393
        %v9543 = vunpack.c.l.b16 %v9394
        %v9544 = vunpack.c.l.b16 %v9395
        %v9545 = vunpack.c.l.b16 %v9396
        %v9546 = vunpack.c.l.b16 %v9397
        %v9547 = vunpack.c.l.b16 %v9398
        %v9548 = vunpack.c.l.b16 %v9399
        %v9549 = vunpack.c.l.b16 %v9400
        %v9550 = vunpack.c.l.b16 %v9401
        %v9551 = vunpack.c.l.b16 %v9402
        %v9552 = vunpack.c.l.b16 %v9403
        %v9553 = vunpack.c.l.b16 %v9404
        %v9554 = vunpack.c.l.b16 %v9405
        %v9555 = vunpack.c.l.b16 %v9406
        %v9556 = vunpack.c.l.b16 %v9407
        %v9557 = vpack.c.b16 %v9542, %v9541
        %v9558 = vpack.c.b16 %v9544, %v9543
        %v9559 = vpack.c.b16 %v9546, %v9545
        %v9560 = vpack.c.b16 %v9548, %v9547
        %v9561 = vpack.c.b16 %v9550, %v9549
        %v9562 = vpack.c.b16 %v9552, %v9551
        %v9563 = vpack.c.b16 %v9554, %v9553
        %v9564 = vpack.c.b16 %v9556, %v9555
        %9573 = vmatprep.subr.bf16.mxu0 0
        %9574 = vmatpush1.bf16.msra.mxu0 %v9557
        %9575 = vmatprep.subr.bf16.mxu0 0
        %9576 = vmatpush1.bf16.msra.mxu0 %v9558
        %9577 = vmatprep.subr.bf16.mxu0 0
        %9578 = vmatpush1.bf16.msra.mxu0 %v9559
        %9579 = vmatprep.subr.bf16.mxu0 0
        %9580 = vmatpush1.bf16.msra.mxu0 %v9560
        %9581 = vmatprep.subr.bf16.mxu0 0
        %9582 = vmatpush1.bf16.msra.mxu0 %v9561
        %9583 = vmatprep.subr.bf16.mxu0 0
        %9584 = vmatpush1.bf16.msra.mxu0 %v9562
        %9585 = vmatprep.subr.bf16.mxu0 0
        %9586 = vmatpush1.bf16.msra.mxu0 %v9563
        %9587 = vmatprep.subr.bf16.mxu0 0
        %9588 = vmatpush1.bf16.msra.mxu0 %v9564
        %9589 = vmatprep.subr.bf16.mxu0 0
        %9590 = vmatpush1.bf16.msra.mxu0 0
        %9591 = vmatprep.subr.bf16.mxu0 0
        %9592 = vmatpush1.bf16.msra.mxu0 0
        %9593 = vmatprep.subr.bf16.mxu0 0
        %9594 = vmatpush1.bf16.msra.mxu0 0
        %9595 = vmatprep.subr.bf16.mxu0 0
        %9596 = vmatpush1.bf16.msra.mxu0 0
        %9597 = vmatprep.subr.bf16.mxu0 0
        %9598 = vmatpush1.bf16.msra.mxu0 0
        %9599 = vmatprep.subr.bf16.mxu0 0
        %9600 = vmatpush1.bf16.msra.mxu0 0
        %9601 = vmatprep.subr.bf16.mxu0 0
        %9602 = vmatpush1.bf16.msra.mxu0 0
        %9603 = vmatprep.subr.bf16.mxu0 0
        %9604 = vmatpush1.bf16.msra.mxu0 0
        %9605 = vmatprep.mubr.bf16.mxu0 0
        %9606 = vmatmul.mubr.bf16.gmra.mrb[0].mxu0 %v9422
        %v9607 = vpop.f32.mrb[0].mxu0
        %v9608 = vadd.f32 0.0, %v9607
        %v9609 = vpop.f32.mrb[0].mxu0
        %v9610 = vpop.f32.mrb[0].mxu0
        %v9611 = vadd.f32 0.0, %v9610
        %v9612 = vpop.f32.mrb[0].mxu0
        %9613 = vmatprep.mubr.bf16.mxu0 0
        %9614 = vmatmul.mubr.bf16.gmra.mrb[0].mxu0 %v9426
        %v9615 = vpop.f32.mrb[0].mxu0
        %v9616 = vadd.f32 0.0, %v9615
        %v9617 = vpop.f32.mrb[0].mxu0
        %v9618 = vpop.f32.mrb[0].mxu0
        %v9619 = vadd.f32 0.0, %v9618
        %v9620 = vpop.f32.mrb[0].mxu0
        %9621 = vmatprep.mubr.bf16.mxu0 0
        %9622 = vmatmul.mubr.bf16.gmra.mrb[0].mxu0 %v9430
        %v9623 = vpop.f32.mrb[0].mxu0
        %v9624 = vadd.f32 0.0, %v9623
        %v9625 = vpop.f32.mrb[0].mxu0
        %v9626 = vpop.f32.mrb[0].mxu0
        %v9627 = vadd.f32 0.0, %v9626
        %v9628 = vpop.f32.mrb[0].mxu0
        %9629 = vmatprep.mubr.bf16.mxu0 0
        %9630 = vmatmul.mubr.bf16.gmra.mrb[0].mxu0 %v9434
        %v9631 = vpop.f32.mrb[0].mxu0
        %v9632 = vadd.f32 0.0, %v9631
        %v9633 = vpop.f32.mrb[0].mxu0
        %v9634 = vpop.f32.mrb[0].mxu0
        %v9635 = vadd.f32 0.0, %v9634
        %v9636 = vpop.f32.mrb[0].mxu0
        %9637 = vmatprep.mubr.bf16.mxu0 0
        %9638 = vmatmul.mubr.bf16.gmra.mrb[0].mxu0 %v9438
        %v9639 = vpop.f32.mrb[0].mxu0
        %v9640 = vadd.f32 0.0, %v9639
        %v9641 = vpop.f32.mrb[0].mxu0
        %v9642 = vpop.f32.mrb[0].mxu0
        %v9643 = vadd.f32 0.0, %v9642
        %v9644 = vpop.f32.mrb[0].mxu0
        %9645 = vmatprep.mubr.bf16.mxu0 0
        %9646 = vmatmul.mubr.bf16.gmra.mrb[0].mxu0 %v9442
        %v9647 = vpop.f32.mrb[0].mxu0
        %v9648 = vadd.f32 0.0, %v9647
        %v9649 = vpop.f32.mrb[0].mxu0
        %v9650 = vpop.f32.mrb[0].mxu0
        %v9651 = vadd.f32 0.0, %v9650
        %v9652 = vpop.f32.mrb[0].mxu0
        %9653 = vmatprep.mubr.bf16.mxu0 0
        %9654 = vmatmul.mubr.bf16.gmra.mrb[0].mxu0 %v9446
        %v9655 = vpop.f32.mrb[0].mxu0
        %v9656 = vadd.f32 0.0, %v9655
        %v9657 = vpop.f32.mrb[0].mxu0
        %v9658 = vpop.f32.mrb[0].mxu0
        %v9659 = vadd.f32 0.0, %v9658
        %v9660 = vpop.f32.mrb[0].mxu0
        %9661 = vmatprep.mubr.bf16.mxu0 0
        %9662 = vmatmul.mubr.bf16.gmra.mrb[0].mxu0 %v9450
        %v9663 = vpop.f32.mrb[0].mxu0
        %v9664 = vadd.f32 0.0, %v9663
        %v9665 = vpop.f32.mrb[0].mxu0
        %v9666 = vpop.f32.mrb[0].mxu0
        %v9667 = vadd.f32 0.0, %v9666
        %v9668 = vpop.f32.mrb[0].mxu0
        %9669 = vmatprep.mubr.bf16.mxu0 0
        %9670 = vmatmul.mubr.bf16.gmra.mrb[0].mxu0 %v9454
        %v9671 = vpop.f32.mrb[0].mxu0
        %v9672 = vadd.f32 0.0, %v9671
        %v9673 = vpop.f32.mrb[0].mxu0
        %v9674 = vpop.f32.mrb[0].mxu0
        %v9675 = vadd.f32 0.0, %v9674
        %v9676 = vpop.f32.mrb[0].mxu0
        %9677 = vmatprep.mubr.bf16.mxu0 0
        %9678 = vmatmul.mubr.bf16.gmra.mrb[0].mxu0 %v9458
        %v9679 = vpop.f32.mrb[0].mxu0
        %v9680 = vadd.f32 0.0, %v9679
        %v9681 = vpop.f32.mrb[0].mxu0
        %v9682 = vpop.f32.mrb[0].mxu0
        %v9683 = vadd.f32 0.0, %v9682
        %v9684 = vpop.f32.mrb[0].mxu0
        %9685 = vmatprep.mubr.bf16.mxu0 0
        %9686 = vmatmul.mubr.bf16.gmra.mrb[0].mxu0 %v9462
        %v9687 = vpop.f32.mrb[0].mxu0
        %v9688 = vadd.f32 0.0, %v9687
        %v9689 = vpop.f32.mrb[0].mxu0
        %v9690 = vpop.f32.mrb[0].mxu0
        %v9691 = vadd.f32 0.0, %v9690
        %v9692 = vpop.f32.mrb[0].mxu0
        %9693 = vmatprep.mubr.bf16.mxu0 0
        %9694 = vmatmul.mubr.bf16.gmra.mrb[0].mxu0 %v9466
        %v9695 = vpop.f32.mrb[0].mxu0
        %v9696 = vadd.f32 0.0, %v9695
        %v9697 = vpop.f32.mrb[0].mxu0
        %v9698 = vpop.f32.mrb[0].mxu0
        %v9699 = vadd.f32 0.0, %v9698
        %v9700 = vpop.f32.mrb[0].mxu0
        %9701 = vmatprep.mubr.bf16.mxu0 0
        %9702 = vmatmul.mubr.bf16.gmra.mrb[0].mxu0 %v9470
        %v9703 = vpop.f32.mrb[0].mxu0
        %v9704 = vadd.f32 0.0, %v9703
        %v9705 = vpop.f32.mrb[0].mxu0
        %v9706 = vpop.f32.mrb[0].mxu0
        %v9707 = vadd.f32 0.0, %v9706
        %v9708 = vpop.f32.mrb[0].mxu0
        %9709 = vmatprep.mubr.bf16.mxu0 0
        %9710 = vmatmul.mubr.bf16.gmra.mrb[0].mxu0 %v9474
        %v9711 = vpop.f32.mrb[0].mxu0
        %v9712 = vadd.f32 0.0, %v9711
        %v9713 = vpop.f32.mrb[0].mxu0
        %v9714 = vpop.f32.mrb[0].mxu0
        %v9715 = vadd.f32 0.0, %v9714
        %v9716 = vpop.f32.mrb[0].mxu0
        %9717 = vmatprep.mubr.bf16.mxu0 0
        %9718 = vmatmul.mubr.bf16.gmra.mrb[0].mxu0 %v9478
        %v9719 = vpop.f32.mrb[0].mxu0
        %v9720 = vadd.f32 0.0, %v9719
        %v9721 = vpop.f32.mrb[0].mxu0
        %v9722 = vpop.f32.mrb[0].mxu0
        %v9723 = vadd.f32 0.0, %v9722
        %v9724 = vpop.f32.mrb[0].mxu0
        %9725 = vmatprep.mubr.bf16.mxu0 0
        %9726 = vmatmul.mubr.bf16.gmra.mrb[0].mxu0 %v9482
        %v9727 = vpop.f32.mrb[0].mxu0
        %v9728 = vadd.f32 0.0, %v9727
        %v9729 = vpop.f32.mrb[0].mxu0
        %v9730 = vpop.f32.mrb[0].mxu0
        %v9731 = vadd.f32 0.0, %v9730
        %v9732 = vpop.f32.mrb[0].mxu0
        %9733 = vmatprep.mubr.bf16.mxu0 0
        %9734 = vmatmul.mubr.bf16.gmra.mrb[0].mxu0 %v9486
        %v9735 = vpop.f32.mrb[0].mxu0
        %v9736 = vadd.f32 0.0, %v9735
        %v9737 = vpop.f32.mrb[0].mxu0
        %v9738 = vpop.f32.mrb[0].mxu0
        %v9739 = vadd.f32 0.0, %v9738
        %v9740 = vpop.f32.mrb[0].mxu0
        %9741 = vmatprep.mubr.bf16.mxu0 0
        %9742 = vmatmul.mubr.bf16.gmra.mrb[0].mxu0 %v9490
        %v9743 = vpop.f32.mrb[0].mxu0
        %v9744 = vadd.f32 0.0, %v9743
        %v9745 = vpop.f32.mrb[0].mxu0
        %v9746 = vpop.f32.mrb[0].mxu0
        %v9747 = vadd.f32 0.0, %v9746
        %v9748 = vpop.f32.mrb[0].mxu0
        %9749 = vmatprep.mubr.bf16.mxu0 0
        %9750 = vmatmul.mubr.bf16.gmra.mrb[0].mxu0 %v9494
        %v9751 = vpop.f32.mrb[0].mxu0
        %v9752 = vadd.f32 0.0, %v9751
        %v9753 = vpop.f32.mrb[0].mxu0
        %v9754 = vpop.f32.mrb[0].mxu0
        %v9755 = vadd.f32 0.0, %v9754
        %v9756 = vpop.f32.mrb[0].mxu0
        %9757 = vmatprep.mubr.bf16.mxu0 0
        %9758 = vmatmul.mubr.bf16.gmra.mrb[0].mxu0 %v9503
        %v9759 = vpop.f32.mrb[0].mxu0
        %v9760 = vadd.f32 0.0, %v9759
        %v9761 = vpop.f32.mrb[0].mxu0
        %v9762 = vpop.f32.mrb[0].mxu0
        %v9763 = vadd.f32 0.0, %v9762
        %v9764 = vpop.f32.mrb[0].mxu0
        %9765 = vmatprep.mubr.bf16.mxu0 0
        %9766 = vmatmul.mubr.bf16.gmra.mrb[0].mxu0 %v9502
        %v9767 = vpop.f32.mrb[0].mxu0
        %v9768 = vadd.f32 0.0, %v9767
        %v9769 = vpop.f32.mrb[0].mxu0
        %v9770 = vpop.f32.mrb[0].mxu0
        %v9771 = vpop.f32.mrb[0].mxu0
        %9772 = vdwg.mxu0
        %v9773 = vadd.f32 %v9349, %v9608
        %v9774 = vadd.f32 %v9350, %v9611
        %v9775 = vadd.f32 %v9351, %v9616
        %v9776 = vadd.f32 %v9352, %v9619
        %v9777 = vadd.f32 %v9353, %v9624
        %v9778 = vadd.f32 %v9354, %v9627
        %v9779 = vadd.f32 %v9355, %v9632
        %v9780 = vadd.f32 %v9356, %v9635
        %v9781 = vadd.f32 %v9357, %v9640
        %v9782 = vadd.f32 %v9358, %v9643
        %v9783 = vadd.f32 %v9359, %v9648
        %v9784 = vadd.f32 %v9360, %v9651
        %v9785 = vadd.f32 %v9361, %v9656
        %v9786 = vadd.f32 %v9362, %v9659
        %v9787 = vadd.f32 %v9363, %v9664
        %v9788 = vadd.f32 %v9364, %v9667
        %v9789 = vadd.f32 %v9365, %v9672
        %v9790 = vadd.f32 %v9366, %v9675
        %v9791 = vadd.f32 %v9367, %v9680
        %v9792 = vadd.f32 %v9368, %v9683
        %v9793 = vadd.f32 %v9369, %v9688
        %v9794 = vadd.f32 %v9370, %v9691
        %v9795 = vadd.f32 %v9371, %v9696
        %v9796 = vadd.f32 %v9372, %v9699
        %v9797 = vadd.f32 %v9373, %v9704
        %v9798 = vadd.f32 %v9374, %v9707
        %v9799 = vadd.f32 %v9375, %v9712
        %v9800 = vadd.f32 %v9376, %v9715
        %v9801 = vadd.f32 %v9377, %v9720
        %v9802 = vadd.f32 %v9378, %v9723
        %v9803 = vadd.f32 %v9379, %v9728
        %v9804 = vadd.f32 %v9380, %v9731
        %v9805 = vadd.f32 %v9381, %v9736
        %v9806 = vadd.f32 %v9382, %v9739
        %v9807 = vadd.f32 %v9383, %v9744
        %v9808 = vadd.f32 %v9384, %v9747
        %v9809 = vadd.f32 %v9385, %v9752
        %v9810 = vadd.f32 %v9386, %v9755
        %v9811 = vadd.f32 %v9387, %v9760
        %v9812 = vadd.f32 %v9388, %v9763
        %v9813 = vadd.f32 %v9389, %v9768
        %v9814 = vld [vmem:[%s262 + $0xc] sm:$0xf]
        %v9815 = vld [vmem:[%s262 + $0x10] sm:$0xf]
        %v9816 = vld [vmem:[%s262 + $0x14] sm:$0xf]
        %v9817 = vld [vmem:[%s262 + $0x18] sm:$0xf]
        %v9818 = vld [vmem:[%s262 + $0x1c] sm:$0xf]
        %v9819 = vld [vmem:[%s262 + $0x20] sm:$0xf]
        %v9820 = vld [vmem:[%s262 + $0x24] sm:$0xf]
        %v9821 = vld [vmem:[%s262 + $0x28] sm:$0xf]
        %v9822 = vld [vmem:[%s262 + $0x2c] sm:$0xf]
        %v9823 = vld [vmem:[%s262 + $0x30] sm:$0xf]
        %v9824 = vld [vmem:[%s262 + $0x34] sm:$0xf]
        %v9825 = vld [vmem:[%s262 + $0x38] sm:$0xf]
        %v9826 = vld [vmem:[%s262 + $0x3c] sm:$0xf]
        %v9827 = vld [vmem:[%s262 + $0x40] sm:$0xf]
        %v9828 = vld [vmem:[%s262 + $0x44] sm:$0xf]
        %v9829 = vld [vmem:[%s262 + $0x48] sm:$0xf]
        %v9830 = vld [vmem:[%s262 + $0x4c] sm:$0xf]
        %v9831 = vld [vmem:[%s262 + $0x50] sm:$0xf]
        %v9832 = vld [vmem:[%s262 + $0x54] sm:$0xf]
        %v9833 = vld [vmem:[%s262 + $0x58] sm:$0xf]
        %v9834 = vld [vmem:[%s262 + $0x5c] sm:$0xf]
        %v9835 = vld [vmem:[%s262 + $0x60] sm:$0xf]
        %v9836 = vld [vmem:[%s262 + $0x64] sm:$0xf]
        %v9837 = vld [vmem:[%s262 + $0x68] sm:$0xf]
        %v9838 = vld [vmem:[%s262 + $0x6c] sm:$0xf]
        %v9839 = vld [vmem:[%s262 + $0x70] sm:$0xf]
        %v9840 = vld [vmem:[%s262 + $0x74] sm:$0xf]
        %v9841 = vld [vmem:[%s262 + $0x78] sm:$0xf]
        %v9842 = vld [vmem:[%s262 + $0x7c] sm:$0xf]
        %v9843 = vld [vmem:[%s262 + $0x80] sm:$0xf]
        %v9844 = vld [vmem:[%s262 + $0x84] sm:$0xf]
        %v9845 = vld [vmem:[%s262 + $0x88] sm:$0xf]
        %v9846 = vld [vmem:[%s262 + $0x8c] sm:$0xf]
        %v9847 = vld [vmem:[%s262 + $0x90] sm:$0xf]
        %v9848 = vld [vmem:[%s262 + $0x94] sm:$0xf]
        %v9849 = vld [vmem:[%s262 + $0x98] sm:$0xf]
        %v9850 = vld [vmem:[%s262 + $0x9c] sm:$0xf]
        %v9851 = vld [vmem:[%s262 + $0xa0] sm:$0xf]
        %v9852 = vld [vmem:[%s262 + $0xa4] sm:$0xf]
        %v9853 = vld [vmem:[%s262 + $0xa8] sm:$0xf]
        %v9854 = vld [vmem:[%s262 + $0xac] sm:$0xf]
        %v9855 = vunpack.c.l.bf16 %v9814
        %v9856 = vunpack.c.l.bf16 %v9815
        %v9857 = vunpack.c.l.bf16 %v9816
        %v9858 = vunpack.c.l.bf16 %v9817
        %v9859 = vunpack.c.l.bf16 %v9818
        %v9860 = vunpack.c.l.bf16 %v9819
        %v9861 = vunpack.c.l.bf16 %v9820
        %v9862 = vunpack.c.l.bf16 %v9821
        %v9863 = vunpack.c.l.bf16 %v9822
        %v9864 = vunpack.c.l.bf16 %v9823
        %v9865 = vunpack.c.l.bf16 %v9824
        %v9866 = vunpack.c.l.bf16 %v9825
        %v9867 = vunpack.c.l.bf16 %v9826
        %v9868 = vunpack.c.l.bf16 %v9827
        %v9869 = vunpack.c.l.bf16 %v9828
        %v9870 = vunpack.c.l.bf16 %v9829
        %v9871 = vunpack.c.l.bf16 %v9830
        %v9872 = vunpack.c.l.bf16 %v9831
        %v9873 = vunpack.c.l.bf16 %v9832
        %v9874 = vunpack.c.l.bf16 %v9833
        %v9875 = vunpack.c.l.bf16 %v9834
        %v9876 = vunpack.c.l.bf16 %v9835
        %v9877 = vunpack.c.l.bf16 %v9836
        %v9878 = vunpack.c.l.bf16 %v9837
        %v9879 = vunpack.c.l.bf16 %v9838
        %v9880 = vunpack.c.l.bf16 %v9839
        %v9881 = vunpack.c.l.bf16 %v9840
        %v9882 = vunpack.c.l.bf16 %v9841
        %v9883 = vunpack.c.l.bf16 %v9842
        %v9884 = vunpack.c.l.bf16 %v9843
        %v9885 = vunpack.c.l.bf16 %v9844
        %v9886 = vunpack.c.l.bf16 %v9845
        %v9887 = vunpack.c.l.bf16 %v9846
        %v9888 = vunpack.c.l.bf16 %v9847
        %v9889 = vunpack.c.l.bf16 %v9848
        %v9890 = vunpack.c.l.bf16 %v9849
        %v9891 = vunpack.c.l.bf16 %v9850
        %v9892 = vunpack.c.l.bf16 %v9851
        %v9893 = vunpack.c.l.bf16 %v9852
        %v9894 = vunpack.c.l.bf16 %v9853
        %v9895 = vunpack.c.l.bf16 %v9854
        %v9896 = vld [vmem:[%s5] sm:$0x1]
        %v9898 = vlaneseq
        %v9899 = vshrl.u32 %v9898, 7
        %v9900 = vsub.s32 0, %v9899
        %v9901 = vrot.slane %v9896, %v9900
        %v9903 = vadd.f32 %v9773, %v9901
        %v9904 = vadd.f32 %v9774, %v9901
        %v9905 = vadd.f32 %v9775, %v9901
        %v9906 = vadd.f32 %v9776, %v9901
        %v9907 = vadd.f32 %v9777, %v9901
        %v9908 = vadd.f32 %v9778, %v9901
        %v9909 = vadd.f32 %v9779, %v9901
        %v9910 = vadd.f32 %v9780, %v9901
        %v9911 = vadd.f32 %v9781, %v9901
        %v9912 = vadd.f32 %v9782, %v9901
        %v9913 = vadd.f32 %v9783, %v9901
        %v9914 = vadd.f32 %v9784, %v9901
        %v9915 = vadd.f32 %v9785, %v9901
        %v9916 = vadd.f32 %v9786, %v9901
        %v9917 = vadd.f32 %v9787, %v9901
        %v9918 = vadd.f32 %v9788, %v9901
        %v9919 = vadd.f32 %v9789, %v9901
        %v9920 = vadd.f32 %v9790, %v9901
        %v9921 = vadd.f32 %v9791, %v9901
        %v9922 = vadd.f32 %v9792, %v9901
        %v9923 = vadd.f32 %v9793, %v9901
        %v9924 = vadd.f32 %v9794, %v9901
        %v9925 = vadd.f32 %v9795, %v9901
        %v9926 = vadd.f32 %v9796, %v9901
        %v9927 = vadd.f32 %v9797, %v9901
        %v9928 = vadd.f32 %v9798, %v9901
        %v9929 = vadd.f32 %v9799, %v9901
        %v9930 = vadd.f32 %v9800, %v9901
        %v9931 = vadd.f32 %v9801, %v9901
        %v9932 = vadd.f32 %v9802, %v9901
        %v9933 = vadd.f32 %v9803, %v9901
        %v9934 = vadd.f32 %v9804, %v9901
        %v9935 = vadd.f32 %v9805, %v9901
        %v9936 = vadd.f32 %v9806, %v9901
        %v9937 = vadd.f32 %v9807, %v9901
        %v9938 = vadd.f32 %v9808, %v9901
        %v9939 = vadd.f32 %v9809, %v9901
        %v9940 = vadd.f32 %v9810, %v9901
        %v9941 = vadd.f32 %v9811, %v9901
        %v9942 = vadd.f32 %v9812, %v9901
        %v9943 = vadd.f32 %v9813, %v9901
        %v9944 = vadd.f32 %v9903, %v9855
        %v9945 = vadd.f32 %v9904, %v9856
        %v9946 = vadd.f32 %v9905, %v9857
        %v9947 = vadd.f32 %v9906, %v9858
        %v9948 = vadd.f32 %v9907, %v9859
        %v9949 = vadd.f32 %v9908, %v9860
        %v9950 = vadd.f32 %v9909, %v9861
        %v9951 = vadd.f32 %v9910, %v9862
        %v9952 = vadd.f32 %v9911, %v9863
        %v9953 = vadd.f32 %v9912, %v9864
        %v9954 = vadd.f32 %v9913, %v9865
        %v9955 = vadd.f32 %v9914, %v9866
        %v9956 = vadd.f32 %v9915, %v9867
        %v9957 = vadd.f32 %v9916, %v9868
        %v9958 = vadd.f32 %v9917, %v9869
        %v9959 = vadd.f32 %v9918, %v9870
        %v9960 = vadd.f32 %v9919, %v9871
        %v9961 = vadd.f32 %v9920, %v9872
        %v9962 = vadd.f32 %v9921, %v9873
        %v9963 = vadd.f32 %v9922, %v9874
        %v9964 = vadd.f32 %v9923, %v9875
        %v9965 = vadd.f32 %v9924, %v9876
        %v9966 = vadd.f32 %v9925, %v9877
        %v9967 = vadd.f32 %v9926, %v9878
        %v9968 = vadd.f32 %v9927, %v9879
        %v9969 = vadd.f32 %v9928, %v9880
        %v9970 = vadd.f32 %v9929, %v9881
        %v9971 = vadd.f32 %v9930, %v9882
        %v9972 = vadd.f32 %v9931, %v9883
        %v9973 = vadd.f32 %v9932, %v9884
        %v9974 = vadd.f32 %v9933, %v9885
        %v9975 = vadd.f32 %v9934, %v9886
        %v9976 = vadd.f32 %v9935, %v9887
        %v9977 = vadd.f32 %v9936, %v9888
        %v9978 = vadd.f32 %v9937, %v9889
        %v9979 = vadd.f32 %v9938, %v9890
        %v9980 = vadd.f32 %v9939, %v9891
        %v9981 = vadd.f32 %v9940, %v9892
        %v9982 = vadd.f32 %v9941, %v9893
        %v9983 = vadd.f32 %v9942, %v9894
        %v9984 = vadd.f32 %v9943, %v9895
        %v9985 = vmax.f32 %v9944, 0.0
        %v9986 = vmax.f32 %v9945, 0.0
        %v9987 = vmax.f32 %v9946, 0.0
        %v9988 = vmax.f32 %v9947, 0.0
        %v9989 = vmax.f32 %v9948, 0.0
        %v9990 = vmax.f32 %v9949, 0.0
        %v9991 = vmax.f32 %v9950, 0.0
        %v9992 = vmax.f32 %v9951, 0.0
        %v9993 = vmax.f32 %v9952, 0.0
        %v9994 = vmax.f32 %v9953, 0.0
        %v9995 = vmax.f32 %v9954, 0.0
        %v9996 = vmax.f32 %v9955, 0.0
        %v9997 = vmax.f32 %v9956, 0.0
        %v9998 = vmax.f32 %v9957, 0.0
        %v9999 = vmax.f32 %v9958, 0.0
        %v10000 = vmax.f32 %v9959, 0.0
        %v10001 = vmax.f32 %v9960, 0.0
        %v10002 = vmax.f32 %v9961, 0.0
        %v10003 = vmax.f32 %v9962, 0.0
        %v10004 = vmax.f32 %v9963, 0.0
        %v10005 = vmax.f32 %v9964, 0.0
        %v10006 = vmax.f32 %v9965, 0.0
        %v10007 = vmax.f32 %v9966, 0.0
        %v10008 = vmax.f32 %v9967, 0.0
        %v10009 = vmax.f32 %v9968, 0.0
        %v10010 = vmax.f32 %v9969, 0.0
        %v10011 = vmax.f32 %v9970, 0.0
        %v10012 = vmax.f32 %v9971, 0.0
        %v10013 = vmax.f32 %v9972, 0.0
        %v10014 = vmax.f32 %v9973, 0.0
        %v10015 = vmax.f32 %v9974, 0.0
        %v10016 = vmax.f32 %v9975, 0.0
        %v10017 = vmax.f32 %v9976, 0.0
        %v10018 = vmax.f32 %v9977, 0.0
        %v10019 = vmax.f32 %v9978, 0.0
        %v10020 = vmax.f32 %v9979, 0.0
        %v10021 = vmax.f32 %v9980, 0.0
        %v10022 = vmax.f32 %v9981, 0.0
        %v10023 = vmax.f32 %v9982, 0.0
        %v10024 = vmax.f32 %v9983, 0.0
        %v10025 = vmax.f32 %v9984, 0.0
        %10026 = vst [vmem:[%s298] sm:$0xff] %v9985
        %10027 = vst [vmem:[%s298 + $0x8] sm:$0xff] %v9986
        %10028 = vst [vmem:[%s298 + $0x10] sm:$0xff] %v9987
        %10029 = vst [vmem:[%s298 + $0x18] sm:$0xff] %v9988
        %10030 = vst [vmem:[%s298 + $0x20] sm:$0xff] %v9989
        %10031 = vst [vmem:[%s298 + $0x28] sm:$0xff] %v9990
        %10032 = vst [vmem:[%s298 + $0x30] sm:$0xff] %v9991
        %10033 = vst [vmem:[%s298 + $0x38] sm:$0xff] %v9992
        %10034 = vst [vmem:[%s298 + $0x40] sm:$0xff] %v9993
        %10035 = vst [vmem:[%s298 + $0x48] sm:$0xff] %v9994
        %10036 = vst [vmem:[%s298 + $0x50] sm:$0xff] %v9995
        %10037 = vst [vmem:[%s298 + $0x58] sm:$0xff] %v9996
        %10038 = vst [vmem:[%s298 + $0x60] sm:$0xff] %v9997
        %10039 = vst [vmem:[%s298 + $0x68] sm:$0xff] %v9998
        %10040 = vst [vmem:[%s298 + $0x70] sm:$0xff] %v9999
        %10041 = vst [vmem:[%s298 + $0x78] sm:$0xff] %v10000
        %10042 = vst [vmem:[%s298 + $0x80] sm:$0xff] %v10001
        %10043 = vst [vmem:[%s298 + $0x88] sm:$0xff] %v10002
        %10044 = vst [vmem:[%s298 + $0x90] sm:$0xff] %v10003
        %10045 = vst [vmem:[%s298 + $0x98] sm:$0xff] %v10004
        %10046 = vst [vmem:[%s298 + $0xa0] sm:$0xff] %v10005
        %10047 = vst [vmem:[%s298 + $0xa8] sm:$0xff] %v10006
        %10048 = vst [vmem:[%s298 + $0xb0] sm:$0xff] %v10007
        %10049 = vst [vmem:[%s298 + $0xb8] sm:$0xff] %v10008
        %10050 = vst [vmem:[%s298 + $0xc0] sm:$0xff] %v10009
        %10051 = vst [vmem:[%s298 + $0xc8] sm:$0xff] %v10010
        %10052 = vst [vmem:[%s298 + $0xd0] sm:$0xff] %v10011
        %10053 = vst [vmem:[%s298 + $0xd8] sm:$0xff] %v10012
        %10054 = vst [vmem:[%s298 + $0xe0] sm:$0xff] %v10013
        %10055 = vst [vmem:[%s298 + $0xe8] sm:$0xff] %v10014
        %10056 = vst [vmem:[%s298 + $0xf0] sm:$0xff] %v10015
        %10057 = vst [vmem:[%s298 + $0xf8] sm:$0xff] %v10016
        %10058 = vst [vmem:[%s298 + $0x100] sm:$0xff] %v10017
        %10059 = vst [vmem:[%s298 + $0x108] sm:$0xff] %v10018
        %10060 = vst [vmem:[%s298 + $0x110] sm:$0xff] %v10019
        %10061 = vst [vmem:[%s298 + $0x118] sm:$0xff] %v10020
        %10062 = vst [vmem:[%s298 + $0x120] sm:$0xff] %v10021
        %10063 = vst [vmem:[%s298 + $0x128] sm:$0xff] %v10022
        %10064 = vst [vmem:[%s298 + $0x130] sm:$0xff] %v10023
        %10065 = vst [vmem:[%s298 + $0x138] sm:$0xff] %v10024
        %10066 = vst [vmem:[%s298 + $0x140] sm:$0xff] %v10025
        %s10067 = sand.u32 %s163, 1
        %s10068 = scalar_lea.sflag [#allocation5], %s10067
        %s10069 = sand.u32 %s163, 1
        %s10070 = smul.addr %s10069, 328
        %s10071 = scalar_lea.vmem [#allocation9], %s10070
        // Predicated region
        $region57: #{tpu_custom_call.1} parent=43 // pred_check
          %p10072 = pneg %p173
        $region58: #{tpu_custom_call.1} parent=43 // pred_check_branch
          %10074 = sbr.rel (%p10072) target = $region60
        $region59: #{tpu_custom_call.1} parent=43 // pred_region
          %s10076 = ssub.s32 5248, 5248
          %10077 = vsyncadd %s10068, %s10076
          %s10078 = smul.addr %s24, 41
          %s10079 = smul.addr %s10078, 128
          %s10080 = scalar_lea.hbm %s6, %s10079
          %s10081 = sshll.u32 %s10071, 4
          %s10082 = int_to_ptr.vmem [resolvable:$true] %s10081
          %10087 = dma.vmem_to_hbm [thread:$0]  %s10082, 5248, %s10080, %s10068, 128, 128, 8
        $region60: #{tpu_custom_call.1} parent=43 // pred_fallthru
          _
      $region44: #{tpu_custom_call.1} parent=5 // pred_fallthru
        _
      %p10088 = scmp.le.s32.totalorder 2, %s19
      // Predicated region
      $region61: #{tpu_custom_call.1} parent=5 // pred_check
        %p10089 = pneg %p10088
      $region62: #{tpu_custom_call.1} parent=5 // pred_check_branch
        %10091 = sbr.rel (%p10089) target = $region64
      $region63: #{tpu_custom_call.1} parent=5 // pred_region
        %s10092 = ssub.s32 %s19, 2
        // Predicated region
        $region65: #{tpu_custom_call.1} parent=63 // pred_check
          %p10093 = pneg %p179
        $region66: #{tpu_custom_call.1} parent=63 // pred_check_branch
          %10095 = sbr.rel (%p10093) target = $region68
        $region67: #{tpu_custom_call.1} parent=63 // pred_region
          %s10096 = sand.u32 %s164, 1
          %s10097 = scalar_lea.sflag [#allocation5], %s10096
          %s10098 = sand.u32 %s164, 1
          %s10099 = smul.addr %s10098, 328
          %s10100 = scalar_lea.vmem [#allocation9], %s10099
          %10101 = dma.done %s10097, 5248
        $region68: #{tpu_custom_call.1} parent=63 // pred_fallthru
          _
      $region64: #{tpu_custom_call.1} parent=5 // pred_fallthru
        _
    $region6: #{tpu_custom_call.1} parent=1 // loop_footer
      %s23 = sadd.s32 1, %s19
    $region7: #{tpu_custom_call.1} parent=1 // loop_footer_branch
      %18 = sbr.rel target = $region3
    $region8: #{tpu_custom_call.1} parent=1 // loop_exit
      _
    %10102 = vsyncpa [#allocation4], 1
    %s10103 = scalar_lea.sflag [#allocation4], 1
    %10104 = vsyncpa %s10103, 1
    %10105 = vsyncpa [#allocation7], 1
    %10106 = vsyncpa [#allocation5], 1
    %s10107 = scalar_lea.sflag [#allocation5], 1
    %10108 = vsyncpa %s10107, 1

</llo_original>
